<compile_context>
chip_gen: v7x
topology: tpu7x:2x2x1
jax: 0.10.0
libtpu: 0.0.40
codegen_flags: <defaults>
</compile_context>

<pallas_src>
import jax
import jax.numpy as jnp
from jax.experimental import pallas as pl
from jax.experimental.pallas import tpu as pltpu

LEAKY_SLOPE = 0.2
BN_EPS = 0.8                # nn.BatchNorm2d(C, 0.8): 2nd positional arg is eps.
MXU_DTYPE = jnp.bfloat16    # MXU operand dtype (accumulation is always f32).
                            # jnp.float32 => bit-exact vs. the f32 reference.


# ------------------------------ kernel helpers ------------------------------ #

def _post_conv(y, bias, gamma, beta):
    """bias -> LeakyReLU(0.2) -> Dropout(0) -> BatchNorm2d on an (M, C) tile."""
    y = y + bias                                      # conv bias (pre-activation)
    y = jnp.where(y >= 0.0, y, LEAKY_SLOPE * y)       # LeakyReLU(0.2)
    # Dropout(p=0) is the identity.
    # BatchNorm2d (training): biased batch stats over (N, H, W) = all rows.
    inv_n = 1.0 / y.shape[0]
    mean = jnp.sum(y, axis=0, keepdims=True) * inv_n
    d = y - mean
    var = jnp.sum(d * d, axis=0, keepdims=True) * inv_n
    return d * jax.lax.rsqrt(var + BN_EPS) * gamma + beta


def _conv_block(a, w_mat, bias, gamma, beta):
    """conv(k3, s2, p1) + bias -> LeakyReLU -> BN, as ONE im2col matmul.

    a     : (B, H, W, Cin) f32 activations (H, W even).
    w_mat : (9*Cin, Cout), rows ordered (kh, kw, cin).
    bias, gamma, beta : (1, Cout) f32.
    returns (B, H//2, W//2, Cout) f32.
    """
    b, h, w, cin = a.shape
    oh, ow = h // 2, w // 2
    cout = w_mat.shape[-1]

    # Zero-pad H (leading axis) and W (second-minor axis) by one on each side.
    # The bottom row / right column are never selected; they only keep the
    # kh=2 slice and the column-pair reshape below in range / even-sized.
    zr = jnp.zeros((b, 1, w, cin), jnp.float32)
    ap = jnp.concatenate([zr, a, zr], axis=1)                  # (B, H+2, W, Cin)
    zc = jnp.zeros((b, h + 2, 1, cin), jnp.float32)
    ap = jnp.concatenate([zc, ap, zc], axis=2)                 # (B, H+2, W+2, Cin)
    # Split padded columns into (pair j, parity p): padded col q = 2*j + p.
    ap = ap.reshape(b, h + 2, ow + 1, 2, cin)

    patches = []
    for kh in range(3):
        # Stride-2 row selection (padded row = 2*oh + kh): leading-dim reshape
        # + static index -> layout no-op.
        rows = ap[:, kh:kh + 2 * oh]                           # (B,2*OH,OW+1,2,Cin)
        rows = rows.reshape(b, oh, 2, ow + 1, 2, cin)[:, :, 0]  # (B,OH,OW+1,2,Cin)
        patches.append(rows[:, :, :ow, 0])   # kw=0 -> padded col 2*ow
        patches.append(rows[:, :, :ow, 1])   # kw=1 -> padded col 2*ow + 1
        patches.append(rows[:, :, 1:, 0])    # kw=2 -> padded col 2*ow + 2

    # im2col tile and the single per-block matmul:
    #   M = B*OH*OW, K = 9*Cin (144/288/576), N = Cout.
    col = jnp.concatenate(patches, axis=-1)                    # (B,OH,OW,9*Cin)
    col = col.reshape(b * oh * ow, 9 * cin)
    y = jnp.dot(col.astype(w_mat.dtype), w_mat,
                preferred_element_type=jnp.float32)            # (M, Cout) f32
    y = _post_conv(y, bias, gamma, beta)
    return y.reshape(b, oh, ow, cout)


def _discriminator_kernel(xcol_ref,
                          w1_ref, b1_ref, g1_ref, e1_ref,
                          w2_ref, b2_ref, g2_ref, e2_ref,
                          w3_ref, b3_ref, g3_ref, e3_ref,
                          w4_ref, b4_ref, g4_ref, e4_ref,
                          wfc_ref, bfc_ref, o_ref):
    batch = o_ref.shape[0]

    # ---- block 1: wrapper-built im2col (B*16*16, 9) @ (9, 16) ---- #
    w1 = w1_ref[...]
    y = jnp.dot(xcol_ref[...].astype(w1.dtype), w1,
                preferred_element_type=jnp.float32)
    y = _post_conv(y, b1_ref[...], g1_ref[...], e1_ref[...])
    s1 = int(round((xcol_ref.shape[0] // batch) ** 0.5))       # 16 for 32x32 input
    a = y.reshape(batch, s1, s1, w1.shape[-1])

    # ---- blocks 2-4 (all activations stay in VMEM/vregs) ---- #
    a = _conv_block(a, w2_ref[...], b2_ref[...], g2_ref[...], e2_ref[...])
    a = _conv_block(a, w3_ref[...], b3_ref[...], g3_ref[...], e3_ref[...])
    a = _conv_block(a, w4_ref[...], b4_ref[...], g4_ref[...], e4_ref[...])

    # ---- NCHW flatten + Linear(512, 1) + Sigmoid ---- #
    # The NCHW flatten permutation is folded into wfc (indexed (oh, ow, c)),
    # so the FC layer is an elementwise product + full reduction per image.
    prod = a * wfc_ref[...]                                    # (B, 2, 2, 128)
    out = jnp.sum(jnp.sum(jnp.sum(prod, axis=3, keepdims=True),
                          axis=2, keepdims=True), axis=1, keepdims=True)
    out = out.reshape(batch, 1) + bfc_ref[...]
    o_ref[...] = 1.0 / (1.0 + jnp.exp(-out))                   # Sigmoid


# ------------------------------- JAX wrapper -------------------------------- #

def _layer1_im2col(x):
    """Layer-1 im2col (pure gather / layout plumbing on the raw input image).

    x: (B, 1, H, W) NCHW f32 -> (B*(H//2)*(W//2), 9), tap order kh*3 + kw.
    Built wrapper-side so the kernel never touches a Cin=1 (1/128-lane-dense)
    layout; in-kernel, layer 1 is a single dense K=9 matmul.
    """
    b, _, h, w = x.shape
    oh, ow = h // 2, w // 2
    xp = jnp.pad(x[:, 0], ((0, 0), (1, 1), (1, 1)))
    taps = [xp[:, kh:kh + 2 * oh:2, kw:kw + 2 * ow:2]
            for kh in range(3) for kw in range(3)]
    return jnp.stack(taps, axis=-1).reshape(b * oh * ow, 9)


@jax.jit
def discriminator_forward(params, x):
    """x: (B, 1, 32, 32) NCHW float32 -> (B, 1) probabilities."""
    b = x.shape[0]
    args = [_layer1_im2col(x)]
    for idx in range(1, 5):
        cw = params[f"conv{idx}_w"]                     # (Cout, Cin, 3, 3)
        cout, cin = cw.shape[0], cw.shape[1]
        # (kh, kw, cin, cout) -> (9*cin, cout): matches the in-kernel im2col order.
        w_mat = cw.transpose(2, 3, 1, 0).reshape(9 * cin, cout).astype(MXU_DTYPE)
        args += [w_mat,
                 params[f"conv{idx}_b"].reshape(1, cout),
                 params[f"bn{idx}_gamma"].reshape(1, cout),
                 params[f"bn{idx}_beta"].reshape(1, cout)]
    # Fold the PyTorch NCHW flatten into the FC weight:
    # column j = c*4 + oh*2 + ow of fc_w becomes wfc[0, oh, ow, c].
    wfc = params["fc_w"].reshape(128, 2, 2).transpose(1, 2, 0)[None]  # (1,2,2,128)
    args += [wfc, params["fc_b"].reshape(1, 1)]

    # Weights (~0.2 MB bf16) + activations for B=2 are trivially VMEM resident,
    # so a single gridless pallas_call is used.
    # TODO(synk): for large batches (or v7x's idle second TensorCore), add a
    # "parallel" batch grid with a two-pass (sum / sum-of-squares) BatchNorm
    # reduction and size tiles for v7x's 64 MiB VMEM.
    return pl.pallas_call(
        _discriminator_kernel,
        out_shape=jax.ShapeDtypeStruct((b, 1), jnp.float32),
        in_specs=[pl.BlockSpec(memory_space=pltpu.MemorySpace.VMEM)] * len(args),
        out_specs=pl.BlockSpec(memory_space=pltpu.MemorySpace.VMEM),
    )(*args)


# ---------------------------- Parameters / model ---------------------------- #

def init_params(key):
    params = {}
    keys = jax.random.split(key, 5)
    chans = [(1, 16), (16, 32), (32, 64), (64, 128)]
    for idx, (ci, co) in enumerate(chans, start=1):
        fan_in = ci * 9
        bound = 1.0 / float(fan_in) ** 0.5
        wk, bk = jax.random.split(keys[idx - 1])
        params[f"conv{idx}_w"] = jax.random.uniform(
            wk, (co, ci, 3, 3), jnp.float32, -bound, bound)
        params[f"conv{idx}_b"] = jax.random.uniform(
            bk, (co,), jnp.float32, -bound, bound)
        params[f"bn{idx}_gamma"] = jnp.ones((co,), jnp.float32)  # PyTorch BN init
        params[f"bn{idx}_beta"] = jnp.zeros((co,), jnp.float32)
    bound = 1.0 / 512.0 ** 0.5
    wk, bk = jax.random.split(keys[4])
    params["fc_w"] = jax.random.uniform(wk, (1, 512), jnp.float32, -bound, bound)
    params["fc_b"] = jax.random.uniform(bk, (1,), jnp.float32, -bound, bound)
    return params


# ----------------------------------- main ------------------------------------ #

if __name__ == "__main__":
    key = jax.random.PRNGKey(0)
    pkey, xkey = jax.random.split(key)
    params = init_params(pkey)
    # Input must be 32x32 so that 128 * 2 * 2 == 512 (Linear in_features).
    x = jax.random.normal(xkey, (2, 1, 32, 32), dtype=jnp.float32)
    out = jax.block_until_ready(discriminator_forward(params, x))
    assert out.shape == (2, 1) and out.dtype == jnp.float32
    assert bool(jnp.all(jnp.isfinite(out)))
    assert bool(jnp.all((out >= 0.0) & (out <= 1.0)))
    print("KERNEL_OK")
</pallas_src>

<mosaic_0001>
module attributes {stable_mosaic.version = 11 : i64} {
  func.func @_discriminator_kernel(%arg0: memref<512x9xf32, #tpu.memory_space<vmem>>, %arg1: memref<9x16xbf16, #tpu.memory_space<vmem>>, %arg2: memref<1x16xf32, #tpu.memory_space<vmem>>, %arg3: memref<1x16xf32, #tpu.memory_space<vmem>>, %arg4: memref<1x16xf32, #tpu.memory_space<vmem>>, %arg5: memref<144x32xbf16, #tpu.memory_space<vmem>>, %arg6: memref<1x32xf32, #tpu.memory_space<vmem>>, %arg7: memref<1x32xf32, #tpu.memory_space<vmem>>, %arg8: memref<1x32xf32, #tpu.memory_space<vmem>>, %arg9: memref<288x64xbf16, #tpu.memory_space<vmem>>, %arg10: memref<1x64xf32, #tpu.memory_space<vmem>>, %arg11: memref<1x64xf32, #tpu.memory_space<vmem>>, %arg12: memref<1x64xf32, #tpu.memory_space<vmem>>, %arg13: memref<576x128xbf16, #tpu.memory_space<vmem>>, %arg14: memref<1x128xf32, #tpu.memory_space<vmem>>, %arg15: memref<1x128xf32, #tpu.memory_space<vmem>>, %arg16: memref<1x128xf32, #tpu.memory_space<vmem>>, %arg17: memref<1x2x2x128xf32, #tpu.memory_space<vmem>>, %arg18: memref<1x1xf32, #tpu.memory_space<vmem>>, %arg19: memref<2x1xf32, #tpu.memory_space<vmem>>) attributes {dimension_semantics = [], scalar_prefetch = 0 : i64, scratch_operands = 0 : i64, tpu.core_type = #tpu.core_type<tc>} {
    %c0 = arith.constant 0 : index
    %c0_0 = arith.constant 0 : index
    %0 = vector.load %arg1[%c0, %c0_0] : memref<9x16xbf16, #tpu.memory_space<vmem>>, vector<9x16xbf16>
    %c0_1 = arith.constant 0 : index
    %c0_2 = arith.constant 0 : index
    %1 = vector.load %arg0[%c0_1, %c0_2] : memref<512x9xf32, #tpu.memory_space<vmem>>, vector<512x9xf32>
    %2 = arith.truncf %1 : vector<512x9xf32> to vector<512x9xbf16>
    %cst = arith.constant dense<0.000000e+00> : vector<512x16xf32>
    %3 = tpu.matmul %2, %0, %cst {dimension_numbers = #tpu.dot_dimension_numbers<[1], [0], [0], [1], [0, 0, 1, 1], [], []>} : vector<512x9xbf16>, vector<9x16xbf16>, vector<512x16xf32> -> vector<512x16xf32>
    %c0_3 = arith.constant 0 : index
    %c0_4 = arith.constant 0 : index
    %4 = vector.load %arg2[%c0_3, %c0_4] : memref<1x16xf32, #tpu.memory_space<vmem>>, vector<1x16xf32>
    %c0_5 = arith.constant 0 : index
    %c0_6 = arith.constant 0 : index
    %5 = vector.load %arg3[%c0_5, %c0_6] : memref<1x16xf32, #tpu.memory_space<vmem>>, vector<1x16xf32>
    %c0_7 = arith.constant 0 : index
    %c0_8 = arith.constant 0 : index
    %6 = vector.load %arg4[%c0_7, %c0_8] : memref<1x16xf32, #tpu.memory_space<vmem>>, vector<1x16xf32>
    %7 = vector.broadcast %4 : vector<1x16xf32> to vector<512x16xf32>
    %8 = arith.addf %3, %7 : vector<512x16xf32>
    %cst_9 = arith.constant 0.000000e+00 : f32
    %9 = vector.broadcast %cst_9 : f32 to vector<512x16xf32>
    %10 = arith.cmpf oge, %8, %9 : vector<512x16xf32>
    %cst_10 = arith.constant 2.000000e-01 : f32
    %11 = vector.broadcast %cst_10 : f32 to vector<512x16xf32>
    %12 = arith.mulf %11, %8 : vector<512x16xf32>
    %13 = arith.select %10, %8, %12 : vector<512x16xi1>, vector<512x16xf32>
    %cst_11 = arith.constant dense<0.000000e+00> : vector<16xf32>
    %14 = vector.multi_reduction <add>, %13, %cst_11 [0] : vector<512x16xf32> to vector<16xf32>
    %15 = vector.shape_cast %14 : vector<16xf32> to vector<1x16xf32>
    %cst_12 = arith.constant 0.001953125 : f32
    %16 = vector.broadcast %cst_12 : f32 to vector<1x16xf32>
    %17 = arith.mulf %15, %16 : vector<1x16xf32>
    %18 = vector.broadcast %17 : vector<1x16xf32> to vector<512x16xf32>
    %19 = arith.subf %13, %18 : vector<512x16xf32>
    %20 = arith.mulf %19, %19 : vector<512x16xf32>
    %cst_13 = arith.constant dense<0.000000e+00> : vector<16xf32>
    %21 = vector.multi_reduction <add>, %20, %cst_13 [0] : vector<512x16xf32> to vector<16xf32>
    %22 = vector.shape_cast %21 : vector<16xf32> to vector<1x16xf32>
    %cst_14 = arith.constant 0.001953125 : f32
    %23 = vector.broadcast %cst_14 : f32 to vector<1x16xf32>
    %24 = arith.mulf %22, %23 : vector<1x16xf32>
    %cst_15 = arith.constant 8.000000e-01 : f32
    %25 = vector.broadcast %cst_15 : f32 to vector<1x16xf32>
    %26 = arith.addf %24, %25 : vector<1x16xf32>
    %27 = math.rsqrt %26 : vector<1x16xf32>
    %28 = vector.broadcast %27 : vector<1x16xf32> to vector<512x16xf32>
    %29 = arith.mulf %19, %28 : vector<512x16xf32>
    %30 = vector.broadcast %5 : vector<1x16xf32> to vector<512x16xf32>
    %31 = arith.mulf %29, %30 : vector<512x16xf32>
    %32 = vector.broadcast %6 : vector<1x16xf32> to vector<512x16xf32>
    %33 = arith.addf %31, %32 : vector<512x16xf32>
    %34 = vector.shape_cast %33 : vector<512x16xf32> to vector<2x16x16x16xf32>
    %c0_16 = arith.constant 0 : index
    %c0_17 = arith.constant 0 : index
    %35 = vector.load %arg5[%c0_16, %c0_17] : memref<144x32xbf16, #tpu.memory_space<vmem>>, vector<144x32xbf16>
    %c0_18 = arith.constant 0 : index
    %c0_19 = arith.constant 0 : index
    %36 = vector.load %arg6[%c0_18, %c0_19] : memref<1x32xf32, #tpu.memory_space<vmem>>, vector<1x32xf32>
    %c0_20 = arith.constant 0 : index
    %c0_21 = arith.constant 0 : index
    %37 = vector.load %arg7[%c0_20, %c0_21] : memref<1x32xf32, #tpu.memory_space<vmem>>, vector<1x32xf32>
    %c0_22 = arith.constant 0 : index
    %c0_23 = arith.constant 0 : index
    %38 = vector.load %arg8[%c0_22, %c0_23] : memref<1x32xf32, #tpu.memory_space<vmem>>, vector<1x32xf32>
    %cst_24 = arith.constant 0.000000e+00 : f32
    %39 = vector.broadcast %cst_24 : f32 to vector<2x1x16x16xf32>
    %40 = tpu.concatenate %39, %34, %39 in 1 : vector<2x1x16x16xf32>, vector<2x16x16x16xf32>, vector<2x1x16x16xf32> -> vector<2x18x16x16xf32>
    %cst_25 = arith.constant 0.000000e+00 : f32
    %41 = vector.broadcast %cst_25 : f32 to vector<2x18x1x16xf32>
    %42 = tpu.concatenate %41, %40, %41 in 2 : vector<2x18x1x16xf32>, vector<2x18x16x16xf32>, vector<2x18x1x16xf32> -> vector<2x18x18x16xf32>
    %43 = vector.shape_cast %42 : vector<2x18x18x16xf32> to vector<2x18x9x2x16xf32>
    %44 = vector.extract_strided_slice %43 {offsets = [0, 0, 0, 0, 0], sizes = [2, 16, 9, 2, 16], strides = [1, 1, 1, 1, 1]} : vector<2x18x9x2x16xf32> to vector<2x16x9x2x16xf32>
    %45 = vector.shape_cast %44 : vector<2x16x9x2x16xf32> to vector<2x8x2x9x2x16xf32>
    %46 = vector.extract_strided_slice %45 {offsets = [0, 0, 0, 0, 0, 0], sizes = [2, 8, 1, 9, 2, 16], strides = [1, 1, 1, 1, 1, 1]} : vector<2x8x2x9x2x16xf32> to vector<2x8x1x9x2x16xf32>
    %47 = vector.shape_cast %46 : vector<2x8x1x9x2x16xf32> to vector<2x8x9x2x16xf32>
    %48 = vector.extract_strided_slice %47 {offsets = [0, 0, 0, 0, 0], sizes = [2, 8, 8, 1, 16], strides = [1, 1, 1, 1, 1]} : vector<2x8x9x2x16xf32> to vector<2x8x8x1x16xf32>
    %49 = vector.shape_cast %48 : vector<2x8x8x1x16xf32> to vector<2x8x8x16xf32>
    %50 = vector.extract_strided_slice %47 {offsets = [0, 0, 0, 1, 0], sizes = [2, 8, 8, 1, 16], strides = [1, 1, 1, 1, 1]} : vector<2x8x9x2x16xf32> to vector<2x8x8x1x16xf32>
    %51 = vector.shape_cast %50 : vector<2x8x8x1x16xf32> to vector<2x8x8x16xf32>
    %52 = vector.extract_strided_slice %47 {offsets = [0, 0, 1, 0, 0], sizes = [2, 8, 8, 1, 16], strides = [1, 1, 1, 1, 1]} : vector<2x8x9x2x16xf32> to vector<2x8x8x1x16xf32>
    %53 = vector.shape_cast %52 : vector<2x8x8x1x16xf32> to vector<2x8x8x16xf32>
    %54 = vector.extract_strided_slice %43 {offsets = [0, 1, 0, 0, 0], sizes = [2, 16, 9, 2, 16], strides = [1, 1, 1, 1, 1]} : vector<2x18x9x2x16xf32> to vector<2x16x9x2x16xf32>
    %55 = vector.shape_cast %54 : vector<2x16x9x2x16xf32> to vector<2x8x2x9x2x16xf32>
    %56 = vector.extract_strided_slice %55 {offsets = [0, 0, 0, 0, 0, 0], sizes = [2, 8, 1, 9, 2, 16], strides = [1, 1, 1, 1, 1, 1]} : vector<2x8x2x9x2x16xf32> to vector<2x8x1x9x2x16xf32>
    %57 = vector.shape_cast %56 : vector<2x8x1x9x2x16xf32> to vector<2x8x9x2x16xf32>
    %58 = vector.extract_strided_slice %57 {offsets = [0, 0, 0, 0, 0], sizes = [2, 8, 8, 1, 16], strides = [1, 1, 1, 1, 1]} : vector<2x8x9x2x16xf32> to vector<2x8x8x1x16xf32>
    %59 = vector.shape_cast %58 : vector<2x8x8x1x16xf32> to vector<2x8x8x16xf32>
    %60 = vector.extract_strided_slice %57 {offsets = [0, 0, 0, 1, 0], sizes = [2, 8, 8, 1, 16], strides = [1, 1, 1, 1, 1]} : vector<2x8x9x2x16xf32> to vector<2x8x8x1x16xf32>
    %61 = vector.shape_cast %60 : vector<2x8x8x1x16xf32> to vector<2x8x8x16xf32>
    %62 = vector.extract_strided_slice %57 {offsets = [0, 0, 1, 0, 0], sizes = [2, 8, 8, 1, 16], strides = [1, 1, 1, 1, 1]} : vector<2x8x9x2x16xf32> to vector<2x8x8x1x16xf32>
    %63 = vector.shape_cast %62 : vector<2x8x8x1x16xf32> to vector<2x8x8x16xf32>
    %64 = vector.extract_strided_slice %43 {offsets = [0, 2, 0, 0, 0], sizes = [2, 16, 9, 2, 16], strides = [1, 1, 1, 1, 1]} : vector<2x18x9x2x16xf32> to vector<2x16x9x2x16xf32>
    %65 = vector.shape_cast %64 : vector<2x16x9x2x16xf32> to vector<2x8x2x9x2x16xf32>
    %66 = vector.extract_strided_slice %65 {offsets = [0, 0, 0, 0, 0, 0], sizes = [2, 8, 1, 9, 2, 16], strides = [1, 1, 1, 1, 1, 1]} : vector<2x8x2x9x2x16xf32> to vector<2x8x1x9x2x16xf32>
    %67 = vector.shape_cast %66 : vector<2x8x1x9x2x16xf32> to vector<2x8x9x2x16xf32>
    %68 = vector.extract_strided_slice %67 {offsets = [0, 0, 0, 0, 0], sizes = [2, 8, 8, 1, 16], strides = [1, 1, 1, 1, 1]} : vector<2x8x9x2x16xf32> to vector<2x8x8x1x16xf32>
    %69 = vector.shape_cast %68 : vector<2x8x8x1x16xf32> to vector<2x8x8x16xf32>
    %70 = vector.extract_strided_slice %67 {offsets = [0, 0, 0, 1, 0], sizes = [2, 8, 8, 1, 16], strides = [1, 1, 1, 1, 1]} : vector<2x8x9x2x16xf32> to vector<2x8x8x1x16xf32>
    %71 = vector.shape_cast %70 : vector<2x8x8x1x16xf32> to vector<2x8x8x16xf32>
    %72 = vector.extract_strided_slice %67 {offsets = [0, 0, 1, 0, 0], sizes = [2, 8, 8, 1, 16], strides = [1, 1, 1, 1, 1]} : vector<2x8x9x2x16xf32> to vector<2x8x8x1x16xf32>
    %73 = vector.shape_cast %72 : vector<2x8x8x1x16xf32> to vector<2x8x8x16xf32>
    %74 = tpu.concatenate %49, %51, %53, %59, %61, %63, %69, %71, %73 in 3 : vector<2x8x8x16xf32>, vector<2x8x8x16xf32>, vector<2x8x8x16xf32>, vector<2x8x8x16xf32>, vector<2x8x8x16xf32>, vector<2x8x8x16xf32>, vector<2x8x8x16xf32>, vector<2x8x8x16xf32>, vector<2x8x8x16xf32> -> vector<2x8x8x144xf32>
    %75 = vector.shape_cast %74 : vector<2x8x8x144xf32> to vector<128x144xf32>
    %76 = arith.truncf %75 : vector<128x144xf32> to vector<128x144xbf16>
    %cst_26 = arith.constant dense<0.000000e+00> : vector<128x32xf32>
    %77 = tpu.matmul %76, %35, %cst_26 {dimension_numbers = #tpu.dot_dimension_numbers<[1], [0], [0], [1], [0, 0, 1, 1], [], []>} : vector<128x144xbf16>, vector<144x32xbf16>, vector<128x32xf32> -> vector<128x32xf32>
    %78 = vector.broadcast %36 : vector<1x32xf32> to vector<128x32xf32>
    %79 = arith.addf %77, %78 : vector<128x32xf32>
    %cst_27 = arith.constant 0.000000e+00 : f32
    %80 = vector.broadcast %cst_27 : f32 to vector<128x32xf32>
    %81 = arith.cmpf oge, %79, %80 : vector<128x32xf32>
    %cst_28 = arith.constant 2.000000e-01 : f32
    %82 = vector.broadcast %cst_28 : f32 to vector<128x32xf32>
    %83 = arith.mulf %82, %79 : vector<128x32xf32>
    %84 = arith.select %81, %79, %83 : vector<128x32xi1>, vector<128x32xf32>
    %cst_29 = arith.constant dense<0.000000e+00> : vector<32xf32>
    %85 = vector.multi_reduction <add>, %84, %cst_29 [0] : vector<128x32xf32> to vector<32xf32>
    %86 = vector.shape_cast %85 : vector<32xf32> to vector<1x32xf32>
    %cst_30 = arith.constant 7.812500e-03 : f32
    %87 = vector.broadcast %cst_30 : f32 to vector<1x32xf32>
    %88 = arith.mulf %86, %87 : vector<1x32xf32>
    %89 = vector.broadcast %88 : vector<1x32xf32> to vector<128x32xf32>
    %90 = arith.subf %84, %89 : vector<128x32xf32>
    %91 = arith.mulf %90, %90 : vector<128x32xf32>
    %cst_31 = arith.constant dense<0.000000e+00> : vector<32xf32>
    %92 = vector.multi_reduction <add>, %91, %cst_31 [0] : vector<128x32xf32> to vector<32xf32>
    %93 = vector.shape_cast %92 : vector<32xf32> to vector<1x32xf32>
    %cst_32 = arith.constant 7.812500e-03 : f32
    %94 = vector.broadcast %cst_32 : f32 to vector<1x32xf32>
    %95 = arith.mulf %93, %94 : vector<1x32xf32>
    %cst_33 = arith.constant 8.000000e-01 : f32
    %96 = vector.broadcast %cst_33 : f32 to vector<1x32xf32>
    %97 = arith.addf %95, %96 : vector<1x32xf32>
    %98 = math.rsqrt %97 : vector<1x32xf32>
    %99 = vector.broadcast %98 : vector<1x32xf32> to vector<128x32xf32>
    %100 = arith.mulf %90, %99 : vector<128x32xf32>
    %101 = vector.broadcast %37 : vector<1x32xf32> to vector<128x32xf32>
    %102 = arith.mulf %100, %101 : vector<128x32xf32>
    %103 = vector.broadcast %38 : vector<1x32xf32> to vector<128x32xf32>
    %104 = arith.addf %102, %103 : vector<128x32xf32>
    %105 = vector.shape_cast %104 : vector<128x32xf32> to vector<2x8x8x32xf32>
    %c0_34 = arith.constant 0 : index
    %c0_35 = arith.constant 0 : index
    %106 = vector.load %arg9[%c0_34, %c0_35] : memref<288x64xbf16, #tpu.memory_space<vmem>>, vector<288x64xbf16>
    %c0_36 = arith.constant 0 : index
    %c0_37 = arith.constant 0 : index
    %107 = vector.load %arg10[%c0_36, %c0_37] : memref<1x64xf32, #tpu.memory_space<vmem>>, vector<1x64xf32>
    %c0_38 = arith.constant 0 : index
    %c0_39 = arith.constant 0 : index
    %108 = vector.load %arg11[%c0_38, %c0_39] : memref<1x64xf32, #tpu.memory_space<vmem>>, vector<1x64xf32>
    %c0_40 = arith.constant 0 : index
    %c0_41 = arith.constant 0 : index
    %109 = vector.load %arg12[%c0_40, %c0_41] : memref<1x64xf32, #tpu.memory_space<vmem>>, vector<1x64xf32>
    %cst_42 = arith.constant 0.000000e+00 : f32
    %110 = vector.broadcast %cst_42 : f32 to vector<2x1x8x32xf32>
    %111 = tpu.concatenate %110, %105, %110 in 1 : vector<2x1x8x32xf32>, vector<2x8x8x32xf32>, vector<2x1x8x32xf32> -> vector<2x10x8x32xf32>
    %cst_43 = arith.constant 0.000000e+00 : f32
    %112 = vector.broadcast %cst_43 : f32 to vector<2x10x1x32xf32>
    %113 = tpu.concatenate %112, %111, %112 in 2 : vector<2x10x1x32xf32>, vector<2x10x8x32xf32>, vector<2x10x1x32xf32> -> vector<2x10x10x32xf32>
    %114 = vector.shape_cast %113 : vector<2x10x10x32xf32> to vector<2x10x5x2x32xf32>
    %115 = vector.extract_strided_slice %114 {offsets = [0, 0, 0, 0, 0], sizes = [2, 8, 5, 2, 32], strides = [1, 1, 1, 1, 1]} : vector<2x10x5x2x32xf32> to vector<2x8x5x2x32xf32>
    %116 = vector.shape_cast %115 : vector<2x8x5x2x32xf32> to vector<2x4x2x5x2x32xf32>
    %117 = vector.extract_strided_slice %116 {offsets = [0, 0, 0, 0, 0, 0], sizes = [2, 4, 1, 5, 2, 32], strides = [1, 1, 1, 1, 1, 1]} : vector<2x4x2x5x2x32xf32> to vector<2x4x1x5x2x32xf32>
    %118 = vector.shape_cast %117 : vector<2x4x1x5x2x32xf32> to vector<2x4x5x2x32xf32>
    %119 = vector.extract_strided_slice %118 {offsets = [0, 0, 0, 0, 0], sizes = [2, 4, 4, 1, 32], strides = [1, 1, 1, 1, 1]} : vector<2x4x5x2x32xf32> to vector<2x4x4x1x32xf32>
    %120 = vector.shape_cast %119 : vector<2x4x4x1x32xf32> to vector<2x4x4x32xf32>
    %121 = vector.extract_strided_slice %118 {offsets = [0, 0, 0, 1, 0], sizes = [2, 4, 4, 1, 32], strides = [1, 1, 1, 1, 1]} : vector<2x4x5x2x32xf32> to vector<2x4x4x1x32xf32>
    %122 = vector.shape_cast %121 : vector<2x4x4x1x32xf32> to vector<2x4x4x32xf32>
    %123 = vector.extract_strided_slice %118 {offsets = [0, 0, 1, 0, 0], sizes = [2, 4, 4, 1, 32], strides = [1, 1, 1, 1, 1]} : vector<2x4x5x2x32xf32> to vector<2x4x4x1x32xf32>
    %124 = vector.shape_cast %123 : vector<2x4x4x1x32xf32> to vector<2x4x4x32xf32>
    %125 = vector.extract_strided_slice %114 {offsets = [0, 1, 0, 0, 0], sizes = [2, 8, 5, 2, 32], strides = [1, 1, 1, 1, 1]} : vector<2x10x5x2x32xf32> to vector<2x8x5x2x32xf32>
    %126 = vector.shape_cast %125 : vector<2x8x5x2x32xf32> to vector<2x4x2x5x2x32xf32>
    %127 = vector.extract_strided_slice %126 {offsets = [0, 0, 0, 0, 0, 0], sizes = [2, 4, 1, 5, 2, 32], strides = [1, 1, 1, 1, 1, 1]} : vector<2x4x2x5x2x32xf32> to vector<2x4x1x5x2x32xf32>
    %128 = vector.shape_cast %127 : vector<2x4x1x5x2x32xf32> to vector<2x4x5x2x32xf32>
    %129 = vector.extract_strided_slice %128 {offsets = [0, 0, 0, 0, 0], sizes = [2, 4, 4, 1, 32], strides = [1, 1, 1, 1, 1]} : vector<2x4x5x2x32xf32> to vector<2x4x4x1x32xf32>
    %130 = vector.shape_cast %129 : vector<2x4x4x1x32xf32> to vector<2x4x4x32xf32>
    %131 = vector.extract_strided_slice %128 {offsets = [0, 0, 0, 1, 0], sizes = [2, 4, 4, 1, 32], strides = [1, 1, 1, 1, 1]} : vector<2x4x5x2x32xf32> to vector<2x4x4x1x32xf32>
    %132 = vector.shape_cast %131 : vector<2x4x4x1x32xf32> to vector<2x4x4x32xf32>
    %133 = vector.extract_strided_slice %128 {offsets = [0, 0, 1, 0, 0], sizes = [2, 4, 4, 1, 32], strides = [1, 1, 1, 1, 1]} : vector<2x4x5x2x32xf32> to vector<2x4x4x1x32xf32>
    %134 = vector.shape_cast %133 : vector<2x4x4x1x32xf32> to vector<2x4x4x32xf32>
    %135 = vector.extract_strided_slice %114 {offsets = [0, 2, 0, 0, 0], sizes = [2, 8, 5, 2, 32], strides = [1, 1, 1, 1, 1]} : vector<2x10x5x2x32xf32> to vector<2x8x5x2x32xf32>
    %136 = vector.shape_cast %135 : vector<2x8x5x2x32xf32> to vector<2x4x2x5x2x32xf32>
    %137 = vector.extract_strided_slice %136 {offsets = [0, 0, 0, 0, 0, 0], sizes = [2, 4, 1, 5, 2, 32], strides = [1, 1, 1, 1, 1, 1]} : vector<2x4x2x5x2x32xf32> to vector<2x4x1x5x2x32xf32>
    %138 = vector.shape_cast %137 : vector<2x4x1x5x2x32xf32> to vector<2x4x5x2x32xf32>
    %139 = vector.extract_strided_slice %138 {offsets = [0, 0, 0, 0, 0], sizes = [2, 4, 4, 1, 32], strides = [1, 1, 1, 1, 1]} : vector<2x4x5x2x32xf32> to vector<2x4x4x1x32xf32>
    %140 = vector.shape_cast %139 : vector<2x4x4x1x32xf32> to vector<2x4x4x32xf32>
    %141 = vector.extract_strided_slice %138 {offsets = [0, 0, 0, 1, 0], sizes = [2, 4, 4, 1, 32], strides = [1, 1, 1, 1, 1]} : vector<2x4x5x2x32xf32> to vector<2x4x4x1x32xf32>
    %142 = vector.shape_cast %141 : vector<2x4x4x1x32xf32> to vector<2x4x4x32xf32>
    %143 = vector.extract_strided_slice %138 {offsets = [0, 0, 1, 0, 0], sizes = [2, 4, 4, 1, 32], strides = [1, 1, 1, 1, 1]} : vector<2x4x5x2x32xf32> to vector<2x4x4x1x32xf32>
    %144 = vector.shape_cast %143 : vector<2x4x4x1x32xf32> to vector<2x4x4x32xf32>
    %145 = tpu.concatenate %120, %122, %124, %130, %132, %134, %140, %142, %144 in 3 : vector<2x4x4x32xf32>, vector<2x4x4x32xf32>, vector<2x4x4x32xf32>, vector<2x4x4x32xf32>, vector<2x4x4x32xf32>, vector<2x4x4x32xf32>, vector<2x4x4x32xf32>, vector<2x4x4x32xf32>, vector<2x4x4x32xf32> -> vector<2x4x4x288xf32>
    %146 = vector.shape_cast %145 : vector<2x4x4x288xf32> to vector<32x288xf32>
    %147 = arith.truncf %146 : vector<32x288xf32> to vector<32x288xbf16>
    %cst_44 = arith.constant dense<0.000000e+00> : vector<32x64xf32>
    %148 = tpu.matmul %147, %106, %cst_44 {dimension_numbers = #tpu.dot_dimension_numbers<[1], [0], [0], [1], [0, 0, 1, 1], [], []>} : vector<32x288xbf16>, vector<288x64xbf16>, vector<32x64xf32> -> vector<32x64xf32>
    %149 = vector.broadcast %107 : vector<1x64xf32> to vector<32x64xf32>
    %150 = arith.addf %148, %149 : vector<32x64xf32>
    %cst_45 = arith.constant 0.000000e+00 : f32
    %151 = vector.broadcast %cst_45 : f32 to vector<32x64xf32>
    %152 = arith.cmpf oge, %150, %151 : vector<32x64xf32>
    %cst_46 = arith.constant 2.000000e-01 : f32
    %153 = vector.broadcast %cst_46 : f32 to vector<32x64xf32>
    %154 = arith.mulf %153, %150 : vector<32x64xf32>
    %155 = arith.select %152, %150, %154 : vector<32x64xi1>, vector<32x64xf32>
    %cst_47 = arith.constant dense<0.000000e+00> : vector<64xf32>
    %156 = vector.multi_reduction <add>, %155, %cst_47 [0] : vector<32x64xf32> to vector<64xf32>
    %157 = vector.shape_cast %156 : vector<64xf32> to vector<1x64xf32>
    %cst_48 = arith.constant 3.125000e-02 : f32
    %158 = vector.broadcast %cst_48 : f32 to vector<1x64xf32>
    %159 = arith.mulf %157, %158 : vector<1x64xf32>
    %160 = vector.broadcast %159 : vector<1x64xf32> to vector<32x64xf32>
    %161 = arith.subf %155, %160 : vector<32x64xf32>
    %162 = arith.mulf %161, %161 : vector<32x64xf32>
    %cst_49 = arith.constant dense<0.000000e+00> : vector<64xf32>
    %163 = vector.multi_reduction <add>, %162, %cst_49 [0] : vector<32x64xf32> to vector<64xf32>
    %164 = vector.shape_cast %163 : vector<64xf32> to vector<1x64xf32>
    %cst_50 = arith.constant 3.125000e-02 : f32
    %165 = vector.broadcast %cst_50 : f32 to vector<1x64xf32>
    %166 = arith.mulf %164, %165 : vector<1x64xf32>
    %cst_51 = arith.constant 8.000000e-01 : f32
    %167 = vector.broadcast %cst_51 : f32 to vector<1x64xf32>
    %168 = arith.addf %166, %167 : vector<1x64xf32>
    %169 = math.rsqrt %168 : vector<1x64xf32>
    %170 = vector.broadcast %169 : vector<1x64xf32> to vector<32x64xf32>
    %171 = arith.mulf %161, %170 : vector<32x64xf32>
    %172 = vector.broadcast %108 : vector<1x64xf32> to vector<32x64xf32>
    %173 = arith.mulf %171, %172 : vector<32x64xf32>
    %174 = vector.broadcast %109 : vector<1x64xf32> to vector<32x64xf32>
    %175 = arith.addf %173, %174 : vector<32x64xf32>
    %176 = vector.shape_cast %175 : vector<32x64xf32> to vector<2x4x4x64xf32>
    %c0_52 = arith.constant 0 : index
    %c0_53 = arith.constant 0 : index
    %177 = vector.load %arg13[%c0_52, %c0_53] : memref<576x128xbf16, #tpu.memory_space<vmem>>, vector<576x128xbf16>
    %c0_54 = arith.constant 0 : index
    %c0_55 = arith.constant 0 : index
    %178 = vector.load %arg14[%c0_54, %c0_55] : memref<1x128xf32, #tpu.memory_space<vmem>>, vector<1x128xf32>
    %c0_56 = arith.constant 0 : index
    %c0_57 = arith.constant 0 : index
    %179 = vector.load %arg15[%c0_56, %c0_57] : memref<1x128xf32, #tpu.memory_space<vmem>>, vector<1x128xf32>
    %c0_58 = arith.constant 0 : index
    %c0_59 = arith.constant 0 : index
    %180 = vector.load %arg16[%c0_58, %c0_59] : memref<1x128xf32, #tpu.memory_space<vmem>>, vector<1x128xf32>
    %cst_60 = arith.constant 0.000000e+00 : f32
    %181 = vector.broadcast %cst_60 : f32 to vector<2x1x4x64xf32>
    %182 = tpu.concatenate %181, %176, %181 in 1 : vector<2x1x4x64xf32>, vector<2x4x4x64xf32>, vector<2x1x4x64xf32> -> vector<2x6x4x64xf32>
    %cst_61 = arith.constant 0.000000e+00 : f32
    %183 = vector.broadcast %cst_61 : f32 to vector<2x6x1x64xf32>
    %184 = tpu.concatenate %183, %182, %183 in 2 : vector<2x6x1x64xf32>, vector<2x6x4x64xf32>, vector<2x6x1x64xf32> -> vector<2x6x6x64xf32>
    %185 = vector.shape_cast %184 : vector<2x6x6x64xf32> to vector<2x6x3x2x64xf32>
    %186 = vector.extract_strided_slice %185 {offsets = [0, 0, 0, 0, 0], sizes = [2, 4, 3, 2, 64], strides = [1, 1, 1, 1, 1]} : vector<2x6x3x2x64xf32> to vector<2x4x3x2x64xf32>
    %187 = vector.shape_cast %186 : vector<2x4x3x2x64xf32> to vector<2x2x2x3x2x64xf32>
    %188 = vector.extract_strided_slice %187 {offsets = [0, 0, 0, 0, 0, 0], sizes = [2, 2, 1, 3, 2, 64], strides = [1, 1, 1, 1, 1, 1]} : vector<2x2x2x3x2x64xf32> to vector<2x2x1x3x2x64xf32>
    %189 = vector.shape_cast %188 : vector<2x2x1x3x2x64xf32> to vector<2x2x3x2x64xf32>
    %190 = vector.extract_strided_slice %189 {offsets = [0, 0, 0, 0, 0], sizes = [2, 2, 2, 1, 64], strides = [1, 1, 1, 1, 1]} : vector<2x2x3x2x64xf32> to vector<2x2x2x1x64xf32>
    %191 = vector.shape_cast %190 : vector<2x2x2x1x64xf32> to vector<2x2x2x64xf32>
    %192 = vector.extract_strided_slice %189 {offsets = [0, 0, 0, 1, 0], sizes = [2, 2, 2, 1, 64], strides = [1, 1, 1, 1, 1]} : vector<2x2x3x2x64xf32> to vector<2x2x2x1x64xf32>
    %193 = vector.shape_cast %192 : vector<2x2x2x1x64xf32> to vector<2x2x2x64xf32>
    %194 = vector.extract_strided_slice %189 {offsets = [0, 0, 1, 0, 0], sizes = [2, 2, 2, 1, 64], strides = [1, 1, 1, 1, 1]} : vector<2x2x3x2x64xf32> to vector<2x2x2x1x64xf32>
    %195 = vector.shape_cast %194 : vector<2x2x2x1x64xf32> to vector<2x2x2x64xf32>
    %196 = vector.extract_strided_slice %185 {offsets = [0, 1, 0, 0, 0], sizes = [2, 4, 3, 2, 64], strides = [1, 1, 1, 1, 1]} : vector<2x6x3x2x64xf32> to vector<2x4x3x2x64xf32>
    %197 = vector.shape_cast %196 : vector<2x4x3x2x64xf32> to vector<2x2x2x3x2x64xf32>
    %198 = vector.extract_strided_slice %197 {offsets = [0, 0, 0, 0, 0, 0], sizes = [2, 2, 1, 3, 2, 64], strides = [1, 1, 1, 1, 1, 1]} : vector<2x2x2x3x2x64xf32> to vector<2x2x1x3x2x64xf32>
    %199 = vector.shape_cast %198 : vector<2x2x1x3x2x64xf32> to vector<2x2x3x2x64xf32>
    %200 = vector.extract_strided_slice %199 {offsets = [0, 0, 0, 0, 0], sizes = [2, 2, 2, 1, 64], strides = [1, 1, 1, 1, 1]} : vector<2x2x3x2x64xf32> to vector<2x2x2x1x64xf32>
    %201 = vector.shape_cast %200 : vector<2x2x2x1x64xf32> to vector<2x2x2x64xf32>
    %202 = vector.extract_strided_slice %199 {offsets = [0, 0, 0, 1, 0], sizes = [2, 2, 2, 1, 64], strides = [1, 1, 1, 1, 1]} : vector<2x2x3x2x64xf32> to vector<2x2x2x1x64xf32>
    %203 = vector.shape_cast %202 : vector<2x2x2x1x64xf32> to vector<2x2x2x64xf32>
    %204 = vector.extract_strided_slice %199 {offsets = [0, 0, 1, 0, 0], sizes = [2, 2, 2, 1, 64], strides = [1, 1, 1, 1, 1]} : vector<2x2x3x2x64xf32> to vector<2x2x2x1x64xf32>
    %205 = vector.shape_cast %204 : vector<2x2x2x1x64xf32> to vector<2x2x2x64xf32>
    %206 = vector.extract_strided_slice %185 {offsets = [0, 2, 0, 0, 0], sizes = [2, 4, 3, 2, 64], strides = [1, 1, 1, 1, 1]} : vector<2x6x3x2x64xf32> to vector<2x4x3x2x64xf32>
    %207 = vector.shape_cast %206 : vector<2x4x3x2x64xf32> to vector<2x2x2x3x2x64xf32>
    %208 = vector.extract_strided_slice %207 {offsets = [0, 0, 0, 0, 0, 0], sizes = [2, 2, 1, 3, 2, 64], strides = [1, 1, 1, 1, 1, 1]} : vector<2x2x2x3x2x64xf32> to vector<2x2x1x3x2x64xf32>
    %209 = vector.shape_cast %208 : vector<2x2x1x3x2x64xf32> to vector<2x2x3x2x64xf32>
    %210 = vector.extract_strided_slice %209 {offsets = [0, 0, 0, 0, 0], sizes = [2, 2, 2, 1, 64], strides = [1, 1, 1, 1, 1]} : vector<2x2x3x2x64xf32> to vector<2x2x2x1x64xf32>
    %211 = vector.shape_cast %210 : vector<2x2x2x1x64xf32> to vector<2x2x2x64xf32>
    %212 = vector.extract_strided_slice %209 {offsets = [0, 0, 0, 1, 0], sizes = [2, 2, 2, 1, 64], strides = [1, 1, 1, 1, 1]} : vector<2x2x3x2x64xf32> to vector<2x2x2x1x64xf32>
    %213 = vector.shape_cast %212 : vector<2x2x2x1x64xf32> to vector<2x2x2x64xf32>
    %214 = vector.extract_strided_slice %209 {offsets = [0, 0, 1, 0, 0], sizes = [2, 2, 2, 1, 64], strides = [1, 1, 1, 1, 1]} : vector<2x2x3x2x64xf32> to vector<2x2x2x1x64xf32>
    %215 = vector.shape_cast %214 : vector<2x2x2x1x64xf32> to vector<2x2x2x64xf32>
    %216 = tpu.concatenate %191, %193, %195, %201, %203, %205, %211, %213, %215 in 3 : vector<2x2x2x64xf32>, vector<2x2x2x64xf32>, vector<2x2x2x64xf32>, vector<2x2x2x64xf32>, vector<2x2x2x64xf32>, vector<2x2x2x64xf32>, vector<2x2x2x64xf32>, vector<2x2x2x64xf32>, vector<2x2x2x64xf32> -> vector<2x2x2x576xf32>
    %217 = vector.shape_cast %216 : vector<2x2x2x576xf32> to vector<8x576xf32>
    %218 = arith.truncf %217 : vector<8x576xf32> to vector<8x576xbf16>
    %cst_62 = arith.constant dense<0.000000e+00> : vector<8x128xf32>
    %219 = tpu.matmul %218, %177, %cst_62 {dimension_numbers = #tpu.dot_dimension_numbers<[1], [0], [0], [1], [0, 0, 1, 1], [], []>} : vector<8x576xbf16>, vector<576x128xbf16>, vector<8x128xf32> -> vector<8x128xf32>
    %220 = vector.broadcast %178 : vector<1x128xf32> to vector<8x128xf32>
    %221 = arith.addf %219, %220 : vector<8x128xf32>
    %cst_63 = arith.constant 0.000000e+00 : f32
    %222 = vector.broadcast %cst_63 : f32 to vector<8x128xf32>
    %223 = arith.cmpf oge, %221, %222 : vector<8x128xf32>
    %cst_64 = arith.constant 2.000000e-01 : f32
    %224 = vector.broadcast %cst_64 : f32 to vector<8x128xf32>
    %225 = arith.mulf %224, %221 : vector<8x128xf32>
    %226 = arith.select %223, %221, %225 : vector<8x128xi1>, vector<8x128xf32>
    %cst_65 = arith.constant dense<0.000000e+00> : vector<128xf32>
    %227 = vector.multi_reduction <add>, %226, %cst_65 [0] : vector<8x128xf32> to vector<128xf32>
    %228 = vector.shape_cast %227 : vector<128xf32> to vector<1x128xf32>
    %cst_66 = arith.constant 1.250000e-01 : f32
    %229 = vector.broadcast %cst_66 : f32 to vector<1x128xf32>
    %230 = arith.mulf %228, %229 : vector<1x128xf32>
    %231 = vector.broadcast %230 : vector<1x128xf32> to vector<8x128xf32>
    %232 = arith.subf %226, %231 : vector<8x128xf32>
    %233 = arith.mulf %232, %232 : vector<8x128xf32>
    %cst_67 = arith.constant dense<0.000000e+00> : vector<128xf32>
    %234 = vector.multi_reduction <add>, %233, %cst_67 [0] : vector<8x128xf32> to vector<128xf32>
    %235 = vector.shape_cast %234 : vector<128xf32> to vector<1x128xf32>
    %cst_68 = arith.constant 1.250000e-01 : f32
    %236 = vector.broadcast %cst_68 : f32 to vector<1x128xf32>
    %237 = arith.mulf %235, %236 : vector<1x128xf32>
    %cst_69 = arith.constant 8.000000e-01 : f32
    %238 = vector.broadcast %cst_69 : f32 to vector<1x128xf32>
    %239 = arith.addf %237, %238 : vector<1x128xf32>
    %240 = math.rsqrt %239 : vector<1x128xf32>
    %241 = vector.broadcast %240 : vector<1x128xf32> to vector<8x128xf32>
    %242 = arith.mulf %232, %241 : vector<8x128xf32>
    %243 = vector.broadcast %179 : vector<1x128xf32> to vector<8x128xf32>
    %244 = arith.mulf %242, %243 : vector<8x128xf32>
    %245 = vector.broadcast %180 : vector<1x128xf32> to vector<8x128xf32>
    %246 = arith.addf %244, %245 : vector<8x128xf32>
    %247 = vector.shape_cast %246 : vector<8x128xf32> to vector<2x2x2x128xf32>
    %c0_70 = arith.constant 0 : index
    %c0_71 = arith.constant 0 : index
    %c0_72 = arith.constant 0 : index
    %c0_73 = arith.constant 0 : index
    %248 = vector.load %arg17[%c0_70, %c0_71, %c0_72, %c0_73] : memref<1x2x2x128xf32, #tpu.memory_space<vmem>>, vector<1x2x2x128xf32>
    %249 = vector.broadcast %248 : vector<1x2x2x128xf32> to vector<2x2x2x128xf32>
    %250 = arith.mulf %247, %249 : vector<2x2x2x128xf32>
    %cst_74 = arith.constant dense<0.000000e+00> : vector<2x2x2xf32>
    %251 = vector.multi_reduction <add>, %250, %cst_74 [3] : vector<2x2x2x128xf32> to vector<2x2x2xf32>
    %252 = vector.shape_cast %251 : vector<2x2x2xf32> to vector<2x2x2x1xf32>
    %cst_75 = arith.constant dense<0.000000e+00> : vector<2x2x1xf32>
    %253 = vector.multi_reduction <add>, %252, %cst_75 [2] : vector<2x2x2x1xf32> to vector<2x2x1xf32>
    %254 = vector.shape_cast %253 : vector<2x2x1xf32> to vector<2x2x1x1xf32>
    %cst_76 = arith.constant dense<0.000000e+00> : vector<2x1x1xf32>
    %255 = vector.multi_reduction <add>, %254, %cst_76 [1] : vector<2x2x1x1xf32> to vector<2x1x1xf32>
    %256 = vector.shape_cast %255 : vector<2x1x1xf32> to vector<2x1x1x1xf32>
    %257 = vector.shape_cast %256 : vector<2x1x1x1xf32> to vector<2x1xf32>
    %c0_77 = arith.constant 0 : index
    %c0_78 = arith.constant 0 : index
    %258 = vector.load %arg18[%c0_77, %c0_78] : memref<1x1xf32, #tpu.memory_space<vmem>>, vector<1x1xf32>
    %259 = vector.broadcast %258 : vector<1x1xf32> to vector<2x1xf32>
    %260 = arith.addf %257, %259 : vector<2x1xf32>
    %cst_79 = arith.constant 0.000000e+00 : f32
    %261 = vector.broadcast %cst_79 : f32 to vector<2x1xf32>
    %262 = arith.subf %261, %260 : vector<2x1xf32>
    %263 = math.exp %262 : vector<2x1xf32>
    %cst_80 = arith.constant 1.000000e+00 : f32
    %264 = vector.broadcast %cst_80 : f32 to vector<2x1xf32>
    %265 = arith.addf %264, %263 : vector<2x1xf32>
    %cst_81 = arith.constant 1.000000e+00 : f32
    %266 = vector.broadcast %cst_81 : f32 to vector<2x1xf32>
    %267 = arith.divf %266, %265 : vector<2x1xf32>
    %c0_82 = arith.constant 0 : index
    %c0_83 = arith.constant 0 : index
    %268 = vector.load %arg19[%c0_82, %c0_83] : memref<2x1xf32, #tpu.memory_space<vmem>>, vector<2x1xf32>
    tpu.vector_store %arg19[%c0_82, %c0_83], %267 {strides = array<i32>} : memref<2x1xf32, #tpu.memory_space<vmem>>, vector<2x1xf32>,
    return
  }
}

</mosaic_0001>

<llo_original>
// kernel: discriminator_forward.1
$region0: #{discriminator_forward.1}
  #allocation0 [shape = 'u32[]', space=smem, size = 0x4, offset = 0x4, fixed_abs, tag = 'smem constant byte address 0x4 - core index']
  #allocation1 [shape = 'u32[144,128]{1,0:T(1,128)}', space=vmem, size = 0x12000, scoped, tag = 'internal scratch']
  #allocation2 [shape = 'f32[1,1]{1,0:T(1,128)S(1)}', space=vmem, size = 0x200, scoped, tag = 'scoped memory for discriminator_forward.1']
  %s0 = inlined_call_operand.vmem [shape: f32[512,9], index: 0, kind: input, shape index: {}]
  %s1 = inlined_call_operand.vmem [shape: bf16[9,16], index: 1, kind: input, shape index: {}]
  %s2 = inlined_call_operand.vmem [shape: f32[1,16], index: 2, kind: input, shape index: {}]
  %s3 = inlined_call_operand.vmem [shape: f32[1,16], index: 3, kind: input, shape index: {}]
  %s4 = inlined_call_operand.vmem [shape: f32[1,16], index: 4, kind: input, shape index: {}]
  %s5 = inlined_call_operand.vmem [shape: bf16[144,32], index: 5, kind: input, shape index: {}]
  %s6 = inlined_call_operand.vmem [shape: f32[1,32], index: 6, kind: input, shape index: {}]
  %s7 = inlined_call_operand.vmem [shape: f32[1,32], index: 7, kind: input, shape index: {}]
  %s8 = inlined_call_operand.vmem [shape: f32[1,32], index: 8, kind: input, shape index: {}]
  %s9 = inlined_call_operand.vmem [shape: bf16[288,64], index: 9, kind: input, shape index: {}]
  %s10 = inlined_call_operand.vmem [shape: f32[1,64], index: 10, kind: input, shape index: {}]
  %s11 = inlined_call_operand.vmem [shape: f32[1,64], index: 11, kind: input, shape index: {}]
  %s12 = inlined_call_operand.vmem [shape: f32[1,64], index: 12, kind: input, shape index: {}]
  %s13 = inlined_call_operand.vmem [shape: bf16[576,128], index: 13, kind: input, shape index: {}]
  %s14 = inlined_call_operand.vmem [shape: f32[1,128], index: 14, kind: input, shape index: {}]
  %s15 = inlined_call_operand.vmem [shape: f32[1,128], index: 15, kind: input, shape index: {}]
  %s16 = inlined_call_operand.vmem [shape: f32[1,128], index: 16, kind: input, shape index: {}]
  %s17 = inlined_call_operand.vmem [shape: f32[1,2,2,128], index: 17, kind: input, shape index: {}]
  %s18 = inlined_call_operand.<no memory space> [shape: f32[1,1], index: 18, kind: input, shape index: {}]
  %s19 = inlined_call_operand.vmem [shape: f32[2,1], index: 19, kind: output, shape index: {}]
  %s20 = sld [smem:[#allocation0]]
  $region86: #{discriminator_forward.1} parent=0
    _
  %s22 = ssub.s32 1, %s20
  %s23 = scalar_select 0, %s22, %s20
  %v24 = vstv %s18
  %25 = vst [vmem:[#allocation2] sm:$0x1] %v24
  // Predicated region
  $region2: #{discriminator_forward.1} parent=0 // pred_check
    _
  $region3: #{discriminator_forward.1} parent=0 // pred_check_branch
    %27 = sbr.rel (0) target = $region5
  $region4: #{discriminator_forward.1} parent=0 // pred_region
    _
  $region5: #{discriminator_forward.1} parent=0 // pred_fallthru
    _
  // Predicated region
  $region6: #{discriminator_forward.1} parent=0 // pred_check
    _
  $region7: #{discriminator_forward.1} parent=0 // pred_check_branch
    %29 = sbr.rel (0) target = $region9
  $region8: #{discriminator_forward.1} parent=0 // pred_region
    _
  $region9: #{discriminator_forward.1} parent=0 // pred_fallthru
    _
  // Predicated region
  $region10: #{discriminator_forward.1} parent=0 // pred_check
    _
  $region11: #{discriminator_forward.1} parent=0 // pred_check_branch
    %31 = sbr.rel (0) target = $region13
  $region12: #{discriminator_forward.1} parent=0 // pred_region
    _
  $region13: #{discriminator_forward.1} parent=0 // pred_fallthru
    _
  // Predicated region
  $region14: #{discriminator_forward.1} parent=0 // pred_check
    _
  $region15: #{discriminator_forward.1} parent=0 // pred_check_branch
    %33 = sbr.rel (0) target = $region17
  $region16: #{discriminator_forward.1} parent=0 // pred_region
    _
  $region17: #{discriminator_forward.1} parent=0 // pred_fallthru
    _
  // Predicated region
  $region18: #{discriminator_forward.1} parent=0 // pred_check
    _
  $region19: #{discriminator_forward.1} parent=0 // pred_check_branch
    %35 = sbr.rel (0) target = $region21
  $region20: #{discriminator_forward.1} parent=0 // pred_region
    _
  $region21: #{discriminator_forward.1} parent=0 // pred_fallthru
    _
  // Predicated region
  $region22: #{discriminator_forward.1} parent=0 // pred_check
    _
  $region23: #{discriminator_forward.1} parent=0 // pred_check_branch
    %37 = sbr.rel (0) target = $region25
  $region24: #{discriminator_forward.1} parent=0 // pred_region
    _
  $region25: #{discriminator_forward.1} parent=0 // pred_fallthru
    _
  // Predicated region
  $region26: #{discriminator_forward.1} parent=0 // pred_check
    _
  $region27: #{discriminator_forward.1} parent=0 // pred_check_branch
    %39 = sbr.rel (0) target = $region29
  $region28: #{discriminator_forward.1} parent=0 // pred_region
    _
  $region29: #{discriminator_forward.1} parent=0 // pred_fallthru
    _
  // Predicated region
  $region30: #{discriminator_forward.1} parent=0 // pred_check
    _
  $region31: #{discriminator_forward.1} parent=0 // pred_check_branch
    %41 = sbr.rel (0) target = $region33
  $region32: #{discriminator_forward.1} parent=0 // pred_region
    _
  $region33: #{discriminator_forward.1} parent=0 // pred_fallthru
    _
  // Predicated region
  $region34: #{discriminator_forward.1} parent=0 // pred_check
    _
  $region35: #{discriminator_forward.1} parent=0 // pred_check_branch
    %43 = sbr.rel (0) target = $region37
  $region36: #{discriminator_forward.1} parent=0 // pred_region
    _
  $region37: #{discriminator_forward.1} parent=0 // pred_fallthru
    _
  // Predicated region
  $region38: #{discriminator_forward.1} parent=0 // pred_check
    _
  $region39: #{discriminator_forward.1} parent=0 // pred_check_branch
    %45 = sbr.rel (0) target = $region41
  $region40: #{discriminator_forward.1} parent=0 // pred_region
    _
  $region41: #{discriminator_forward.1} parent=0 // pred_fallthru
    _
  // Predicated region
  $region42: #{discriminator_forward.1} parent=0 // pred_check
    _
  $region43: #{discriminator_forward.1} parent=0 // pred_check_branch
    %47 = sbr.rel (0) target = $region45
  $region44: #{discriminator_forward.1} parent=0 // pred_region
    _
  $region45: #{discriminator_forward.1} parent=0 // pred_fallthru
    _
  // Predicated region
  $region46: #{discriminator_forward.1} parent=0 // pred_check
    _
  $region47: #{discriminator_forward.1} parent=0 // pred_check_branch
    %49 = sbr.rel (0) target = $region49
  $region48: #{discriminator_forward.1} parent=0 // pred_region
    _
  $region49: #{discriminator_forward.1} parent=0 // pred_fallthru
    _
  // Predicated region
  $region50: #{discriminator_forward.1} parent=0 // pred_check
    _
  $region51: #{discriminator_forward.1} parent=0 // pred_check_branch
    %51 = sbr.rel (0) target = $region53
  $region52: #{discriminator_forward.1} parent=0 // pred_region
    _
  $region53: #{discriminator_forward.1} parent=0 // pred_fallthru
    _
  // Predicated region
  $region54: #{discriminator_forward.1} parent=0 // pred_check
    _
  $region55: #{discriminator_forward.1} parent=0 // pred_check_branch
    %53 = sbr.rel (0) target = $region57
  $region56: #{discriminator_forward.1} parent=0 // pred_region
    _
  $region57: #{discriminator_forward.1} parent=0 // pred_fallthru
    _
  // Predicated region
  $region58: #{discriminator_forward.1} parent=0 // pred_check
    _
  $region59: #{discriminator_forward.1} parent=0 // pred_check_branch
    %55 = sbr.rel (0) target = $region61
  $region60: #{discriminator_forward.1} parent=0 // pred_region
    _
  $region61: #{discriminator_forward.1} parent=0 // pred_fallthru
    _
  // Predicated region
  $region62: #{discriminator_forward.1} parent=0 // pred_check
    _
  $region63: #{discriminator_forward.1} parent=0 // pred_check_branch
    %57 = sbr.rel (0) target = $region65
  $region64: #{discriminator_forward.1} parent=0 // pred_region
    _
  $region65: #{discriminator_forward.1} parent=0 // pred_fallthru
    _
  // Predicated region
  $region66: #{discriminator_forward.1} parent=0 // pred_check
    _
  $region67: #{discriminator_forward.1} parent=0 // pred_check_branch
    %59 = sbr.rel (0) target = $region69
  $region68: #{discriminator_forward.1} parent=0 // pred_region
    _
  $region69: #{discriminator_forward.1} parent=0 // pred_fallthru
    _
  // Predicated region
  $region70: #{discriminator_forward.1} parent=0 // pred_check
    _
  $region71: #{discriminator_forward.1} parent=0 // pred_check_branch
    %61 = sbr.rel (0) target = $region73
  $region72: #{discriminator_forward.1} parent=0 // pred_region
    _
  $region73: #{discriminator_forward.1} parent=0 // pred_fallthru
    _
  // Predicated region
  $region74: #{discriminator_forward.1} parent=0 // pred_check
    _
  $region75: #{discriminator_forward.1} parent=0 // pred_check_branch
    %63 = sbr.rel (0) target = $region77
  $region76: #{discriminator_forward.1} parent=0 // pred_region
    _
  $region77: #{discriminator_forward.1} parent=0 // pred_fallthru
    _
  %v65 = vld [vmem:[%s1] sm:$0xf]
  %v66 = vld [vmem:[%s1 + $0x4] sm:$0x1]
  %v67 = vld [vmem:[%s0] sm:$0xff]
  %v68 = vld [vmem:[%s0 + $0x8] sm:$0xff]
  %v69 = vld [vmem:[%s0 + $0x10] sm:$0xff]
  %v70 = vld [vmem:[%s0 + $0x18] sm:$0xff]
  %v71 = vld [vmem:[%s0 + $0x20] sm:$0xff]
  %v72 = vld [vmem:[%s0 + $0x28] sm:$0xff]
  %v73 = vld [vmem:[%s0 + $0x30] sm:$0xff]
  %v74 = vld [vmem:[%s0 + $0x38] sm:$0xff]
  %v75 = vld [vmem:[%s0 + $0x40] sm:$0xff]
  %v76 = vld [vmem:[%s0 + $0x48] sm:$0xff]
  %v77 = vld [vmem:[%s0 + $0x50] sm:$0xff]
  %v78 = vld [vmem:[%s0 + $0x58] sm:$0xff]
  %v79 = vld [vmem:[%s0 + $0x60] sm:$0xff]
  %v80 = vld [vmem:[%s0 + $0x68] sm:$0xff]
  %v81 = vld [vmem:[%s0 + $0x70] sm:$0xff]
  %v82 = vld [vmem:[%s0 + $0x78] sm:$0xff]
  %v83 = vld [vmem:[%s0 + $0x80] sm:$0xff]
  %v84 = vld [vmem:[%s0 + $0x88] sm:$0xff]
  %v85 = vld [vmem:[%s0 + $0x90] sm:$0xff]
  %v86 = vld [vmem:[%s0 + $0x98] sm:$0xff]
  %v87 = vld [vmem:[%s0 + $0xa0] sm:$0xff]
  %v88 = vld [vmem:[%s0 + $0xa8] sm:$0xff]
  %v89 = vld [vmem:[%s0 + $0xb0] sm:$0xff]
  %v90 = vld [vmem:[%s0 + $0xb8] sm:$0xff]
  %v91 = vld [vmem:[%s0 + $0xc0] sm:$0xff]
  %v92 = vld [vmem:[%s0 + $0xc8] sm:$0xff]
  %v93 = vld [vmem:[%s0 + $0xd0] sm:$0xff]
  %v94 = vld [vmem:[%s0 + $0xd8] sm:$0xff]
  %v95 = vld [vmem:[%s0 + $0xe0] sm:$0xff]
  %v96 = vld [vmem:[%s0 + $0xe8] sm:$0xff]
  %v97 = vld [vmem:[%s0 + $0xf0] sm:$0xff]
  %v98 = vld [vmem:[%s0 + $0xf8] sm:$0xff]
  %v99 = vld [vmem:[%s0 + $0x100] sm:$0xff]
  %v100 = vld [vmem:[%s0 + $0x108] sm:$0xff]
  %v101 = vld [vmem:[%s0 + $0x110] sm:$0xff]
  %v102 = vld [vmem:[%s0 + $0x118] sm:$0xff]
  %v103 = vld [vmem:[%s0 + $0x120] sm:$0xff]
  %v104 = vld [vmem:[%s0 + $0x128] sm:$0xff]
  %v105 = vld [vmem:[%s0 + $0x130] sm:$0xff]
  %v106 = vld [vmem:[%s0 + $0x138] sm:$0xff]
  %v107 = vld [vmem:[%s0 + $0x140] sm:$0xff]
  %v108 = vld [vmem:[%s0 + $0x148] sm:$0xff]
  %v109 = vld [vmem:[%s0 + $0x150] sm:$0xff]
  %v110 = vld [vmem:[%s0 + $0x158] sm:$0xff]
  %v111 = vld [vmem:[%s0 + $0x160] sm:$0xff]
  %v112 = vld [vmem:[%s0 + $0x168] sm:$0xff]
  %v113 = vld [vmem:[%s0 + $0x170] sm:$0xff]
  %v114 = vld [vmem:[%s0 + $0x178] sm:$0xff]
  %v115 = vld [vmem:[%s0 + $0x180] sm:$0xff]
  %v116 = vld [vmem:[%s0 + $0x188] sm:$0xff]
  %v117 = vld [vmem:[%s0 + $0x190] sm:$0xff]
  %v118 = vld [vmem:[%s0 + $0x198] sm:$0xff]
  %v119 = vld [vmem:[%s0 + $0x1a0] sm:$0xff]
  %v120 = vld [vmem:[%s0 + $0x1a8] sm:$0xff]
  %v121 = vld [vmem:[%s0 + $0x1b0] sm:$0xff]
  %v122 = vld [vmem:[%s0 + $0x1b8] sm:$0xff]
  %v123 = vld [vmem:[%s0 + $0x1c0] sm:$0xff]
  %v124 = vld [vmem:[%s0 + $0x1c8] sm:$0xff]
  %v125 = vld [vmem:[%s0 + $0x1d0] sm:$0xff]
  %v126 = vld [vmem:[%s0 + $0x1d8] sm:$0xff]
  %v127 = vld [vmem:[%s0 + $0x1e0] sm:$0xff]
  %v128 = vld [vmem:[%s0 + $0x1e8] sm:$0xff]
  %v129 = vld [vmem:[%s0 + $0x1f0] sm:$0xff]
  %v130 = vld [vmem:[%s0 + $0x1f8] sm:$0xff]
  %v131 = vpack.c.bf16 %v68, %v67
  %v132 = vpack.c.bf16 %v70, %v69
  %v133 = vpack.c.bf16 %v72, %v71
  %v134 = vpack.c.bf16 %v74, %v73
  %v135 = vpack.c.bf16 %v76, %v75
  %v136 = vpack.c.bf16 %v78, %v77
  %v137 = vpack.c.bf16 %v80, %v79
  %v138 = vpack.c.bf16 %v82, %v81
  %v139 = vpack.c.bf16 %v84, %v83
  %v140 = vpack.c.bf16 %v86, %v85
  %v141 = vpack.c.bf16 %v88, %v87
  %v142 = vpack.c.bf16 %v90, %v89
  %v143 = vpack.c.bf16 %v92, %v91
  %v144 = vpack.c.bf16 %v94, %v93
  %v145 = vpack.c.bf16 %v96, %v95
  %v146 = vpack.c.bf16 %v98, %v97
  %v147 = vpack.c.bf16 %v100, %v99
  %v148 = vpack.c.bf16 %v102, %v101
  %v149 = vpack.c.bf16 %v104, %v103
  %v150 = vpack.c.bf16 %v106, %v105
  %v151 = vpack.c.bf16 %v108, %v107
  %v152 = vpack.c.bf16 %v110, %v109
  %v153 = vpack.c.bf16 %v112, %v111
  %v154 = vpack.c.bf16 %v114, %v113
  %v155 = vpack.c.bf16 %v116, %v115
  %v156 = vpack.c.bf16 %v118, %v117
  %v157 = vpack.c.bf16 %v120, %v119
  %v158 = vpack.c.bf16 %v122, %v121
  %v159 = vpack.c.bf16 %v124, %v123
  %v160 = vpack.c.bf16 %v126, %v125
  %v161 = vpack.c.bf16 %v128, %v127
  %v162 = vpack.c.bf16 %v130, %v129
  %v163 = vld [vmem:[%s2] sm:$0x1]
  %v164 = vld [vmem:[%s3] sm:$0x1]
  %v165 = vld [vmem:[%s4] sm:$0x1]
  %v167 = vlaneseq
  %v168 = vshrl.u32 %v167, 7
  %v169 = vsub.s32 0, %v168
  %v170 = vrot.slane %v163, %v169
  %v174 = vunpack.c.l.b16 %v65
  %v175 = vunpack.c.l.b16 %v66
  %v176 = vpack.c.b16 %v175, %v174
  %vm177 = vcmask 72704
  %v179 = vsel %vm177, %v131, 0
  %v182 = vsel %vm177, %v132, 0
  %v185 = vsel %vm177, %v133, 0
  %v188 = vsel %vm177, %v134, 0
  %v191 = vsel %vm177, %v135, 0
  %v194 = vsel %vm177, %v136, 0
  %v197 = vsel %vm177, %v137, 0
  %v200 = vsel %vm177, %v138, 0
  %v203 = vsel %vm177, %v139, 0
  %v206 = vsel %vm177, %v140, 0
  %v209 = vsel %vm177, %v141, 0
  %v212 = vsel %vm177, %v142, 0
  %v215 = vsel %vm177, %v143, 0
  %v218 = vsel %vm177, %v144, 0
  %v221 = vsel %vm177, %v145, 0
  %v224 = vsel %vm177, %v146, 0
  %v227 = vsel %vm177, %v147, 0
  %v230 = vsel %vm177, %v148, 0
  %v233 = vsel %vm177, %v149, 0
  %v236 = vsel %vm177, %v150, 0
  %v239 = vsel %vm177, %v151, 0
  %v242 = vsel %vm177, %v152, 0
  %v245 = vsel %vm177, %v153, 0
  %v248 = vsel %vm177, %v154, 0
  %v251 = vsel %vm177, %v155, 0
  %v254 = vsel %vm177, %v156, 0
  %v257 = vsel %vm177, %v157, 0
  %v260 = vsel %vm177, %v158, 0
  %v263 = vsel %vm177, %v159, 0
  %v266 = vsel %vm177, %v160, 0
  %v269 = vsel %vm177, %v161, 0
  %v272 = vsel %vm177, %v162, 0
  %vm274 = vcmask 1043456
  %vm275 = vcmask 1044480
  %v276 = vsel %vm274, 4294967295, 65535
  %v277 = vsel %vm275, %v276, 0
  %v279 = vand.u32 %v176, %v277
  %281 = vmatprep.subr.bf16.mxu0 0
  %282 = vmatpush1.bf16.msra.mxu0 %v279
  %283 = vmatprep.subr.bf16.mxu0 0
  %284 = vmatpush1.bf16.msra.mxu0 0
  %285 = vmatprep.subr.bf16.mxu0 0
  %286 = vmatpush1.bf16.msra.mxu0 0
  %287 = vmatprep.subr.bf16.mxu0 0
  %288 = vmatpush1.bf16.msra.mxu0 0
  %289 = vmatprep.subr.bf16.mxu0 0
  %290 = vmatpush1.bf16.msra.mxu0 0
  %291 = vmatprep.subr.bf16.mxu0 0
  %292 = vmatpush1.bf16.msra.mxu0 0
  %293 = vmatprep.subr.bf16.mxu0 0
  %294 = vmatpush1.bf16.msra.mxu0 0
  %295 = vmatprep.subr.bf16.mxu0 0
  %296 = vmatpush1.bf16.msra.mxu0 0
  %297 = vmatprep.subr.bf16.mxu0 0
  %298 = vmatpush1.bf16.msra.mxu0 0
  %299 = vmatprep.subr.bf16.mxu0 0
  %300 = vmatpush1.bf16.msra.mxu0 0
  %301 = vmatprep.subr.bf16.mxu0 0
  %302 = vmatpush1.bf16.msra.mxu0 0
  %303 = vmatprep.subr.bf16.mxu0 0
  %304 = vmatpush1.bf16.msra.mxu0 0
  %305 = vmatprep.subr.bf16.mxu0 0
  %306 = vmatpush1.bf16.msra.mxu0 0
  %307 = vmatprep.subr.bf16.mxu0 0
  %308 = vmatpush1.bf16.msra.mxu0 0
  %309 = vmatprep.subr.bf16.mxu0 0
  %310 = vmatpush1.bf16.msra.mxu0 0
  %311 = vmatprep.subr.bf16.mxu0 0
  %312 = vmatpush1.bf16.msra.mxu0 0
  %313 = vmatprep.mubr.bf16.mxu0 0
  %314 = vmatmul.mubr.bf16.gmra.mrb[0].mxu0 %v179
  %v315 = vpop.f32.mrb[0].mxu0
  %v316 = vadd.f32 %v170, %v315
  %v317 = vpop.f32.mrb[0].mxu0
  %v318 = vpop.f32.mrb[0].mxu0
  %v319 = vadd.f32 %v170, %v318
  %v320 = vpop.f32.mrb[0].mxu0
  %321 = vmatprep.mubr.bf16.mxu0 0
  %322 = vmatmul.mubr.bf16.gmra.mrb[0].mxu0 %v182
  %v323 = vpop.f32.mrb[0].mxu0
  %v324 = vadd.f32 %v170, %v323
  %v325 = vpop.f32.mrb[0].mxu0
  %v326 = vpop.f32.mrb[0].mxu0
  %v327 = vadd.f32 %v170, %v326
  %v328 = vpop.f32.mrb[0].mxu0
  %329 = vmatprep.mubr.bf16.mxu0 0
  %330 = vmatmul.mubr.bf16.gmra.mrb[0].mxu0 %v185
  %v331 = vpop.f32.mrb[0].mxu0
  %v332 = vadd.f32 %v170, %v331
  %v333 = vpop.f32.mrb[0].mxu0
  %v334 = vpop.f32.mrb[0].mxu0
  %v335 = vadd.f32 %v170, %v334
  %v336 = vpop.f32.mrb[0].mxu0
  %337 = vmatprep.mubr.bf16.mxu0 0
  %338 = vmatmul.mubr.bf16.gmra.mrb[0].mxu0 %v188
  %v339 = vpop.f32.mrb[0].mxu0
  %v340 = vadd.f32 %v170, %v339
  %v341 = vpop.f32.mrb[0].mxu0
  %v342 = vpop.f32.mrb[0].mxu0
  %v343 = vadd.f32 %v170, %v342
  %v344 = vpop.f32.mrb[0].mxu0
  %345 = vmatprep.mubr.bf16.mxu0 0
  %346 = vmatmul.mubr.bf16.gmra.mrb[0].mxu0 %v191
  %v347 = vpop.f32.mrb[0].mxu0
  %v348 = vadd.f32 %v170, %v347
  %v349 = vpop.f32.mrb[0].mxu0
  %v350 = vpop.f32.mrb[0].mxu0
  %v351 = vadd.f32 %v170, %v350
  %v352 = vpop.f32.mrb[0].mxu0
  %353 = vmatprep.mubr.bf16.mxu0 0
  %354 = vmatmul.mubr.bf16.gmra.mrb[0].mxu0 %v194
  %v355 = vpop.f32.mrb[0].mxu0
  %v356 = vadd.f32 %v170, %v355
  %v357 = vpop.f32.mrb[0].mxu0
  %v358 = vpop.f32.mrb[0].mxu0
  %v359 = vadd.f32 %v170, %v358
  %v360 = vpop.f32.mrb[0].mxu0
  %361 = vmatprep.mubr.bf16.mxu0 0
  %362 = vmatmul.mubr.bf16.gmra.mrb[0].mxu0 %v197
  %v363 = vpop.f32.mrb[0].mxu0
  %v364 = vadd.f32 %v170, %v363
  %v365 = vpop.f32.mrb[0].mxu0
  %v366 = vpop.f32.mrb[0].mxu0
  %v367 = vadd.f32 %v170, %v366
  %v368 = vpop.f32.mrb[0].mxu0
  %369 = vmatprep.mubr.bf16.mxu0 0
  %370 = vmatmul.mubr.bf16.gmra.mrb[0].mxu0 %v200
  %v371 = vpop.f32.mrb[0].mxu0
  %v372 = vadd.f32 %v170, %v371
  %v373 = vpop.f32.mrb[0].mxu0
  %v374 = vpop.f32.mrb[0].mxu0
  %v375 = vadd.f32 %v170, %v374
  %v376 = vpop.f32.mrb[0].mxu0
  %377 = vmatprep.mubr.bf16.mxu0 0
  %378 = vmatmul.mubr.bf16.gmra.mrb[0].mxu0 %v203
  %v379 = vpop.f32.mrb[0].mxu0
  %v380 = vadd.f32 %v170, %v379
  %v381 = vpop.f32.mrb[0].mxu0
  %v382 = vpop.f32.mrb[0].mxu0
  %v383 = vadd.f32 %v170, %v382
  %v384 = vpop.f32.mrb[0].mxu0
  %385 = vmatprep.mubr.bf16.mxu0 0
  %386 = vmatmul.mubr.bf16.gmra.mrb[0].mxu0 %v206
  %v387 = vpop.f32.mrb[0].mxu0
  %v388 = vadd.f32 %v170, %v387
  %v389 = vpop.f32.mrb[0].mxu0
  %v390 = vpop.f32.mrb[0].mxu0
  %v391 = vadd.f32 %v170, %v390
  %v392 = vpop.f32.mrb[0].mxu0
  %393 = vmatprep.mubr.bf16.mxu0 0
  %394 = vmatmul.mubr.bf16.gmra.mrb[0].mxu0 %v209
  %v395 = vpop.f32.mrb[0].mxu0
  %v396 = vadd.f32 %v170, %v395
  %v397 = vpop.f32.mrb[0].mxu0
  %v398 = vpop.f32.mrb[0].mxu0
  %v399 = vadd.f32 %v170, %v398
  %v400 = vpop.f32.mrb[0].mxu0
  %401 = vmatprep.mubr.bf16.mxu0 0
  %402 = vmatmul.mubr.bf16.gmra.mrb[0].mxu0 %v212
  %v403 = vpop.f32.mrb[0].mxu0
  %v404 = vadd.f32 %v170, %v403
  %v405 = vpop.f32.mrb[0].mxu0
  %v406 = vpop.f32.mrb[0].mxu0
  %v407 = vadd.f32 %v170, %v406
  %v408 = vpop.f32.mrb[0].mxu0
  %409 = vmatprep.mubr.bf16.mxu0 0
  %410 = vmatmul.mubr.bf16.gmra.mrb[0].mxu0 %v215
  %v411 = vpop.f32.mrb[0].mxu0
  %v412 = vadd.f32 %v170, %v411
  %v413 = vpop.f32.mrb[0].mxu0
  %v414 = vpop.f32.mrb[0].mxu0
  %v415 = vadd.f32 %v170, %v414
  %v416 = vpop.f32.mrb[0].mxu0
  %417 = vmatprep.mubr.bf16.mxu0 0
  %418 = vmatmul.mubr.bf16.gmra.mrb[0].mxu0 %v218
  %v419 = vpop.f32.mrb[0].mxu0
  %v420 = vadd.f32 %v170, %v419
  %v421 = vpop.f32.mrb[0].mxu0
  %v422 = vpop.f32.mrb[0].mxu0
  %v423 = vadd.f32 %v170, %v422
  %v424 = vpop.f32.mrb[0].mxu0
  %425 = vmatprep.mubr.bf16.mxu0 0
  %426 = vmatmul.mubr.bf16.gmra.mrb[0].mxu0 %v221
  %v427 = vpop.f32.mrb[0].mxu0
  %v428 = vadd.f32 %v170, %v427
  %v429 = vpop.f32.mrb[0].mxu0
  %v430 = vpop.f32.mrb[0].mxu0
  %v431 = vadd.f32 %v170, %v430
  %v432 = vpop.f32.mrb[0].mxu0
  %433 = vmatprep.mubr.bf16.mxu0 0
  %434 = vmatmul.mubr.bf16.gmra.mrb[0].mxu0 %v224
  %v435 = vpop.f32.mrb[0].mxu0
  %v436 = vadd.f32 %v170, %v435
  %v437 = vpop.f32.mrb[0].mxu0
  %v438 = vpop.f32.mrb[0].mxu0
  %v439 = vadd.f32 %v170, %v438
  %v440 = vpop.f32.mrb[0].mxu0
  %441 = vmatprep.mubr.bf16.mxu0 0
  %442 = vmatmul.mubr.bf16.gmra.mrb[0].mxu0 %v227
  %v443 = vpop.f32.mrb[0].mxu0
  %v444 = vadd.f32 %v170, %v443
  %v445 = vpop.f32.mrb[0].mxu0
  %v446 = vpop.f32.mrb[0].mxu0
  %v447 = vadd.f32 %v170, %v446
  %v448 = vpop.f32.mrb[0].mxu0
  %449 = vmatprep.mubr.bf16.mxu0 0
  %450 = vmatmul.mubr.bf16.gmra.mrb[0].mxu0 %v230
  %v451 = vpop.f32.mrb[0].mxu0
  %v452 = vadd.f32 %v170, %v451
  %v453 = vpop.f32.mrb[0].mxu0
  %v454 = vpop.f32.mrb[0].mxu0
  %v455 = vadd.f32 %v170, %v454
  %v456 = vpop.f32.mrb[0].mxu0
  %457 = vmatprep.mubr.bf16.mxu0 0
  %458 = vmatmul.mubr.bf16.gmra.mrb[0].mxu0 %v233
  %v459 = vpop.f32.mrb[0].mxu0
  %v460 = vadd.f32 %v170, %v459
  %v461 = vpop.f32.mrb[0].mxu0
  %v462 = vpop.f32.mrb[0].mxu0
  %v463 = vadd.f32 %v170, %v462
  %v464 = vpop.f32.mrb[0].mxu0
  %465 = vmatprep.mubr.bf16.mxu0 0
  %466 = vmatmul.mubr.bf16.gmra.mrb[0].mxu0 %v236
  %v467 = vpop.f32.mrb[0].mxu0
  %v468 = vadd.f32 %v170, %v467
  %v469 = vpop.f32.mrb[0].mxu0
  %v470 = vpop.f32.mrb[0].mxu0
  %v471 = vadd.f32 %v170, %v470
  %v472 = vpop.f32.mrb[0].mxu0
  %473 = vmatprep.mubr.bf16.mxu0 0
  %474 = vmatmul.mubr.bf16.gmra.mrb[0].mxu0 %v239
  %v475 = vpop.f32.mrb[0].mxu0
  %v476 = vadd.f32 %v170, %v475
  %v477 = vpop.f32.mrb[0].mxu0
  %v478 = vpop.f32.mrb[0].mxu0
  %v479 = vadd.f32 %v170, %v478
  %v480 = vpop.f32.mrb[0].mxu0
  %481 = vmatprep.mubr.bf16.mxu0 0
  %482 = vmatmul.mubr.bf16.gmra.mrb[0].mxu0 %v242
  %v483 = vpop.f32.mrb[0].mxu0
  %v484 = vadd.f32 %v170, %v483
  %v485 = vpop.f32.mrb[0].mxu0
  %v486 = vpop.f32.mrb[0].mxu0
  %v487 = vadd.f32 %v170, %v486
  %v488 = vpop.f32.mrb[0].mxu0
  %489 = vmatprep.mubr.bf16.mxu0 0
  %490 = vmatmul.mubr.bf16.gmra.mrb[0].mxu0 %v245
  %v491 = vpop.f32.mrb[0].mxu0
  %v492 = vadd.f32 %v170, %v491
  %v493 = vpop.f32.mrb[0].mxu0
  %v494 = vpop.f32.mrb[0].mxu0
  %v495 = vadd.f32 %v170, %v494
  %v496 = vpop.f32.mrb[0].mxu0
  %497 = vmatprep.mubr.bf16.mxu0 0
  %498 = vmatmul.mubr.bf16.gmra.mrb[0].mxu0 %v248
  %v499 = vpop.f32.mrb[0].mxu0
  %v500 = vadd.f32 %v170, %v499
  %v501 = vpop.f32.mrb[0].mxu0
  %v502 = vpop.f32.mrb[0].mxu0
  %v503 = vadd.f32 %v170, %v502
  %v504 = vpop.f32.mrb[0].mxu0
  %505 = vmatprep.mubr.bf16.mxu0 0
  %506 = vmatmul.mubr.bf16.gmra.mrb[0].mxu0 %v251
  %v507 = vpop.f32.mrb[0].mxu0
  %v508 = vadd.f32 %v170, %v507
  %v509 = vpop.f32.mrb[0].mxu0
  %v510 = vpop.f32.mrb[0].mxu0
  %v511 = vadd.f32 %v170, %v510
  %v512 = vpop.f32.mrb[0].mxu0
  %513 = vmatprep.mubr.bf16.mxu0 0
  %514 = vmatmul.mubr.bf16.gmra.mrb[0].mxu0 %v254
  %v515 = vpop.f32.mrb[0].mxu0
  %v516 = vadd.f32 %v170, %v515
  %v517 = vpop.f32.mrb[0].mxu0
  %v518 = vpop.f32.mrb[0].mxu0
  %v519 = vadd.f32 %v170, %v518
  %v520 = vpop.f32.mrb[0].mxu0
  %521 = vmatprep.mubr.bf16.mxu0 0
  %522 = vmatmul.mubr.bf16.gmra.mrb[0].mxu0 %v257
  %v523 = vpop.f32.mrb[0].mxu0
  %v524 = vadd.f32 %v170, %v523
  %v525 = vpop.f32.mrb[0].mxu0
  %v526 = vpop.f32.mrb[0].mxu0
  %v527 = vadd.f32 %v170, %v526
  %v528 = vpop.f32.mrb[0].mxu0
  %529 = vmatprep.mubr.bf16.mxu0 0
  %530 = vmatmul.mubr.bf16.gmra.mrb[0].mxu0 %v260
  %v531 = vpop.f32.mrb[0].mxu0
  %v532 = vadd.f32 %v170, %v531
  %v533 = vpop.f32.mrb[0].mxu0
  %v534 = vpop.f32.mrb[0].mxu0
  %v535 = vadd.f32 %v170, %v534
  %v536 = vpop.f32.mrb[0].mxu0
  %537 = vmatprep.mubr.bf16.mxu0 0
  %538 = vmatmul.mubr.bf16.gmra.mrb[0].mxu0 %v263
  %v539 = vpop.f32.mrb[0].mxu0
  %v540 = vadd.f32 %v170, %v539
  %v541 = vpop.f32.mrb[0].mxu0
  %v542 = vpop.f32.mrb[0].mxu0
  %v543 = vadd.f32 %v170, %v542
  %v544 = vpop.f32.mrb[0].mxu0
  %545 = vmatprep.mubr.bf16.mxu0 0
  %546 = vmatmul.mubr.bf16.gmra.mrb[0].mxu0 %v266
  %v547 = vpop.f32.mrb[0].mxu0
  %v548 = vadd.f32 %v170, %v547
  %v549 = vpop.f32.mrb[0].mxu0
  %v550 = vpop.f32.mrb[0].mxu0
  %v551 = vadd.f32 %v170, %v550
  %v552 = vpop.f32.mrb[0].mxu0
  %553 = vmatprep.mubr.bf16.mxu0 0
  %554 = vmatmul.mubr.bf16.gmra.mrb[0].mxu0 %v269
  %v555 = vpop.f32.mrb[0].mxu0
  %v556 = vadd.f32 %v170, %v555
  %v557 = vpop.f32.mrb[0].mxu0
  %v558 = vpop.f32.mrb[0].mxu0
  %v559 = vadd.f32 %v170, %v558
  %v560 = vpop.f32.mrb[0].mxu0
  %561 = vmatprep.mubr.bf16.mxu0 0
  %562 = vmatmul.mubr.bf16.gmra.mrb[0].mxu0 %v272
  %v563 = vpop.f32.mrb[0].mxu0
  %v564 = vadd.f32 %v170, %v563
  %v565 = vpop.f32.mrb[0].mxu0
  %v566 = vpop.f32.mrb[0].mxu0
  %v567 = vadd.f32 %v170, %v566
  %v568 = vpop.f32.mrb[0].mxu0
  %569 = vdwg.mxu0
  %vm570 = vcmp.ge.f32.partialorder %v316, 0.0
  %vm571 = vcmp.ge.f32.partialorder %v319, 0.0
  %vm572 = vcmp.ge.f32.partialorder %v324, 0.0
  %vm573 = vcmp.ge.f32.partialorder %v327, 0.0
  %vm574 = vcmp.ge.f32.partialorder %v332, 0.0
  %vm575 = vcmp.ge.f32.partialorder %v335, 0.0
  %vm576 = vcmp.ge.f32.partialorder %v340, 0.0
  %vm577 = vcmp.ge.f32.partialorder %v343, 0.0
  %vm578 = vcmp.ge.f32.partialorder %v348, 0.0
  %vm579 = vcmp.ge.f32.partialorder %v351, 0.0
  %vm580 = vcmp.ge.f32.partialorder %v356, 0.0
  %vm581 = vcmp.ge.f32.partialorder %v359, 0.0
  %vm582 = vcmp.ge.f32.partialorder %v364, 0.0
  %vm583 = vcmp.ge.f32.partialorder %v367, 0.0
  %vm584 = vcmp.ge.f32.partialorder %v372, 0.0
  %vm585 = vcmp.ge.f32.partialorder %v375, 0.0
  %vm586 = vcmp.ge.f32.partialorder %v380, 0.0
  %vm587 = vcmp.ge.f32.partialorder %v383, 0.0
  %vm588 = vcmp.ge.f32.partialorder %v388, 0.0
  %vm589 = vcmp.ge.f32.partialorder %v391, 0.0
  %vm590 = vcmp.ge.f32.partialorder %v396, 0.0
  %vm591 = vcmp.ge.f32.partialorder %v399, 0.0
  %vm592 = vcmp.ge.f32.partialorder %v404, 0.0
  %vm593 = vcmp.ge.f32.partialorder %v407, 0.0
  %vm594 = vcmp.ge.f32.partialorder %v412, 0.0
  %vm595 = vcmp.ge.f32.partialorder %v415, 0.0
  %vm596 = vcmp.ge.f32.partialorder %v420, 0.0
  %vm597 = vcmp.ge.f32.partialorder %v423, 0.0
  %vm598 = vcmp.ge.f32.partialorder %v428, 0.0
  %vm599 = vcmp.ge.f32.partialorder %v431, 0.0
  %vm600 = vcmp.ge.f32.partialorder %v436, 0.0
  %vm601 = vcmp.ge.f32.partialorder %v439, 0.0
  %vm602 = vcmp.ge.f32.partialorder %v444, 0.0
  %vm603 = vcmp.ge.f32.partialorder %v447, 0.0
  %vm604 = vcmp.ge.f32.partialorder %v452, 0.0
  %vm605 = vcmp.ge.f32.partialorder %v455, 0.0
  %vm606 = vcmp.ge.f32.partialorder %v460, 0.0
  %vm607 = vcmp.ge.f32.partialorder %v463, 0.0
  %vm608 = vcmp.ge.f32.partialorder %v468, 0.0
  %vm609 = vcmp.ge.f32.partialorder %v471, 0.0
  %vm610 = vcmp.ge.f32.partialorder %v476, 0.0
  %vm611 = vcmp.ge.f32.partialorder %v479, 0.0
  %vm612 = vcmp.ge.f32.partialorder %v484, 0.0
  %vm613 = vcmp.ge.f32.partialorder %v487, 0.0
  %vm614 = vcmp.ge.f32.partialorder %v492, 0.0
  %vm615 = vcmp.ge.f32.partialorder %v495, 0.0
  %vm616 = vcmp.ge.f32.partialorder %v500, 0.0
  %vm617 = vcmp.ge.f32.partialorder %v503, 0.0
  %vm618 = vcmp.ge.f32.partialorder %v508, 0.0
  %vm619 = vcmp.ge.f32.partialorder %v511, 0.0
  %vm620 = vcmp.ge.f32.partialorder %v516, 0.0
  %vm621 = vcmp.ge.f32.partialorder %v519, 0.0
  %vm622 = vcmp.ge.f32.partialorder %v524, 0.0
  %vm623 = vcmp.ge.f32.partialorder %v527, 0.0
  %vm624 = vcmp.ge.f32.partialorder %v532, 0.0
  %vm625 = vcmp.ge.f32.partialorder %v535, 0.0
  %vm626 = vcmp.ge.f32.partialorder %v540, 0.0
  %vm627 = vcmp.ge.f32.partialorder %v543, 0.0
  %vm628 = vcmp.ge.f32.partialorder %v548, 0.0
  %vm629 = vcmp.ge.f32.partialorder %v551, 0.0
  %vm630 = vcmp.ge.f32.partialorder %v556, 0.0
  %vm631 = vcmp.ge.f32.partialorder %v559, 0.0
  %vm632 = vcmp.ge.f32.partialorder %v564, 0.0
  %vm633 = vcmp.ge.f32.partialorder %v567, 0.0
  %v634 = vmul.f32 %v316, 0.2
  %v635 = vmul.f32 %v319, 0.2
  %v636 = vmul.f32 %v324, 0.2
  %v637 = vmul.f32 %v327, 0.2
  %v638 = vmul.f32 %v332, 0.2
  %v639 = vmul.f32 %v335, 0.2
  %v640 = vmul.f32 %v340, 0.2
  %v641 = vmul.f32 %v343, 0.2
  %v642 = vmul.f32 %v348, 0.2
  %v643 = vmul.f32 %v351, 0.2
  %v644 = vmul.f32 %v356, 0.2
  %v645 = vmul.f32 %v359, 0.2
  %v646 = vmul.f32 %v364, 0.2
  %v647 = vmul.f32 %v367, 0.2
  %v648 = vmul.f32 %v372, 0.2
  %v649 = vmul.f32 %v375, 0.2
  %v650 = vmul.f32 %v380, 0.2
  %v651 = vmul.f32 %v383, 0.2
  %v652 = vmul.f32 %v388, 0.2
  %v653 = vmul.f32 %v391, 0.2
  %v654 = vmul.f32 %v396, 0.2
  %v655 = vmul.f32 %v399, 0.2
  %v656 = vmul.f32 %v404, 0.2
  %v657 = vmul.f32 %v407, 0.2
  %v658 = vmul.f32 %v412, 0.2
  %v659 = vmul.f32 %v415, 0.2
  %v660 = vmul.f32 %v420, 0.2
  %v661 = vmul.f32 %v423, 0.2
  %v662 = vmul.f32 %v428, 0.2
  %v663 = vmul.f32 %v431, 0.2
  %v664 = vmul.f32 %v436, 0.2
  %v665 = vmul.f32 %v439, 0.2
  %v666 = vmul.f32 %v444, 0.2
  %v667 = vmul.f32 %v447, 0.2
  %v668 = vmul.f32 %v452, 0.2
  %v669 = vmul.f32 %v455, 0.2
  %v670 = vmul.f32 %v460, 0.2
  %v671 = vmul.f32 %v463, 0.2
  %v672 = vmul.f32 %v468, 0.2
  %v673 = vmul.f32 %v471, 0.2
  %v674 = vmul.f32 %v476, 0.2
  %v675 = vmul.f32 %v479, 0.2
  %v676 = vmul.f32 %v484, 0.2
  %v677 = vmul.f32 %v487, 0.2
  %v678 = vmul.f32 %v492, 0.2
  %v679 = vmul.f32 %v495, 0.2
  %v680 = vmul.f32 %v500, 0.2
  %v681 = vmul.f32 %v503, 0.2
  %v682 = vmul.f32 %v508, 0.2
  %v683 = vmul.f32 %v511, 0.2
  %v684 = vmul.f32 %v516, 0.2
  %v685 = vmul.f32 %v519, 0.2
  %v686 = vmul.f32 %v524, 0.2
  %v687 = vmul.f32 %v527, 0.2
  %v688 = vmul.f32 %v532, 0.2
  %v689 = vmul.f32 %v535, 0.2
  %v690 = vmul.f32 %v540, 0.2
  %v691 = vmul.f32 %v543, 0.2
  %v692 = vmul.f32 %v548, 0.2
  %v693 = vmul.f32 %v551, 0.2
  %v694 = vmul.f32 %v556, 0.2
  %v695 = vmul.f32 %v559, 0.2
  %v696 = vmul.f32 %v564, 0.2
  %v697 = vmul.f32 %v567, 0.2
  %v698 = vsel %vm570, %v316, %v634
  %v699 = vsel %vm571, %v319, %v635
  %v700 = vsel %vm572, %v324, %v636
  %v701 = vsel %vm573, %v327, %v637
  %v702 = vsel %vm574, %v332, %v638
  %v703 = vsel %vm575, %v335, %v639
  %v704 = vsel %vm576, %v340, %v640
  %v705 = vsel %vm577, %v343, %v641
  %v706 = vsel %vm578, %v348, %v642
  %v707 = vsel %vm579, %v351, %v643
  %v708 = vsel %vm580, %v356, %v644
  %v709 = vsel %vm581, %v359, %v645
  %v710 = vsel %vm582, %v364, %v646
  %v711 = vsel %vm583, %v367, %v647
  %v712 = vsel %vm584, %v372, %v648
  %v713 = vsel %vm585, %v375, %v649
  %v714 = vsel %vm586, %v380, %v650
  %v715 = vsel %vm587, %v383, %v651
  %v716 = vsel %vm588, %v388, %v652
  %v717 = vsel %vm589, %v391, %v653
  %v718 = vsel %vm590, %v396, %v654
  %v719 = vsel %vm591, %v399, %v655
  %v720 = vsel %vm592, %v404, %v656
  %v721 = vsel %vm593, %v407, %v657
  %v722 = vsel %vm594, %v412, %v658
  %v723 = vsel %vm595, %v415, %v659
  %v724 = vsel %vm596, %v420, %v660
  %v725 = vsel %vm597, %v423, %v661
  %v726 = vsel %vm598, %v428, %v662
  %v727 = vsel %vm599, %v431, %v663
  %v728 = vsel %vm600, %v436, %v664
  %v729 = vsel %vm601, %v439, %v665
  %v730 = vsel %vm602, %v444, %v666
  %v731 = vsel %vm603, %v447, %v667
  %v732 = vsel %vm604, %v452, %v668
  %v733 = vsel %vm605, %v455, %v669
  %v734 = vsel %vm606, %v460, %v670
  %v735 = vsel %vm607, %v463, %v671
  %v736 = vsel %vm608, %v468, %v672
  %v737 = vsel %vm609, %v471, %v673
  %v738 = vsel %vm610, %v476, %v674
  %v739 = vsel %vm611, %v479, %v675
  %v740 = vsel %vm612, %v484, %v676
  %v741 = vsel %vm613, %v487, %v677
  %v742 = vsel %vm614, %v492, %v678
  %v743 = vsel %vm615, %v495, %v679
  %v744 = vsel %vm616, %v500, %v680
  %v745 = vsel %vm617, %v503, %v681
  %v746 = vsel %vm618, %v508, %v682
  %v747 = vsel %vm619, %v511, %v683
  %v748 = vsel %vm620, %v516, %v684
  %v749 = vsel %vm621, %v519, %v685
  %v750 = vsel %vm622, %v524, %v686
  %v751 = vsel %vm623, %v527, %v687
  %v752 = vsel %vm624, %v532, %v688
  %v753 = vsel %vm625, %v535, %v689
  %v754 = vsel %vm626, %v540, %v690
  %v755 = vsel %vm627, %v543, %v691
  %v756 = vsel %vm628, %v548, %v692
  %v757 = vsel %vm629, %v551, %v693
  %v758 = vsel %vm630, %v556, %v694
  %v759 = vsel %vm631, %v559, %v695
  %v760 = vsel %vm632, %v564, %v696
  %v761 = vsel %vm633, %v567, %v697
  %vm762 = vcmask 130048
  %v763 = vsel %vm762, %v698, 0.0
  %v764 = vsel %vm762, %v699, 0.0
  %v765 = vadd.f32 %v763, %v764
  %v766 = vsel %vm762, %v700, 0.0
  %v767 = vadd.f32 %v765, %v766
  %v768 = vsel %vm762, %v701, 0.0
  %v769 = vadd.f32 %v767, %v768
  %v770 = vsel %vm762, %v702, 0.0
  %v771 = vadd.f32 %v769, %v770
  %v772 = vsel %vm762, %v703, 0.0
  %v773 = vadd.f32 %v771, %v772
  %v774 = vsel %vm762, %v704, 0.0
  %v775 = vadd.f32 %v773, %v774
  %v776 = vsel %vm762, %v705, 0.0
  %v777 = vadd.f32 %v775, %v776
  %v778 = vsel %vm762, %v706, 0.0
  %v779 = vadd.f32 %v777, %v778
  %v780 = vsel %vm762, %v707, 0.0
  %v781 = vadd.f32 %v779, %v780
  %v782 = vsel %vm762, %v708, 0.0
  %v783 = vadd.f32 %v781, %v782
  %v784 = vsel %vm762, %v709, 0.0
  %v785 = vadd.f32 %v783, %v784
  %v786 = vsel %vm762, %v710, 0.0
  %v787 = vadd.f32 %v785, %v786
  %v788 = vsel %vm762, %v711, 0.0
  %v789 = vadd.f32 %v787, %v788
  %v790 = vsel %vm762, %v712, 0.0
  %v791 = vadd.f32 %v789, %v790
  %v792 = vsel %vm762, %v713, 0.0
  %v793 = vadd.f32 %v791, %v792
  %v794 = vsel %vm762, %v714, 0.0
  %v795 = vadd.f32 %v793, %v794
  %v796 = vsel %vm762, %v715, 0.0
  %v797 = vadd.f32 %v795, %v796
  %v798 = vsel %vm762, %v716, 0.0
  %v799 = vadd.f32 %v797, %v798
  %v800 = vsel %vm762, %v717, 0.0
  %v801 = vadd.f32 %v799, %v800
  %v802 = vsel %vm762, %v718, 0.0
  %v803 = vadd.f32 %v801, %v802
  %v804 = vsel %vm762, %v719, 0.0
  %v805 = vadd.f32 %v803, %v804
  %v806 = vsel %vm762, %v720, 0.0
  %v807 = vadd.f32 %v805, %v806
  %v808 = vsel %vm762, %v721, 0.0
  %v809 = vadd.f32 %v807, %v808
  %v810 = vsel %vm762, %v722, 0.0
  %v811 = vadd.f32 %v809, %v810
  %v812 = vsel %vm762, %v723, 0.0
  %v813 = vadd.f32 %v811, %v812
  %v814 = vsel %vm762, %v724, 0.0
  %v815 = vadd.f32 %v813, %v814
  %v816 = vsel %vm762, %v725, 0.0
  %v817 = vadd.f32 %v815, %v816
  %v818 = vsel %vm762, %v726, 0.0
  %v819 = vadd.f32 %v817, %v818
  %v820 = vsel %vm762, %v727, 0.0
  %v821 = vadd.f32 %v819, %v820
  %v822 = vsel %vm762, %v728, 0.0
  %v823 = vadd.f32 %v821, %v822
  %v824 = vsel %vm762, %v729, 0.0
  %v825 = vadd.f32 %v823, %v824
  %v826 = vsel %vm762, %v730, 0.0
  %v827 = vadd.f32 %v825, %v826
  %v828 = vsel %vm762, %v731, 0.0
  %v829 = vadd.f32 %v827, %v828
  %v830 = vsel %vm762, %v732, 0.0
  %v831 = vadd.f32 %v829, %v830
  %v832 = vsel %vm762, %v733, 0.0
  %v833 = vadd.f32 %v831, %v832
  %v834 = vsel %vm762, %v734, 0.0
  %v835 = vadd.f32 %v833, %v834
  %v836 = vsel %vm762, %v735, 0.0
  %v837 = vadd.f32 %v835, %v836
  %v838 = vsel %vm762, %v736, 0.0
  %v839 = vadd.f32 %v837, %v838
  %v840 = vsel %vm762, %v737, 0.0
  %v841 = vadd.f32 %v839, %v840
  %v842 = vsel %vm762, %v738, 0.0
  %v843 = vadd.f32 %v841, %v842
  %v844 = vsel %vm762, %v739, 0.0
  %v845 = vadd.f32 %v843, %v844
  %v846 = vsel %vm762, %v740, 0.0
  %v847 = vadd.f32 %v845, %v846
  %v848 = vsel %vm762, %v741, 0.0
  %v849 = vadd.f32 %v847, %v848
  %v850 = vsel %vm762, %v742, 0.0
  %v851 = vadd.f32 %v849, %v850
  %v852 = vsel %vm762, %v743, 0.0
  %v853 = vadd.f32 %v851, %v852
  %v854 = vsel %vm762, %v744, 0.0
  %v855 = vadd.f32 %v853, %v854
  %v856 = vsel %vm762, %v745, 0.0
  %v857 = vadd.f32 %v855, %v856
  %v858 = vsel %vm762, %v746, 0.0
  %v859 = vadd.f32 %v857, %v858
  %v860 = vsel %vm762, %v747, 0.0
  %v861 = vadd.f32 %v859, %v860
  %v862 = vsel %vm762, %v748, 0.0
  %v863 = vadd.f32 %v861, %v862
  %v864 = vsel %vm762, %v749, 0.0
  %v865 = vadd.f32 %v863, %v864
  %v866 = vsel %vm762, %v750, 0.0
  %v867 = vadd.f32 %v865, %v866
  %v868 = vsel %vm762, %v751, 0.0
  %v869 = vadd.f32 %v867, %v868
  %v870 = vsel %vm762, %v752, 0.0
  %v871 = vadd.f32 %v869, %v870
  %v872 = vsel %vm762, %v753, 0.0
  %v873 = vadd.f32 %v871, %v872
  %v874 = vsel %vm762, %v754, 0.0
  %v875 = vadd.f32 %v873, %v874
  %v876 = vsel %vm762, %v755, 0.0
  %v877 = vadd.f32 %v875, %v876
  %v878 = vsel %vm762, %v756, 0.0
  %v879 = vadd.f32 %v877, %v878
  %v880 = vsel %vm762, %v757, 0.0
  %v881 = vadd.f32 %v879, %v880
  %v882 = vsel %vm762, %v758, 0.0
  %v883 = vadd.f32 %v881, %v882
  %v884 = vsel %vm762, %v759, 0.0
  %v885 = vadd.f32 %v883, %v884
  %v886 = vsel %vm762, %v760, 0.0
  %v887 = vadd.f32 %v885, %v886
  %v888 = vsel %vm762, %v761, 0.0
  %v889 = vadd.f32 %v887, %v888
  %v890 = vrot.slane %v889, 4
  %v891 = vadd.f32 %v889, %v890
  %v892 = vrot.slane %v891, 2
  %v893 = vadd.f32 %v891, %v892
  %v894 = vrot.slane %v893, 1
  %v895 = vadd.f32 %v893, %v894
  %v896 = vmul.f32 %v895, 0.001953125
  %v897 = vsub.f32 %v698, %v896
  %v898 = vsub.f32 %v699, %v896
  %v899 = vsub.f32 %v700, %v896
  %v900 = vsub.f32 %v701, %v896
  %v901 = vsub.f32 %v702, %v896
  %v902 = vsub.f32 %v703, %v896
  %v903 = vsub.f32 %v704, %v896
  %v904 = vsub.f32 %v705, %v896
  %v905 = vsub.f32 %v706, %v896
  %v906 = vsub.f32 %v707, %v896
  %v907 = vsub.f32 %v708, %v896
  %v908 = vsub.f32 %v709, %v896
  %v909 = vsub.f32 %v710, %v896
  %v910 = vsub.f32 %v711, %v896
  %v911 = vsub.f32 %v712, %v896
  %v912 = vsub.f32 %v713, %v896
  %v913 = vsub.f32 %v714, %v896
  %v914 = vsub.f32 %v715, %v896
  %v915 = vsub.f32 %v716, %v896
  %v916 = vsub.f32 %v717, %v896
  %v917 = vsub.f32 %v718, %v896
  %v918 = vsub.f32 %v719, %v896
  %v919 = vsub.f32 %v720, %v896
  %v920 = vsub.f32 %v721, %v896
  %v921 = vsub.f32 %v722, %v896
  %v922 = vsub.f32 %v723, %v896
  %v923 = vsub.f32 %v724, %v896
  %v924 = vsub.f32 %v725, %v896
  %v925 = vsub.f32 %v726, %v896
  %v926 = vsub.f32 %v727, %v896
  %v927 = vsub.f32 %v728, %v896
  %v928 = vsub.f32 %v729, %v896
  %v929 = vsub.f32 %v730, %v896
  %v930 = vsub.f32 %v731, %v896
  %v931 = vsub.f32 %v732, %v896
  %v932 = vsub.f32 %v733, %v896
  %v933 = vsub.f32 %v734, %v896
  %v934 = vsub.f32 %v735, %v896
  %v935 = vsub.f32 %v736, %v896
  %v936 = vsub.f32 %v737, %v896
  %v937 = vsub.f32 %v738, %v896
  %v938 = vsub.f32 %v739, %v896
  %v939 = vsub.f32 %v740, %v896
  %v940 = vsub.f32 %v741, %v896
  %v941 = vsub.f32 %v742, %v896
  %v942 = vsub.f32 %v743, %v896
  %v943 = vsub.f32 %v744, %v896
  %v944 = vsub.f32 %v745, %v896
  %v945 = vsub.f32 %v746, %v896
  %v946 = vsub.f32 %v747, %v896
  %v947 = vsub.f32 %v748, %v896
  %v948 = vsub.f32 %v749, %v896
  %v949 = vsub.f32 %v750, %v896
  %v950 = vsub.f32 %v751, %v896
  %v951 = vsub.f32 %v752, %v896
  %v952 = vsub.f32 %v753, %v896
  %v953 = vsub.f32 %v754, %v896
  %v954 = vsub.f32 %v755, %v896
  %v955 = vsub.f32 %v756, %v896
  %v956 = vsub.f32 %v757, %v896
  %v957 = vsub.f32 %v758, %v896
  %v958 = vsub.f32 %v759, %v896
  %v959 = vsub.f32 %v760, %v896
  %v960 = vsub.f32 %v761, %v896
  %v961 = vmul.f32 %v897, %v897
  %v962 = vmul.f32 %v898, %v898
  %v963 = vmul.f32 %v899, %v899
  %v964 = vmul.f32 %v900, %v900
  %v965 = vmul.f32 %v901, %v901
  %v966 = vmul.f32 %v902, %v902
  %v967 = vmul.f32 %v903, %v903
  %v968 = vmul.f32 %v904, %v904
  %v969 = vmul.f32 %v905, %v905
  %v970 = vmul.f32 %v906, %v906
  %v971 = vmul.f32 %v907, %v907
  %v972 = vmul.f32 %v908, %v908
  %v973 = vmul.f32 %v909, %v909
  %v974 = vmul.f32 %v910, %v910
  %v975 = vmul.f32 %v911, %v911
  %v976 = vmul.f32 %v912, %v912
  %v977 = vmul.f32 %v913, %v913
  %v978 = vmul.f32 %v914, %v914
  %v979 = vmul.f32 %v915, %v915
  %v980 = vmul.f32 %v916, %v916
  %v981 = vmul.f32 %v917, %v917
  %v982 = vmul.f32 %v918, %v918
  %v983 = vmul.f32 %v919, %v919
  %v984 = vmul.f32 %v920, %v920
  %v985 = vmul.f32 %v921, %v921
  %v986 = vmul.f32 %v922, %v922
  %v987 = vmul.f32 %v923, %v923
  %v988 = vmul.f32 %v924, %v924
  %v989 = vmul.f32 %v925, %v925
  %v990 = vmul.f32 %v926, %v926
  %v991 = vmul.f32 %v927, %v927
  %v992 = vmul.f32 %v928, %v928
  %v993 = vmul.f32 %v929, %v929
  %v994 = vmul.f32 %v930, %v930
  %v995 = vmul.f32 %v931, %v931
  %v996 = vmul.f32 %v932, %v932
  %v997 = vmul.f32 %v933, %v933
  %v998 = vmul.f32 %v934, %v934
  %v999 = vmul.f32 %v935, %v935
  %v1000 = vmul.f32 %v936, %v936
  %v1001 = vmul.f32 %v937, %v937
  %v1002 = vmul.f32 %v938, %v938
  %v1003 = vmul.f32 %v939, %v939
  %v1004 = vmul.f32 %v940, %v940
  %v1005 = vmul.f32 %v941, %v941
  %v1006 = vmul.f32 %v942, %v942
  %v1007 = vmul.f32 %v943, %v943
  %v1008 = vmul.f32 %v944, %v944
  %v1009 = vmul.f32 %v945, %v945
  %v1010 = vmul.f32 %v946, %v946
  %v1011 = vmul.f32 %v947, %v947
  %v1012 = vmul.f32 %v948, %v948
  %v1013 = vmul.f32 %v949, %v949
  %v1014 = vmul.f32 %v950, %v950
  %v1015 = vmul.f32 %v951, %v951
  %v1016 = vmul.f32 %v952, %v952
  %v1017 = vmul.f32 %v953, %v953
  %v1018 = vmul.f32 %v954, %v954
  %v1019 = vmul.f32 %v955, %v955
  %v1020 = vmul.f32 %v956, %v956
  %v1021 = vmul.f32 %v957, %v957
  %v1022 = vmul.f32 %v958, %v958
  %v1023 = vmul.f32 %v959, %v959
  %v1024 = vmul.f32 %v960, %v960
  %v1025 = vsel %vm762, %v961, 0.0
  %v1026 = vsel %vm762, %v962, 0.0
  %v1027 = vadd.f32 %v1025, %v1026
  %v1028 = vsel %vm762, %v963, 0.0
  %v1029 = vadd.f32 %v1027, %v1028
  %v1030 = vsel %vm762, %v964, 0.0
  %v1031 = vadd.f32 %v1029, %v1030
  %v1032 = vsel %vm762, %v965, 0.0
  %v1033 = vadd.f32 %v1031, %v1032
  %v1034 = vsel %vm762, %v966, 0.0
  %v1035 = vadd.f32 %v1033, %v1034
  %v1036 = vsel %vm762, %v967, 0.0
  %v1037 = vadd.f32 %v1035, %v1036
  %v1038 = vsel %vm762, %v968, 0.0
  %v1039 = vadd.f32 %v1037, %v1038
  %v1040 = vsel %vm762, %v969, 0.0
  %v1041 = vadd.f32 %v1039, %v1040
  %v1042 = vsel %vm762, %v970, 0.0
  %v1043 = vadd.f32 %v1041, %v1042
  %v1044 = vsel %vm762, %v971, 0.0
  %v1045 = vadd.f32 %v1043, %v1044
  %v1046 = vsel %vm762, %v972, 0.0
  %v1047 = vadd.f32 %v1045, %v1046
  %v1048 = vsel %vm762, %v973, 0.0
  %v1049 = vadd.f32 %v1047, %v1048
  %v1050 = vsel %vm762, %v974, 0.0
  %v1051 = vadd.f32 %v1049, %v1050
  %v1052 = vsel %vm762, %v975, 0.0
  %v1053 = vadd.f32 %v1051, %v1052
  %v1054 = vsel %vm762, %v976, 0.0
  %v1055 = vadd.f32 %v1053, %v1054
  %v1056 = vsel %vm762, %v977, 0.0
  %v1057 = vadd.f32 %v1055, %v1056
  %v1058 = vsel %vm762, %v978, 0.0
  %v1059 = vadd.f32 %v1057, %v1058
  %v1060 = vsel %vm762, %v979, 0.0
  %v1061 = vadd.f32 %v1059, %v1060
  %v1062 = vsel %vm762, %v980, 0.0
  %v1063 = vadd.f32 %v1061, %v1062
  %v1064 = vsel %vm762, %v981, 0.0
  %v1065 = vadd.f32 %v1063, %v1064
  %v1066 = vsel %vm762, %v982, 0.0
  %v1067 = vadd.f32 %v1065, %v1066
  %v1068 = vsel %vm762, %v983, 0.0
  %v1069 = vadd.f32 %v1067, %v1068
  %v1070 = vsel %vm762, %v984, 0.0
  %v1071 = vadd.f32 %v1069, %v1070
  %v1072 = vsel %vm762, %v985, 0.0
  %v1073 = vadd.f32 %v1071, %v1072
  %v1074 = vsel %vm762, %v986, 0.0
  %v1075 = vadd.f32 %v1073, %v1074
  %v1076 = vsel %vm762, %v987, 0.0
  %v1077 = vadd.f32 %v1075, %v1076
  %v1078 = vsel %vm762, %v988, 0.0
  %v1079 = vadd.f32 %v1077, %v1078
  %v1080 = vsel %vm762, %v989, 0.0
  %v1081 = vadd.f32 %v1079, %v1080
  %v1082 = vsel %vm762, %v990, 0.0
  %v1083 = vadd.f32 %v1081, %v1082
  %v1084 = vsel %vm762, %v991, 0.0
  %v1085 = vadd.f32 %v1083, %v1084
  %v1086 = vsel %vm762, %v992, 0.0
  %v1087 = vadd.f32 %v1085, %v1086
  %v1088 = vsel %vm762, %v993, 0.0
  %v1089 = vadd.f32 %v1087, %v1088
  %v1090 = vsel %vm762, %v994, 0.0
  %v1091 = vadd.f32 %v1089, %v1090
  %v1092 = vsel %vm762, %v995, 0.0
  %v1093 = vadd.f32 %v1091, %v1092
  %v1094 = vsel %vm762, %v996, 0.0
  %v1095 = vadd.f32 %v1093, %v1094
  %v1096 = vsel %vm762, %v997, 0.0
  %v1097 = vadd.f32 %v1095, %v1096
  %v1098 = vsel %vm762, %v998, 0.0
  %v1099 = vadd.f32 %v1097, %v1098
  %v1100 = vsel %vm762, %v999, 0.0
  %v1101 = vadd.f32 %v1099, %v1100
  %v1102 = vsel %vm762, %v1000, 0.0
  %v1103 = vadd.f32 %v1101, %v1102
  %v1104 = vsel %vm762, %v1001, 0.0
  %v1105 = vadd.f32 %v1103, %v1104
  %v1106 = vsel %vm762, %v1002, 0.0
  %v1107 = vadd.f32 %v1105, %v1106
  %v1108 = vsel %vm762, %v1003, 0.0
  %v1109 = vadd.f32 %v1107, %v1108
  %v1110 = vsel %vm762, %v1004, 0.0
  %v1111 = vadd.f32 %v1109, %v1110
  %v1112 = vsel %vm762, %v1005, 0.0
  %v1113 = vadd.f32 %v1111, %v1112
  %v1114 = vsel %vm762, %v1006, 0.0
  %v1115 = vadd.f32 %v1113, %v1114
  %v1116 = vsel %vm762, %v1007, 0.0
  %v1117 = vadd.f32 %v1115, %v1116
  %v1118 = vsel %vm762, %v1008, 0.0
  %v1119 = vadd.f32 %v1117, %v1118
  %v1120 = vsel %vm762, %v1009, 0.0
  %v1121 = vadd.f32 %v1119, %v1120
  %v1122 = vsel %vm762, %v1010, 0.0
  %v1123 = vadd.f32 %v1121, %v1122
  %v1124 = vsel %vm762, %v1011, 0.0
  %v1125 = vadd.f32 %v1123, %v1124
  %v1126 = vsel %vm762, %v1012, 0.0
  %v1127 = vadd.f32 %v1125, %v1126
  %v1128 = vsel %vm762, %v1013, 0.0
  %v1129 = vadd.f32 %v1127, %v1128
  %v1130 = vsel %vm762, %v1014, 0.0
  %v1131 = vadd.f32 %v1129, %v1130
  %v1132 = vsel %vm762, %v1015, 0.0
  %v1133 = vadd.f32 %v1131, %v1132
  %v1134 = vsel %vm762, %v1016, 0.0
  %v1135 = vadd.f32 %v1133, %v1134
  %v1136 = vsel %vm762, %v1017, 0.0
  %v1137 = vadd.f32 %v1135, %v1136
  %v1138 = vsel %vm762, %v1018, 0.0
  %v1139 = vadd.f32 %v1137, %v1138
  %v1140 = vsel %vm762, %v1019, 0.0
  %v1141 = vadd.f32 %v1139, %v1140
  %v1142 = vsel %vm762, %v1020, 0.0
  %v1143 = vadd.f32 %v1141, %v1142
  %v1144 = vsel %vm762, %v1021, 0.0
  %v1145 = vadd.f32 %v1143, %v1144
  %v1146 = vsel %vm762, %v1022, 0.0
  %v1147 = vadd.f32 %v1145, %v1146
  %v1148 = vsel %vm762, %v1023, 0.0
  %v1149 = vadd.f32 %v1147, %v1148
  %v1150 = vsel %vm762, %v1024, 0.0
  %v1151 = vadd.f32 %v1149, %v1150
  %v1152 = vrot.slane %v1151, 4
  %v1153 = vadd.f32 %v1151, %v1152
  %v1154 = vrot.slane %v1153, 2
  %v1155 = vadd.f32 %v1153, %v1154
  %v1156 = vrot.slane %v1155, 1
  %v1157 = vadd.f32 %v1155, %v1156
  %v1158 = vmul.f32 %v1157, 0.001953125
  %v1159 = vadd.f32 %v1158, 0.8
  %v1160 = vrsqrt.pop %v1159
  %v1161 = vmul.f32 %v897, %v1160
  %v1162 = vmul.f32 %v898, %v1160
  %v1163 = vmul.f32 %v899, %v1160
  %v1164 = vmul.f32 %v900, %v1160
  %v1165 = vmul.f32 %v901, %v1160
  %v1166 = vmul.f32 %v902, %v1160
  %v1167 = vmul.f32 %v903, %v1160
  %v1168 = vmul.f32 %v904, %v1160
  %v1169 = vmul.f32 %v905, %v1160
  %v1170 = vmul.f32 %v906, %v1160
  %v1171 = vmul.f32 %v907, %v1160
  %v1172 = vmul.f32 %v908, %v1160
  %v1173 = vmul.f32 %v909, %v1160
  %v1174 = vmul.f32 %v910, %v1160
  %v1175 = vmul.f32 %v911, %v1160
  %v1176 = vmul.f32 %v912, %v1160
  %v1177 = vmul.f32 %v913, %v1160
  %v1178 = vmul.f32 %v914, %v1160
  %v1179 = vmul.f32 %v915, %v1160
  %v1180 = vmul.f32 %v916, %v1160
  %v1181 = vmul.f32 %v917, %v1160
  %v1182 = vmul.f32 %v918, %v1160
  %v1183 = vmul.f32 %v919, %v1160
  %v1184 = vmul.f32 %v920, %v1160
  %v1185 = vmul.f32 %v921, %v1160
  %v1186 = vmul.f32 %v922, %v1160
  %v1187 = vmul.f32 %v923, %v1160
  %v1188 = vmul.f32 %v924, %v1160
  %v1189 = vmul.f32 %v925, %v1160
  %v1190 = vmul.f32 %v926, %v1160
  %v1191 = vmul.f32 %v927, %v1160
  %v1192 = vmul.f32 %v928, %v1160
  %v1193 = vmul.f32 %v929, %v1160
  %v1194 = vmul.f32 %v930, %v1160
  %v1195 = vmul.f32 %v931, %v1160
  %v1196 = vmul.f32 %v932, %v1160
  %v1197 = vmul.f32 %v933, %v1160
  %v1198 = vmul.f32 %v934, %v1160
  %v1199 = vmul.f32 %v935, %v1160
  %v1200 = vmul.f32 %v936, %v1160
  %v1201 = vmul.f32 %v937, %v1160
  %v1202 = vmul.f32 %v938, %v1160
  %v1203 = vmul.f32 %v939, %v1160
  %v1204 = vmul.f32 %v940, %v1160
  %v1205 = vmul.f32 %v941, %v1160
  %v1206 = vmul.f32 %v942, %v1160
  %v1207 = vmul.f32 %v943, %v1160
  %v1208 = vmul.f32 %v944, %v1160
  %v1209 = vmul.f32 %v945, %v1160
  %v1210 = vmul.f32 %v946, %v1160
  %v1211 = vmul.f32 %v947, %v1160
  %v1212 = vmul.f32 %v948, %v1160
  %v1213 = vmul.f32 %v949, %v1160
  %v1214 = vmul.f32 %v950, %v1160
  %v1215 = vmul.f32 %v951, %v1160
  %v1216 = vmul.f32 %v952, %v1160
  %v1217 = vmul.f32 %v953, %v1160
  %v1218 = vmul.f32 %v954, %v1160
  %v1219 = vmul.f32 %v955, %v1160
  %v1220 = vmul.f32 %v956, %v1160
  %v1221 = vmul.f32 %v957, %v1160
  %v1222 = vmul.f32 %v958, %v1160
  %v1223 = vmul.f32 %v959, %v1160
  %v1224 = vmul.f32 %v960, %v1160
  %v1226 = vlaneseq
  %v1227 = vshrl.u32 %v1226, 7
  %v1228 = vsub.s32 0, %v1227
  %v1229 = vrot.slane %v164, %v1228
  %v1231 = vmul.f32 %v1161, %v1229
  %v1232 = vmul.f32 %v1162, %v1229
  %v1233 = vmul.f32 %v1163, %v1229
  %v1234 = vmul.f32 %v1164, %v1229
  %v1235 = vmul.f32 %v1165, %v1229
  %v1236 = vmul.f32 %v1166, %v1229
  %v1237 = vmul.f32 %v1167, %v1229
  %v1238 = vmul.f32 %v1168, %v1229
  %v1239 = vmul.f32 %v1169, %v1229
  %v1240 = vmul.f32 %v1170, %v1229
  %v1241 = vmul.f32 %v1171, %v1229
  %v1242 = vmul.f32 %v1172, %v1229
  %v1243 = vmul.f32 %v1173, %v1229
  %v1244 = vmul.f32 %v1174, %v1229
  %v1245 = vmul.f32 %v1175, %v1229
  %v1246 = vmul.f32 %v1176, %v1229
  %v1247 = vmul.f32 %v1177, %v1229
  %v1248 = vmul.f32 %v1178, %v1229
  %v1249 = vmul.f32 %v1179, %v1229
  %v1250 = vmul.f32 %v1180, %v1229
  %v1251 = vmul.f32 %v1181, %v1229
  %v1252 = vmul.f32 %v1182, %v1229
  %v1253 = vmul.f32 %v1183, %v1229
  %v1254 = vmul.f32 %v1184, %v1229
  %v1255 = vmul.f32 %v1185, %v1229
  %v1256 = vmul.f32 %v1186, %v1229
  %v1257 = vmul.f32 %v1187, %v1229
  %v1258 = vmul.f32 %v1188, %v1229
  %v1259 = vmul.f32 %v1189, %v1229
  %v1260 = vmul.f32 %v1190, %v1229
  %v1261 = vmul.f32 %v1191, %v1229
  %v1262 = vmul.f32 %v1192, %v1229
  %v1263 = vmul.f32 %v1193, %v1229
  %v1264 = vmul.f32 %v1194, %v1229
  %v1265 = vmul.f32 %v1195, %v1229
  %v1266 = vmul.f32 %v1196, %v1229
  %v1267 = vmul.f32 %v1197, %v1229
  %v1268 = vmul.f32 %v1198, %v1229
  %v1269 = vmul.f32 %v1199, %v1229
  %v1270 = vmul.f32 %v1200, %v1229
  %v1271 = vmul.f32 %v1201, %v1229
  %v1272 = vmul.f32 %v1202, %v1229
  %v1273 = vmul.f32 %v1203, %v1229
  %v1274 = vmul.f32 %v1204, %v1229
  %v1275 = vmul.f32 %v1205, %v1229
  %v1276 = vmul.f32 %v1206, %v1229
  %v1277 = vmul.f32 %v1207, %v1229
  %v1278 = vmul.f32 %v1208, %v1229
  %v1279 = vmul.f32 %v1209, %v1229
  %v1280 = vmul.f32 %v1210, %v1229
  %v1281 = vmul.f32 %v1211, %v1229
  %v1282 = vmul.f32 %v1212, %v1229
  %v1283 = vmul.f32 %v1213, %v1229
  %v1284 = vmul.f32 %v1214, %v1229
  %v1285 = vmul.f32 %v1215, %v1229
  %v1286 = vmul.f32 %v1216, %v1229
  %v1287 = vmul.f32 %v1217, %v1229
  %v1288 = vmul.f32 %v1218, %v1229
  %v1289 = vmul.f32 %v1219, %v1229
  %v1290 = vmul.f32 %v1220, %v1229
  %v1291 = vmul.f32 %v1221, %v1229
  %v1292 = vmul.f32 %v1222, %v1229
  %v1293 = vmul.f32 %v1223, %v1229
  %v1294 = vmul.f32 %v1224, %v1229
  %v1296 = vlaneseq
  %v1297 = vshrl.u32 %v1296, 7
  %v1298 = vsub.s32 0, %v1297
  %v1299 = vrot.slane %v165, %v1298
  %v1301 = vadd.f32 %v1231, %v1299
  %v1302 = vadd.f32 %v1232, %v1299
  %v1303 = vadd.f32 %v1233, %v1299
  %v1304 = vadd.f32 %v1234, %v1299
  %v1305 = vadd.f32 %v1235, %v1299
  %v1306 = vadd.f32 %v1236, %v1299
  %v1307 = vadd.f32 %v1237, %v1299
  %v1308 = vadd.f32 %v1238, %v1299
  %v1309 = vadd.f32 %v1239, %v1299
  %v1310 = vadd.f32 %v1240, %v1299
  %v1311 = vadd.f32 %v1241, %v1299
  %v1312 = vadd.f32 %v1242, %v1299
  %v1313 = vadd.f32 %v1243, %v1299
  %v1314 = vadd.f32 %v1244, %v1299
  %v1315 = vadd.f32 %v1245, %v1299
  %v1316 = vadd.f32 %v1246, %v1299
  %v1317 = vadd.f32 %v1247, %v1299
  %v1318 = vadd.f32 %v1248, %v1299
  %v1319 = vadd.f32 %v1249, %v1299
  %v1320 = vadd.f32 %v1250, %v1299
  %v1321 = vadd.f32 %v1251, %v1299
  %v1322 = vadd.f32 %v1252, %v1299
  %v1323 = vadd.f32 %v1253, %v1299
  %v1324 = vadd.f32 %v1254, %v1299
  %v1325 = vadd.f32 %v1255, %v1299
  %v1326 = vadd.f32 %v1256, %v1299
  %v1327 = vadd.f32 %v1257, %v1299
  %v1328 = vadd.f32 %v1258, %v1299
  %v1329 = vadd.f32 %v1259, %v1299
  %v1330 = vadd.f32 %v1260, %v1299
  %v1331 = vadd.f32 %v1261, %v1299
  %v1332 = vadd.f32 %v1262, %v1299
  %v1333 = vadd.f32 %v1263, %v1299
  %v1334 = vadd.f32 %v1264, %v1299
  %v1335 = vadd.f32 %v1265, %v1299
  %v1336 = vadd.f32 %v1266, %v1299
  %v1337 = vadd.f32 %v1267, %v1299
  %v1338 = vadd.f32 %v1268, %v1299
  %v1339 = vadd.f32 %v1269, %v1299
  %v1340 = vadd.f32 %v1270, %v1299
  %v1341 = vadd.f32 %v1271, %v1299
  %v1342 = vadd.f32 %v1272, %v1299
  %v1343 = vadd.f32 %v1273, %v1299
  %v1344 = vadd.f32 %v1274, %v1299
  %v1345 = vadd.f32 %v1275, %v1299
  %v1346 = vadd.f32 %v1276, %v1299
  %v1347 = vadd.f32 %v1277, %v1299
  %v1348 = vadd.f32 %v1278, %v1299
  %v1349 = vadd.f32 %v1279, %v1299
  %v1350 = vadd.f32 %v1280, %v1299
  %v1351 = vadd.f32 %v1281, %v1299
  %v1352 = vadd.f32 %v1282, %v1299
  %v1353 = vadd.f32 %v1283, %v1299
  %v1354 = vadd.f32 %v1284, %v1299
  %v1355 = vadd.f32 %v1285, %v1299
  %v1356 = vadd.f32 %v1286, %v1299
  %v1357 = vadd.f32 %v1287, %v1299
  %v1358 = vadd.f32 %v1288, %v1299
  %v1359 = vadd.f32 %v1289, %v1299
  %v1360 = vadd.f32 %v1290, %v1299
  %v1361 = vadd.f32 %v1291, %v1299
  %v1362 = vadd.f32 %v1292, %v1299
  %v1363 = vadd.f32 %v1293, %v1299
  %v1364 = vadd.f32 %v1294, %v1299
  %v1365 = vld [vmem:[%s5] sm:$0xf]
  %v1366 = vld [vmem:[%s5 + $0x4] sm:$0xf]
  %v1367 = vld [vmem:[%s5 + $0x8] sm:$0xf]
  %v1368 = vld [vmem:[%s5 + $0xc] sm:$0xf]
  %v1369 = vld [vmem:[%s5 + $0x10] sm:$0xf]
  %v1370 = vld [vmem:[%s5 + $0x14] sm:$0xf]
  %v1371 = vld [vmem:[%s5 + $0x18] sm:$0xf]
  %v1372 = vld [vmem:[%s5 + $0x1c] sm:$0xf]
  %v1373 = vld [vmem:[%s5 + $0x20] sm:$0xf]
  %v1374 = vld [vmem:[%s5 + $0x24] sm:$0xf]
  %v1375 = vld [vmem:[%s5 + $0x28] sm:$0xf]
  %v1376 = vld [vmem:[%s5 + $0x2c] sm:$0xf]
  %v1377 = vld [vmem:[%s5 + $0x30] sm:$0xf]
  %v1378 = vld [vmem:[%s5 + $0x34] sm:$0xf]
  %v1379 = vld [vmem:[%s5 + $0x38] sm:$0xf]
  %v1380 = vld [vmem:[%s5 + $0x3c] sm:$0xf]
  %v1381 = vld [vmem:[%s5 + $0x40] sm:$0xf]
  %v1382 = vld [vmem:[%s5 + $0x44] sm:$0xf]
  %v1383 = vld [vmem:[%s6] sm:$0x1]
  %v1384 = vld [vmem:[%s7] sm:$0x1]
  %v1385 = vld [vmem:[%s8] sm:$0x1]
  %vm1451 = vcmask 1040384
  %v1452 = vrot.slane 0.0, 7
  %v1453 = vsel %vm1451, %v1452, %v1452
  %v1454 = vrot.slane %v1301, 7
  %v1455 = vrot.slane %v1302, 7
  %v1456 = vsel %vm1451, %v1454, %v1455
  %v1457 = vrot.slane %v1303, 7
  %v1458 = vrot.slane %v1304, 7
  %v1459 = vsel %vm1451, %v1457, %v1458
  %v1460 = vrot.slane %v1305, 7
  %v1461 = vrot.slane %v1306, 7
  %v1462 = vsel %vm1451, %v1460, %v1461
  %v1463 = vrot.slane %v1307, 7
  %v1464 = vrot.slane %v1308, 7
  %v1465 = vsel %vm1451, %v1463, %v1464
  %v1466 = vrot.slane %v1309, 7
  %v1467 = vrot.slane %v1310, 7
  %v1468 = vsel %vm1451, %v1466, %v1467
  %v1469 = vrot.slane %v1311, 7
  %v1470 = vrot.slane %v1312, 7
  %v1471 = vsel %vm1451, %v1469, %v1470
  %v1472 = vrot.slane %v1313, 7
  %v1473 = vrot.slane %v1314, 7
  %v1474 = vsel %vm1451, %v1472, %v1473
  %v1475 = vrot.slane %v1315, 7
  %v1476 = vrot.slane %v1316, 7
  %v1477 = vsel %vm1451, %v1475, %v1476
  %v1478 = vrot.slane %v1317, 7
  %v1479 = vrot.slane %v1318, 7
  %v1480 = vsel %vm1451, %v1478, %v1479
  %v1481 = vrot.slane %v1319, 7
  %v1482 = vrot.slane %v1320, 7
  %v1483 = vsel %vm1451, %v1481, %v1482
  %v1484 = vrot.slane %v1321, 7
  %v1485 = vrot.slane %v1322, 7
  %v1486 = vsel %vm1451, %v1484, %v1485
  %v1487 = vrot.slane %v1323, 7
  %v1488 = vrot.slane %v1324, 7
  %v1489 = vsel %vm1451, %v1487, %v1488
  %v1490 = vrot.slane %v1325, 7
  %v1491 = vrot.slane %v1326, 7
  %v1492 = vsel %vm1451, %v1490, %v1491
  %v1493 = vrot.slane %v1327, 7
  %v1494 = vrot.slane %v1328, 7
  %v1495 = vsel %vm1451, %v1493, %v1494
  %v1496 = vrot.slane %v1329, 7
  %v1497 = vrot.slane %v1330, 7
  %v1498 = vsel %vm1451, %v1496, %v1497
  %v1499 = vrot.slane %v1331, 7
  %v1500 = vrot.slane %v1332, 7
  %v1501 = vsel %vm1451, %v1499, %v1500
  %v1502 = vrot.slane %v1333, 7
  %v1503 = vrot.slane %v1334, 7
  %v1504 = vsel %vm1451, %v1502, %v1503
  %v1505 = vrot.slane %v1335, 7
  %v1506 = vrot.slane %v1336, 7
  %v1507 = vsel %vm1451, %v1505, %v1506
  %v1508 = vrot.slane %v1337, 7
  %v1509 = vrot.slane %v1338, 7
  %v1510 = vsel %vm1451, %v1508, %v1509
  %v1511 = vrot.slane %v1339, 7
  %v1512 = vrot.slane %v1340, 7
  %v1513 = vsel %vm1451, %v1511, %v1512
  %v1514 = vrot.slane %v1341, 7
  %v1515 = vrot.slane %v1342, 7
  %v1516 = vsel %vm1451, %v1514, %v1515
  %v1517 = vrot.slane %v1343, 7
  %v1518 = vrot.slane %v1344, 7
  %v1519 = vsel %vm1451, %v1517, %v1518
  %v1520 = vrot.slane %v1345, 7
  %v1521 = vrot.slane %v1346, 7
  %v1522 = vsel %vm1451, %v1520, %v1521
  %v1523 = vrot.slane %v1347, 7
  %v1524 = vrot.slane %v1348, 7
  %v1525 = vsel %vm1451, %v1523, %v1524
  %v1526 = vrot.slane %v1349, 7
  %v1527 = vrot.slane %v1350, 7
  %v1528 = vsel %vm1451, %v1526, %v1527
  %v1529 = vrot.slane %v1351, 7
  %v1530 = vrot.slane %v1352, 7
  %v1531 = vsel %vm1451, %v1529, %v1530
  %v1532 = vrot.slane %v1353, 7
  %v1533 = vrot.slane %v1354, 7
  %v1534 = vsel %vm1451, %v1532, %v1533
  %v1535 = vrot.slane %v1355, 7
  %v1536 = vrot.slane %v1356, 7
  %v1537 = vsel %vm1451, %v1535, %v1536
  %v1538 = vrot.slane %v1357, 7
  %v1539 = vrot.slane %v1358, 7
  %v1540 = vsel %vm1451, %v1538, %v1539
  %v1541 = vrot.slane %v1359, 7
  %v1542 = vrot.slane %v1360, 7
  %v1543 = vsel %vm1451, %v1541, %v1542
  %v1544 = vrot.slane %v1361, 7
  %v1545 = vrot.slane %v1362, 7
  %v1546 = vsel %vm1451, %v1544, %v1545
  %v1547 = vrot.slane %v1363, 7
  %v1548 = vrot.slane %v1364, 7
  %v1549 = vsel %vm1451, %v1547, %v1548
  %v1615 = vsel %vm1451, 0.0, %v1452
  %v1616 = vsel %vm1451, 0.0, %v1454
  %v1617 = vsel %vm1451, 0.0, %v1457
  %v1618 = vsel %vm1451, 0.0, %v1460
  %v1619 = vsel %vm1451, 0.0, %v1463
  %v1620 = vsel %vm1451, 0.0, %v1466
  %v1621 = vsel %vm1451, 0.0, %v1469
  %v1622 = vsel %vm1451, 0.0, %v1472
  %v1623 = vsel %vm1451, 0.0, %v1475
  %v1624 = vsel %vm1451, 0.0, %v1478
  %v1625 = vsel %vm1451, 0.0, %v1481
  %v1626 = vsel %vm1451, 0.0, %v1484
  %v1627 = vsel %vm1451, 0.0, %v1487
  %v1628 = vsel %vm1451, 0.0, %v1490
  %v1629 = vsel %vm1451, 0.0, %v1493
  %v1630 = vsel %vm1451, 0.0, %v1496
  %v1631 = vsel %vm1451, 0.0, %v1499
  %v1632 = vsel %vm1451, 0.0, %v1502
  %v1633 = vsel %vm1451, 0.0, %v1505
  %v1634 = vsel %vm1451, 0.0, %v1508
  %v1635 = vsel %vm1451, 0.0, %v1511
  %v1636 = vsel %vm1451, 0.0, %v1514
  %v1637 = vsel %vm1451, 0.0, %v1517
  %v1638 = vsel %vm1451, 0.0, %v1520
  %v1639 = vsel %vm1451, 0.0, %v1523
  %v1640 = vsel %vm1451, 0.0, %v1526
  %v1641 = vsel %vm1451, 0.0, %v1529
  %v1642 = vsel %vm1451, 0.0, %v1532
  %v1643 = vsel %vm1451, 0.0, %v1535
  %v1644 = vsel %vm1451, 0.0, %v1538
  %v1645 = vsel %vm1451, 0.0, %v1541
  %v1646 = vsel %vm1451, 0.0, %v1544
  %v1647 = vsel %vm1451, 0.0, %v1547
  %v1648 = vsel %vm1451, %v1452, 0.0
  %v1649 = vsel %vm1451, %v1455, 0.0
  %v1650 = vsel %vm1451, %v1458, 0.0
  %v1651 = vsel %vm1451, %v1461, 0.0
  %v1652 = vsel %vm1451, %v1464, 0.0
  %v1653 = vsel %vm1451, %v1467, 0.0
  %v1654 = vsel %vm1451, %v1470, 0.0
  %v1655 = vsel %vm1451, %v1473, 0.0
  %v1656 = vsel %vm1451, %v1476, 0.0
  %v1657 = vsel %vm1451, %v1479, 0.0
  %v1658 = vsel %vm1451, %v1482, 0.0
  %v1659 = vsel %vm1451, %v1485, 0.0
  %v1660 = vsel %vm1451, %v1488, 0.0
  %v1661 = vsel %vm1451, %v1491, 0.0
  %v1662 = vsel %vm1451, %v1494, 0.0
  %v1663 = vsel %vm1451, %v1497, 0.0
  %v1664 = vsel %vm1451, %v1500, 0.0
  %v1665 = vsel %vm1451, %v1503, 0.0
  %v1666 = vsel %vm1451, %v1506, 0.0
  %v1667 = vsel %vm1451, %v1509, 0.0
  %v1668 = vsel %vm1451, %v1512, 0.0
  %v1669 = vsel %vm1451, %v1515, 0.0
  %v1670 = vsel %vm1451, %v1518, 0.0
  %v1671 = vsel %vm1451, %v1521, 0.0
  %v1672 = vsel %vm1451, %v1524, 0.0
  %v1673 = vsel %vm1451, %v1527, 0.0
  %v1674 = vsel %vm1451, %v1530, 0.0
  %v1675 = vsel %vm1451, %v1533, 0.0
  %v1676 = vsel %vm1451, %v1536, 0.0
  %v1677 = vsel %vm1451, %v1539, 0.0
  %v1678 = vsel %vm1451, %v1542, 0.0
  %v1679 = vsel %vm1451, %v1545, 0.0
  %v1680 = vsel %vm1451, %v1548, 0.0
  %v1747 = vcombine.high %v1615, %v1615
  %v1749 = vunpack.c.l.s4 1983009808
  %v1750 = vunpack.c.0.s8 %v1749
  %v1751 = vlaneseq
  %v1752 = vshrl.u32 %v1751, 7
  %v1753 = vsub.s32 %v1750, %v1752
  %v1754 = vrot.slane %v1615, %v1753
  %v1756 = vunpack.c.l.s4 1983009808
  %v1757 = vunpack.c.0.s8 %v1756
  %v1758 = vlaneseq
  %v1759 = vshrl.u32 %v1758, 7
  %v1760 = vsub.s32 %v1757, %v1759
  %v1761 = vrot.slane %v1747, %v1760
  %v1762 = vcombine.high %v1754, %v1754
  %v1763 = vcombine.high %v1761, %v1761
  %v1764 = vcombine.high %v1453, %v1453
  %v1766 = vunpack.c.l.s4 1983009808
  %v1767 = vunpack.c.0.s8 %v1766
  %v1768 = vlaneseq
  %v1769 = vshrl.u32 %v1768, 7
  %v1770 = vsub.s32 %v1767, %v1769
  %v1771 = vrot.slane %v1453, %v1770
  %v1773 = vunpack.c.l.s4 1983009808
  %v1774 = vunpack.c.0.s8 %v1773
  %v1775 = vlaneseq
  %v1776 = vshrl.u32 %v1775, 7
  %v1777 = vsub.s32 %v1774, %v1776
  %v1778 = vrot.slane %v1764, %v1777
  %v1779 = vcombine.high %v1771, %v1771
  %v1780 = vcombine.high %v1778, %v1778
  %v1782 = vunpack.c.l.s4 1983009808
  %v1783 = vunpack.c.0.s8 %v1782
  %v1784 = vlaneseq
  %v1785 = vshrl.u32 %v1784, 7
  %v1786 = vsub.s32 %v1783, %v1785
  %v1787 = vrot.slane %v1648, %v1786
  %v1788 = vcombine.high %v1616, %v1616
  %v1790 = vunpack.c.l.s4 1983009808
  %v1791 = vunpack.c.0.s8 %v1790
  %v1792 = vlaneseq
  %v1793 = vshrl.u32 %v1792, 7
  %v1794 = vsub.s32 %v1791, %v1793
  %v1795 = vrot.slane %v1616, %v1794
  %v1797 = vunpack.c.l.s4 1983009808
  %v1798 = vunpack.c.0.s8 %v1797
  %v1799 = vlaneseq
  %v1800 = vshrl.u32 %v1799, 7
  %v1801 = vsub.s32 %v1798, %v1800
  %v1802 = vrot.slane %v1788, %v1801
  %v1803 = vcombine.high %v1795, %v1795
  %v1804 = vcombine.high %v1802, %v1802
  %v1805 = vcombine.high %v1456, %v1456
  %v1807 = vunpack.c.l.s4 1983009808
  %v1808 = vunpack.c.0.s8 %v1807
  %v1809 = vlaneseq
  %v1810 = vshrl.u32 %v1809, 7
  %v1811 = vsub.s32 %v1808, %v1810
  %v1812 = vrot.slane %v1456, %v1811
  %v1814 = vunpack.c.l.s4 1983009808
  %v1815 = vunpack.c.0.s8 %v1814
  %v1816 = vlaneseq
  %v1817 = vshrl.u32 %v1816, 7
  %v1818 = vsub.s32 %v1815, %v1817
  %v1819 = vrot.slane %v1805, %v1818
  %v1820 = vcombine.high %v1812, %v1812
  %v1821 = vcombine.high %v1819, %v1819
  %v1823 = vunpack.c.l.s4 1983009808
  %v1824 = vunpack.c.0.s8 %v1823
  %v1825 = vlaneseq
  %v1826 = vshrl.u32 %v1825, 7
  %v1827 = vsub.s32 %v1824, %v1826
  %v1828 = vrot.slane %v1649, %v1827
  %v1829 = vcombine.high %v1617, %v1617
  %v1831 = vunpack.c.l.s4 1983009808
  %v1832 = vunpack.c.0.s8 %v1831
  %v1833 = vlaneseq
  %v1834 = vshrl.u32 %v1833, 7
  %v1835 = vsub.s32 %v1832, %v1834
  %v1836 = vrot.slane %v1617, %v1835
  %v1838 = vunpack.c.l.s4 1983009808
  %v1839 = vunpack.c.0.s8 %v1838
  %v1840 = vlaneseq
  %v1841 = vshrl.u32 %v1840, 7
  %v1842 = vsub.s32 %v1839, %v1841
  %v1843 = vrot.slane %v1829, %v1842
  %v1844 = vcombine.high %v1836, %v1836
  %v1845 = vcombine.high %v1843, %v1843
  %v1846 = vcombine.high %v1459, %v1459
  %v1848 = vunpack.c.l.s4 1983009808
  %v1849 = vunpack.c.0.s8 %v1848
  %v1850 = vlaneseq
  %v1851 = vshrl.u32 %v1850, 7
  %v1852 = vsub.s32 %v1849, %v1851
  %v1853 = vrot.slane %v1459, %v1852
  %v1855 = vunpack.c.l.s4 1983009808
  %v1856 = vunpack.c.0.s8 %v1855
  %v1857 = vlaneseq
  %v1858 = vshrl.u32 %v1857, 7
  %v1859 = vsub.s32 %v1856, %v1858
  %v1860 = vrot.slane %v1846, %v1859
  %v1861 = vcombine.high %v1853, %v1853
  %v1862 = vcombine.high %v1860, %v1860
  %v1864 = vunpack.c.l.s4 1983009808
  %v1865 = vunpack.c.0.s8 %v1864
  %v1866 = vlaneseq
  %v1867 = vshrl.u32 %v1866, 7
  %v1868 = vsub.s32 %v1865, %v1867
  %v1869 = vrot.slane %v1650, %v1868
  %v1870 = vcombine.high %v1618, %v1618
  %v1872 = vunpack.c.l.s4 1983009808
  %v1873 = vunpack.c.0.s8 %v1872
  %v1874 = vlaneseq
  %v1875 = vshrl.u32 %v1874, 7
  %v1876 = vsub.s32 %v1873, %v1875
  %v1877 = vrot.slane %v1618, %v1876
  %v1879 = vunpack.c.l.s4 1983009808
  %v1880 = vunpack.c.0.s8 %v1879
  %v1881 = vlaneseq
  %v1882 = vshrl.u32 %v1881, 7
  %v1883 = vsub.s32 %v1880, %v1882
  %v1884 = vrot.slane %v1870, %v1883
  %v1885 = vcombine.high %v1877, %v1877
  %v1886 = vcombine.high %v1884, %v1884
  %v1887 = vcombine.high %v1462, %v1462
  %v1889 = vunpack.c.l.s4 1983009808
  %v1890 = vunpack.c.0.s8 %v1889
  %v1891 = vlaneseq
  %v1892 = vshrl.u32 %v1891, 7
  %v1893 = vsub.s32 %v1890, %v1892
  %v1894 = vrot.slane %v1462, %v1893
  %v1896 = vunpack.c.l.s4 1983009808
  %v1897 = vunpack.c.0.s8 %v1896
  %v1898 = vlaneseq
  %v1899 = vshrl.u32 %v1898, 7
  %v1900 = vsub.s32 %v1897, %v1899
  %v1901 = vrot.slane %v1887, %v1900
  %v1902 = vcombine.high %v1894, %v1894
  %v1903 = vcombine.high %v1901, %v1901
  %v1905 = vunpack.c.l.s4 1983009808
  %v1906 = vunpack.c.0.s8 %v1905
  %v1907 = vlaneseq
  %v1908 = vshrl.u32 %v1907, 7
  %v1909 = vsub.s32 %v1906, %v1908
  %v1910 = vrot.slane %v1651, %v1909
  %v1911 = vcombine.high %v1619, %v1619
  %v1913 = vunpack.c.l.s4 1983009808
  %v1914 = vunpack.c.0.s8 %v1913
  %v1915 = vlaneseq
  %v1916 = vshrl.u32 %v1915, 7
  %v1917 = vsub.s32 %v1914, %v1916
  %v1918 = vrot.slane %v1619, %v1917
  %v1920 = vunpack.c.l.s4 1983009808
  %v1921 = vunpack.c.0.s8 %v1920
  %v1922 = vlaneseq
  %v1923 = vshrl.u32 %v1922, 7
  %v1924 = vsub.s32 %v1921, %v1923
  %v1925 = vrot.slane %v1911, %v1924
  %v1926 = vcombine.high %v1918, %v1918
  %v1927 = vcombine.high %v1925, %v1925
  %v1928 = vcombine.high %v1465, %v1465
  %v1930 = vunpack.c.l.s4 1983009808
  %v1931 = vunpack.c.0.s8 %v1930
  %v1932 = vlaneseq
  %v1933 = vshrl.u32 %v1932, 7
  %v1934 = vsub.s32 %v1931, %v1933
  %v1935 = vrot.slane %v1465, %v1934
  %v1937 = vunpack.c.l.s4 1983009808
  %v1938 = vunpack.c.0.s8 %v1937
  %v1939 = vlaneseq
  %v1940 = vshrl.u32 %v1939, 7
  %v1941 = vsub.s32 %v1938, %v1940
  %v1942 = vrot.slane %v1928, %v1941
  %v1943 = vcombine.high %v1935, %v1935
  %v1944 = vcombine.high %v1942, %v1942
  %v1946 = vunpack.c.l.s4 1983009808
  %v1947 = vunpack.c.0.s8 %v1946
  %v1948 = vlaneseq
  %v1949 = vshrl.u32 %v1948, 7
  %v1950 = vsub.s32 %v1947, %v1949
  %v1951 = vrot.slane %v1652, %v1950
  %v1952 = vcombine.high %v1620, %v1620
  %v1954 = vunpack.c.l.s4 1983009808
  %v1955 = vunpack.c.0.s8 %v1954
  %v1956 = vlaneseq
  %v1957 = vshrl.u32 %v1956, 7
  %v1958 = vsub.s32 %v1955, %v1957
  %v1959 = vrot.slane %v1620, %v1958
  %v1961 = vunpack.c.l.s4 1983009808
  %v1962 = vunpack.c.0.s8 %v1961
  %v1963 = vlaneseq
  %v1964 = vshrl.u32 %v1963, 7
  %v1965 = vsub.s32 %v1962, %v1964
  %v1966 = vrot.slane %v1952, %v1965
  %v1967 = vcombine.high %v1959, %v1959
  %v1968 = vcombine.high %v1966, %v1966
  %v1969 = vcombine.high %v1468, %v1468
  %v1971 = vunpack.c.l.s4 1983009808
  %v1972 = vunpack.c.0.s8 %v1971
  %v1973 = vlaneseq
  %v1974 = vshrl.u32 %v1973, 7
  %v1975 = vsub.s32 %v1972, %v1974
  %v1976 = vrot.slane %v1468, %v1975
  %v1978 = vunpack.c.l.s4 1983009808
  %v1979 = vunpack.c.0.s8 %v1978
  %v1980 = vlaneseq
  %v1981 = vshrl.u32 %v1980, 7
  %v1982 = vsub.s32 %v1979, %v1981
  %v1983 = vrot.slane %v1969, %v1982
  %v1984 = vcombine.high %v1976, %v1976
  %v1985 = vcombine.high %v1983, %v1983
  %v1987 = vunpack.c.l.s4 1983009808
  %v1988 = vunpack.c.0.s8 %v1987
  %v1989 = vlaneseq
  %v1990 = vshrl.u32 %v1989, 7
  %v1991 = vsub.s32 %v1988, %v1990
  %v1992 = vrot.slane %v1653, %v1991
  %v1993 = vcombine.high %v1621, %v1621
  %v1995 = vunpack.c.l.s4 1983009808
  %v1996 = vunpack.c.0.s8 %v1995
  %v1997 = vlaneseq
  %v1998 = vshrl.u32 %v1997, 7
  %v1999 = vsub.s32 %v1996, %v1998
  %v2000 = vrot.slane %v1621, %v1999
  %v2002 = vunpack.c.l.s4 1983009808
  %v2003 = vunpack.c.0.s8 %v2002
  %v2004 = vlaneseq
  %v2005 = vshrl.u32 %v2004, 7
  %v2006 = vsub.s32 %v2003, %v2005
  %v2007 = vrot.slane %v1993, %v2006
  %v2008 = vcombine.high %v2000, %v2000
  %v2009 = vcombine.high %v2007, %v2007
  %v2010 = vcombine.high %v1471, %v1471
  %v2012 = vunpack.c.l.s4 1983009808
  %v2013 = vunpack.c.0.s8 %v2012
  %v2014 = vlaneseq
  %v2015 = vshrl.u32 %v2014, 7
  %v2016 = vsub.s32 %v2013, %v2015
  %v2017 = vrot.slane %v1471, %v2016
  %v2019 = vunpack.c.l.s4 1983009808
  %v2020 = vunpack.c.0.s8 %v2019
  %v2021 = vlaneseq
  %v2022 = vshrl.u32 %v2021, 7
  %v2023 = vsub.s32 %v2020, %v2022
  %v2024 = vrot.slane %v2010, %v2023
  %v2025 = vcombine.high %v2017, %v2017
  %v2026 = vcombine.high %v2024, %v2024
  %v2028 = vunpack.c.l.s4 1983009808
  %v2029 = vunpack.c.0.s8 %v2028
  %v2030 = vlaneseq
  %v2031 = vshrl.u32 %v2030, 7
  %v2032 = vsub.s32 %v2029, %v2031
  %v2033 = vrot.slane %v1654, %v2032
  %v2034 = vcombine.high %v1622, %v1622
  %v2036 = vunpack.c.l.s4 1983009808
  %v2037 = vunpack.c.0.s8 %v2036
  %v2038 = vlaneseq
  %v2039 = vshrl.u32 %v2038, 7
  %v2040 = vsub.s32 %v2037, %v2039
  %v2041 = vrot.slane %v1622, %v2040
  %v2043 = vunpack.c.l.s4 1983009808
  %v2044 = vunpack.c.0.s8 %v2043
  %v2045 = vlaneseq
  %v2046 = vshrl.u32 %v2045, 7
  %v2047 = vsub.s32 %v2044, %v2046
  %v2048 = vrot.slane %v2034, %v2047
  %v2049 = vcombine.high %v2041, %v2041
  %v2050 = vcombine.high %v2048, %v2048
  %v2051 = vcombine.high %v1474, %v1474
  %v2053 = vunpack.c.l.s4 1983009808
  %v2054 = vunpack.c.0.s8 %v2053
  %v2055 = vlaneseq
  %v2056 = vshrl.u32 %v2055, 7
  %v2057 = vsub.s32 %v2054, %v2056
  %v2058 = vrot.slane %v1474, %v2057
  %v2060 = vunpack.c.l.s4 1983009808
  %v2061 = vunpack.c.0.s8 %v2060
  %v2062 = vlaneseq
  %v2063 = vshrl.u32 %v2062, 7
  %v2064 = vsub.s32 %v2061, %v2063
  %v2065 = vrot.slane %v2051, %v2064
  %v2066 = vcombine.high %v2058, %v2058
  %v2067 = vcombine.high %v2065, %v2065
  %v2069 = vunpack.c.l.s4 1983009808
  %v2070 = vunpack.c.0.s8 %v2069
  %v2071 = vlaneseq
  %v2072 = vshrl.u32 %v2071, 7
  %v2073 = vsub.s32 %v2070, %v2072
  %v2074 = vrot.slane %v1655, %v2073
  %v2075 = vcombine.high %v1623, %v1623
  %v2077 = vunpack.c.l.s4 1983009808
  %v2078 = vunpack.c.0.s8 %v2077
  %v2079 = vlaneseq
  %v2080 = vshrl.u32 %v2079, 7
  %v2081 = vsub.s32 %v2078, %v2080
  %v2082 = vrot.slane %v1623, %v2081
  %v2084 = vunpack.c.l.s4 1983009808
  %v2085 = vunpack.c.0.s8 %v2084
  %v2086 = vlaneseq
  %v2087 = vshrl.u32 %v2086, 7
  %v2088 = vsub.s32 %v2085, %v2087
  %v2089 = vrot.slane %v2075, %v2088
  %v2090 = vcombine.high %v2082, %v2082
  %v2091 = vcombine.high %v2089, %v2089
  %v2092 = vcombine.high %v1477, %v1477
  %v2094 = vunpack.c.l.s4 1983009808
  %v2095 = vunpack.c.0.s8 %v2094
  %v2096 = vlaneseq
  %v2097 = vshrl.u32 %v2096, 7
  %v2098 = vsub.s32 %v2095, %v2097
  %v2099 = vrot.slane %v1477, %v2098
  %v2101 = vunpack.c.l.s4 1983009808
  %v2102 = vunpack.c.0.s8 %v2101
  %v2103 = vlaneseq
  %v2104 = vshrl.u32 %v2103, 7
  %v2105 = vsub.s32 %v2102, %v2104
  %v2106 = vrot.slane %v2092, %v2105
  %v2107 = vcombine.high %v2099, %v2099
  %v2108 = vcombine.high %v2106, %v2106
  %v2110 = vunpack.c.l.s4 1983009808
  %v2111 = vunpack.c.0.s8 %v2110
  %v2112 = vlaneseq
  %v2113 = vshrl.u32 %v2112, 7
  %v2114 = vsub.s32 %v2111, %v2113
  %v2115 = vrot.slane %v1656, %v2114
  %v2116 = vcombine.high %v1624, %v1624
  %v2118 = vunpack.c.l.s4 1983009808
  %v2119 = vunpack.c.0.s8 %v2118
  %v2120 = vlaneseq
  %v2121 = vshrl.u32 %v2120, 7
  %v2122 = vsub.s32 %v2119, %v2121
  %v2123 = vrot.slane %v1624, %v2122
  %v2125 = vunpack.c.l.s4 1983009808
  %v2126 = vunpack.c.0.s8 %v2125
  %v2127 = vlaneseq
  %v2128 = vshrl.u32 %v2127, 7
  %v2129 = vsub.s32 %v2126, %v2128
  %v2130 = vrot.slane %v2116, %v2129
  %v2131 = vcombine.high %v2123, %v2123
  %v2132 = vcombine.high %v2130, %v2130
  %v2133 = vcombine.high %v1480, %v1480
  %v2135 = vunpack.c.l.s4 1983009808
  %v2136 = vunpack.c.0.s8 %v2135
  %v2137 = vlaneseq
  %v2138 = vshrl.u32 %v2137, 7
  %v2139 = vsub.s32 %v2136, %v2138
  %v2140 = vrot.slane %v1480, %v2139
  %v2142 = vunpack.c.l.s4 1983009808
  %v2143 = vunpack.c.0.s8 %v2142
  %v2144 = vlaneseq
  %v2145 = vshrl.u32 %v2144, 7
  %v2146 = vsub.s32 %v2143, %v2145
  %v2147 = vrot.slane %v2133, %v2146
  %v2148 = vcombine.high %v2140, %v2140
  %v2149 = vcombine.high %v2147, %v2147
  %v2151 = vunpack.c.l.s4 1983009808
  %v2152 = vunpack.c.0.s8 %v2151
  %v2153 = vlaneseq
  %v2154 = vshrl.u32 %v2153, 7
  %v2155 = vsub.s32 %v2152, %v2154
  %v2156 = vrot.slane %v1657, %v2155
  %v2157 = vcombine.high %v1625, %v1625
  %v2159 = vunpack.c.l.s4 1983009808
  %v2160 = vunpack.c.0.s8 %v2159
  %v2161 = vlaneseq
  %v2162 = vshrl.u32 %v2161, 7
  %v2163 = vsub.s32 %v2160, %v2162
  %v2164 = vrot.slane %v1625, %v2163
  %v2166 = vunpack.c.l.s4 1983009808
  %v2167 = vunpack.c.0.s8 %v2166
  %v2168 = vlaneseq
  %v2169 = vshrl.u32 %v2168, 7
  %v2170 = vsub.s32 %v2167, %v2169
  %v2171 = vrot.slane %v2157, %v2170
  %v2172 = vcombine.high %v2164, %v2164
  %v2173 = vcombine.high %v2171, %v2171
  %v2174 = vcombine.high %v1483, %v1483
  %v2176 = vunpack.c.l.s4 1983009808
  %v2177 = vunpack.c.0.s8 %v2176
  %v2178 = vlaneseq
  %v2179 = vshrl.u32 %v2178, 7
  %v2180 = vsub.s32 %v2177, %v2179
  %v2181 = vrot.slane %v1483, %v2180
  %v2183 = vunpack.c.l.s4 1983009808
  %v2184 = vunpack.c.0.s8 %v2183
  %v2185 = vlaneseq
  %v2186 = vshrl.u32 %v2185, 7
  %v2187 = vsub.s32 %v2184, %v2186
  %v2188 = vrot.slane %v2174, %v2187
  %v2189 = vcombine.high %v2181, %v2181
  %v2190 = vcombine.high %v2188, %v2188
  %v2192 = vunpack.c.l.s4 1983009808
  %v2193 = vunpack.c.0.s8 %v2192
  %v2194 = vlaneseq
  %v2195 = vshrl.u32 %v2194, 7
  %v2196 = vsub.s32 %v2193, %v2195
  %v2197 = vrot.slane %v1658, %v2196
  %v2198 = vcombine.high %v1626, %v1626
  %v2200 = vunpack.c.l.s4 1983009808
  %v2201 = vunpack.c.0.s8 %v2200
  %v2202 = vlaneseq
  %v2203 = vshrl.u32 %v2202, 7
  %v2204 = vsub.s32 %v2201, %v2203
  %v2205 = vrot.slane %v1626, %v2204
  %v2207 = vunpack.c.l.s4 1983009808
  %v2208 = vunpack.c.0.s8 %v2207
  %v2209 = vlaneseq
  %v2210 = vshrl.u32 %v2209, 7
  %v2211 = vsub.s32 %v2208, %v2210
  %v2212 = vrot.slane %v2198, %v2211
  %v2213 = vcombine.high %v2205, %v2205
  %v2214 = vcombine.high %v2212, %v2212
  %v2215 = vcombine.high %v1486, %v1486
  %v2217 = vunpack.c.l.s4 1983009808
  %v2218 = vunpack.c.0.s8 %v2217
  %v2219 = vlaneseq
  %v2220 = vshrl.u32 %v2219, 7
  %v2221 = vsub.s32 %v2218, %v2220
  %v2222 = vrot.slane %v1486, %v2221
  %v2224 = vunpack.c.l.s4 1983009808
  %v2225 = vunpack.c.0.s8 %v2224
  %v2226 = vlaneseq
  %v2227 = vshrl.u32 %v2226, 7
  %v2228 = vsub.s32 %v2225, %v2227
  %v2229 = vrot.slane %v2215, %v2228
  %v2230 = vcombine.high %v2222, %v2222
  %v2231 = vcombine.high %v2229, %v2229
  %v2233 = vunpack.c.l.s4 1983009808
  %v2234 = vunpack.c.0.s8 %v2233
  %v2235 = vlaneseq
  %v2236 = vshrl.u32 %v2235, 7
  %v2237 = vsub.s32 %v2234, %v2236
  %v2238 = vrot.slane %v1659, %v2237
  %v2239 = vcombine.high %v1627, %v1627
  %v2241 = vunpack.c.l.s4 1983009808
  %v2242 = vunpack.c.0.s8 %v2241
  %v2243 = vlaneseq
  %v2244 = vshrl.u32 %v2243, 7
  %v2245 = vsub.s32 %v2242, %v2244
  %v2246 = vrot.slane %v1627, %v2245
  %v2248 = vunpack.c.l.s4 1983009808
  %v2249 = vunpack.c.0.s8 %v2248
  %v2250 = vlaneseq
  %v2251 = vshrl.u32 %v2250, 7
  %v2252 = vsub.s32 %v2249, %v2251
  %v2253 = vrot.slane %v2239, %v2252
  %v2254 = vcombine.high %v2246, %v2246
  %v2255 = vcombine.high %v2253, %v2253
  %v2256 = vcombine.high %v1489, %v1489
  %v2258 = vunpack.c.l.s4 1983009808
  %v2259 = vunpack.c.0.s8 %v2258
  %v2260 = vlaneseq
  %v2261 = vshrl.u32 %v2260, 7
  %v2262 = vsub.s32 %v2259, %v2261
  %v2263 = vrot.slane %v1489, %v2262
  %v2265 = vunpack.c.l.s4 1983009808
  %v2266 = vunpack.c.0.s8 %v2265
  %v2267 = vlaneseq
  %v2268 = vshrl.u32 %v2267, 7
  %v2269 = vsub.s32 %v2266, %v2268
  %v2270 = vrot.slane %v2256, %v2269
  %v2271 = vcombine.high %v2263, %v2263
  %v2272 = vcombine.high %v2270, %v2270
  %v2274 = vunpack.c.l.s4 1983009808
  %v2275 = vunpack.c.0.s8 %v2274
  %v2276 = vlaneseq
  %v2277 = vshrl.u32 %v2276, 7
  %v2278 = vsub.s32 %v2275, %v2277
  %v2279 = vrot.slane %v1660, %v2278
  %v2280 = vcombine.high %v1628, %v1628
  %v2282 = vunpack.c.l.s4 1983009808
  %v2283 = vunpack.c.0.s8 %v2282
  %v2284 = vlaneseq
  %v2285 = vshrl.u32 %v2284, 7
  %v2286 = vsub.s32 %v2283, %v2285
  %v2287 = vrot.slane %v1628, %v2286
  %v2289 = vunpack.c.l.s4 1983009808
  %v2290 = vunpack.c.0.s8 %v2289
  %v2291 = vlaneseq
  %v2292 = vshrl.u32 %v2291, 7
  %v2293 = vsub.s32 %v2290, %v2292
  %v2294 = vrot.slane %v2280, %v2293
  %v2295 = vcombine.high %v2287, %v2287
  %v2296 = vcombine.high %v2294, %v2294
  %v2297 = vcombine.high %v1492, %v1492
  %v2299 = vunpack.c.l.s4 1983009808
  %v2300 = vunpack.c.0.s8 %v2299
  %v2301 = vlaneseq
  %v2302 = vshrl.u32 %v2301, 7
  %v2303 = vsub.s32 %v2300, %v2302
  %v2304 = vrot.slane %v1492, %v2303
  %v2306 = vunpack.c.l.s4 1983009808
  %v2307 = vunpack.c.0.s8 %v2306
  %v2308 = vlaneseq
  %v2309 = vshrl.u32 %v2308, 7
  %v2310 = vsub.s32 %v2307, %v2309
  %v2311 = vrot.slane %v2297, %v2310
  %v2312 = vcombine.high %v2304, %v2304
  %v2313 = vcombine.high %v2311, %v2311
  %v2315 = vunpack.c.l.s4 1983009808
  %v2316 = vunpack.c.0.s8 %v2315
  %v2317 = vlaneseq
  %v2318 = vshrl.u32 %v2317, 7
  %v2319 = vsub.s32 %v2316, %v2318
  %v2320 = vrot.slane %v1661, %v2319
  %v2321 = vcombine.high %v1629, %v1629
  %v2323 = vunpack.c.l.s4 1983009808
  %v2324 = vunpack.c.0.s8 %v2323
  %v2325 = vlaneseq
  %v2326 = vshrl.u32 %v2325, 7
  %v2327 = vsub.s32 %v2324, %v2326
  %v2328 = vrot.slane %v1629, %v2327
  %v2330 = vunpack.c.l.s4 1983009808
  %v2331 = vunpack.c.0.s8 %v2330
  %v2332 = vlaneseq
  %v2333 = vshrl.u32 %v2332, 7
  %v2334 = vsub.s32 %v2331, %v2333
  %v2335 = vrot.slane %v2321, %v2334
  %v2336 = vcombine.high %v2328, %v2328
  %v2337 = vcombine.high %v2335, %v2335
  %v2338 = vcombine.high %v1495, %v1495
  %v2340 = vunpack.c.l.s4 1983009808
  %v2341 = vunpack.c.0.s8 %v2340
  %v2342 = vlaneseq
  %v2343 = vshrl.u32 %v2342, 7
  %v2344 = vsub.s32 %v2341, %v2343
  %v2345 = vrot.slane %v1495, %v2344
  %v2347 = vunpack.c.l.s4 1983009808
  %v2348 = vunpack.c.0.s8 %v2347
  %v2349 = vlaneseq
  %v2350 = vshrl.u32 %v2349, 7
  %v2351 = vsub.s32 %v2348, %v2350
  %v2352 = vrot.slane %v2338, %v2351
  %v2353 = vcombine.high %v2345, %v2345
  %v2354 = vcombine.high %v2352, %v2352
  %v2356 = vunpack.c.l.s4 1983009808
  %v2357 = vunpack.c.0.s8 %v2356
  %v2358 = vlaneseq
  %v2359 = vshrl.u32 %v2358, 7
  %v2360 = vsub.s32 %v2357, %v2359
  %v2361 = vrot.slane %v1662, %v2360
  %v2362 = vcombine.high %v1630, %v1630
  %v2364 = vunpack.c.l.s4 1983009808
  %v2365 = vunpack.c.0.s8 %v2364
  %v2366 = vlaneseq
  %v2367 = vshrl.u32 %v2366, 7
  %v2368 = vsub.s32 %v2365, %v2367
  %v2369 = vrot.slane %v1630, %v2368
  %v2371 = vunpack.c.l.s4 1983009808
  %v2372 = vunpack.c.0.s8 %v2371
  %v2373 = vlaneseq
  %v2374 = vshrl.u32 %v2373, 7
  %v2375 = vsub.s32 %v2372, %v2374
  %v2376 = vrot.slane %v2362, %v2375
  %v2377 = vcombine.high %v2369, %v2369
  %v2378 = vcombine.high %v2376, %v2376
  %v2379 = vcombine.high %v1498, %v1498
  %v2381 = vunpack.c.l.s4 1983009808
  %v2382 = vunpack.c.0.s8 %v2381
  %v2383 = vlaneseq
  %v2384 = vshrl.u32 %v2383, 7
  %v2385 = vsub.s32 %v2382, %v2384
  %v2386 = vrot.slane %v1498, %v2385
  %v2388 = vunpack.c.l.s4 1983009808
  %v2389 = vunpack.c.0.s8 %v2388
  %v2390 = vlaneseq
  %v2391 = vshrl.u32 %v2390, 7
  %v2392 = vsub.s32 %v2389, %v2391
  %v2393 = vrot.slane %v2379, %v2392
  %v2394 = vcombine.high %v2386, %v2386
  %v2395 = vcombine.high %v2393, %v2393
  %v2397 = vunpack.c.l.s4 1983009808
  %v2398 = vunpack.c.0.s8 %v2397
  %v2399 = vlaneseq
  %v2400 = vshrl.u32 %v2399, 7
  %v2401 = vsub.s32 %v2398, %v2400
  %v2402 = vrot.slane %v1663, %v2401
  %v2403 = vcombine.high %v1631, %v1631
  %v2405 = vunpack.c.l.s4 1983009808
  %v2406 = vunpack.c.0.s8 %v2405
  %v2407 = vlaneseq
  %v2408 = vshrl.u32 %v2407, 7
  %v2409 = vsub.s32 %v2406, %v2408
  %v2410 = vrot.slane %v1631, %v2409
  %v2412 = vunpack.c.l.s4 1983009808
  %v2413 = vunpack.c.0.s8 %v2412
  %v2414 = vlaneseq
  %v2415 = vshrl.u32 %v2414, 7
  %v2416 = vsub.s32 %v2413, %v2415
  %v2417 = vrot.slane %v2403, %v2416
  %v2418 = vcombine.high %v2410, %v2410
  %v2419 = vcombine.high %v2417, %v2417
  %v2420 = vcombine.high %v1501, %v1501
  %v2422 = vunpack.c.l.s4 1983009808
  %v2423 = vunpack.c.0.s8 %v2422
  %v2424 = vlaneseq
  %v2425 = vshrl.u32 %v2424, 7
  %v2426 = vsub.s32 %v2423, %v2425
  %v2427 = vrot.slane %v1501, %v2426
  %v2429 = vunpack.c.l.s4 1983009808
  %v2430 = vunpack.c.0.s8 %v2429
  %v2431 = vlaneseq
  %v2432 = vshrl.u32 %v2431, 7
  %v2433 = vsub.s32 %v2430, %v2432
  %v2434 = vrot.slane %v2420, %v2433
  %v2435 = vcombine.high %v2427, %v2427
  %v2436 = vcombine.high %v2434, %v2434
  %v2438 = vunpack.c.l.s4 1983009808
  %v2439 = vunpack.c.0.s8 %v2438
  %v2440 = vlaneseq
  %v2441 = vshrl.u32 %v2440, 7
  %v2442 = vsub.s32 %v2439, %v2441
  %v2443 = vrot.slane %v1664, %v2442
  %v2444 = vcombine.high %v1632, %v1632
  %v2446 = vunpack.c.l.s4 1983009808
  %v2447 = vunpack.c.0.s8 %v2446
  %v2448 = vlaneseq
  %v2449 = vshrl.u32 %v2448, 7
  %v2450 = vsub.s32 %v2447, %v2449
  %v2451 = vrot.slane %v1632, %v2450
  %v2453 = vunpack.c.l.s4 1983009808
  %v2454 = vunpack.c.0.s8 %v2453
  %v2455 = vlaneseq
  %v2456 = vshrl.u32 %v2455, 7
  %v2457 = vsub.s32 %v2454, %v2456
  %v2458 = vrot.slane %v2444, %v2457
  %v2459 = vcombine.high %v2451, %v2451
  %v2460 = vcombine.high %v2458, %v2458
  %v2461 = vcombine.high %v1504, %v1504
  %v2463 = vunpack.c.l.s4 1983009808
  %v2464 = vunpack.c.0.s8 %v2463
  %v2465 = vlaneseq
  %v2466 = vshrl.u32 %v2465, 7
  %v2467 = vsub.s32 %v2464, %v2466
  %v2468 = vrot.slane %v1504, %v2467
  %v2470 = vunpack.c.l.s4 1983009808
  %v2471 = vunpack.c.0.s8 %v2470
  %v2472 = vlaneseq
  %v2473 = vshrl.u32 %v2472, 7
  %v2474 = vsub.s32 %v2471, %v2473
  %v2475 = vrot.slane %v2461, %v2474
  %v2476 = vcombine.high %v2468, %v2468
  %v2477 = vcombine.high %v2475, %v2475
  %v2479 = vunpack.c.l.s4 1983009808
  %v2480 = vunpack.c.0.s8 %v2479
  %v2481 = vlaneseq
  %v2482 = vshrl.u32 %v2481, 7
  %v2483 = vsub.s32 %v2480, %v2482
  %v2484 = vrot.slane %v1665, %v2483
  %v2485 = vcombine.high %v1633, %v1633
  %v2487 = vunpack.c.l.s4 1983009808
  %v2488 = vunpack.c.0.s8 %v2487
  %v2489 = vlaneseq
  %v2490 = vshrl.u32 %v2489, 7
  %v2491 = vsub.s32 %v2488, %v2490
  %v2492 = vrot.slane %v1633, %v2491
  %v2494 = vunpack.c.l.s4 1983009808
  %v2495 = vunpack.c.0.s8 %v2494
  %v2496 = vlaneseq
  %v2497 = vshrl.u32 %v2496, 7
  %v2498 = vsub.s32 %v2495, %v2497
  %v2499 = vrot.slane %v2485, %v2498
  %v2500 = vcombine.high %v2492, %v2492
  %v2501 = vcombine.high %v2499, %v2499
  %v2502 = vcombine.high %v1507, %v1507
  %v2504 = vunpack.c.l.s4 1983009808
  %v2505 = vunpack.c.0.s8 %v2504
  %v2506 = vlaneseq
  %v2507 = vshrl.u32 %v2506, 7
  %v2508 = vsub.s32 %v2505, %v2507
  %v2509 = vrot.slane %v1507, %v2508
  %v2511 = vunpack.c.l.s4 1983009808
  %v2512 = vunpack.c.0.s8 %v2511
  %v2513 = vlaneseq
  %v2514 = vshrl.u32 %v2513, 7
  %v2515 = vsub.s32 %v2512, %v2514
  %v2516 = vrot.slane %v2502, %v2515
  %v2517 = vcombine.high %v2509, %v2509
  %v2518 = vcombine.high %v2516, %v2516
  %v2520 = vunpack.c.l.s4 1983009808
  %v2521 = vunpack.c.0.s8 %v2520
  %v2522 = vlaneseq
  %v2523 = vshrl.u32 %v2522, 7
  %v2524 = vsub.s32 %v2521, %v2523
  %v2525 = vrot.slane %v1666, %v2524
  %v2526 = vcombine.high %v1634, %v1634
  %v2528 = vunpack.c.l.s4 1983009808
  %v2529 = vunpack.c.0.s8 %v2528
  %v2530 = vlaneseq
  %v2531 = vshrl.u32 %v2530, 7
  %v2532 = vsub.s32 %v2529, %v2531
  %v2533 = vrot.slane %v1634, %v2532
  %v2535 = vunpack.c.l.s4 1983009808
  %v2536 = vunpack.c.0.s8 %v2535
  %v2537 = vlaneseq
  %v2538 = vshrl.u32 %v2537, 7
  %v2539 = vsub.s32 %v2536, %v2538
  %v2540 = vrot.slane %v2526, %v2539
  %v2541 = vcombine.high %v2533, %v2533
  %v2542 = vcombine.high %v2540, %v2540
  %v2543 = vcombine.high %v1510, %v1510
  %v2545 = vunpack.c.l.s4 1983009808
  %v2546 = vunpack.c.0.s8 %v2545
  %v2547 = vlaneseq
  %v2548 = vshrl.u32 %v2547, 7
  %v2549 = vsub.s32 %v2546, %v2548
  %v2550 = vrot.slane %v1510, %v2549
  %v2552 = vunpack.c.l.s4 1983009808
  %v2553 = vunpack.c.0.s8 %v2552
  %v2554 = vlaneseq
  %v2555 = vshrl.u32 %v2554, 7
  %v2556 = vsub.s32 %v2553, %v2555
  %v2557 = vrot.slane %v2543, %v2556
  %v2558 = vcombine.high %v2550, %v2550
  %v2559 = vcombine.high %v2557, %v2557
  %v2561 = vunpack.c.l.s4 1983009808
  %v2562 = vunpack.c.0.s8 %v2561
  %v2563 = vlaneseq
  %v2564 = vshrl.u32 %v2563, 7
  %v2565 = vsub.s32 %v2562, %v2564
  %v2566 = vrot.slane %v1667, %v2565
  %v2567 = vcombine.high %v1635, %v1635
  %v2569 = vunpack.c.l.s4 1983009808
  %v2570 = vunpack.c.0.s8 %v2569
  %v2571 = vlaneseq
  %v2572 = vshrl.u32 %v2571, 7
  %v2573 = vsub.s32 %v2570, %v2572
  %v2574 = vrot.slane %v1635, %v2573
  %v2576 = vunpack.c.l.s4 1983009808
  %v2577 = vunpack.c.0.s8 %v2576
  %v2578 = vlaneseq
  %v2579 = vshrl.u32 %v2578, 7
  %v2580 = vsub.s32 %v2577, %v2579
  %v2581 = vrot.slane %v2567, %v2580
  %v2582 = vcombine.high %v2574, %v2574
  %v2583 = vcombine.high %v2581, %v2581
  %v2584 = vcombine.high %v1513, %v1513
  %v2586 = vunpack.c.l.s4 1983009808
  %v2587 = vunpack.c.0.s8 %v2586
  %v2588 = vlaneseq
  %v2589 = vshrl.u32 %v2588, 7
  %v2590 = vsub.s32 %v2587, %v2589
  %v2591 = vrot.slane %v1513, %v2590
  %v2593 = vunpack.c.l.s4 1983009808
  %v2594 = vunpack.c.0.s8 %v2593
  %v2595 = vlaneseq
  %v2596 = vshrl.u32 %v2595, 7
  %v2597 = vsub.s32 %v2594, %v2596
  %v2598 = vrot.slane %v2584, %v2597
  %v2599 = vcombine.high %v2591, %v2591
  %v2600 = vcombine.high %v2598, %v2598
  %v2602 = vunpack.c.l.s4 1983009808
  %v2603 = vunpack.c.0.s8 %v2602
  %v2604 = vlaneseq
  %v2605 = vshrl.u32 %v2604, 7
  %v2606 = vsub.s32 %v2603, %v2605
  %v2607 = vrot.slane %v1668, %v2606
  %v2608 = vcombine.high %v1636, %v1636
  %v2610 = vunpack.c.l.s4 1983009808
  %v2611 = vunpack.c.0.s8 %v2610
  %v2612 = vlaneseq
  %v2613 = vshrl.u32 %v2612, 7
  %v2614 = vsub.s32 %v2611, %v2613
  %v2615 = vrot.slane %v1636, %v2614
  %v2617 = vunpack.c.l.s4 1983009808
  %v2618 = vunpack.c.0.s8 %v2617
  %v2619 = vlaneseq
  %v2620 = vshrl.u32 %v2619, 7
  %v2621 = vsub.s32 %v2618, %v2620
  %v2622 = vrot.slane %v2608, %v2621
  %v2623 = vcombine.high %v2615, %v2615
  %v2624 = vcombine.high %v2622, %v2622
  %v2625 = vcombine.high %v1516, %v1516
  %v2627 = vunpack.c.l.s4 1983009808
  %v2628 = vunpack.c.0.s8 %v2627
  %v2629 = vlaneseq
  %v2630 = vshrl.u32 %v2629, 7
  %v2631 = vsub.s32 %v2628, %v2630
  %v2632 = vrot.slane %v1516, %v2631
  %v2634 = vunpack.c.l.s4 1983009808
  %v2635 = vunpack.c.0.s8 %v2634
  %v2636 = vlaneseq
  %v2637 = vshrl.u32 %v2636, 7
  %v2638 = vsub.s32 %v2635, %v2637
  %v2639 = vrot.slane %v2625, %v2638
  %v2640 = vcombine.high %v2632, %v2632
  %v2641 = vcombine.high %v2639, %v2639
  %v2643 = vunpack.c.l.s4 1983009808
  %v2644 = vunpack.c.0.s8 %v2643
  %v2645 = vlaneseq
  %v2646 = vshrl.u32 %v2645, 7
  %v2647 = vsub.s32 %v2644, %v2646
  %v2648 = vrot.slane %v1669, %v2647
  %v2649 = vcombine.high %v1637, %v1637
  %v2651 = vunpack.c.l.s4 1983009808
  %v2652 = vunpack.c.0.s8 %v2651
  %v2653 = vlaneseq
  %v2654 = vshrl.u32 %v2653, 7
  %v2655 = vsub.s32 %v2652, %v2654
  %v2656 = vrot.slane %v1637, %v2655
  %v2658 = vunpack.c.l.s4 1983009808
  %v2659 = vunpack.c.0.s8 %v2658
  %v2660 = vlaneseq
  %v2661 = vshrl.u32 %v2660, 7
  %v2662 = vsub.s32 %v2659, %v2661
  %v2663 = vrot.slane %v2649, %v2662
  %v2664 = vcombine.high %v2656, %v2656
  %v2665 = vcombine.high %v2663, %v2663
  %v2666 = vcombine.high %v1519, %v1519
  %v2668 = vunpack.c.l.s4 1983009808
  %v2669 = vunpack.c.0.s8 %v2668
  %v2670 = vlaneseq
  %v2671 = vshrl.u32 %v2670, 7
  %v2672 = vsub.s32 %v2669, %v2671
  %v2673 = vrot.slane %v1519, %v2672
  %v2675 = vunpack.c.l.s4 1983009808
  %v2676 = vunpack.c.0.s8 %v2675
  %v2677 = vlaneseq
  %v2678 = vshrl.u32 %v2677, 7
  %v2679 = vsub.s32 %v2676, %v2678
  %v2680 = vrot.slane %v2666, %v2679
  %v2681 = vcombine.high %v2673, %v2673
  %v2682 = vcombine.high %v2680, %v2680
  %v2684 = vunpack.c.l.s4 1983009808
  %v2685 = vunpack.c.0.s8 %v2684
  %v2686 = vlaneseq
  %v2687 = vshrl.u32 %v2686, 7
  %v2688 = vsub.s32 %v2685, %v2687
  %v2689 = vrot.slane %v1670, %v2688
  %v2690 = vcombine.high %v1638, %v1638
  %v2692 = vunpack.c.l.s4 1983009808
  %v2693 = vunpack.c.0.s8 %v2692
  %v2694 = vlaneseq
  %v2695 = vshrl.u32 %v2694, 7
  %v2696 = vsub.s32 %v2693, %v2695
  %v2697 = vrot.slane %v1638, %v2696
  %v2699 = vunpack.c.l.s4 1983009808
  %v2700 = vunpack.c.0.s8 %v2699
  %v2701 = vlaneseq
  %v2702 = vshrl.u32 %v2701, 7
  %v2703 = vsub.s32 %v2700, %v2702
  %v2704 = vrot.slane %v2690, %v2703
  %v2705 = vcombine.high %v2697, %v2697
  %v2706 = vcombine.high %v2704, %v2704
  %v2707 = vcombine.high %v1522, %v1522
  %v2709 = vunpack.c.l.s4 1983009808
  %v2710 = vunpack.c.0.s8 %v2709
  %v2711 = vlaneseq
  %v2712 = vshrl.u32 %v2711, 7
  %v2713 = vsub.s32 %v2710, %v2712
  %v2714 = vrot.slane %v1522, %v2713
  %v2716 = vunpack.c.l.s4 1983009808
  %v2717 = vunpack.c.0.s8 %v2716
  %v2718 = vlaneseq
  %v2719 = vshrl.u32 %v2718, 7
  %v2720 = vsub.s32 %v2717, %v2719
  %v2721 = vrot.slane %v2707, %v2720
  %v2722 = vcombine.high %v2714, %v2714
  %v2723 = vcombine.high %v2721, %v2721
  %v2725 = vunpack.c.l.s4 1983009808
  %v2726 = vunpack.c.0.s8 %v2725
  %v2727 = vlaneseq
  %v2728 = vshrl.u32 %v2727, 7
  %v2729 = vsub.s32 %v2726, %v2728
  %v2730 = vrot.slane %v1671, %v2729
  %v2731 = vcombine.high %v1639, %v1639
  %v2733 = vunpack.c.l.s4 1983009808
  %v2734 = vunpack.c.0.s8 %v2733
  %v2735 = vlaneseq
  %v2736 = vshrl.u32 %v2735, 7
  %v2737 = vsub.s32 %v2734, %v2736
  %v2738 = vrot.slane %v1639, %v2737
  %v2740 = vunpack.c.l.s4 1983009808
  %v2741 = vunpack.c.0.s8 %v2740
  %v2742 = vlaneseq
  %v2743 = vshrl.u32 %v2742, 7
  %v2744 = vsub.s32 %v2741, %v2743
  %v2745 = vrot.slane %v2731, %v2744
  %v2746 = vcombine.high %v2738, %v2738
  %v2747 = vcombine.high %v2745, %v2745
  %v2748 = vcombine.high %v1525, %v1525
  %v2750 = vunpack.c.l.s4 1983009808
  %v2751 = vunpack.c.0.s8 %v2750
  %v2752 = vlaneseq
  %v2753 = vshrl.u32 %v2752, 7
  %v2754 = vsub.s32 %v2751, %v2753
  %v2755 = vrot.slane %v1525, %v2754
  %v2757 = vunpack.c.l.s4 1983009808
  %v2758 = vunpack.c.0.s8 %v2757
  %v2759 = vlaneseq
  %v2760 = vshrl.u32 %v2759, 7
  %v2761 = vsub.s32 %v2758, %v2760
  %v2762 = vrot.slane %v2748, %v2761
  %v2763 = vcombine.high %v2755, %v2755
  %v2764 = vcombine.high %v2762, %v2762
  %v2766 = vunpack.c.l.s4 1983009808
  %v2767 = vunpack.c.0.s8 %v2766
  %v2768 = vlaneseq
  %v2769 = vshrl.u32 %v2768, 7
  %v2770 = vsub.s32 %v2767, %v2769
  %v2771 = vrot.slane %v1672, %v2770
  %v2772 = vcombine.high %v1640, %v1640
  %v2774 = vunpack.c.l.s4 1983009808
  %v2775 = vunpack.c.0.s8 %v2774
  %v2776 = vlaneseq
  %v2777 = vshrl.u32 %v2776, 7
  %v2778 = vsub.s32 %v2775, %v2777
  %v2779 = vrot.slane %v1640, %v2778
  %v2781 = vunpack.c.l.s4 1983009808
  %v2782 = vunpack.c.0.s8 %v2781
  %v2783 = vlaneseq
  %v2784 = vshrl.u32 %v2783, 7
  %v2785 = vsub.s32 %v2782, %v2784
  %v2786 = vrot.slane %v2772, %v2785
  %v2787 = vcombine.high %v2779, %v2779
  %v2788 = vcombine.high %v2786, %v2786
  %v2789 = vcombine.high %v1528, %v1528
  %v2791 = vunpack.c.l.s4 1983009808
  %v2792 = vunpack.c.0.s8 %v2791
  %v2793 = vlaneseq
  %v2794 = vshrl.u32 %v2793, 7
  %v2795 = vsub.s32 %v2792, %v2794
  %v2796 = vrot.slane %v1528, %v2795
  %v2798 = vunpack.c.l.s4 1983009808
  %v2799 = vunpack.c.0.s8 %v2798
  %v2800 = vlaneseq
  %v2801 = vshrl.u32 %v2800, 7
  %v2802 = vsub.s32 %v2799, %v2801
  %v2803 = vrot.slane %v2789, %v2802
  %v2804 = vcombine.high %v2796, %v2796
  %v2805 = vcombine.high %v2803, %v2803
  %v2807 = vunpack.c.l.s4 1983009808
  %v2808 = vunpack.c.0.s8 %v2807
  %v2809 = vlaneseq
  %v2810 = vshrl.u32 %v2809, 7
  %v2811 = vsub.s32 %v2808, %v2810
  %v2812 = vrot.slane %v1673, %v2811
  %v2813 = vcombine.high %v1641, %v1641
  %v2815 = vunpack.c.l.s4 1983009808
  %v2816 = vunpack.c.0.s8 %v2815
  %v2817 = vlaneseq
  %v2818 = vshrl.u32 %v2817, 7
  %v2819 = vsub.s32 %v2816, %v2818
  %v2820 = vrot.slane %v1641, %v2819
  %v2822 = vunpack.c.l.s4 1983009808
  %v2823 = vunpack.c.0.s8 %v2822
  %v2824 = vlaneseq
  %v2825 = vshrl.u32 %v2824, 7
  %v2826 = vsub.s32 %v2823, %v2825
  %v2827 = vrot.slane %v2813, %v2826
  %v2828 = vcombine.high %v2820, %v2820
  %v2829 = vcombine.high %v2827, %v2827
  %v2830 = vcombine.high %v1531, %v1531
  %v2832 = vunpack.c.l.s4 1983009808
  %v2833 = vunpack.c.0.s8 %v2832
  %v2834 = vlaneseq
  %v2835 = vshrl.u32 %v2834, 7
  %v2836 = vsub.s32 %v2833, %v2835
  %v2837 = vrot.slane %v1531, %v2836
  %v2839 = vunpack.c.l.s4 1983009808
  %v2840 = vunpack.c.0.s8 %v2839
  %v2841 = vlaneseq
  %v2842 = vshrl.u32 %v2841, 7
  %v2843 = vsub.s32 %v2840, %v2842
  %v2844 = vrot.slane %v2830, %v2843
  %v2845 = vcombine.high %v2837, %v2837
  %v2846 = vcombine.high %v2844, %v2844
  %v2848 = vunpack.c.l.s4 1983009808
  %v2849 = vunpack.c.0.s8 %v2848
  %v2850 = vlaneseq
  %v2851 = vshrl.u32 %v2850, 7
  %v2852 = vsub.s32 %v2849, %v2851
  %v2853 = vrot.slane %v1674, %v2852
  %v2854 = vcombine.high %v1642, %v1642
  %v2856 = vunpack.c.l.s4 1983009808
  %v2857 = vunpack.c.0.s8 %v2856
  %v2858 = vlaneseq
  %v2859 = vshrl.u32 %v2858, 7
  %v2860 = vsub.s32 %v2857, %v2859
  %v2861 = vrot.slane %v1642, %v2860
  %v2863 = vunpack.c.l.s4 1983009808
  %v2864 = vunpack.c.0.s8 %v2863
  %v2865 = vlaneseq
  %v2866 = vshrl.u32 %v2865, 7
  %v2867 = vsub.s32 %v2864, %v2866
  %v2868 = vrot.slane %v2854, %v2867
  %v2869 = vcombine.high %v2861, %v2861
  %v2870 = vcombine.high %v2868, %v2868
  %v2871 = vcombine.high %v1534, %v1534
  %v2873 = vunpack.c.l.s4 1983009808
  %v2874 = vunpack.c.0.s8 %v2873
  %v2875 = vlaneseq
  %v2876 = vshrl.u32 %v2875, 7
  %v2877 = vsub.s32 %v2874, %v2876
  %v2878 = vrot.slane %v1534, %v2877
  %v2880 = vunpack.c.l.s4 1983009808
  %v2881 = vunpack.c.0.s8 %v2880
  %v2882 = vlaneseq
  %v2883 = vshrl.u32 %v2882, 7
  %v2884 = vsub.s32 %v2881, %v2883
  %v2885 = vrot.slane %v2871, %v2884
  %v2886 = vcombine.high %v2878, %v2878
  %v2887 = vcombine.high %v2885, %v2885
  %v2889 = vunpack.c.l.s4 1983009808
  %v2890 = vunpack.c.0.s8 %v2889
  %v2891 = vlaneseq
  %v2892 = vshrl.u32 %v2891, 7
  %v2893 = vsub.s32 %v2890, %v2892
  %v2894 = vrot.slane %v1675, %v2893
  %v2895 = vcombine.high %v1643, %v1643
  %v2897 = vunpack.c.l.s4 1983009808
  %v2898 = vunpack.c.0.s8 %v2897
  %v2899 = vlaneseq
  %v2900 = vshrl.u32 %v2899, 7
  %v2901 = vsub.s32 %v2898, %v2900
  %v2902 = vrot.slane %v1643, %v2901
  %v2904 = vunpack.c.l.s4 1983009808
  %v2905 = vunpack.c.0.s8 %v2904
  %v2906 = vlaneseq
  %v2907 = vshrl.u32 %v2906, 7
  %v2908 = vsub.s32 %v2905, %v2907
  %v2909 = vrot.slane %v2895, %v2908
  %v2910 = vcombine.high %v2902, %v2902
  %v2911 = vcombine.high %v2909, %v2909
  %v2912 = vcombine.high %v1537, %v1537
  %v2914 = vunpack.c.l.s4 1983009808
  %v2915 = vunpack.c.0.s8 %v2914
  %v2916 = vlaneseq
  %v2917 = vshrl.u32 %v2916, 7
  %v2918 = vsub.s32 %v2915, %v2917
  %v2919 = vrot.slane %v1537, %v2918
  %v2921 = vunpack.c.l.s4 1983009808
  %v2922 = vunpack.c.0.s8 %v2921
  %v2923 = vlaneseq
  %v2924 = vshrl.u32 %v2923, 7
  %v2925 = vsub.s32 %v2922, %v2924
  %v2926 = vrot.slane %v2912, %v2925
  %v2927 = vcombine.high %v2919, %v2919
  %v2928 = vcombine.high %v2926, %v2926
  %v2930 = vunpack.c.l.s4 1983009808
  %v2931 = vunpack.c.0.s8 %v2930
  %v2932 = vlaneseq
  %v2933 = vshrl.u32 %v2932, 7
  %v2934 = vsub.s32 %v2931, %v2933
  %v2935 = vrot.slane %v1676, %v2934
  %v2936 = vcombine.high %v1644, %v1644
  %v2938 = vunpack.c.l.s4 1983009808
  %v2939 = vunpack.c.0.s8 %v2938
  %v2940 = vlaneseq
  %v2941 = vshrl.u32 %v2940, 7
  %v2942 = vsub.s32 %v2939, %v2941
  %v2943 = vrot.slane %v1644, %v2942
  %v2945 = vunpack.c.l.s4 1983009808
  %v2946 = vunpack.c.0.s8 %v2945
  %v2947 = vlaneseq
  %v2948 = vshrl.u32 %v2947, 7
  %v2949 = vsub.s32 %v2946, %v2948
  %v2950 = vrot.slane %v2936, %v2949
  %v2951 = vcombine.high %v2943, %v2943
  %v2952 = vcombine.high %v2950, %v2950
  %v2953 = vcombine.high %v1540, %v1540
  %v2955 = vunpack.c.l.s4 1983009808
  %v2956 = vunpack.c.0.s8 %v2955
  %v2957 = vlaneseq
  %v2958 = vshrl.u32 %v2957, 7
  %v2959 = vsub.s32 %v2956, %v2958
  %v2960 = vrot.slane %v1540, %v2959
  %v2962 = vunpack.c.l.s4 1983009808
  %v2963 = vunpack.c.0.s8 %v2962
  %v2964 = vlaneseq
  %v2965 = vshrl.u32 %v2964, 7
  %v2966 = vsub.s32 %v2963, %v2965
  %v2967 = vrot.slane %v2953, %v2966
  %v2968 = vcombine.high %v2960, %v2960
  %v2969 = vcombine.high %v2967, %v2967
  %v2971 = vunpack.c.l.s4 1983009808
  %v2972 = vunpack.c.0.s8 %v2971
  %v2973 = vlaneseq
  %v2974 = vshrl.u32 %v2973, 7
  %v2975 = vsub.s32 %v2972, %v2974
  %v2976 = vrot.slane %v1677, %v2975
  %v2977 = vcombine.high %v1645, %v1645
  %v2979 = vunpack.c.l.s4 1983009808
  %v2980 = vunpack.c.0.s8 %v2979
  %v2981 = vlaneseq
  %v2982 = vshrl.u32 %v2981, 7
  %v2983 = vsub.s32 %v2980, %v2982
  %v2984 = vrot.slane %v1645, %v2983
  %v2986 = vunpack.c.l.s4 1983009808
  %v2987 = vunpack.c.0.s8 %v2986
  %v2988 = vlaneseq
  %v2989 = vshrl.u32 %v2988, 7
  %v2990 = vsub.s32 %v2987, %v2989
  %v2991 = vrot.slane %v2977, %v2990
  %v2992 = vcombine.high %v2984, %v2984
  %v2993 = vcombine.high %v2991, %v2991
  %v2994 = vcombine.high %v1543, %v1543
  %v2996 = vunpack.c.l.s4 1983009808
  %v2997 = vunpack.c.0.s8 %v2996
  %v2998 = vlaneseq
  %v2999 = vshrl.u32 %v2998, 7
  %v3000 = vsub.s32 %v2997, %v2999
  %v3001 = vrot.slane %v1543, %v3000
  %v3003 = vunpack.c.l.s4 1983009808
  %v3004 = vunpack.c.0.s8 %v3003
  %v3005 = vlaneseq
  %v3006 = vshrl.u32 %v3005, 7
  %v3007 = vsub.s32 %v3004, %v3006
  %v3008 = vrot.slane %v2994, %v3007
  %v3009 = vcombine.high %v3001, %v3001
  %v3010 = vcombine.high %v3008, %v3008
  %v3012 = vunpack.c.l.s4 1983009808
  %v3013 = vunpack.c.0.s8 %v3012
  %v3014 = vlaneseq
  %v3015 = vshrl.u32 %v3014, 7
  %v3016 = vsub.s32 %v3013, %v3015
  %v3017 = vrot.slane %v1678, %v3016
  %v3018 = vcombine.high %v1646, %v1646
  %v3020 = vunpack.c.l.s4 1983009808
  %v3021 = vunpack.c.0.s8 %v3020
  %v3022 = vlaneseq
  %v3023 = vshrl.u32 %v3022, 7
  %v3024 = vsub.s32 %v3021, %v3023
  %v3025 = vrot.slane %v1646, %v3024
  %v3027 = vunpack.c.l.s4 1983009808
  %v3028 = vunpack.c.0.s8 %v3027
  %v3029 = vlaneseq
  %v3030 = vshrl.u32 %v3029, 7
  %v3031 = vsub.s32 %v3028, %v3030
  %v3032 = vrot.slane %v3018, %v3031
  %v3033 = vcombine.high %v3025, %v3025
  %v3034 = vcombine.high %v3032, %v3032
  %v3035 = vcombine.high %v1546, %v1546
  %v3037 = vunpack.c.l.s4 1983009808
  %v3038 = vunpack.c.0.s8 %v3037
  %v3039 = vlaneseq
  %v3040 = vshrl.u32 %v3039, 7
  %v3041 = vsub.s32 %v3038, %v3040
  %v3042 = vrot.slane %v1546, %v3041
  %v3044 = vunpack.c.l.s4 1983009808
  %v3045 = vunpack.c.0.s8 %v3044
  %v3046 = vlaneseq
  %v3047 = vshrl.u32 %v3046, 7
  %v3048 = vsub.s32 %v3045, %v3047
  %v3049 = vrot.slane %v3035, %v3048
  %v3050 = vcombine.high %v3042, %v3042
  %v3051 = vcombine.high %v3049, %v3049
  %v3053 = vunpack.c.l.s4 1983009808
  %v3054 = vunpack.c.0.s8 %v3053
  %v3055 = vlaneseq
  %v3056 = vshrl.u32 %v3055, 7
  %v3057 = vsub.s32 %v3054, %v3056
  %v3058 = vrot.slane %v1679, %v3057
  %v3059 = vcombine.high %v1647, %v1647
  %v3061 = vunpack.c.l.s4 1983009808
  %v3062 = vunpack.c.0.s8 %v3061
  %v3063 = vlaneseq
  %v3064 = vshrl.u32 %v3063, 7
  %v3065 = vsub.s32 %v3062, %v3064
  %v3066 = vrot.slane %v1647, %v3065
  %v3068 = vunpack.c.l.s4 1983009808
  %v3069 = vunpack.c.0.s8 %v3068
  %v3070 = vlaneseq
  %v3071 = vshrl.u32 %v3070, 7
  %v3072 = vsub.s32 %v3069, %v3071
  %v3073 = vrot.slane %v3059, %v3072
  %v3074 = vcombine.high %v3066, %v3066
  %v3075 = vcombine.high %v3073, %v3073
  %v3076 = vcombine.high %v1549, %v1549
  %v3078 = vunpack.c.l.s4 1983009808
  %v3079 = vunpack.c.0.s8 %v3078
  %v3080 = vlaneseq
  %v3081 = vshrl.u32 %v3080, 7
  %v3082 = vsub.s32 %v3079, %v3081
  %v3083 = vrot.slane %v1549, %v3082
  %v3085 = vunpack.c.l.s4 1983009808
  %v3086 = vunpack.c.0.s8 %v3085
  %v3087 = vlaneseq
  %v3088 = vshrl.u32 %v3087, 7
  %v3089 = vsub.s32 %v3086, %v3088
  %v3090 = vrot.slane %v3076, %v3089
  %v3091 = vcombine.high %v3083, %v3083
  %v3092 = vcombine.high %v3090, %v3090
  %v3094 = vunpack.c.l.s4 1983009808
  %v3095 = vunpack.c.0.s8 %v3094
  %v3096 = vlaneseq
  %v3097 = vshrl.u32 %v3096, 7
  %v3098 = vsub.s32 %v3095, %v3097
  %v3099 = vrot.slane %v1680, %v3098
  %v3100 = vlaneseq
  %v3101 = vshrl.u32 %v3100, 7
  %v3102 = vsub.s32 0, %v3101
  %v3103 = vrot.slane %v1754, %v3102
  %v3104 = vlaneseq
  %v3105 = vshrl.u32 %v3104, 7
  %v3106 = vsub.s32 0, %v3105
  %v3107 = vrot.slane %v1762, %v3106
  %v3108 = vlaneseq
  %v3109 = vshrl.u32 %v3108, 7
  %v3110 = vsub.s32 0, %v3109
  %v3111 = vrot.slane %v1761, %v3110
  %v3112 = vlaneseq
  %v3113 = vshrl.u32 %v3112, 7
  %v3114 = vsub.s32 0, %v3113
  %v3115 = vrot.slane %v1763, %v3114
  %v3116 = vlaneseq
  %v3117 = vshrl.u32 %v3116, 7
  %v3118 = vsub.s32 0, %v3117
  %v3119 = vrot.slane %v1771, %v3118
  %v3120 = vlaneseq
  %v3121 = vshrl.u32 %v3120, 7
  %v3122 = vsub.s32 0, %v3121
  %v3123 = vrot.slane %v1779, %v3122
  %v3124 = vlaneseq
  %v3125 = vshrl.u32 %v3124, 7
  %v3126 = vsub.s32 0, %v3125
  %v3127 = vrot.slane %v1778, %v3126
  %v3128 = vlaneseq
  %v3129 = vshrl.u32 %v3128, 7
  %v3130 = vsub.s32 0, %v3129
  %v3131 = vrot.slane %v1780, %v3130
  %v3132 = vlaneseq
  %v3133 = vshrl.u32 %v3132, 7
  %v3134 = vsub.s32 0, %v3133
  %v3135 = vrot.slane %v1836, %v3134
  %v3136 = vlaneseq
  %v3137 = vshrl.u32 %v3136, 7
  %v3138 = vsub.s32 0, %v3137
  %v3139 = vrot.slane %v1844, %v3138
  %v3140 = vlaneseq
  %v3141 = vshrl.u32 %v3140, 7
  %v3142 = vsub.s32 0, %v3141
  %v3143 = vrot.slane %v1843, %v3142
  %v3144 = vlaneseq
  %v3145 = vshrl.u32 %v3144, 7
  %v3146 = vsub.s32 0, %v3145
  %v3147 = vrot.slane %v1845, %v3146
  %v3148 = vlaneseq
  %v3149 = vshrl.u32 %v3148, 7
  %v3150 = vsub.s32 0, %v3149
  %v3151 = vrot.slane %v1853, %v3150
  %v3152 = vlaneseq
  %v3153 = vshrl.u32 %v3152, 7
  %v3154 = vsub.s32 0, %v3153
  %v3155 = vrot.slane %v1861, %v3154
  %v3156 = vlaneseq
  %v3157 = vshrl.u32 %v3156, 7
  %v3158 = vsub.s32 0, %v3157
  %v3159 = vrot.slane %v1860, %v3158
  %v3160 = vlaneseq
  %v3161 = vshrl.u32 %v3160, 7
  %v3162 = vsub.s32 0, %v3161
  %v3163 = vrot.slane %v1862, %v3162
  %v3164 = vlaneseq
  %v3165 = vshrl.u32 %v3164, 7
  %v3166 = vsub.s32 0, %v3165
  %v3167 = vrot.slane %v1918, %v3166
  %v3168 = vlaneseq
  %v3169 = vshrl.u32 %v3168, 7
  %v3170 = vsub.s32 0, %v3169
  %v3171 = vrot.slane %v1926, %v3170
  %v3172 = vlaneseq
  %v3173 = vshrl.u32 %v3172, 7
  %v3174 = vsub.s32 0, %v3173
  %v3175 = vrot.slane %v1925, %v3174
  %v3176 = vlaneseq
  %v3177 = vshrl.u32 %v3176, 7
  %v3178 = vsub.s32 0, %v3177
  %v3179 = vrot.slane %v1927, %v3178
  %v3180 = vlaneseq
  %v3181 = vshrl.u32 %v3180, 7
  %v3182 = vsub.s32 0, %v3181
  %v3183 = vrot.slane %v1935, %v3182
  %v3184 = vlaneseq
  %v3185 = vshrl.u32 %v3184, 7
  %v3186 = vsub.s32 0, %v3185
  %v3187 = vrot.slane %v1943, %v3186
  %v3188 = vlaneseq
  %v3189 = vshrl.u32 %v3188, 7
  %v3190 = vsub.s32 0, %v3189
  %v3191 = vrot.slane %v1942, %v3190
  %v3192 = vlaneseq
  %v3193 = vshrl.u32 %v3192, 7
  %v3194 = vsub.s32 0, %v3193
  %v3195 = vrot.slane %v1944, %v3194
  %v3196 = vlaneseq
  %v3197 = vshrl.u32 %v3196, 7
  %v3198 = vsub.s32 0, %v3197
  %v3199 = vrot.slane %v2000, %v3198
  %v3200 = vlaneseq
  %v3201 = vshrl.u32 %v3200, 7
  %v3202 = vsub.s32 0, %v3201
  %v3203 = vrot.slane %v2008, %v3202
  %v3204 = vlaneseq
  %v3205 = vshrl.u32 %v3204, 7
  %v3206 = vsub.s32 0, %v3205
  %v3207 = vrot.slane %v2007, %v3206
  %v3208 = vlaneseq
  %v3209 = vshrl.u32 %v3208, 7
  %v3210 = vsub.s32 0, %v3209
  %v3211 = vrot.slane %v2009, %v3210
  %v3212 = vlaneseq
  %v3213 = vshrl.u32 %v3212, 7
  %v3214 = vsub.s32 0, %v3213
  %v3215 = vrot.slane %v2017, %v3214
  %v3216 = vlaneseq
  %v3217 = vshrl.u32 %v3216, 7
  %v3218 = vsub.s32 0, %v3217
  %v3219 = vrot.slane %v2025, %v3218
  %v3220 = vlaneseq
  %v3221 = vshrl.u32 %v3220, 7
  %v3222 = vsub.s32 0, %v3221
  %v3223 = vrot.slane %v2024, %v3222
  %v3224 = vlaneseq
  %v3225 = vshrl.u32 %v3224, 7
  %v3226 = vsub.s32 0, %v3225
  %v3227 = vrot.slane %v2026, %v3226
  %v3228 = vlaneseq
  %v3229 = vshrl.u32 %v3228, 7
  %v3230 = vsub.s32 0, %v3229
  %v3231 = vrot.slane %v2082, %v3230
  %v3232 = vlaneseq
  %v3233 = vshrl.u32 %v3232, 7
  %v3234 = vsub.s32 0, %v3233
  %v3235 = vrot.slane %v2090, %v3234
  %v3236 = vlaneseq
  %v3237 = vshrl.u32 %v3236, 7
  %v3238 = vsub.s32 0, %v3237
  %v3239 = vrot.slane %v2089, %v3238
  %v3240 = vlaneseq
  %v3241 = vshrl.u32 %v3240, 7
  %v3242 = vsub.s32 0, %v3241
  %v3243 = vrot.slane %v2091, %v3242
  %v3244 = vlaneseq
  %v3245 = vshrl.u32 %v3244, 7
  %v3246 = vsub.s32 0, %v3245
  %v3247 = vrot.slane %v2099, %v3246
  %v3248 = vlaneseq
  %v3249 = vshrl.u32 %v3248, 7
  %v3250 = vsub.s32 0, %v3249
  %v3251 = vrot.slane %v2107, %v3250
  %v3252 = vlaneseq
  %v3253 = vshrl.u32 %v3252, 7
  %v3254 = vsub.s32 0, %v3253
  %v3255 = vrot.slane %v2106, %v3254
  %v3256 = vlaneseq
  %v3257 = vshrl.u32 %v3256, 7
  %v3258 = vsub.s32 0, %v3257
  %v3259 = vrot.slane %v2108, %v3258
  %v3260 = vlaneseq
  %v3261 = vshrl.u32 %v3260, 7
  %v3262 = vsub.s32 0, %v3261
  %v3263 = vrot.slane %v2164, %v3262
  %v3264 = vlaneseq
  %v3265 = vshrl.u32 %v3264, 7
  %v3266 = vsub.s32 0, %v3265
  %v3267 = vrot.slane %v2172, %v3266
  %v3268 = vlaneseq
  %v3269 = vshrl.u32 %v3268, 7
  %v3270 = vsub.s32 0, %v3269
  %v3271 = vrot.slane %v2171, %v3270
  %v3272 = vlaneseq
  %v3273 = vshrl.u32 %v3272, 7
  %v3274 = vsub.s32 0, %v3273
  %v3275 = vrot.slane %v2173, %v3274
  %v3276 = vlaneseq
  %v3277 = vshrl.u32 %v3276, 7
  %v3278 = vsub.s32 0, %v3277
  %v3279 = vrot.slane %v2181, %v3278
  %v3280 = vlaneseq
  %v3281 = vshrl.u32 %v3280, 7
  %v3282 = vsub.s32 0, %v3281
  %v3283 = vrot.slane %v2189, %v3282
  %v3284 = vlaneseq
  %v3285 = vshrl.u32 %v3284, 7
  %v3286 = vsub.s32 0, %v3285
  %v3287 = vrot.slane %v2188, %v3286
  %v3288 = vlaneseq
  %v3289 = vshrl.u32 %v3288, 7
  %v3290 = vsub.s32 0, %v3289
  %v3291 = vrot.slane %v2190, %v3290
  %v3292 = vlaneseq
  %v3293 = vshrl.u32 %v3292, 7
  %v3294 = vsub.s32 0, %v3293
  %v3295 = vrot.slane %v2246, %v3294
  %v3296 = vlaneseq
  %v3297 = vshrl.u32 %v3296, 7
  %v3298 = vsub.s32 0, %v3297
  %v3299 = vrot.slane %v2254, %v3298
  %v3300 = vlaneseq
  %v3301 = vshrl.u32 %v3300, 7
  %v3302 = vsub.s32 0, %v3301
  %v3303 = vrot.slane %v2253, %v3302
  %v3304 = vlaneseq
  %v3305 = vshrl.u32 %v3304, 7
  %v3306 = vsub.s32 0, %v3305
  %v3307 = vrot.slane %v2255, %v3306
  %v3308 = vlaneseq
  %v3309 = vshrl.u32 %v3308, 7
  %v3310 = vsub.s32 0, %v3309
  %v3311 = vrot.slane %v2263, %v3310
  %v3312 = vlaneseq
  %v3313 = vshrl.u32 %v3312, 7
  %v3314 = vsub.s32 0, %v3313
  %v3315 = vrot.slane %v2271, %v3314
  %v3316 = vlaneseq
  %v3317 = vshrl.u32 %v3316, 7
  %v3318 = vsub.s32 0, %v3317
  %v3319 = vrot.slane %v2270, %v3318
  %v3320 = vlaneseq
  %v3321 = vshrl.u32 %v3320, 7
  %v3322 = vsub.s32 0, %v3321
  %v3323 = vrot.slane %v2272, %v3322
  %v3324 = vlaneseq
  %v3325 = vshrl.u32 %v3324, 7
  %v3326 = vsub.s32 0, %v3325
  %v3327 = vrot.slane %v2328, %v3326
  %v3328 = vlaneseq
  %v3329 = vshrl.u32 %v3328, 7
  %v3330 = vsub.s32 0, %v3329
  %v3331 = vrot.slane %v2336, %v3330
  %v3332 = vlaneseq
  %v3333 = vshrl.u32 %v3332, 7
  %v3334 = vsub.s32 0, %v3333
  %v3335 = vrot.slane %v2335, %v3334
  %v3336 = vlaneseq
  %v3337 = vshrl.u32 %v3336, 7
  %v3338 = vsub.s32 0, %v3337
  %v3339 = vrot.slane %v2337, %v3338
  %v3340 = vlaneseq
  %v3341 = vshrl.u32 %v3340, 7
  %v3342 = vsub.s32 0, %v3341
  %v3343 = vrot.slane %v2345, %v3342
  %v3344 = vlaneseq
  %v3345 = vshrl.u32 %v3344, 7
  %v3346 = vsub.s32 0, %v3345
  %v3347 = vrot.slane %v2353, %v3346
  %v3348 = vlaneseq
  %v3349 = vshrl.u32 %v3348, 7
  %v3350 = vsub.s32 0, %v3349
  %v3351 = vrot.slane %v2352, %v3350
  %v3352 = vlaneseq
  %v3353 = vshrl.u32 %v3352, 7
  %v3354 = vsub.s32 0, %v3353
  %v3355 = vrot.slane %v2354, %v3354
  %v3356 = vlaneseq
  %v3357 = vshrl.u32 %v3356, 7
  %v3358 = vsub.s32 0, %v3357
  %v3359 = vrot.slane %v2492, %v3358
  %v3360 = vlaneseq
  %v3361 = vshrl.u32 %v3360, 7
  %v3362 = vsub.s32 0, %v3361
  %v3363 = vrot.slane %v2500, %v3362
  %v3364 = vlaneseq
  %v3365 = vshrl.u32 %v3364, 7
  %v3366 = vsub.s32 0, %v3365
  %v3367 = vrot.slane %v2499, %v3366
  %v3368 = vlaneseq
  %v3369 = vshrl.u32 %v3368, 7
  %v3370 = vsub.s32 0, %v3369
  %v3371 = vrot.slane %v2501, %v3370
  %v3372 = vlaneseq
  %v3373 = vshrl.u32 %v3372, 7
  %v3374 = vsub.s32 0, %v3373
  %v3375 = vrot.slane %v2509, %v3374
  %v3376 = vlaneseq
  %v3377 = vshrl.u32 %v3376, 7
  %v3378 = vsub.s32 0, %v3377
  %v3379 = vrot.slane %v2517, %v3378
  %v3380 = vlaneseq
  %v3381 = vshrl.u32 %v3380, 7
  %v3382 = vsub.s32 0, %v3381
  %v3383 = vrot.slane %v2516, %v3382
  %v3384 = vlaneseq
  %v3385 = vshrl.u32 %v3384, 7
  %v3386 = vsub.s32 0, %v3385
  %v3387 = vrot.slane %v2518, %v3386
  %v3388 = vlaneseq
  %v3389 = vshrl.u32 %v3388, 7
  %v3390 = vsub.s32 0, %v3389
  %v3391 = vrot.slane %v2574, %v3390
  %v3392 = vlaneseq
  %v3393 = vshrl.u32 %v3392, 7
  %v3394 = vsub.s32 0, %v3393
  %v3395 = vrot.slane %v2582, %v3394
  %v3396 = vlaneseq
  %v3397 = vshrl.u32 %v3396, 7
  %v3398 = vsub.s32 0, %v3397
  %v3399 = vrot.slane %v2581, %v3398
  %v3400 = vlaneseq
  %v3401 = vshrl.u32 %v3400, 7
  %v3402 = vsub.s32 0, %v3401
  %v3403 = vrot.slane %v2583, %v3402
  %v3404 = vlaneseq
  %v3405 = vshrl.u32 %v3404, 7
  %v3406 = vsub.s32 0, %v3405
  %v3407 = vrot.slane %v2591, %v3406
  %v3408 = vlaneseq
  %v3409 = vshrl.u32 %v3408, 7
  %v3410 = vsub.s32 0, %v3409
  %v3411 = vrot.slane %v2599, %v3410
  %v3412 = vlaneseq
  %v3413 = vshrl.u32 %v3412, 7
  %v3414 = vsub.s32 0, %v3413
  %v3415 = vrot.slane %v2598, %v3414
  %v3416 = vlaneseq
  %v3417 = vshrl.u32 %v3416, 7
  %v3418 = vsub.s32 0, %v3417
  %v3419 = vrot.slane %v2600, %v3418
  %v3420 = vlaneseq
  %v3421 = vshrl.u32 %v3420, 7
  %v3422 = vsub.s32 0, %v3421
  %v3423 = vrot.slane %v2656, %v3422
  %v3424 = vlaneseq
  %v3425 = vshrl.u32 %v3424, 7
  %v3426 = vsub.s32 0, %v3425
  %v3427 = vrot.slane %v2664, %v3426
  %v3428 = vlaneseq
  %v3429 = vshrl.u32 %v3428, 7
  %v3430 = vsub.s32 0, %v3429
  %v3431 = vrot.slane %v2663, %v3430
  %v3432 = vlaneseq
  %v3433 = vshrl.u32 %v3432, 7
  %v3434 = vsub.s32 0, %v3433
  %v3435 = vrot.slane %v2665, %v3434
  %v3436 = vlaneseq
  %v3437 = vshrl.u32 %v3436, 7
  %v3438 = vsub.s32 0, %v3437
  %v3439 = vrot.slane %v2673, %v3438
  %v3440 = vlaneseq
  %v3441 = vshrl.u32 %v3440, 7
  %v3442 = vsub.s32 0, %v3441
  %v3443 = vrot.slane %v2681, %v3442
  %v3444 = vlaneseq
  %v3445 = vshrl.u32 %v3444, 7
  %v3446 = vsub.s32 0, %v3445
  %v3447 = vrot.slane %v2680, %v3446
  %v3448 = vlaneseq
  %v3449 = vshrl.u32 %v3448, 7
  %v3450 = vsub.s32 0, %v3449
  %v3451 = vrot.slane %v2682, %v3450
  %v3452 = vlaneseq
  %v3453 = vshrl.u32 %v3452, 7
  %v3454 = vsub.s32 0, %v3453
  %v3455 = vrot.slane %v2738, %v3454
  %v3456 = vlaneseq
  %v3457 = vshrl.u32 %v3456, 7
  %v3458 = vsub.s32 0, %v3457
  %v3459 = vrot.slane %v2746, %v3458
  %v3460 = vlaneseq
  %v3461 = vshrl.u32 %v3460, 7
  %v3462 = vsub.s32 0, %v3461
  %v3463 = vrot.slane %v2745, %v3462
  %v3464 = vlaneseq
  %v3465 = vshrl.u32 %v3464, 7
  %v3466 = vsub.s32 0, %v3465
  %v3467 = vrot.slane %v2747, %v3466
  %v3468 = vlaneseq
  %v3469 = vshrl.u32 %v3468, 7
  %v3470 = vsub.s32 0, %v3469
  %v3471 = vrot.slane %v2755, %v3470
  %v3472 = vlaneseq
  %v3473 = vshrl.u32 %v3472, 7
  %v3474 = vsub.s32 0, %v3473
  %v3475 = vrot.slane %v2763, %v3474
  %v3476 = vlaneseq
  %v3477 = vshrl.u32 %v3476, 7
  %v3478 = vsub.s32 0, %v3477
  %v3479 = vrot.slane %v2762, %v3478
  %v3480 = vlaneseq
  %v3481 = vshrl.u32 %v3480, 7
  %v3482 = vsub.s32 0, %v3481
  %v3483 = vrot.slane %v2764, %v3482
  %v3484 = vlaneseq
  %v3485 = vshrl.u32 %v3484, 7
  %v3486 = vsub.s32 0, %v3485
  %v3487 = vrot.slane %v2820, %v3486
  %v3488 = vlaneseq
  %v3489 = vshrl.u32 %v3488, 7
  %v3490 = vsub.s32 0, %v3489
  %v3491 = vrot.slane %v2828, %v3490
  %v3492 = vlaneseq
  %v3493 = vshrl.u32 %v3492, 7
  %v3494 = vsub.s32 0, %v3493
  %v3495 = vrot.slane %v2827, %v3494
  %v3496 = vlaneseq
  %v3497 = vshrl.u32 %v3496, 7
  %v3498 = vsub.s32 0, %v3497
  %v3499 = vrot.slane %v2829, %v3498
  %v3500 = vlaneseq
  %v3501 = vshrl.u32 %v3500, 7
  %v3502 = vsub.s32 0, %v3501
  %v3503 = vrot.slane %v2837, %v3502
  %v3504 = vlaneseq
  %v3505 = vshrl.u32 %v3504, 7
  %v3506 = vsub.s32 0, %v3505
  %v3507 = vrot.slane %v2845, %v3506
  %v3508 = vlaneseq
  %v3509 = vshrl.u32 %v3508, 7
  %v3510 = vsub.s32 0, %v3509
  %v3511 = vrot.slane %v2844, %v3510
  %v3512 = vlaneseq
  %v3513 = vshrl.u32 %v3512, 7
  %v3514 = vsub.s32 0, %v3513
  %v3515 = vrot.slane %v2846, %v3514
  %v3516 = vlaneseq
  %v3517 = vshrl.u32 %v3516, 7
  %v3518 = vsub.s32 0, %v3517
  %v3519 = vrot.slane %v2902, %v3518
  %v3520 = vlaneseq
  %v3521 = vshrl.u32 %v3520, 7
  %v3522 = vsub.s32 0, %v3521
  %v3523 = vrot.slane %v2910, %v3522
  %v3524 = vlaneseq
  %v3525 = vshrl.u32 %v3524, 7
  %v3526 = vsub.s32 0, %v3525
  %v3527 = vrot.slane %v2909, %v3526
  %v3528 = vlaneseq
  %v3529 = vshrl.u32 %v3528, 7
  %v3530 = vsub.s32 0, %v3529
  %v3531 = vrot.slane %v2911, %v3530
  %v3532 = vlaneseq
  %v3533 = vshrl.u32 %v3532, 7
  %v3534 = vsub.s32 0, %v3533
  %v3535 = vrot.slane %v2919, %v3534
  %v3536 = vlaneseq
  %v3537 = vshrl.u32 %v3536, 7
  %v3538 = vsub.s32 0, %v3537
  %v3539 = vrot.slane %v2927, %v3538
  %v3540 = vlaneseq
  %v3541 = vshrl.u32 %v3540, 7
  %v3542 = vsub.s32 0, %v3541
  %v3543 = vrot.slane %v2926, %v3542
  %v3544 = vlaneseq
  %v3545 = vshrl.u32 %v3544, 7
  %v3546 = vsub.s32 0, %v3545
  %v3547 = vrot.slane %v2928, %v3546
  %v3548 = vlaneseq
  %v3549 = vshrl.u32 %v3548, 7
  %v3550 = vsub.s32 0, %v3549
  %v3551 = vrot.slane %v2984, %v3550
  %v3552 = vlaneseq
  %v3553 = vshrl.u32 %v3552, 7
  %v3554 = vsub.s32 0, %v3553
  %v3555 = vrot.slane %v2992, %v3554
  %v3556 = vlaneseq
  %v3557 = vshrl.u32 %v3556, 7
  %v3558 = vsub.s32 0, %v3557
  %v3559 = vrot.slane %v2991, %v3558
  %v3560 = vlaneseq
  %v3561 = vshrl.u32 %v3560, 7
  %v3562 = vsub.s32 0, %v3561
  %v3563 = vrot.slane %v2993, %v3562
  %v3564 = vlaneseq
  %v3565 = vshrl.u32 %v3564, 7
  %v3566 = vsub.s32 0, %v3565
  %v3567 = vrot.slane %v3001, %v3566
  %v3568 = vlaneseq
  %v3569 = vshrl.u32 %v3568, 7
  %v3570 = vsub.s32 0, %v3569
  %v3571 = vrot.slane %v3009, %v3570
  %v3572 = vlaneseq
  %v3573 = vshrl.u32 %v3572, 7
  %v3574 = vsub.s32 0, %v3573
  %v3575 = vrot.slane %v3008, %v3574
  %v3576 = vlaneseq
  %v3577 = vshrl.u32 %v3576, 7
  %v3578 = vsub.s32 0, %v3577
  %v3579 = vrot.slane %v3010, %v3578
  %vm3580 = vcmask 1041409
  %v3581 = vsel %vm3580, %v3107, %v3103
  %vm3582 = vcmask 1042434
  %v3583 = vsel %vm3582, %v3111, %v3581
  %vm3584 = vcmask 1043459
  %v3585 = vsel %vm3584, %v3115, %v3583
  %vm3586 = vcmask 1044484
  %v3587 = vsel %vm3586, %v3119, %v3585
  %vm3588 = vcmask 1045509
  %v3589 = vsel %vm3588, %v3123, %v3587
  %vm3590 = vcmask 1046534
  %v3591 = vsel %vm3590, %v3127, %v3589
  %vm3592 = vcmask 1047559
  %v3593 = vsel %vm3592, %v3131, %v3591
  %v3594 = vsel %vm3580, %v3139, %v3135
  %v3595 = vsel %vm3582, %v3143, %v3594
  %v3596 = vsel %vm3584, %v3147, %v3595
  %v3597 = vsel %vm3586, %v3151, %v3596
  %v3598 = vsel %vm3588, %v3155, %v3597
  %v3599 = vsel %vm3590, %v3159, %v3598
  %v3600 = vsel %vm3592, %v3163, %v3599
  %v3601 = vsel %vm3580, %v3171, %v3167
  %v3602 = vsel %vm3582, %v3175, %v3601
  %v3603 = vsel %vm3584, %v3179, %v3602
  %v3604 = vsel %vm3586, %v3183, %v3603
  %v3605 = vsel %vm3588, %v3187, %v3604
  %v3606 = vsel %vm3590, %v3191, %v3605
  %v3607 = vsel %vm3592, %v3195, %v3606
  %v3608 = vsel %vm3580, %v3203, %v3199
  %v3609 = vsel %vm3582, %v3207, %v3608
  %v3610 = vsel %vm3584, %v3211, %v3609
  %v3611 = vsel %vm3586, %v3215, %v3610
  %v3612 = vsel %vm3588, %v3219, %v3611
  %v3613 = vsel %vm3590, %v3223, %v3612
  %v3614 = vsel %vm3592, %v3227, %v3613
  %v3615 = vsel %vm3580, %v3235, %v3231
  %v3616 = vsel %vm3582, %v3239, %v3615
  %v3617 = vsel %vm3584, %v3243, %v3616
  %v3618 = vsel %vm3586, %v3247, %v3617
  %v3619 = vsel %vm3588, %v3251, %v3618
  %v3620 = vsel %vm3590, %v3255, %v3619
  %v3621 = vsel %vm3592, %v3259, %v3620
  %v3622 = vsel %vm3580, %v3267, %v3263
  %v3623 = vsel %vm3582, %v3271, %v3622
  %v3624 = vsel %vm3584, %v3275, %v3623
  %v3625 = vsel %vm3586, %v3279, %v3624
  %v3626 = vsel %vm3588, %v3283, %v3625
  %v3627 = vsel %vm3590, %v3287, %v3626
  %v3628 = vsel %vm3592, %v3291, %v3627
  %v3629 = vsel %vm3580, %v3299, %v3295
  %v3630 = vsel %vm3582, %v3303, %v3629
  %v3631 = vsel %vm3584, %v3307, %v3630
  %v3632 = vsel %vm3586, %v3311, %v3631
  %v3633 = vsel %vm3588, %v3315, %v3632
  %v3634 = vsel %vm3590, %v3319, %v3633
  %v3635 = vsel %vm3592, %v3323, %v3634
  %v3636 = vsel %vm3580, %v3331, %v3327
  %v3637 = vsel %vm3582, %v3335, %v3636
  %v3638 = vsel %vm3584, %v3339, %v3637
  %v3639 = vsel %vm3586, %v3343, %v3638
  %v3640 = vsel %vm3588, %v3347, %v3639
  %v3641 = vsel %vm3590, %v3351, %v3640
  %v3642 = vsel %vm3592, %v3355, %v3641
  %v3643 = vsel %vm3580, %v3363, %v3359
  %v3644 = vsel %vm3582, %v3367, %v3643
  %v3645 = vsel %vm3584, %v3371, %v3644
  %v3646 = vsel %vm3586, %v3375, %v3645
  %v3647 = vsel %vm3588, %v3379, %v3646
  %v3648 = vsel %vm3590, %v3383, %v3647
  %v3649 = vsel %vm3592, %v3387, %v3648
  %v3650 = vsel %vm3580, %v3395, %v3391
  %v3651 = vsel %vm3582, %v3399, %v3650
  %v3652 = vsel %vm3584, %v3403, %v3651
  %v3653 = vsel %vm3586, %v3407, %v3652
  %v3654 = vsel %vm3588, %v3411, %v3653
  %v3655 = vsel %vm3590, %v3415, %v3654
  %v3656 = vsel %vm3592, %v3419, %v3655
  %v3657 = vsel %vm3580, %v3427, %v3423
  %v3658 = vsel %vm3582, %v3431, %v3657
  %v3659 = vsel %vm3584, %v3435, %v3658
  %v3660 = vsel %vm3586, %v3439, %v3659
  %v3661 = vsel %vm3588, %v3443, %v3660
  %v3662 = vsel %vm3590, %v3447, %v3661
  %v3663 = vsel %vm3592, %v3451, %v3662
  %v3664 = vsel %vm3580, %v3459, %v3455
  %v3665 = vsel %vm3582, %v3463, %v3664
  %v3666 = vsel %vm3584, %v3467, %v3665
  %v3667 = vsel %vm3586, %v3471, %v3666
  %v3668 = vsel %vm3588, %v3475, %v3667
  %v3669 = vsel %vm3590, %v3479, %v3668
  %v3670 = vsel %vm3592, %v3483, %v3669
  %v3671 = vsel %vm3580, %v3491, %v3487
  %v3672 = vsel %vm3582, %v3495, %v3671
  %v3673 = vsel %vm3584, %v3499, %v3672
  %v3674 = vsel %vm3586, %v3503, %v3673
  %v3675 = vsel %vm3588, %v3507, %v3674
  %v3676 = vsel %vm3590, %v3511, %v3675
  %v3677 = vsel %vm3592, %v3515, %v3676
  %v3678 = vsel %vm3580, %v3523, %v3519
  %v3679 = vsel %vm3582, %v3527, %v3678
  %v3680 = vsel %vm3584, %v3531, %v3679
  %v3681 = vsel %vm3586, %v3535, %v3680
  %v3682 = vsel %vm3588, %v3539, %v3681
  %v3683 = vsel %vm3590, %v3543, %v3682
  %v3684 = vsel %vm3592, %v3547, %v3683
  %v3685 = vsel %vm3580, %v3555, %v3551
  %v3686 = vsel %vm3582, %v3559, %v3685
  %v3687 = vsel %vm3584, %v3563, %v3686
  %v3688 = vsel %vm3586, %v3567, %v3687
  %v3689 = vsel %vm3588, %v3571, %v3688
  %v3690 = vsel %vm3590, %v3575, %v3689
  %v3691 = vsel %vm3592, %v3579, %v3690
  %v3707 = vlaneseq
  %v3708 = vshrl.u32 %v3707, 7
  %v3709 = vsub.s32 1, %v3708
  %v3710 = vrot.slane %v1754, %v3709
  %v3711 = vlaneseq
  %v3712 = vshrl.u32 %v3711, 7
  %v3713 = vsub.s32 1, %v3712
  %v3714 = vrot.slane %v1762, %v3713
  %v3715 = vlaneseq
  %v3716 = vshrl.u32 %v3715, 7
  %v3717 = vsub.s32 1, %v3716
  %v3718 = vrot.slane %v1761, %v3717
  %v3719 = vlaneseq
  %v3720 = vshrl.u32 %v3719, 7
  %v3721 = vsub.s32 1, %v3720
  %v3722 = vrot.slane %v1763, %v3721
  %v3723 = vlaneseq
  %v3724 = vshrl.u32 %v3723, 7
  %v3725 = vsub.s32 1, %v3724
  %v3726 = vrot.slane %v1771, %v3725
  %v3727 = vlaneseq
  %v3728 = vshrl.u32 %v3727, 7
  %v3729 = vsub.s32 1, %v3728
  %v3730 = vrot.slane %v1779, %v3729
  %v3731 = vlaneseq
  %v3732 = vshrl.u32 %v3731, 7
  %v3733 = vsub.s32 1, %v3732
  %v3734 = vrot.slane %v1778, %v3733
  %v3735 = vlaneseq
  %v3736 = vshrl.u32 %v3735, 7
  %v3737 = vsub.s32 1, %v3736
  %v3738 = vrot.slane %v1780, %v3737
  %v3739 = vlaneseq
  %v3740 = vshrl.u32 %v3739, 7
  %v3741 = vsub.s32 1, %v3740
  %v3742 = vrot.slane %v1836, %v3741
  %v3743 = vlaneseq
  %v3744 = vshrl.u32 %v3743, 7
  %v3745 = vsub.s32 1, %v3744
  %v3746 = vrot.slane %v1844, %v3745
  %v3747 = vlaneseq
  %v3748 = vshrl.u32 %v3747, 7
  %v3749 = vsub.s32 1, %v3748
  %v3750 = vrot.slane %v1843, %v3749
  %v3751 = vlaneseq
  %v3752 = vshrl.u32 %v3751, 7
  %v3753 = vsub.s32 1, %v3752
  %v3754 = vrot.slane %v1845, %v3753
  %v3755 = vlaneseq
  %v3756 = vshrl.u32 %v3755, 7
  %v3757 = vsub.s32 1, %v3756
  %v3758 = vrot.slane %v1853, %v3757
  %v3759 = vlaneseq
  %v3760 = vshrl.u32 %v3759, 7
  %v3761 = vsub.s32 1, %v3760
  %v3762 = vrot.slane %v1861, %v3761
  %v3763 = vlaneseq
  %v3764 = vshrl.u32 %v3763, 7
  %v3765 = vsub.s32 1, %v3764
  %v3766 = vrot.slane %v1860, %v3765
  %v3767 = vlaneseq
  %v3768 = vshrl.u32 %v3767, 7
  %v3769 = vsub.s32 1, %v3768
  %v3770 = vrot.slane %v1862, %v3769
  %v3771 = vlaneseq
  %v3772 = vshrl.u32 %v3771, 7
  %v3773 = vsub.s32 1, %v3772
  %v3774 = vrot.slane %v1918, %v3773
  %v3775 = vlaneseq
  %v3776 = vshrl.u32 %v3775, 7
  %v3777 = vsub.s32 1, %v3776
  %v3778 = vrot.slane %v1926, %v3777
  %v3779 = vlaneseq
  %v3780 = vshrl.u32 %v3779, 7
  %v3781 = vsub.s32 1, %v3780
  %v3782 = vrot.slane %v1925, %v3781
  %v3783 = vlaneseq
  %v3784 = vshrl.u32 %v3783, 7
  %v3785 = vsub.s32 1, %v3784
  %v3786 = vrot.slane %v1927, %v3785
  %v3787 = vlaneseq
  %v3788 = vshrl.u32 %v3787, 7
  %v3789 = vsub.s32 1, %v3788
  %v3790 = vrot.slane %v1935, %v3789
  %v3791 = vlaneseq
  %v3792 = vshrl.u32 %v3791, 7
  %v3793 = vsub.s32 1, %v3792
  %v3794 = vrot.slane %v1943, %v3793
  %v3795 = vlaneseq
  %v3796 = vshrl.u32 %v3795, 7
  %v3797 = vsub.s32 1, %v3796
  %v3798 = vrot.slane %v1942, %v3797
  %v3799 = vlaneseq
  %v3800 = vshrl.u32 %v3799, 7
  %v3801 = vsub.s32 1, %v3800
  %v3802 = vrot.slane %v1944, %v3801
  %v3803 = vlaneseq
  %v3804 = vshrl.u32 %v3803, 7
  %v3805 = vsub.s32 1, %v3804
  %v3806 = vrot.slane %v2000, %v3805
  %v3807 = vlaneseq
  %v3808 = vshrl.u32 %v3807, 7
  %v3809 = vsub.s32 1, %v3808
  %v3810 = vrot.slane %v2008, %v3809
  %v3811 = vlaneseq
  %v3812 = vshrl.u32 %v3811, 7
  %v3813 = vsub.s32 1, %v3812
  %v3814 = vrot.slane %v2007, %v3813
  %v3815 = vlaneseq
  %v3816 = vshrl.u32 %v3815, 7
  %v3817 = vsub.s32 1, %v3816
  %v3818 = vrot.slane %v2009, %v3817
  %v3819 = vlaneseq
  %v3820 = vshrl.u32 %v3819, 7
  %v3821 = vsub.s32 1, %v3820
  %v3822 = vrot.slane %v2017, %v3821
  %v3823 = vlaneseq
  %v3824 = vshrl.u32 %v3823, 7
  %v3825 = vsub.s32 1, %v3824
  %v3826 = vrot.slane %v2025, %v3825
  %v3827 = vlaneseq
  %v3828 = vshrl.u32 %v3827, 7
  %v3829 = vsub.s32 1, %v3828
  %v3830 = vrot.slane %v2024, %v3829
  %v3831 = vlaneseq
  %v3832 = vshrl.u32 %v3831, 7
  %v3833 = vsub.s32 1, %v3832
  %v3834 = vrot.slane %v2026, %v3833
  %v3835 = vlaneseq
  %v3836 = vshrl.u32 %v3835, 7
  %v3837 = vsub.s32 1, %v3836
  %v3838 = vrot.slane %v2082, %v3837
  %v3839 = vlaneseq
  %v3840 = vshrl.u32 %v3839, 7
  %v3841 = vsub.s32 1, %v3840
  %v3842 = vrot.slane %v2090, %v3841
  %v3843 = vlaneseq
  %v3844 = vshrl.u32 %v3843, 7
  %v3845 = vsub.s32 1, %v3844
  %v3846 = vrot.slane %v2089, %v3845
  %v3847 = vlaneseq
  %v3848 = vshrl.u32 %v3847, 7
  %v3849 = vsub.s32 1, %v3848
  %v3850 = vrot.slane %v2091, %v3849
  %v3851 = vlaneseq
  %v3852 = vshrl.u32 %v3851, 7
  %v3853 = vsub.s32 1, %v3852
  %v3854 = vrot.slane %v2099, %v3853
  %v3855 = vlaneseq
  %v3856 = vshrl.u32 %v3855, 7
  %v3857 = vsub.s32 1, %v3856
  %v3858 = vrot.slane %v2107, %v3857
  %v3859 = vlaneseq
  %v3860 = vshrl.u32 %v3859, 7
  %v3861 = vsub.s32 1, %v3860
  %v3862 = vrot.slane %v2106, %v3861
  %v3863 = vlaneseq
  %v3864 = vshrl.u32 %v3863, 7
  %v3865 = vsub.s32 1, %v3864
  %v3866 = vrot.slane %v2108, %v3865
  %v3867 = vlaneseq
  %v3868 = vshrl.u32 %v3867, 7
  %v3869 = vsub.s32 1, %v3868
  %v3870 = vrot.slane %v2164, %v3869
  %v3871 = vlaneseq
  %v3872 = vshrl.u32 %v3871, 7
  %v3873 = vsub.s32 1, %v3872
  %v3874 = vrot.slane %v2172, %v3873
  %v3875 = vlaneseq
  %v3876 = vshrl.u32 %v3875, 7
  %v3877 = vsub.s32 1, %v3876
  %v3878 = vrot.slane %v2171, %v3877
  %v3879 = vlaneseq
  %v3880 = vshrl.u32 %v3879, 7
  %v3881 = vsub.s32 1, %v3880
  %v3882 = vrot.slane %v2173, %v3881
  %v3883 = vlaneseq
  %v3884 = vshrl.u32 %v3883, 7
  %v3885 = vsub.s32 1, %v3884
  %v3886 = vrot.slane %v2181, %v3885
  %v3887 = vlaneseq
  %v3888 = vshrl.u32 %v3887, 7
  %v3889 = vsub.s32 1, %v3888
  %v3890 = vrot.slane %v2189, %v3889
  %v3891 = vlaneseq
  %v3892 = vshrl.u32 %v3891, 7
  %v3893 = vsub.s32 1, %v3892
  %v3894 = vrot.slane %v2188, %v3893
  %v3895 = vlaneseq
  %v3896 = vshrl.u32 %v3895, 7
  %v3897 = vsub.s32 1, %v3896
  %v3898 = vrot.slane %v2190, %v3897
  %v3899 = vlaneseq
  %v3900 = vshrl.u32 %v3899, 7
  %v3901 = vsub.s32 1, %v3900
  %v3902 = vrot.slane %v2246, %v3901
  %v3903 = vlaneseq
  %v3904 = vshrl.u32 %v3903, 7
  %v3905 = vsub.s32 1, %v3904
  %v3906 = vrot.slane %v2254, %v3905
  %v3907 = vlaneseq
  %v3908 = vshrl.u32 %v3907, 7
  %v3909 = vsub.s32 1, %v3908
  %v3910 = vrot.slane %v2253, %v3909
  %v3911 = vlaneseq
  %v3912 = vshrl.u32 %v3911, 7
  %v3913 = vsub.s32 1, %v3912
  %v3914 = vrot.slane %v2255, %v3913
  %v3915 = vlaneseq
  %v3916 = vshrl.u32 %v3915, 7
  %v3917 = vsub.s32 1, %v3916
  %v3918 = vrot.slane %v2263, %v3917
  %v3919 = vlaneseq
  %v3920 = vshrl.u32 %v3919, 7
  %v3921 = vsub.s32 1, %v3920
  %v3922 = vrot.slane %v2271, %v3921
  %v3923 = vlaneseq
  %v3924 = vshrl.u32 %v3923, 7
  %v3925 = vsub.s32 1, %v3924
  %v3926 = vrot.slane %v2270, %v3925
  %v3927 = vlaneseq
  %v3928 = vshrl.u32 %v3927, 7
  %v3929 = vsub.s32 1, %v3928
  %v3930 = vrot.slane %v2272, %v3929
  %v3931 = vlaneseq
  %v3932 = vshrl.u32 %v3931, 7
  %v3933 = vsub.s32 1, %v3932
  %v3934 = vrot.slane %v2328, %v3933
  %v3935 = vlaneseq
  %v3936 = vshrl.u32 %v3935, 7
  %v3937 = vsub.s32 1, %v3936
  %v3938 = vrot.slane %v2336, %v3937
  %v3939 = vlaneseq
  %v3940 = vshrl.u32 %v3939, 7
  %v3941 = vsub.s32 1, %v3940
  %v3942 = vrot.slane %v2335, %v3941
  %v3943 = vlaneseq
  %v3944 = vshrl.u32 %v3943, 7
  %v3945 = vsub.s32 1, %v3944
  %v3946 = vrot.slane %v2337, %v3945
  %v3947 = vlaneseq
  %v3948 = vshrl.u32 %v3947, 7
  %v3949 = vsub.s32 1, %v3948
  %v3950 = vrot.slane %v2345, %v3949
  %v3951 = vlaneseq
  %v3952 = vshrl.u32 %v3951, 7
  %v3953 = vsub.s32 1, %v3952
  %v3954 = vrot.slane %v2353, %v3953
  %v3955 = vlaneseq
  %v3956 = vshrl.u32 %v3955, 7
  %v3957 = vsub.s32 1, %v3956
  %v3958 = vrot.slane %v2352, %v3957
  %v3959 = vlaneseq
  %v3960 = vshrl.u32 %v3959, 7
  %v3961 = vsub.s32 1, %v3960
  %v3962 = vrot.slane %v2354, %v3961
  %v3963 = vlaneseq
  %v3964 = vshrl.u32 %v3963, 7
  %v3965 = vsub.s32 1, %v3964
  %v3966 = vrot.slane %v2492, %v3965
  %v3967 = vlaneseq
  %v3968 = vshrl.u32 %v3967, 7
  %v3969 = vsub.s32 1, %v3968
  %v3970 = vrot.slane %v2500, %v3969
  %v3971 = vlaneseq
  %v3972 = vshrl.u32 %v3971, 7
  %v3973 = vsub.s32 1, %v3972
  %v3974 = vrot.slane %v2499, %v3973
  %v3975 = vlaneseq
  %v3976 = vshrl.u32 %v3975, 7
  %v3977 = vsub.s32 1, %v3976
  %v3978 = vrot.slane %v2501, %v3977
  %v3979 = vlaneseq
  %v3980 = vshrl.u32 %v3979, 7
  %v3981 = vsub.s32 1, %v3980
  %v3982 = vrot.slane %v2509, %v3981
  %v3983 = vlaneseq
  %v3984 = vshrl.u32 %v3983, 7
  %v3985 = vsub.s32 1, %v3984
  %v3986 = vrot.slane %v2517, %v3985
  %v3987 = vlaneseq
  %v3988 = vshrl.u32 %v3987, 7
  %v3989 = vsub.s32 1, %v3988
  %v3990 = vrot.slane %v2516, %v3989
  %v3991 = vlaneseq
  %v3992 = vshrl.u32 %v3991, 7
  %v3993 = vsub.s32 1, %v3992
  %v3994 = vrot.slane %v2518, %v3993
  %v3995 = vlaneseq
  %v3996 = vshrl.u32 %v3995, 7
  %v3997 = vsub.s32 1, %v3996
  %v3998 = vrot.slane %v2574, %v3997
  %v3999 = vlaneseq
  %v4000 = vshrl.u32 %v3999, 7
  %v4001 = vsub.s32 1, %v4000
  %v4002 = vrot.slane %v2582, %v4001
  %v4003 = vlaneseq
  %v4004 = vshrl.u32 %v4003, 7
  %v4005 = vsub.s32 1, %v4004
  %v4006 = vrot.slane %v2581, %v4005
  %v4007 = vlaneseq
  %v4008 = vshrl.u32 %v4007, 7
  %v4009 = vsub.s32 1, %v4008
  %v4010 = vrot.slane %v2583, %v4009
  %v4011 = vlaneseq
  %v4012 = vshrl.u32 %v4011, 7
  %v4013 = vsub.s32 1, %v4012
  %v4014 = vrot.slane %v2591, %v4013
  %v4015 = vlaneseq
  %v4016 = vshrl.u32 %v4015, 7
  %v4017 = vsub.s32 1, %v4016
  %v4018 = vrot.slane %v2599, %v4017
  %v4019 = vlaneseq
  %v4020 = vshrl.u32 %v4019, 7
  %v4021 = vsub.s32 1, %v4020
  %v4022 = vrot.slane %v2598, %v4021
  %v4023 = vlaneseq
  %v4024 = vshrl.u32 %v4023, 7
  %v4025 = vsub.s32 1, %v4024
  %v4026 = vrot.slane %v2600, %v4025
  %v4027 = vlaneseq
  %v4028 = vshrl.u32 %v4027, 7
  %v4029 = vsub.s32 1, %v4028
  %v4030 = vrot.slane %v2656, %v4029
  %v4031 = vlaneseq
  %v4032 = vshrl.u32 %v4031, 7
  %v4033 = vsub.s32 1, %v4032
  %v4034 = vrot.slane %v2664, %v4033
  %v4035 = vlaneseq
  %v4036 = vshrl.u32 %v4035, 7
  %v4037 = vsub.s32 1, %v4036
  %v4038 = vrot.slane %v2663, %v4037
  %v4039 = vlaneseq
  %v4040 = vshrl.u32 %v4039, 7
  %v4041 = vsub.s32 1, %v4040
  %v4042 = vrot.slane %v2665, %v4041
  %v4043 = vlaneseq
  %v4044 = vshrl.u32 %v4043, 7
  %v4045 = vsub.s32 1, %v4044
  %v4046 = vrot.slane %v2673, %v4045
  %v4047 = vlaneseq
  %v4048 = vshrl.u32 %v4047, 7
  %v4049 = vsub.s32 1, %v4048
  %v4050 = vrot.slane %v2681, %v4049
  %v4051 = vlaneseq
  %v4052 = vshrl.u32 %v4051, 7
  %v4053 = vsub.s32 1, %v4052
  %v4054 = vrot.slane %v2680, %v4053
  %v4055 = vlaneseq
  %v4056 = vshrl.u32 %v4055, 7
  %v4057 = vsub.s32 1, %v4056
  %v4058 = vrot.slane %v2682, %v4057
  %v4059 = vlaneseq
  %v4060 = vshrl.u32 %v4059, 7
  %v4061 = vsub.s32 1, %v4060
  %v4062 = vrot.slane %v2738, %v4061
  %v4063 = vlaneseq
  %v4064 = vshrl.u32 %v4063, 7
  %v4065 = vsub.s32 1, %v4064
  %v4066 = vrot.slane %v2746, %v4065
  %v4067 = vlaneseq
  %v4068 = vshrl.u32 %v4067, 7
  %v4069 = vsub.s32 1, %v4068
  %v4070 = vrot.slane %v2745, %v4069
  %v4071 = vlaneseq
  %v4072 = vshrl.u32 %v4071, 7
  %v4073 = vsub.s32 1, %v4072
  %v4074 = vrot.slane %v2747, %v4073
  %v4075 = vlaneseq
  %v4076 = vshrl.u32 %v4075, 7
  %v4077 = vsub.s32 1, %v4076
  %v4078 = vrot.slane %v2755, %v4077
  %v4079 = vlaneseq
  %v4080 = vshrl.u32 %v4079, 7
  %v4081 = vsub.s32 1, %v4080
  %v4082 = vrot.slane %v2763, %v4081
  %v4083 = vlaneseq
  %v4084 = vshrl.u32 %v4083, 7
  %v4085 = vsub.s32 1, %v4084
  %v4086 = vrot.slane %v2762, %v4085
  %v4087 = vlaneseq
  %v4088 = vshrl.u32 %v4087, 7
  %v4089 = vsub.s32 1, %v4088
  %v4090 = vrot.slane %v2764, %v4089
  %v4091 = vlaneseq
  %v4092 = vshrl.u32 %v4091, 7
  %v4093 = vsub.s32 1, %v4092
  %v4094 = vrot.slane %v2820, %v4093
  %v4095 = vlaneseq
  %v4096 = vshrl.u32 %v4095, 7
  %v4097 = vsub.s32 1, %v4096
  %v4098 = vrot.slane %v2828, %v4097
  %v4099 = vlaneseq
  %v4100 = vshrl.u32 %v4099, 7
  %v4101 = vsub.s32 1, %v4100
  %v4102 = vrot.slane %v2827, %v4101
  %v4103 = vlaneseq
  %v4104 = vshrl.u32 %v4103, 7
  %v4105 = vsub.s32 1, %v4104
  %v4106 = vrot.slane %v2829, %v4105
  %v4107 = vlaneseq
  %v4108 = vshrl.u32 %v4107, 7
  %v4109 = vsub.s32 1, %v4108
  %v4110 = vrot.slane %v2837, %v4109
  %v4111 = vlaneseq
  %v4112 = vshrl.u32 %v4111, 7
  %v4113 = vsub.s32 1, %v4112
  %v4114 = vrot.slane %v2845, %v4113
  %v4115 = vlaneseq
  %v4116 = vshrl.u32 %v4115, 7
  %v4117 = vsub.s32 1, %v4116
  %v4118 = vrot.slane %v2844, %v4117
  %v4119 = vlaneseq
  %v4120 = vshrl.u32 %v4119, 7
  %v4121 = vsub.s32 1, %v4120
  %v4122 = vrot.slane %v2846, %v4121
  %v4123 = vlaneseq
  %v4124 = vshrl.u32 %v4123, 7
  %v4125 = vsub.s32 1, %v4124
  %v4126 = vrot.slane %v2902, %v4125
  %v4127 = vlaneseq
  %v4128 = vshrl.u32 %v4127, 7
  %v4129 = vsub.s32 1, %v4128
  %v4130 = vrot.slane %v2910, %v4129
  %v4131 = vlaneseq
  %v4132 = vshrl.u32 %v4131, 7
  %v4133 = vsub.s32 1, %v4132
  %v4134 = vrot.slane %v2909, %v4133
  %v4135 = vlaneseq
  %v4136 = vshrl.u32 %v4135, 7
  %v4137 = vsub.s32 1, %v4136
  %v4138 = vrot.slane %v2911, %v4137
  %v4139 = vlaneseq
  %v4140 = vshrl.u32 %v4139, 7
  %v4141 = vsub.s32 1, %v4140
  %v4142 = vrot.slane %v2919, %v4141
  %v4143 = vlaneseq
  %v4144 = vshrl.u32 %v4143, 7
  %v4145 = vsub.s32 1, %v4144
  %v4146 = vrot.slane %v2927, %v4145
  %v4147 = vlaneseq
  %v4148 = vshrl.u32 %v4147, 7
  %v4149 = vsub.s32 1, %v4148
  %v4150 = vrot.slane %v2926, %v4149
  %v4151 = vlaneseq
  %v4152 = vshrl.u32 %v4151, 7
  %v4153 = vsub.s32 1, %v4152
  %v4154 = vrot.slane %v2928, %v4153
  %v4155 = vlaneseq
  %v4156 = vshrl.u32 %v4155, 7
  %v4157 = vsub.s32 1, %v4156
  %v4158 = vrot.slane %v2984, %v4157
  %v4159 = vlaneseq
  %v4160 = vshrl.u32 %v4159, 7
  %v4161 = vsub.s32 1, %v4160
  %v4162 = vrot.slane %v2992, %v4161
  %v4163 = vlaneseq
  %v4164 = vshrl.u32 %v4163, 7
  %v4165 = vsub.s32 1, %v4164
  %v4166 = vrot.slane %v2991, %v4165
  %v4167 = vlaneseq
  %v4168 = vshrl.u32 %v4167, 7
  %v4169 = vsub.s32 1, %v4168
  %v4170 = vrot.slane %v2993, %v4169
  %v4171 = vlaneseq
  %v4172 = vshrl.u32 %v4171, 7
  %v4173 = vsub.s32 1, %v4172
  %v4174 = vrot.slane %v3001, %v4173
  %v4175 = vlaneseq
  %v4176 = vshrl.u32 %v4175, 7
  %v4177 = vsub.s32 1, %v4176
  %v4178 = vrot.slane %v3009, %v4177
  %v4179 = vlaneseq
  %v4180 = vshrl.u32 %v4179, 7
  %v4181 = vsub.s32 1, %v4180
  %v4182 = vrot.slane %v3008, %v4181
  %v4183 = vlaneseq
  %v4184 = vshrl.u32 %v4183, 7
  %v4185 = vsub.s32 1, %v4184
  %v4186 = vrot.slane %v3010, %v4185
  %v4187 = vsel %vm3580, %v3714, %v3710
  %v4188 = vsel %vm3582, %v3718, %v4187
  %v4189 = vsel %vm3584, %v3722, %v4188
  %v4190 = vsel %vm3586, %v3726, %v4189
  %v4191 = vsel %vm3588, %v3730, %v4190
  %v4192 = vsel %vm3590, %v3734, %v4191
  %v4193 = vsel %vm3592, %v3738, %v4192
  %v4194 = vsel %vm3580, %v3746, %v3742
  %v4195 = vsel %vm3582, %v3750, %v4194
  %v4196 = vsel %vm3584, %v3754, %v4195
  %v4197 = vsel %vm3586, %v3758, %v4196
  %v4198 = vsel %vm3588, %v3762, %v4197
  %v4199 = vsel %vm3590, %v3766, %v4198
  %v4200 = vsel %vm3592, %v3770, %v4199
  %v4201 = vsel %vm3580, %v3778, %v3774
  %v4202 = vsel %vm3582, %v3782, %v4201
  %v4203 = vsel %vm3584, %v3786, %v4202
  %v4204 = vsel %vm3586, %v3790, %v4203
  %v4205 = vsel %vm3588, %v3794, %v4204
  %v4206 = vsel %vm3590, %v3798, %v4205
  %v4207 = vsel %vm3592, %v3802, %v4206
  %v4208 = vsel %vm3580, %v3810, %v3806
  %v4209 = vsel %vm3582, %v3814, %v4208
  %v4210 = vsel %vm3584, %v3818, %v4209
  %v4211 = vsel %vm3586, %v3822, %v4210
  %v4212 = vsel %vm3588, %v3826, %v4211
  %v4213 = vsel %vm3590, %v3830, %v4212
  %v4214 = vsel %vm3592, %v3834, %v4213
  %v4215 = vsel %vm3580, %v3842, %v3838
  %v4216 = vsel %vm3582, %v3846, %v4215
  %v4217 = vsel %vm3584, %v3850, %v4216
  %v4218 = vsel %vm3586, %v3854, %v4217
  %v4219 = vsel %vm3588, %v3858, %v4218
  %v4220 = vsel %vm3590, %v3862, %v4219
  %v4221 = vsel %vm3592, %v3866, %v4220
  %v4222 = vsel %vm3580, %v3874, %v3870
  %v4223 = vsel %vm3582, %v3878, %v4222
  %v4224 = vsel %vm3584, %v3882, %v4223
  %v4225 = vsel %vm3586, %v3886, %v4224
  %v4226 = vsel %vm3588, %v3890, %v4225
  %v4227 = vsel %vm3590, %v3894, %v4226
  %v4228 = vsel %vm3592, %v3898, %v4227
  %v4229 = vsel %vm3580, %v3906, %v3902
  %v4230 = vsel %vm3582, %v3910, %v4229
  %v4231 = vsel %vm3584, %v3914, %v4230
  %v4232 = vsel %vm3586, %v3918, %v4231
  %v4233 = vsel %vm3588, %v3922, %v4232
  %v4234 = vsel %vm3590, %v3926, %v4233
  %v4235 = vsel %vm3592, %v3930, %v4234
  %v4236 = vsel %vm3580, %v3938, %v3934
  %v4237 = vsel %vm3582, %v3942, %v4236
  %v4238 = vsel %vm3584, %v3946, %v4237
  %v4239 = vsel %vm3586, %v3950, %v4238
  %v4240 = vsel %vm3588, %v3954, %v4239
  %v4241 = vsel %vm3590, %v3958, %v4240
  %v4242 = vsel %vm3592, %v3962, %v4241
  %v4243 = vsel %vm3580, %v3970, %v3966
  %v4244 = vsel %vm3582, %v3974, %v4243
  %v4245 = vsel %vm3584, %v3978, %v4244
  %v4246 = vsel %vm3586, %v3982, %v4245
  %v4247 = vsel %vm3588, %v3986, %v4246
  %v4248 = vsel %vm3590, %v3990, %v4247
  %v4249 = vsel %vm3592, %v3994, %v4248
  %v4250 = vsel %vm3580, %v4002, %v3998
  %v4251 = vsel %vm3582, %v4006, %v4250
  %v4252 = vsel %vm3584, %v4010, %v4251
  %v4253 = vsel %vm3586, %v4014, %v4252
  %v4254 = vsel %vm3588, %v4018, %v4253
  %v4255 = vsel %vm3590, %v4022, %v4254
  %v4256 = vsel %vm3592, %v4026, %v4255
  %v4257 = vsel %vm3580, %v4034, %v4030
  %v4258 = vsel %vm3582, %v4038, %v4257
  %v4259 = vsel %vm3584, %v4042, %v4258
  %v4260 = vsel %vm3586, %v4046, %v4259
  %v4261 = vsel %vm3588, %v4050, %v4260
  %v4262 = vsel %vm3590, %v4054, %v4261
  %v4263 = vsel %vm3592, %v4058, %v4262
  %v4264 = vsel %vm3580, %v4066, %v4062
  %v4265 = vsel %vm3582, %v4070, %v4264
  %v4266 = vsel %vm3584, %v4074, %v4265
  %v4267 = vsel %vm3586, %v4078, %v4266
  %v4268 = vsel %vm3588, %v4082, %v4267
  %v4269 = vsel %vm3590, %v4086, %v4268
  %v4270 = vsel %vm3592, %v4090, %v4269
  %v4271 = vsel %vm3580, %v4098, %v4094
  %v4272 = vsel %vm3582, %v4102, %v4271
  %v4273 = vsel %vm3584, %v4106, %v4272
  %v4274 = vsel %vm3586, %v4110, %v4273
  %v4275 = vsel %vm3588, %v4114, %v4274
  %v4276 = vsel %vm3590, %v4118, %v4275
  %v4277 = vsel %vm3592, %v4122, %v4276
  %v4278 = vsel %vm3580, %v4130, %v4126
  %v4279 = vsel %vm3582, %v4134, %v4278
  %v4280 = vsel %vm3584, %v4138, %v4279
  %v4281 = vsel %vm3586, %v4142, %v4280
  %v4282 = vsel %vm3588, %v4146, %v4281
  %v4283 = vsel %vm3590, %v4150, %v4282
  %v4284 = vsel %vm3592, %v4154, %v4283
  %v4285 = vsel %vm3580, %v4162, %v4158
  %v4286 = vsel %vm3582, %v4166, %v4285
  %v4287 = vsel %vm3584, %v4170, %v4286
  %v4288 = vsel %vm3586, %v4174, %v4287
  %v4289 = vsel %vm3588, %v4178, %v4288
  %v4290 = vsel %vm3590, %v4182, %v4289
  %v4291 = vsel %vm3592, %v4186, %v4290
  %4292 = vrot.lane.b32.xlu0 %v4193, 16
  %v4293 = vpop.permute.xlu0 %4292
  %4294 = vrot.lane.b32.xlu0 %v4200, 16
  %v4295 = vpop.permute.xlu0 %4294
  %4296 = vrot.lane.b32.xlu0 %v4207, 16
  %v4297 = vpop.permute.xlu0 %4296
  %4298 = vrot.lane.b32.xlu0 %v4214, 16
  %v4299 = vpop.permute.xlu0 %4298
  %4300 = vrot.lane.b32.xlu0 %v4221, 16
  %v4301 = vpop.permute.xlu0 %4300
  %4302 = vrot.lane.b32.xlu0 %v4228, 16
  %v4303 = vpop.permute.xlu0 %4302
  %4304 = vrot.lane.b32.xlu0 %v4235, 16
  %v4305 = vpop.permute.xlu0 %4304
  %4306 = vrot.lane.b32.xlu0 %v4242, 16
  %v4307 = vpop.permute.xlu0 %4306
  %4308 = vrot.lane.b32.xlu0 %v4249, 16
  %v4309 = vpop.permute.xlu0 %4308
  %4310 = vrot.lane.b32.xlu0 %v4256, 16
  %v4311 = vpop.permute.xlu0 %4310
  %4312 = vrot.lane.b32.xlu0 %v4263, 16
  %v4313 = vpop.permute.xlu0 %4312
  %4314 = vrot.lane.b32.xlu0 %v4270, 16
  %v4315 = vpop.permute.xlu0 %4314
  %4316 = vrot.lane.b32.xlu0 %v4277, 16
  %v4317 = vpop.permute.xlu0 %4316
  %4318 = vrot.lane.b32.xlu0 %v4284, 16
  %v4319 = vpop.permute.xlu0 %4318
  %4320 = vrot.lane.b32.xlu0 %v4291, 16
  %v4321 = vpop.permute.xlu0 %4320
  %v4337 = vlaneseq
  %v4338 = vshrl.u32 %v4337, 7
  %v4339 = vsub.s32 0, %v4338
  %v4340 = vrot.slane %v1787, %v4339
  %v4341 = vlaneseq
  %v4342 = vshrl.u32 %v4341, 7
  %v4343 = vsub.s32 0, %v4342
  %v4344 = vrot.slane %v1869, %v4343
  %v4345 = vlaneseq
  %v4346 = vshrl.u32 %v4345, 7
  %v4347 = vsub.s32 0, %v4346
  %v4348 = vrot.slane %v1951, %v4347
  %v4349 = vlaneseq
  %v4350 = vshrl.u32 %v4349, 7
  %v4351 = vsub.s32 0, %v4350
  %v4352 = vrot.slane %v2033, %v4351
  %v4353 = vlaneseq
  %v4354 = vshrl.u32 %v4353, 7
  %v4355 = vsub.s32 0, %v4354
  %v4356 = vrot.slane %v2115, %v4355
  %v4357 = vlaneseq
  %v4358 = vshrl.u32 %v4357, 7
  %v4359 = vsub.s32 0, %v4358
  %v4360 = vrot.slane %v2197, %v4359
  %v4361 = vlaneseq
  %v4362 = vshrl.u32 %v4361, 7
  %v4363 = vsub.s32 0, %v4362
  %v4364 = vrot.slane %v2279, %v4363
  %v4365 = vlaneseq
  %v4366 = vshrl.u32 %v4365, 7
  %v4367 = vsub.s32 0, %v4366
  %v4368 = vrot.slane %v2361, %v4367
  %v4369 = vlaneseq
  %v4370 = vshrl.u32 %v4369, 7
  %v4371 = vsub.s32 0, %v4370
  %v4372 = vrot.slane %v2525, %v4371
  %v4373 = vlaneseq
  %v4374 = vshrl.u32 %v4373, 7
  %v4375 = vsub.s32 0, %v4374
  %v4376 = vrot.slane %v2607, %v4375
  %v4377 = vlaneseq
  %v4378 = vshrl.u32 %v4377, 7
  %v4379 = vsub.s32 0, %v4378
  %v4380 = vrot.slane %v2689, %v4379
  %v4381 = vlaneseq
  %v4382 = vshrl.u32 %v4381, 7
  %v4383 = vsub.s32 0, %v4382
  %v4384 = vrot.slane %v2771, %v4383
  %v4385 = vlaneseq
  %v4386 = vshrl.u32 %v4385, 7
  %v4387 = vsub.s32 0, %v4386
  %v4388 = vrot.slane %v2853, %v4387
  %v4389 = vlaneseq
  %v4390 = vshrl.u32 %v4389, 7
  %v4391 = vsub.s32 0, %v4390
  %v4392 = vrot.slane %v2935, %v4391
  %v4393 = vlaneseq
  %v4394 = vshrl.u32 %v4393, 7
  %v4395 = vsub.s32 0, %v4394
  %v4396 = vrot.slane %v3017, %v4395
  %v4397 = vsel %vm3580, %v3111, %v3107
  %v4398 = vsel %vm3582, %v3115, %v4397
  %v4399 = vsel %vm3584, %v3119, %v4398
  %v4400 = vsel %vm3586, %v3123, %v4399
  %v4401 = vsel %vm3588, %v3127, %v4400
  %v4402 = vsel %vm3590, %v3131, %v4401
  %v4403 = vsel %vm3592, %v4340, %v4402
  %v4404 = vsel %vm3580, %v3143, %v3139
  %v4405 = vsel %vm3582, %v3147, %v4404
  %v4406 = vsel %vm3584, %v3151, %v4405
  %v4407 = vsel %vm3586, %v3155, %v4406
  %v4408 = vsel %vm3588, %v3159, %v4407
  %v4409 = vsel %vm3590, %v3163, %v4408
  %v4410 = vsel %vm3592, %v4344, %v4409
  %v4411 = vsel %vm3580, %v3175, %v3171
  %v4412 = vsel %vm3582, %v3179, %v4411
  %v4413 = vsel %vm3584, %v3183, %v4412
  %v4414 = vsel %vm3586, %v3187, %v4413
  %v4415 = vsel %vm3588, %v3191, %v4414
  %v4416 = vsel %vm3590, %v3195, %v4415
  %v4417 = vsel %vm3592, %v4348, %v4416
  %v4418 = vsel %vm3580, %v3207, %v3203
  %v4419 = vsel %vm3582, %v3211, %v4418
  %v4420 = vsel %vm3584, %v3215, %v4419
  %v4421 = vsel %vm3586, %v3219, %v4420
  %v4422 = vsel %vm3588, %v3223, %v4421
  %v4423 = vsel %vm3590, %v3227, %v4422
  %v4424 = vsel %vm3592, %v4352, %v4423
  %v4425 = vsel %vm3580, %v3239, %v3235
  %v4426 = vsel %vm3582, %v3243, %v4425
  %v4427 = vsel %vm3584, %v3247, %v4426
  %v4428 = vsel %vm3586, %v3251, %v4427
  %v4429 = vsel %vm3588, %v3255, %v4428
  %v4430 = vsel %vm3590, %v3259, %v4429
  %v4431 = vsel %vm3592, %v4356, %v4430
  %v4432 = vsel %vm3580, %v3271, %v3267
  %v4433 = vsel %vm3582, %v3275, %v4432
  %v4434 = vsel %vm3584, %v3279, %v4433
  %v4435 = vsel %vm3586, %v3283, %v4434
  %v4436 = vsel %vm3588, %v3287, %v4435
  %v4437 = vsel %vm3590, %v3291, %v4436
  %v4438 = vsel %vm3592, %v4360, %v4437
  %v4439 = vsel %vm3580, %v3303, %v3299
  %v4440 = vsel %vm3582, %v3307, %v4439
  %v4441 = vsel %vm3584, %v3311, %v4440
  %v4442 = vsel %vm3586, %v3315, %v4441
  %v4443 = vsel %vm3588, %v3319, %v4442
  %v4444 = vsel %vm3590, %v3323, %v4443
  %v4445 = vsel %vm3592, %v4364, %v4444
  %v4446 = vsel %vm3580, %v3335, %v3331
  %v4447 = vsel %vm3582, %v3339, %v4446
  %v4448 = vsel %vm3584, %v3343, %v4447
  %v4449 = vsel %vm3586, %v3347, %v4448
  %v4450 = vsel %vm3588, %v3351, %v4449
  %v4451 = vsel %vm3590, %v3355, %v4450
  %v4452 = vsel %vm3592, %v4368, %v4451
  %v4453 = vsel %vm3580, %v3367, %v3363
  %v4454 = vsel %vm3582, %v3371, %v4453
  %v4455 = vsel %vm3584, %v3375, %v4454
  %v4456 = vsel %vm3586, %v3379, %v4455
  %v4457 = vsel %vm3588, %v3383, %v4456
  %v4458 = vsel %vm3590, %v3387, %v4457
  %v4459 = vsel %vm3592, %v4372, %v4458
  %v4460 = vsel %vm3580, %v3399, %v3395
  %v4461 = vsel %vm3582, %v3403, %v4460
  %v4462 = vsel %vm3584, %v3407, %v4461
  %v4463 = vsel %vm3586, %v3411, %v4462
  %v4464 = vsel %vm3588, %v3415, %v4463
  %v4465 = vsel %vm3590, %v3419, %v4464
  %v4466 = vsel %vm3592, %v4376, %v4465
  %v4467 = vsel %vm3580, %v3431, %v3427
  %v4468 = vsel %vm3582, %v3435, %v4467
  %v4469 = vsel %vm3584, %v3439, %v4468
  %v4470 = vsel %vm3586, %v3443, %v4469
  %v4471 = vsel %vm3588, %v3447, %v4470
  %v4472 = vsel %vm3590, %v3451, %v4471
  %v4473 = vsel %vm3592, %v4380, %v4472
  %v4474 = vsel %vm3580, %v3463, %v3459
  %v4475 = vsel %vm3582, %v3467, %v4474
  %v4476 = vsel %vm3584, %v3471, %v4475
  %v4477 = vsel %vm3586, %v3475, %v4476
  %v4478 = vsel %vm3588, %v3479, %v4477
  %v4479 = vsel %vm3590, %v3483, %v4478
  %v4480 = vsel %vm3592, %v4384, %v4479
  %v4481 = vsel %vm3580, %v3495, %v3491
  %v4482 = vsel %vm3582, %v3499, %v4481
  %v4483 = vsel %vm3584, %v3503, %v4482
  %v4484 = vsel %vm3586, %v3507, %v4483
  %v4485 = vsel %vm3588, %v3511, %v4484
  %v4486 = vsel %vm3590, %v3515, %v4485
  %v4487 = vsel %vm3592, %v4388, %v4486
  %v4488 = vsel %vm3580, %v3527, %v3523
  %v4489 = vsel %vm3582, %v3531, %v4488
  %v4490 = vsel %vm3584, %v3535, %v4489
  %v4491 = vsel %vm3586, %v3539, %v4490
  %v4492 = vsel %vm3588, %v3543, %v4491
  %v4493 = vsel %vm3590, %v3547, %v4492
  %v4494 = vsel %vm3592, %v4392, %v4493
  %v4495 = vsel %vm3580, %v3559, %v3555
  %v4496 = vsel %vm3582, %v3563, %v4495
  %v4497 = vsel %vm3584, %v3567, %v4496
  %v4498 = vsel %vm3586, %v3571, %v4497
  %v4499 = vsel %vm3588, %v3575, %v4498
  %v4500 = vsel %vm3590, %v3579, %v4499
  %v4501 = vsel %vm3592, %v4396, %v4500
  %4502 = vrot.lane.b32.xlu0 %v4403, 32
  %v4503 = vpop.permute.xlu0 %4502
  %4504 = vrot.lane.b32.xlu0 %v4410, 32
  %v4505 = vpop.permute.xlu0 %4504
  %4506 = vrot.lane.b32.xlu0 %v4417, 32
  %v4507 = vpop.permute.xlu0 %4506
  %4508 = vrot.lane.b32.xlu0 %v4424, 32
  %v4509 = vpop.permute.xlu0 %4508
  %4510 = vrot.lane.b32.xlu0 %v4431, 32
  %v4511 = vpop.permute.xlu0 %4510
  %4512 = vrot.lane.b32.xlu0 %v4438, 32
  %v4513 = vpop.permute.xlu0 %4512
  %4514 = vrot.lane.b32.xlu0 %v4445, 32
  %v4515 = vpop.permute.xlu0 %4514
  %4516 = vrot.lane.b32.xlu0 %v4452, 32
  %v4517 = vpop.permute.xlu0 %4516
  %4518 = vrot.lane.b32.xlu0 %v4459, 32
  %v4519 = vpop.permute.xlu0 %4518
  %4520 = vrot.lane.b32.xlu0 %v4466, 32
  %v4521 = vpop.permute.xlu0 %4520
  %4522 = vrot.lane.b32.xlu0 %v4473, 32
  %v4523 = vpop.permute.xlu0 %4522
  %4524 = vrot.lane.b32.xlu0 %v4480, 32
  %v4525 = vpop.permute.xlu0 %4524
  %4526 = vrot.lane.b32.xlu0 %v4487, 32
  %v4527 = vpop.permute.xlu0 %4526
  %4528 = vrot.lane.b32.xlu0 %v4494, 32
  %v4529 = vpop.permute.xlu0 %4528
  %4530 = vrot.lane.b32.xlu0 %v4501, 32
  %v4531 = vpop.permute.xlu0 %4530
  %v4547 = vlaneseq
  %v4548 = vshrl.u32 %v4547, 7
  %v4549 = vsub.s32 0, %v4548
  %v4550 = vrot.slane %v1795, %v4549
  %v4551 = vlaneseq
  %v4552 = vshrl.u32 %v4551, 7
  %v4553 = vsub.s32 0, %v4552
  %v4554 = vrot.slane %v1803, %v4553
  %v4555 = vlaneseq
  %v4556 = vshrl.u32 %v4555, 7
  %v4557 = vsub.s32 0, %v4556
  %v4558 = vrot.slane %v1802, %v4557
  %v4559 = vlaneseq
  %v4560 = vshrl.u32 %v4559, 7
  %v4561 = vsub.s32 0, %v4560
  %v4562 = vrot.slane %v1804, %v4561
  %v4563 = vlaneseq
  %v4564 = vshrl.u32 %v4563, 7
  %v4565 = vsub.s32 0, %v4564
  %v4566 = vrot.slane %v1812, %v4565
  %v4567 = vlaneseq
  %v4568 = vshrl.u32 %v4567, 7
  %v4569 = vsub.s32 0, %v4568
  %v4570 = vrot.slane %v1820, %v4569
  %v4571 = vlaneseq
  %v4572 = vshrl.u32 %v4571, 7
  %v4573 = vsub.s32 0, %v4572
  %v4574 = vrot.slane %v1819, %v4573
  %v4575 = vlaneseq
  %v4576 = vshrl.u32 %v4575, 7
  %v4577 = vsub.s32 0, %v4576
  %v4578 = vrot.slane %v1821, %v4577
  %v4579 = vlaneseq
  %v4580 = vshrl.u32 %v4579, 7
  %v4581 = vsub.s32 0, %v4580
  %v4582 = vrot.slane %v1877, %v4581
  %v4583 = vlaneseq
  %v4584 = vshrl.u32 %v4583, 7
  %v4585 = vsub.s32 0, %v4584
  %v4586 = vrot.slane %v1885, %v4585
  %v4587 = vlaneseq
  %v4588 = vshrl.u32 %v4587, 7
  %v4589 = vsub.s32 0, %v4588
  %v4590 = vrot.slane %v1884, %v4589
  %v4591 = vlaneseq
  %v4592 = vshrl.u32 %v4591, 7
  %v4593 = vsub.s32 0, %v4592
  %v4594 = vrot.slane %v1886, %v4593
  %v4595 = vlaneseq
  %v4596 = vshrl.u32 %v4595, 7
  %v4597 = vsub.s32 0, %v4596
  %v4598 = vrot.slane %v1894, %v4597
  %v4599 = vlaneseq
  %v4600 = vshrl.u32 %v4599, 7
  %v4601 = vsub.s32 0, %v4600
  %v4602 = vrot.slane %v1902, %v4601
  %v4603 = vlaneseq
  %v4604 = vshrl.u32 %v4603, 7
  %v4605 = vsub.s32 0, %v4604
  %v4606 = vrot.slane %v1901, %v4605
  %v4607 = vlaneseq
  %v4608 = vshrl.u32 %v4607, 7
  %v4609 = vsub.s32 0, %v4608
  %v4610 = vrot.slane %v1903, %v4609
  %v4611 = vlaneseq
  %v4612 = vshrl.u32 %v4611, 7
  %v4613 = vsub.s32 0, %v4612
  %v4614 = vrot.slane %v1959, %v4613
  %v4615 = vlaneseq
  %v4616 = vshrl.u32 %v4615, 7
  %v4617 = vsub.s32 0, %v4616
  %v4618 = vrot.slane %v1967, %v4617
  %v4619 = vlaneseq
  %v4620 = vshrl.u32 %v4619, 7
  %v4621 = vsub.s32 0, %v4620
  %v4622 = vrot.slane %v1966, %v4621
  %v4623 = vlaneseq
  %v4624 = vshrl.u32 %v4623, 7
  %v4625 = vsub.s32 0, %v4624
  %v4626 = vrot.slane %v1968, %v4625
  %v4627 = vlaneseq
  %v4628 = vshrl.u32 %v4627, 7
  %v4629 = vsub.s32 0, %v4628
  %v4630 = vrot.slane %v1976, %v4629
  %v4631 = vlaneseq
  %v4632 = vshrl.u32 %v4631, 7
  %v4633 = vsub.s32 0, %v4632
  %v4634 = vrot.slane %v1984, %v4633
  %v4635 = vlaneseq
  %v4636 = vshrl.u32 %v4635, 7
  %v4637 = vsub.s32 0, %v4636
  %v4638 = vrot.slane %v1983, %v4637
  %v4639 = vlaneseq
  %v4640 = vshrl.u32 %v4639, 7
  %v4641 = vsub.s32 0, %v4640
  %v4642 = vrot.slane %v1985, %v4641
  %v4643 = vlaneseq
  %v4644 = vshrl.u32 %v4643, 7
  %v4645 = vsub.s32 0, %v4644
  %v4646 = vrot.slane %v2041, %v4645
  %v4647 = vlaneseq
  %v4648 = vshrl.u32 %v4647, 7
  %v4649 = vsub.s32 0, %v4648
  %v4650 = vrot.slane %v2049, %v4649
  %v4651 = vlaneseq
  %v4652 = vshrl.u32 %v4651, 7
  %v4653 = vsub.s32 0, %v4652
  %v4654 = vrot.slane %v2048, %v4653
  %v4655 = vlaneseq
  %v4656 = vshrl.u32 %v4655, 7
  %v4657 = vsub.s32 0, %v4656
  %v4658 = vrot.slane %v2050, %v4657
  %v4659 = vlaneseq
  %v4660 = vshrl.u32 %v4659, 7
  %v4661 = vsub.s32 0, %v4660
  %v4662 = vrot.slane %v2058, %v4661
  %v4663 = vlaneseq
  %v4664 = vshrl.u32 %v4663, 7
  %v4665 = vsub.s32 0, %v4664
  %v4666 = vrot.slane %v2066, %v4665
  %v4667 = vlaneseq
  %v4668 = vshrl.u32 %v4667, 7
  %v4669 = vsub.s32 0, %v4668
  %v4670 = vrot.slane %v2065, %v4669
  %v4671 = vlaneseq
  %v4672 = vshrl.u32 %v4671, 7
  %v4673 = vsub.s32 0, %v4672
  %v4674 = vrot.slane %v2067, %v4673
  %v4675 = vlaneseq
  %v4676 = vshrl.u32 %v4675, 7
  %v4677 = vsub.s32 0, %v4676
  %v4678 = vrot.slane %v2123, %v4677
  %v4679 = vlaneseq
  %v4680 = vshrl.u32 %v4679, 7
  %v4681 = vsub.s32 0, %v4680
  %v4682 = vrot.slane %v2131, %v4681
  %v4683 = vlaneseq
  %v4684 = vshrl.u32 %v4683, 7
  %v4685 = vsub.s32 0, %v4684
  %v4686 = vrot.slane %v2130, %v4685
  %v4687 = vlaneseq
  %v4688 = vshrl.u32 %v4687, 7
  %v4689 = vsub.s32 0, %v4688
  %v4690 = vrot.slane %v2132, %v4689
  %v4691 = vlaneseq
  %v4692 = vshrl.u32 %v4691, 7
  %v4693 = vsub.s32 0, %v4692
  %v4694 = vrot.slane %v2140, %v4693
  %v4695 = vlaneseq
  %v4696 = vshrl.u32 %v4695, 7
  %v4697 = vsub.s32 0, %v4696
  %v4698 = vrot.slane %v2148, %v4697
  %v4699 = vlaneseq
  %v4700 = vshrl.u32 %v4699, 7
  %v4701 = vsub.s32 0, %v4700
  %v4702 = vrot.slane %v2147, %v4701
  %v4703 = vlaneseq
  %v4704 = vshrl.u32 %v4703, 7
  %v4705 = vsub.s32 0, %v4704
  %v4706 = vrot.slane %v2149, %v4705
  %v4707 = vlaneseq
  %v4708 = vshrl.u32 %v4707, 7
  %v4709 = vsub.s32 0, %v4708
  %v4710 = vrot.slane %v2205, %v4709
  %v4711 = vlaneseq
  %v4712 = vshrl.u32 %v4711, 7
  %v4713 = vsub.s32 0, %v4712
  %v4714 = vrot.slane %v2213, %v4713
  %v4715 = vlaneseq
  %v4716 = vshrl.u32 %v4715, 7
  %v4717 = vsub.s32 0, %v4716
  %v4718 = vrot.slane %v2212, %v4717
  %v4719 = vlaneseq
  %v4720 = vshrl.u32 %v4719, 7
  %v4721 = vsub.s32 0, %v4720
  %v4722 = vrot.slane %v2214, %v4721
  %v4723 = vlaneseq
  %v4724 = vshrl.u32 %v4723, 7
  %v4725 = vsub.s32 0, %v4724
  %v4726 = vrot.slane %v2222, %v4725
  %v4727 = vlaneseq
  %v4728 = vshrl.u32 %v4727, 7
  %v4729 = vsub.s32 0, %v4728
  %v4730 = vrot.slane %v2230, %v4729
  %v4731 = vlaneseq
  %v4732 = vshrl.u32 %v4731, 7
  %v4733 = vsub.s32 0, %v4732
  %v4734 = vrot.slane %v2229, %v4733
  %v4735 = vlaneseq
  %v4736 = vshrl.u32 %v4735, 7
  %v4737 = vsub.s32 0, %v4736
  %v4738 = vrot.slane %v2231, %v4737
  %v4739 = vlaneseq
  %v4740 = vshrl.u32 %v4739, 7
  %v4741 = vsub.s32 0, %v4740
  %v4742 = vrot.slane %v2287, %v4741
  %v4743 = vlaneseq
  %v4744 = vshrl.u32 %v4743, 7
  %v4745 = vsub.s32 0, %v4744
  %v4746 = vrot.slane %v2295, %v4745
  %v4747 = vlaneseq
  %v4748 = vshrl.u32 %v4747, 7
  %v4749 = vsub.s32 0, %v4748
  %v4750 = vrot.slane %v2294, %v4749
  %v4751 = vlaneseq
  %v4752 = vshrl.u32 %v4751, 7
  %v4753 = vsub.s32 0, %v4752
  %v4754 = vrot.slane %v2296, %v4753
  %v4755 = vlaneseq
  %v4756 = vshrl.u32 %v4755, 7
  %v4757 = vsub.s32 0, %v4756
  %v4758 = vrot.slane %v2304, %v4757
  %v4759 = vlaneseq
  %v4760 = vshrl.u32 %v4759, 7
  %v4761 = vsub.s32 0, %v4760
  %v4762 = vrot.slane %v2312, %v4761
  %v4763 = vlaneseq
  %v4764 = vshrl.u32 %v4763, 7
  %v4765 = vsub.s32 0, %v4764
  %v4766 = vrot.slane %v2311, %v4765
  %v4767 = vlaneseq
  %v4768 = vshrl.u32 %v4767, 7
  %v4769 = vsub.s32 0, %v4768
  %v4770 = vrot.slane %v2313, %v4769
  %v4771 = vlaneseq
  %v4772 = vshrl.u32 %v4771, 7
  %v4773 = vsub.s32 0, %v4772
  %v4774 = vrot.slane %v2369, %v4773
  %v4775 = vlaneseq
  %v4776 = vshrl.u32 %v4775, 7
  %v4777 = vsub.s32 0, %v4776
  %v4778 = vrot.slane %v2377, %v4777
  %v4779 = vlaneseq
  %v4780 = vshrl.u32 %v4779, 7
  %v4781 = vsub.s32 0, %v4780
  %v4782 = vrot.slane %v2376, %v4781
  %v4783 = vlaneseq
  %v4784 = vshrl.u32 %v4783, 7
  %v4785 = vsub.s32 0, %v4784
  %v4786 = vrot.slane %v2378, %v4785
  %v4787 = vlaneseq
  %v4788 = vshrl.u32 %v4787, 7
  %v4789 = vsub.s32 0, %v4788
  %v4790 = vrot.slane %v2386, %v4789
  %v4791 = vlaneseq
  %v4792 = vshrl.u32 %v4791, 7
  %v4793 = vsub.s32 0, %v4792
  %v4794 = vrot.slane %v2394, %v4793
  %v4795 = vlaneseq
  %v4796 = vshrl.u32 %v4795, 7
  %v4797 = vsub.s32 0, %v4796
  %v4798 = vrot.slane %v2393, %v4797
  %v4799 = vlaneseq
  %v4800 = vshrl.u32 %v4799, 7
  %v4801 = vsub.s32 0, %v4800
  %v4802 = vrot.slane %v2395, %v4801
  %v4803 = vlaneseq
  %v4804 = vshrl.u32 %v4803, 7
  %v4805 = vsub.s32 0, %v4804
  %v4806 = vrot.slane %v2451, %v4805
  %v4807 = vlaneseq
  %v4808 = vshrl.u32 %v4807, 7
  %v4809 = vsub.s32 0, %v4808
  %v4810 = vrot.slane %v2459, %v4809
  %v4811 = vlaneseq
  %v4812 = vshrl.u32 %v4811, 7
  %v4813 = vsub.s32 0, %v4812
  %v4814 = vrot.slane %v2458, %v4813
  %v4815 = vlaneseq
  %v4816 = vshrl.u32 %v4815, 7
  %v4817 = vsub.s32 0, %v4816
  %v4818 = vrot.slane %v2460, %v4817
  %v4819 = vlaneseq
  %v4820 = vshrl.u32 %v4819, 7
  %v4821 = vsub.s32 0, %v4820
  %v4822 = vrot.slane %v2468, %v4821
  %v4823 = vlaneseq
  %v4824 = vshrl.u32 %v4823, 7
  %v4825 = vsub.s32 0, %v4824
  %v4826 = vrot.slane %v2476, %v4825
  %v4827 = vlaneseq
  %v4828 = vshrl.u32 %v4827, 7
  %v4829 = vsub.s32 0, %v4828
  %v4830 = vrot.slane %v2475, %v4829
  %v4831 = vlaneseq
  %v4832 = vshrl.u32 %v4831, 7
  %v4833 = vsub.s32 0, %v4832
  %v4834 = vrot.slane %v2477, %v4833
  %v4835 = vlaneseq
  %v4836 = vshrl.u32 %v4835, 7
  %v4837 = vsub.s32 0, %v4836
  %v4838 = vrot.slane %v2533, %v4837
  %v4839 = vlaneseq
  %v4840 = vshrl.u32 %v4839, 7
  %v4841 = vsub.s32 0, %v4840
  %v4842 = vrot.slane %v2541, %v4841
  %v4843 = vlaneseq
  %v4844 = vshrl.u32 %v4843, 7
  %v4845 = vsub.s32 0, %v4844
  %v4846 = vrot.slane %v2540, %v4845
  %v4847 = vlaneseq
  %v4848 = vshrl.u32 %v4847, 7
  %v4849 = vsub.s32 0, %v4848
  %v4850 = vrot.slane %v2542, %v4849
  %v4851 = vlaneseq
  %v4852 = vshrl.u32 %v4851, 7
  %v4853 = vsub.s32 0, %v4852
  %v4854 = vrot.slane %v2550, %v4853
  %v4855 = vlaneseq
  %v4856 = vshrl.u32 %v4855, 7
  %v4857 = vsub.s32 0, %v4856
  %v4858 = vrot.slane %v2558, %v4857
  %v4859 = vlaneseq
  %v4860 = vshrl.u32 %v4859, 7
  %v4861 = vsub.s32 0, %v4860
  %v4862 = vrot.slane %v2557, %v4861
  %v4863 = vlaneseq
  %v4864 = vshrl.u32 %v4863, 7
  %v4865 = vsub.s32 0, %v4864
  %v4866 = vrot.slane %v2559, %v4865
  %v4867 = vlaneseq
  %v4868 = vshrl.u32 %v4867, 7
  %v4869 = vsub.s32 0, %v4868
  %v4870 = vrot.slane %v2615, %v4869
  %v4871 = vlaneseq
  %v4872 = vshrl.u32 %v4871, 7
  %v4873 = vsub.s32 0, %v4872
  %v4874 = vrot.slane %v2623, %v4873
  %v4875 = vlaneseq
  %v4876 = vshrl.u32 %v4875, 7
  %v4877 = vsub.s32 0, %v4876
  %v4878 = vrot.slane %v2622, %v4877
  %v4879 = vlaneseq
  %v4880 = vshrl.u32 %v4879, 7
  %v4881 = vsub.s32 0, %v4880
  %v4882 = vrot.slane %v2624, %v4881
  %v4883 = vlaneseq
  %v4884 = vshrl.u32 %v4883, 7
  %v4885 = vsub.s32 0, %v4884
  %v4886 = vrot.slane %v2632, %v4885
  %v4887 = vlaneseq
  %v4888 = vshrl.u32 %v4887, 7
  %v4889 = vsub.s32 0, %v4888
  %v4890 = vrot.slane %v2640, %v4889
  %v4891 = vlaneseq
  %v4892 = vshrl.u32 %v4891, 7
  %v4893 = vsub.s32 0, %v4892
  %v4894 = vrot.slane %v2639, %v4893
  %v4895 = vlaneseq
  %v4896 = vshrl.u32 %v4895, 7
  %v4897 = vsub.s32 0, %v4896
  %v4898 = vrot.slane %v2641, %v4897
  %v4899 = vlaneseq
  %v4900 = vshrl.u32 %v4899, 7
  %v4901 = vsub.s32 0, %v4900
  %v4902 = vrot.slane %v2697, %v4901
  %v4903 = vlaneseq
  %v4904 = vshrl.u32 %v4903, 7
  %v4905 = vsub.s32 0, %v4904
  %v4906 = vrot.slane %v2705, %v4905
  %v4907 = vlaneseq
  %v4908 = vshrl.u32 %v4907, 7
  %v4909 = vsub.s32 0, %v4908
  %v4910 = vrot.slane %v2704, %v4909
  %v4911 = vlaneseq
  %v4912 = vshrl.u32 %v4911, 7
  %v4913 = vsub.s32 0, %v4912
  %v4914 = vrot.slane %v2706, %v4913
  %v4915 = vlaneseq
  %v4916 = vshrl.u32 %v4915, 7
  %v4917 = vsub.s32 0, %v4916
  %v4918 = vrot.slane %v2714, %v4917
  %v4919 = vlaneseq
  %v4920 = vshrl.u32 %v4919, 7
  %v4921 = vsub.s32 0, %v4920
  %v4922 = vrot.slane %v2722, %v4921
  %v4923 = vlaneseq
  %v4924 = vshrl.u32 %v4923, 7
  %v4925 = vsub.s32 0, %v4924
  %v4926 = vrot.slane %v2721, %v4925
  %v4927 = vlaneseq
  %v4928 = vshrl.u32 %v4927, 7
  %v4929 = vsub.s32 0, %v4928
  %v4930 = vrot.slane %v2723, %v4929
  %v4931 = vlaneseq
  %v4932 = vshrl.u32 %v4931, 7
  %v4933 = vsub.s32 0, %v4932
  %v4934 = vrot.slane %v2779, %v4933
  %v4935 = vlaneseq
  %v4936 = vshrl.u32 %v4935, 7
  %v4937 = vsub.s32 0, %v4936
  %v4938 = vrot.slane %v2787, %v4937
  %v4939 = vlaneseq
  %v4940 = vshrl.u32 %v4939, 7
  %v4941 = vsub.s32 0, %v4940
  %v4942 = vrot.slane %v2786, %v4941
  %v4943 = vlaneseq
  %v4944 = vshrl.u32 %v4943, 7
  %v4945 = vsub.s32 0, %v4944
  %v4946 = vrot.slane %v2788, %v4945
  %v4947 = vlaneseq
  %v4948 = vshrl.u32 %v4947, 7
  %v4949 = vsub.s32 0, %v4948
  %v4950 = vrot.slane %v2796, %v4949
  %v4951 = vlaneseq
  %v4952 = vshrl.u32 %v4951, 7
  %v4953 = vsub.s32 0, %v4952
  %v4954 = vrot.slane %v2804, %v4953
  %v4955 = vlaneseq
  %v4956 = vshrl.u32 %v4955, 7
  %v4957 = vsub.s32 0, %v4956
  %v4958 = vrot.slane %v2803, %v4957
  %v4959 = vlaneseq
  %v4960 = vshrl.u32 %v4959, 7
  %v4961 = vsub.s32 0, %v4960
  %v4962 = vrot.slane %v2805, %v4961
  %v4963 = vlaneseq
  %v4964 = vshrl.u32 %v4963, 7
  %v4965 = vsub.s32 0, %v4964
  %v4966 = vrot.slane %v2861, %v4965
  %v4967 = vlaneseq
  %v4968 = vshrl.u32 %v4967, 7
  %v4969 = vsub.s32 0, %v4968
  %v4970 = vrot.slane %v2869, %v4969
  %v4971 = vlaneseq
  %v4972 = vshrl.u32 %v4971, 7
  %v4973 = vsub.s32 0, %v4972
  %v4974 = vrot.slane %v2868, %v4973
  %v4975 = vlaneseq
  %v4976 = vshrl.u32 %v4975, 7
  %v4977 = vsub.s32 0, %v4976
  %v4978 = vrot.slane %v2870, %v4977
  %v4979 = vlaneseq
  %v4980 = vshrl.u32 %v4979, 7
  %v4981 = vsub.s32 0, %v4980
  %v4982 = vrot.slane %v2878, %v4981
  %v4983 = vlaneseq
  %v4984 = vshrl.u32 %v4983, 7
  %v4985 = vsub.s32 0, %v4984
  %v4986 = vrot.slane %v2886, %v4985
  %v4987 = vlaneseq
  %v4988 = vshrl.u32 %v4987, 7
  %v4989 = vsub.s32 0, %v4988
  %v4990 = vrot.slane %v2885, %v4989
  %v4991 = vlaneseq
  %v4992 = vshrl.u32 %v4991, 7
  %v4993 = vsub.s32 0, %v4992
  %v4994 = vrot.slane %v2887, %v4993
  %v4995 = vlaneseq
  %v4996 = vshrl.u32 %v4995, 7
  %v4997 = vsub.s32 0, %v4996
  %v4998 = vrot.slane %v2943, %v4997
  %v4999 = vlaneseq
  %v5000 = vshrl.u32 %v4999, 7
  %v5001 = vsub.s32 0, %v5000
  %v5002 = vrot.slane %v2951, %v5001
  %v5003 = vlaneseq
  %v5004 = vshrl.u32 %v5003, 7
  %v5005 = vsub.s32 0, %v5004
  %v5006 = vrot.slane %v2950, %v5005
  %v5007 = vlaneseq
  %v5008 = vshrl.u32 %v5007, 7
  %v5009 = vsub.s32 0, %v5008
  %v5010 = vrot.slane %v2952, %v5009
  %v5011 = vlaneseq
  %v5012 = vshrl.u32 %v5011, 7
  %v5013 = vsub.s32 0, %v5012
  %v5014 = vrot.slane %v2960, %v5013
  %v5015 = vlaneseq
  %v5016 = vshrl.u32 %v5015, 7
  %v5017 = vsub.s32 0, %v5016
  %v5018 = vrot.slane %v2968, %v5017
  %v5019 = vlaneseq
  %v5020 = vshrl.u32 %v5019, 7
  %v5021 = vsub.s32 0, %v5020
  %v5022 = vrot.slane %v2967, %v5021
  %v5023 = vlaneseq
  %v5024 = vshrl.u32 %v5023, 7
  %v5025 = vsub.s32 0, %v5024
  %v5026 = vrot.slane %v2969, %v5025
  %v5027 = vlaneseq
  %v5028 = vshrl.u32 %v5027, 7
  %v5029 = vsub.s32 0, %v5028
  %v5030 = vrot.slane %v3025, %v5029
  %v5031 = vlaneseq
  %v5032 = vshrl.u32 %v5031, 7
  %v5033 = vsub.s32 0, %v5032
  %v5034 = vrot.slane %v3033, %v5033
  %v5035 = vlaneseq
  %v5036 = vshrl.u32 %v5035, 7
  %v5037 = vsub.s32 0, %v5036
  %v5038 = vrot.slane %v3032, %v5037
  %v5039 = vlaneseq
  %v5040 = vshrl.u32 %v5039, 7
  %v5041 = vsub.s32 0, %v5040
  %v5042 = vrot.slane %v3034, %v5041
  %v5043 = vlaneseq
  %v5044 = vshrl.u32 %v5043, 7
  %v5045 = vsub.s32 0, %v5044
  %v5046 = vrot.slane %v3042, %v5045
  %v5047 = vlaneseq
  %v5048 = vshrl.u32 %v5047, 7
  %v5049 = vsub.s32 0, %v5048
  %v5050 = vrot.slane %v3050, %v5049
  %v5051 = vlaneseq
  %v5052 = vshrl.u32 %v5051, 7
  %v5053 = vsub.s32 0, %v5052
  %v5054 = vrot.slane %v3049, %v5053
  %v5055 = vlaneseq
  %v5056 = vshrl.u32 %v5055, 7
  %v5057 = vsub.s32 0, %v5056
  %v5058 = vrot.slane %v3051, %v5057
  %v5059 = vsel %vm3580, %v4554, %v4550
  %v5060 = vsel %vm3582, %v4558, %v5059
  %v5061 = vsel %vm3584, %v4562, %v5060
  %v5062 = vsel %vm3586, %v4566, %v5061
  %v5063 = vsel %vm3588, %v4570, %v5062
  %v5064 = vsel %vm3590, %v4574, %v5063
  %v5065 = vsel %vm3592, %v4578, %v5064
  %v5066 = vsel %vm3580, %v4586, %v4582
  %v5067 = vsel %vm3582, %v4590, %v5066
  %v5068 = vsel %vm3584, %v4594, %v5067
  %v5069 = vsel %vm3586, %v4598, %v5068
  %v5070 = vsel %vm3588, %v4602, %v5069
  %v5071 = vsel %vm3590, %v4606, %v5070
  %v5072 = vsel %vm3592, %v4610, %v5071
  %v5073 = vsel %vm3580, %v4618, %v4614
  %v5074 = vsel %vm3582, %v4622, %v5073
  %v5075 = vsel %vm3584, %v4626, %v5074
  %v5076 = vsel %vm3586, %v4630, %v5075
  %v5077 = vsel %vm3588, %v4634, %v5076
  %v5078 = vsel %vm3590, %v4638, %v5077
  %v5079 = vsel %vm3592, %v4642, %v5078
  %v5080 = vsel %vm3580, %v4650, %v4646
  %v5081 = vsel %vm3582, %v4654, %v5080
  %v5082 = vsel %vm3584, %v4658, %v5081
  %v5083 = vsel %vm3586, %v4662, %v5082
  %v5084 = vsel %vm3588, %v4666, %v5083
  %v5085 = vsel %vm3590, %v4670, %v5084
  %v5086 = vsel %vm3592, %v4674, %v5085
  %v5087 = vsel %vm3580, %v4682, %v4678
  %v5088 = vsel %vm3582, %v4686, %v5087
  %v5089 = vsel %vm3584, %v4690, %v5088
  %v5090 = vsel %vm3586, %v4694, %v5089
  %v5091 = vsel %vm3588, %v4698, %v5090
  %v5092 = vsel %vm3590, %v4702, %v5091
  %v5093 = vsel %vm3592, %v4706, %v5092
  %v5094 = vsel %vm3580, %v4714, %v4710
  %v5095 = vsel %vm3582, %v4718, %v5094
  %v5096 = vsel %vm3584, %v4722, %v5095
  %v5097 = vsel %vm3586, %v4726, %v5096
  %v5098 = vsel %vm3588, %v4730, %v5097
  %v5099 = vsel %vm3590, %v4734, %v5098
  %v5100 = vsel %vm3592, %v4738, %v5099
  %v5101 = vsel %vm3580, %v4746, %v4742
  %v5102 = vsel %vm3582, %v4750, %v5101
  %v5103 = vsel %vm3584, %v4754, %v5102
  %v5104 = vsel %vm3586, %v4758, %v5103
  %v5105 = vsel %vm3588, %v4762, %v5104
  %v5106 = vsel %vm3590, %v4766, %v5105
  %v5107 = vsel %vm3592, %v4770, %v5106
  %v5108 = vsel %vm3580, %v4778, %v4774
  %v5109 = vsel %vm3582, %v4782, %v5108
  %v5110 = vsel %vm3584, %v4786, %v5109
  %v5111 = vsel %vm3586, %v4790, %v5110
  %v5112 = vsel %vm3588, %v4794, %v5111
  %v5113 = vsel %vm3590, %v4798, %v5112
  %v5114 = vsel %vm3592, %v4802, %v5113
  %v5115 = vsel %vm3580, %v4810, %v4806
  %v5116 = vsel %vm3582, %v4814, %v5115
  %v5117 = vsel %vm3584, %v4818, %v5116
  %v5118 = vsel %vm3586, %v4822, %v5117
  %v5119 = vsel %vm3588, %v4826, %v5118
  %v5120 = vsel %vm3590, %v4830, %v5119
  %v5121 = vsel %vm3592, %v4834, %v5120
  %v5122 = vsel %vm3580, %v4842, %v4838
  %v5123 = vsel %vm3582, %v4846, %v5122
  %v5124 = vsel %vm3584, %v4850, %v5123
  %v5125 = vsel %vm3586, %v4854, %v5124
  %v5126 = vsel %vm3588, %v4858, %v5125
  %v5127 = vsel %vm3590, %v4862, %v5126
  %v5128 = vsel %vm3592, %v4866, %v5127
  %v5129 = vsel %vm3580, %v4874, %v4870
  %v5130 = vsel %vm3582, %v4878, %v5129
  %v5131 = vsel %vm3584, %v4882, %v5130
  %v5132 = vsel %vm3586, %v4886, %v5131
  %v5133 = vsel %vm3588, %v4890, %v5132
  %v5134 = vsel %vm3590, %v4894, %v5133
  %v5135 = vsel %vm3592, %v4898, %v5134
  %v5136 = vsel %vm3580, %v4906, %v4902
  %v5137 = vsel %vm3582, %v4910, %v5136
  %v5138 = vsel %vm3584, %v4914, %v5137
  %v5139 = vsel %vm3586, %v4918, %v5138
  %v5140 = vsel %vm3588, %v4922, %v5139
  %v5141 = vsel %vm3590, %v4926, %v5140
  %v5142 = vsel %vm3592, %v4930, %v5141
  %v5143 = vsel %vm3580, %v4938, %v4934
  %v5144 = vsel %vm3582, %v4942, %v5143
  %v5145 = vsel %vm3584, %v4946, %v5144
  %v5146 = vsel %vm3586, %v4950, %v5145
  %v5147 = vsel %vm3588, %v4954, %v5146
  %v5148 = vsel %vm3590, %v4958, %v5147
  %v5149 = vsel %vm3592, %v4962, %v5148
  %v5150 = vsel %vm3580, %v4970, %v4966
  %v5151 = vsel %vm3582, %v4974, %v5150
  %v5152 = vsel %vm3584, %v4978, %v5151
  %v5153 = vsel %vm3586, %v4982, %v5152
  %v5154 = vsel %vm3588, %v4986, %v5153
  %v5155 = vsel %vm3590, %v4990, %v5154
  %v5156 = vsel %vm3592, %v4994, %v5155
  %v5157 = vsel %vm3580, %v5002, %v4998
  %v5158 = vsel %vm3582, %v5006, %v5157
  %v5159 = vsel %vm3584, %v5010, %v5158
  %v5160 = vsel %vm3586, %v5014, %v5159
  %v5161 = vsel %vm3588, %v5018, %v5160
  %v5162 = vsel %vm3590, %v5022, %v5161
  %v5163 = vsel %vm3592, %v5026, %v5162
  %v5164 = vsel %vm3580, %v5034, %v5030
  %v5165 = vsel %vm3582, %v5038, %v5164
  %v5166 = vsel %vm3584, %v5042, %v5165
  %v5167 = vsel %vm3586, %v5046, %v5166
  %v5168 = vsel %vm3588, %v5050, %v5167
  %v5169 = vsel %vm3590, %v5054, %v5168
  %v5170 = vsel %vm3592, %v5058, %v5169
  %5171 = vrot.lane.b32.xlu0 %v5065, 48
  %v5172 = vpop.permute.xlu0 %5171
  %5173 = vrot.lane.b32.xlu0 %v5072, 48
  %v5174 = vpop.permute.xlu0 %5173
  %5175 = vrot.lane.b32.xlu0 %v5079, 48
  %v5176 = vpop.permute.xlu0 %5175
  %5177 = vrot.lane.b32.xlu0 %v5086, 48
  %v5178 = vpop.permute.xlu0 %5177
  %5179 = vrot.lane.b32.xlu0 %v5093, 48
  %v5180 = vpop.permute.xlu0 %5179
  %5181 = vrot.lane.b32.xlu0 %v5100, 48
  %v5182 = vpop.permute.xlu0 %5181
  %5183 = vrot.lane.b32.xlu0 %v5107, 48
  %v5184 = vpop.permute.xlu0 %5183
  %5185 = vrot.lane.b32.xlu0 %v5114, 48
  %v5186 = vpop.permute.xlu0 %5185
  %5187 = vrot.lane.b32.xlu0 %v5121, 48
  %v5188 = vpop.permute.xlu0 %5187
  %5189 = vrot.lane.b32.xlu0 %v5128, 48
  %v5190 = vpop.permute.xlu0 %5189
  %5191 = vrot.lane.b32.xlu0 %v5135, 48
  %v5192 = vpop.permute.xlu0 %5191
  %5193 = vrot.lane.b32.xlu0 %v5142, 48
  %v5194 = vpop.permute.xlu0 %5193
  %5195 = vrot.lane.b32.xlu0 %v5149, 48
  %v5196 = vpop.permute.xlu0 %5195
  %5197 = vrot.lane.b32.xlu0 %v5156, 48
  %v5198 = vpop.permute.xlu0 %5197
  %5199 = vrot.lane.b32.xlu0 %v5163, 48
  %v5200 = vpop.permute.xlu0 %5199
  %5201 = vrot.lane.b32.xlu0 %v5170, 48
  %v5202 = vpop.permute.xlu0 %5201
  %v5219 = vlaneseq
  %v5220 = vshrl.u32 %v5219, 7
  %v5221 = vsub.s32 1, %v5220
  %v5222 = vrot.slane %v1795, %v5221
  %v5223 = vlaneseq
  %v5224 = vshrl.u32 %v5223, 7
  %v5225 = vsub.s32 1, %v5224
  %v5226 = vrot.slane %v1803, %v5225
  %v5227 = vlaneseq
  %v5228 = vshrl.u32 %v5227, 7
  %v5229 = vsub.s32 1, %v5228
  %v5230 = vrot.slane %v1802, %v5229
  %v5231 = vlaneseq
  %v5232 = vshrl.u32 %v5231, 7
  %v5233 = vsub.s32 1, %v5232
  %v5234 = vrot.slane %v1804, %v5233
  %v5235 = vlaneseq
  %v5236 = vshrl.u32 %v5235, 7
  %v5237 = vsub.s32 1, %v5236
  %v5238 = vrot.slane %v1812, %v5237
  %v5239 = vlaneseq
  %v5240 = vshrl.u32 %v5239, 7
  %v5241 = vsub.s32 1, %v5240
  %v5242 = vrot.slane %v1820, %v5241
  %v5243 = vlaneseq
  %v5244 = vshrl.u32 %v5243, 7
  %v5245 = vsub.s32 1, %v5244
  %v5246 = vrot.slane %v1819, %v5245
  %v5247 = vlaneseq
  %v5248 = vshrl.u32 %v5247, 7
  %v5249 = vsub.s32 1, %v5248
  %v5250 = vrot.slane %v1821, %v5249
  %v5251 = vlaneseq
  %v5252 = vshrl.u32 %v5251, 7
  %v5253 = vsub.s32 1, %v5252
  %v5254 = vrot.slane %v1877, %v5253
  %v5255 = vlaneseq
  %v5256 = vshrl.u32 %v5255, 7
  %v5257 = vsub.s32 1, %v5256
  %v5258 = vrot.slane %v1885, %v5257
  %v5259 = vlaneseq
  %v5260 = vshrl.u32 %v5259, 7
  %v5261 = vsub.s32 1, %v5260
  %v5262 = vrot.slane %v1884, %v5261
  %v5263 = vlaneseq
  %v5264 = vshrl.u32 %v5263, 7
  %v5265 = vsub.s32 1, %v5264
  %v5266 = vrot.slane %v1886, %v5265
  %v5267 = vlaneseq
  %v5268 = vshrl.u32 %v5267, 7
  %v5269 = vsub.s32 1, %v5268
  %v5270 = vrot.slane %v1894, %v5269
  %v5271 = vlaneseq
  %v5272 = vshrl.u32 %v5271, 7
  %v5273 = vsub.s32 1, %v5272
  %v5274 = vrot.slane %v1902, %v5273
  %v5275 = vlaneseq
  %v5276 = vshrl.u32 %v5275, 7
  %v5277 = vsub.s32 1, %v5276
  %v5278 = vrot.slane %v1901, %v5277
  %v5279 = vlaneseq
  %v5280 = vshrl.u32 %v5279, 7
  %v5281 = vsub.s32 1, %v5280
  %v5282 = vrot.slane %v1903, %v5281
  %v5283 = vlaneseq
  %v5284 = vshrl.u32 %v5283, 7
  %v5285 = vsub.s32 1, %v5284
  %v5286 = vrot.slane %v1959, %v5285
  %v5287 = vlaneseq
  %v5288 = vshrl.u32 %v5287, 7
  %v5289 = vsub.s32 1, %v5288
  %v5290 = vrot.slane %v1967, %v5289
  %v5291 = vlaneseq
  %v5292 = vshrl.u32 %v5291, 7
  %v5293 = vsub.s32 1, %v5292
  %v5294 = vrot.slane %v1966, %v5293
  %v5295 = vlaneseq
  %v5296 = vshrl.u32 %v5295, 7
  %v5297 = vsub.s32 1, %v5296
  %v5298 = vrot.slane %v1968, %v5297
  %v5299 = vlaneseq
  %v5300 = vshrl.u32 %v5299, 7
  %v5301 = vsub.s32 1, %v5300
  %v5302 = vrot.slane %v1976, %v5301
  %v5303 = vlaneseq
  %v5304 = vshrl.u32 %v5303, 7
  %v5305 = vsub.s32 1, %v5304
  %v5306 = vrot.slane %v1984, %v5305
  %v5307 = vlaneseq
  %v5308 = vshrl.u32 %v5307, 7
  %v5309 = vsub.s32 1, %v5308
  %v5310 = vrot.slane %v1983, %v5309
  %v5311 = vlaneseq
  %v5312 = vshrl.u32 %v5311, 7
  %v5313 = vsub.s32 1, %v5312
  %v5314 = vrot.slane %v1985, %v5313
  %v5315 = vlaneseq
  %v5316 = vshrl.u32 %v5315, 7
  %v5317 = vsub.s32 1, %v5316
  %v5318 = vrot.slane %v2041, %v5317
  %v5319 = vlaneseq
  %v5320 = vshrl.u32 %v5319, 7
  %v5321 = vsub.s32 1, %v5320
  %v5322 = vrot.slane %v2049, %v5321
  %v5323 = vlaneseq
  %v5324 = vshrl.u32 %v5323, 7
  %v5325 = vsub.s32 1, %v5324
  %v5326 = vrot.slane %v2048, %v5325
  %v5327 = vlaneseq
  %v5328 = vshrl.u32 %v5327, 7
  %v5329 = vsub.s32 1, %v5328
  %v5330 = vrot.slane %v2050, %v5329
  %v5331 = vlaneseq
  %v5332 = vshrl.u32 %v5331, 7
  %v5333 = vsub.s32 1, %v5332
  %v5334 = vrot.slane %v2058, %v5333
  %v5335 = vlaneseq
  %v5336 = vshrl.u32 %v5335, 7
  %v5337 = vsub.s32 1, %v5336
  %v5338 = vrot.slane %v2066, %v5337
  %v5339 = vlaneseq
  %v5340 = vshrl.u32 %v5339, 7
  %v5341 = vsub.s32 1, %v5340
  %v5342 = vrot.slane %v2065, %v5341
  %v5343 = vlaneseq
  %v5344 = vshrl.u32 %v5343, 7
  %v5345 = vsub.s32 1, %v5344
  %v5346 = vrot.slane %v2067, %v5345
  %v5347 = vlaneseq
  %v5348 = vshrl.u32 %v5347, 7
  %v5349 = vsub.s32 1, %v5348
  %v5350 = vrot.slane %v2123, %v5349
  %v5351 = vlaneseq
  %v5352 = vshrl.u32 %v5351, 7
  %v5353 = vsub.s32 1, %v5352
  %v5354 = vrot.slane %v2131, %v5353
  %v5355 = vlaneseq
  %v5356 = vshrl.u32 %v5355, 7
  %v5357 = vsub.s32 1, %v5356
  %v5358 = vrot.slane %v2130, %v5357
  %v5359 = vlaneseq
  %v5360 = vshrl.u32 %v5359, 7
  %v5361 = vsub.s32 1, %v5360
  %v5362 = vrot.slane %v2132, %v5361
  %v5363 = vlaneseq
  %v5364 = vshrl.u32 %v5363, 7
  %v5365 = vsub.s32 1, %v5364
  %v5366 = vrot.slane %v2140, %v5365
  %v5367 = vlaneseq
  %v5368 = vshrl.u32 %v5367, 7
  %v5369 = vsub.s32 1, %v5368
  %v5370 = vrot.slane %v2148, %v5369
  %v5371 = vlaneseq
  %v5372 = vshrl.u32 %v5371, 7
  %v5373 = vsub.s32 1, %v5372
  %v5374 = vrot.slane %v2147, %v5373
  %v5375 = vlaneseq
  %v5376 = vshrl.u32 %v5375, 7
  %v5377 = vsub.s32 1, %v5376
  %v5378 = vrot.slane %v2149, %v5377
  %v5379 = vlaneseq
  %v5380 = vshrl.u32 %v5379, 7
  %v5381 = vsub.s32 1, %v5380
  %v5382 = vrot.slane %v2205, %v5381
  %v5383 = vlaneseq
  %v5384 = vshrl.u32 %v5383, 7
  %v5385 = vsub.s32 1, %v5384
  %v5386 = vrot.slane %v2213, %v5385
  %v5387 = vlaneseq
  %v5388 = vshrl.u32 %v5387, 7
  %v5389 = vsub.s32 1, %v5388
  %v5390 = vrot.slane %v2212, %v5389
  %v5391 = vlaneseq
  %v5392 = vshrl.u32 %v5391, 7
  %v5393 = vsub.s32 1, %v5392
  %v5394 = vrot.slane %v2214, %v5393
  %v5395 = vlaneseq
  %v5396 = vshrl.u32 %v5395, 7
  %v5397 = vsub.s32 1, %v5396
  %v5398 = vrot.slane %v2222, %v5397
  %v5399 = vlaneseq
  %v5400 = vshrl.u32 %v5399, 7
  %v5401 = vsub.s32 1, %v5400
  %v5402 = vrot.slane %v2230, %v5401
  %v5403 = vlaneseq
  %v5404 = vshrl.u32 %v5403, 7
  %v5405 = vsub.s32 1, %v5404
  %v5406 = vrot.slane %v2229, %v5405
  %v5407 = vlaneseq
  %v5408 = vshrl.u32 %v5407, 7
  %v5409 = vsub.s32 1, %v5408
  %v5410 = vrot.slane %v2231, %v5409
  %v5411 = vlaneseq
  %v5412 = vshrl.u32 %v5411, 7
  %v5413 = vsub.s32 1, %v5412
  %v5414 = vrot.slane %v2287, %v5413
  %v5415 = vlaneseq
  %v5416 = vshrl.u32 %v5415, 7
  %v5417 = vsub.s32 1, %v5416
  %v5418 = vrot.slane %v2295, %v5417
  %v5419 = vlaneseq
  %v5420 = vshrl.u32 %v5419, 7
  %v5421 = vsub.s32 1, %v5420
  %v5422 = vrot.slane %v2294, %v5421
  %v5423 = vlaneseq
  %v5424 = vshrl.u32 %v5423, 7
  %v5425 = vsub.s32 1, %v5424
  %v5426 = vrot.slane %v2296, %v5425
  %v5427 = vlaneseq
  %v5428 = vshrl.u32 %v5427, 7
  %v5429 = vsub.s32 1, %v5428
  %v5430 = vrot.slane %v2304, %v5429
  %v5431 = vlaneseq
  %v5432 = vshrl.u32 %v5431, 7
  %v5433 = vsub.s32 1, %v5432
  %v5434 = vrot.slane %v2312, %v5433
  %v5435 = vlaneseq
  %v5436 = vshrl.u32 %v5435, 7
  %v5437 = vsub.s32 1, %v5436
  %v5438 = vrot.slane %v2311, %v5437
  %v5439 = vlaneseq
  %v5440 = vshrl.u32 %v5439, 7
  %v5441 = vsub.s32 1, %v5440
  %v5442 = vrot.slane %v2313, %v5441
  %v5443 = vlaneseq
  %v5444 = vshrl.u32 %v5443, 7
  %v5445 = vsub.s32 1, %v5444
  %v5446 = vrot.slane %v2369, %v5445
  %v5447 = vlaneseq
  %v5448 = vshrl.u32 %v5447, 7
  %v5449 = vsub.s32 1, %v5448
  %v5450 = vrot.slane %v2377, %v5449
  %v5451 = vlaneseq
  %v5452 = vshrl.u32 %v5451, 7
  %v5453 = vsub.s32 1, %v5452
  %v5454 = vrot.slane %v2376, %v5453
  %v5455 = vlaneseq
  %v5456 = vshrl.u32 %v5455, 7
  %v5457 = vsub.s32 1, %v5456
  %v5458 = vrot.slane %v2378, %v5457
  %v5459 = vlaneseq
  %v5460 = vshrl.u32 %v5459, 7
  %v5461 = vsub.s32 1, %v5460
  %v5462 = vrot.slane %v2386, %v5461
  %v5463 = vlaneseq
  %v5464 = vshrl.u32 %v5463, 7
  %v5465 = vsub.s32 1, %v5464
  %v5466 = vrot.slane %v2394, %v5465
  %v5467 = vlaneseq
  %v5468 = vshrl.u32 %v5467, 7
  %v5469 = vsub.s32 1, %v5468
  %v5470 = vrot.slane %v2393, %v5469
  %v5471 = vlaneseq
  %v5472 = vshrl.u32 %v5471, 7
  %v5473 = vsub.s32 1, %v5472
  %v5474 = vrot.slane %v2395, %v5473
  %v5475 = vlaneseq
  %v5476 = vshrl.u32 %v5475, 7
  %v5477 = vsub.s32 1, %v5476
  %v5478 = vrot.slane %v2451, %v5477
  %v5479 = vlaneseq
  %v5480 = vshrl.u32 %v5479, 7
  %v5481 = vsub.s32 1, %v5480
  %v5482 = vrot.slane %v2459, %v5481
  %v5483 = vlaneseq
  %v5484 = vshrl.u32 %v5483, 7
  %v5485 = vsub.s32 1, %v5484
  %v5486 = vrot.slane %v2458, %v5485
  %v5487 = vlaneseq
  %v5488 = vshrl.u32 %v5487, 7
  %v5489 = vsub.s32 1, %v5488
  %v5490 = vrot.slane %v2460, %v5489
  %v5491 = vlaneseq
  %v5492 = vshrl.u32 %v5491, 7
  %v5493 = vsub.s32 1, %v5492
  %v5494 = vrot.slane %v2468, %v5493
  %v5495 = vlaneseq
  %v5496 = vshrl.u32 %v5495, 7
  %v5497 = vsub.s32 1, %v5496
  %v5498 = vrot.slane %v2476, %v5497
  %v5499 = vlaneseq
  %v5500 = vshrl.u32 %v5499, 7
  %v5501 = vsub.s32 1, %v5500
  %v5502 = vrot.slane %v2475, %v5501
  %v5503 = vlaneseq
  %v5504 = vshrl.u32 %v5503, 7
  %v5505 = vsub.s32 1, %v5504
  %v5506 = vrot.slane %v2477, %v5505
  %v5507 = vlaneseq
  %v5508 = vshrl.u32 %v5507, 7
  %v5509 = vsub.s32 1, %v5508
  %v5510 = vrot.slane %v2533, %v5509
  %v5511 = vlaneseq
  %v5512 = vshrl.u32 %v5511, 7
  %v5513 = vsub.s32 1, %v5512
  %v5514 = vrot.slane %v2541, %v5513
  %v5515 = vlaneseq
  %v5516 = vshrl.u32 %v5515, 7
  %v5517 = vsub.s32 1, %v5516
  %v5518 = vrot.slane %v2540, %v5517
  %v5519 = vlaneseq
  %v5520 = vshrl.u32 %v5519, 7
  %v5521 = vsub.s32 1, %v5520
  %v5522 = vrot.slane %v2542, %v5521
  %v5523 = vlaneseq
  %v5524 = vshrl.u32 %v5523, 7
  %v5525 = vsub.s32 1, %v5524
  %v5526 = vrot.slane %v2550, %v5525
  %v5527 = vlaneseq
  %v5528 = vshrl.u32 %v5527, 7
  %v5529 = vsub.s32 1, %v5528
  %v5530 = vrot.slane %v2558, %v5529
  %v5531 = vlaneseq
  %v5532 = vshrl.u32 %v5531, 7
  %v5533 = vsub.s32 1, %v5532
  %v5534 = vrot.slane %v2557, %v5533
  %v5535 = vlaneseq
  %v5536 = vshrl.u32 %v5535, 7
  %v5537 = vsub.s32 1, %v5536
  %v5538 = vrot.slane %v2559, %v5537
  %v5539 = vlaneseq
  %v5540 = vshrl.u32 %v5539, 7
  %v5541 = vsub.s32 1, %v5540
  %v5542 = vrot.slane %v2615, %v5541
  %v5543 = vlaneseq
  %v5544 = vshrl.u32 %v5543, 7
  %v5545 = vsub.s32 1, %v5544
  %v5546 = vrot.slane %v2623, %v5545
  %v5547 = vlaneseq
  %v5548 = vshrl.u32 %v5547, 7
  %v5549 = vsub.s32 1, %v5548
  %v5550 = vrot.slane %v2622, %v5549
  %v5551 = vlaneseq
  %v5552 = vshrl.u32 %v5551, 7
  %v5553 = vsub.s32 1, %v5552
  %v5554 = vrot.slane %v2624, %v5553
  %v5555 = vlaneseq
  %v5556 = vshrl.u32 %v5555, 7
  %v5557 = vsub.s32 1, %v5556
  %v5558 = vrot.slane %v2632, %v5557
  %v5559 = vlaneseq
  %v5560 = vshrl.u32 %v5559, 7
  %v5561 = vsub.s32 1, %v5560
  %v5562 = vrot.slane %v2640, %v5561
  %v5563 = vlaneseq
  %v5564 = vshrl.u32 %v5563, 7
  %v5565 = vsub.s32 1, %v5564
  %v5566 = vrot.slane %v2639, %v5565
  %v5567 = vlaneseq
  %v5568 = vshrl.u32 %v5567, 7
  %v5569 = vsub.s32 1, %v5568
  %v5570 = vrot.slane %v2641, %v5569
  %v5571 = vlaneseq
  %v5572 = vshrl.u32 %v5571, 7
  %v5573 = vsub.s32 1, %v5572
  %v5574 = vrot.slane %v2697, %v5573
  %v5575 = vlaneseq
  %v5576 = vshrl.u32 %v5575, 7
  %v5577 = vsub.s32 1, %v5576
  %v5578 = vrot.slane %v2705, %v5577
  %v5579 = vlaneseq
  %v5580 = vshrl.u32 %v5579, 7
  %v5581 = vsub.s32 1, %v5580
  %v5582 = vrot.slane %v2704, %v5581
  %v5583 = vlaneseq
  %v5584 = vshrl.u32 %v5583, 7
  %v5585 = vsub.s32 1, %v5584
  %v5586 = vrot.slane %v2706, %v5585
  %v5587 = vlaneseq
  %v5588 = vshrl.u32 %v5587, 7
  %v5589 = vsub.s32 1, %v5588
  %v5590 = vrot.slane %v2714, %v5589
  %v5591 = vlaneseq
  %v5592 = vshrl.u32 %v5591, 7
  %v5593 = vsub.s32 1, %v5592
  %v5594 = vrot.slane %v2722, %v5593
  %v5595 = vlaneseq
  %v5596 = vshrl.u32 %v5595, 7
  %v5597 = vsub.s32 1, %v5596
  %v5598 = vrot.slane %v2721, %v5597
  %v5599 = vlaneseq
  %v5600 = vshrl.u32 %v5599, 7
  %v5601 = vsub.s32 1, %v5600
  %v5602 = vrot.slane %v2723, %v5601
  %v5603 = vlaneseq
  %v5604 = vshrl.u32 %v5603, 7
  %v5605 = vsub.s32 1, %v5604
  %v5606 = vrot.slane %v2779, %v5605
  %v5607 = vlaneseq
  %v5608 = vshrl.u32 %v5607, 7
  %v5609 = vsub.s32 1, %v5608
  %v5610 = vrot.slane %v2787, %v5609
  %v5611 = vlaneseq
  %v5612 = vshrl.u32 %v5611, 7
  %v5613 = vsub.s32 1, %v5612
  %v5614 = vrot.slane %v2786, %v5613
  %v5615 = vlaneseq
  %v5616 = vshrl.u32 %v5615, 7
  %v5617 = vsub.s32 1, %v5616
  %v5618 = vrot.slane %v2788, %v5617
  %v5619 = vlaneseq
  %v5620 = vshrl.u32 %v5619, 7
  %v5621 = vsub.s32 1, %v5620
  %v5622 = vrot.slane %v2796, %v5621
  %v5623 = vlaneseq
  %v5624 = vshrl.u32 %v5623, 7
  %v5625 = vsub.s32 1, %v5624
  %v5626 = vrot.slane %v2804, %v5625
  %v5627 = vlaneseq
  %v5628 = vshrl.u32 %v5627, 7
  %v5629 = vsub.s32 1, %v5628
  %v5630 = vrot.slane %v2803, %v5629
  %v5631 = vlaneseq
  %v5632 = vshrl.u32 %v5631, 7
  %v5633 = vsub.s32 1, %v5632
  %v5634 = vrot.slane %v2805, %v5633
  %v5635 = vlaneseq
  %v5636 = vshrl.u32 %v5635, 7
  %v5637 = vsub.s32 1, %v5636
  %v5638 = vrot.slane %v2861, %v5637
  %v5639 = vlaneseq
  %v5640 = vshrl.u32 %v5639, 7
  %v5641 = vsub.s32 1, %v5640
  %v5642 = vrot.slane %v2869, %v5641
  %v5643 = vlaneseq
  %v5644 = vshrl.u32 %v5643, 7
  %v5645 = vsub.s32 1, %v5644
  %v5646 = vrot.slane %v2868, %v5645
  %v5647 = vlaneseq
  %v5648 = vshrl.u32 %v5647, 7
  %v5649 = vsub.s32 1, %v5648
  %v5650 = vrot.slane %v2870, %v5649
  %v5651 = vlaneseq
  %v5652 = vshrl.u32 %v5651, 7
  %v5653 = vsub.s32 1, %v5652
  %v5654 = vrot.slane %v2878, %v5653
  %v5655 = vlaneseq
  %v5656 = vshrl.u32 %v5655, 7
  %v5657 = vsub.s32 1, %v5656
  %v5658 = vrot.slane %v2886, %v5657
  %v5659 = vlaneseq
  %v5660 = vshrl.u32 %v5659, 7
  %v5661 = vsub.s32 1, %v5660
  %v5662 = vrot.slane %v2885, %v5661
  %v5663 = vlaneseq
  %v5664 = vshrl.u32 %v5663, 7
  %v5665 = vsub.s32 1, %v5664
  %v5666 = vrot.slane %v2887, %v5665
  %v5667 = vlaneseq
  %v5668 = vshrl.u32 %v5667, 7
  %v5669 = vsub.s32 1, %v5668
  %v5670 = vrot.slane %v2943, %v5669
  %v5671 = vlaneseq
  %v5672 = vshrl.u32 %v5671, 7
  %v5673 = vsub.s32 1, %v5672
  %v5674 = vrot.slane %v2951, %v5673
  %v5675 = vlaneseq
  %v5676 = vshrl.u32 %v5675, 7
  %v5677 = vsub.s32 1, %v5676
  %v5678 = vrot.slane %v2950, %v5677
  %v5679 = vlaneseq
  %v5680 = vshrl.u32 %v5679, 7
  %v5681 = vsub.s32 1, %v5680
  %v5682 = vrot.slane %v2952, %v5681
  %v5683 = vlaneseq
  %v5684 = vshrl.u32 %v5683, 7
  %v5685 = vsub.s32 1, %v5684
  %v5686 = vrot.slane %v2960, %v5685
  %v5687 = vlaneseq
  %v5688 = vshrl.u32 %v5687, 7
  %v5689 = vsub.s32 1, %v5688
  %v5690 = vrot.slane %v2968, %v5689
  %v5691 = vlaneseq
  %v5692 = vshrl.u32 %v5691, 7
  %v5693 = vsub.s32 1, %v5692
  %v5694 = vrot.slane %v2967, %v5693
  %v5695 = vlaneseq
  %v5696 = vshrl.u32 %v5695, 7
  %v5697 = vsub.s32 1, %v5696
  %v5698 = vrot.slane %v2969, %v5697
  %v5699 = vlaneseq
  %v5700 = vshrl.u32 %v5699, 7
  %v5701 = vsub.s32 1, %v5700
  %v5702 = vrot.slane %v3025, %v5701
  %v5703 = vlaneseq
  %v5704 = vshrl.u32 %v5703, 7
  %v5705 = vsub.s32 1, %v5704
  %v5706 = vrot.slane %v3033, %v5705
  %v5707 = vlaneseq
  %v5708 = vshrl.u32 %v5707, 7
  %v5709 = vsub.s32 1, %v5708
  %v5710 = vrot.slane %v3032, %v5709
  %v5711 = vlaneseq
  %v5712 = vshrl.u32 %v5711, 7
  %v5713 = vsub.s32 1, %v5712
  %v5714 = vrot.slane %v3034, %v5713
  %v5715 = vlaneseq
  %v5716 = vshrl.u32 %v5715, 7
  %v5717 = vsub.s32 1, %v5716
  %v5718 = vrot.slane %v3042, %v5717
  %v5719 = vlaneseq
  %v5720 = vshrl.u32 %v5719, 7
  %v5721 = vsub.s32 1, %v5720
  %v5722 = vrot.slane %v3050, %v5721
  %v5723 = vlaneseq
  %v5724 = vshrl.u32 %v5723, 7
  %v5725 = vsub.s32 1, %v5724
  %v5726 = vrot.slane %v3049, %v5725
  %v5727 = vlaneseq
  %v5728 = vshrl.u32 %v5727, 7
  %v5729 = vsub.s32 1, %v5728
  %v5730 = vrot.slane %v3051, %v5729
  %v5731 = vsel %vm3580, %v5226, %v5222
  %v5732 = vsel %vm3582, %v5230, %v5731
  %v5733 = vsel %vm3584, %v5234, %v5732
  %v5734 = vsel %vm3586, %v5238, %v5733
  %v5735 = vsel %vm3588, %v5242, %v5734
  %v5736 = vsel %vm3590, %v5246, %v5735
  %v5737 = vsel %vm3592, %v5250, %v5736
  %v5738 = vsel %vm3580, %v5258, %v5254
  %v5739 = vsel %vm3582, %v5262, %v5738
  %v5740 = vsel %vm3584, %v5266, %v5739
  %v5741 = vsel %vm3586, %v5270, %v5740
  %v5742 = vsel %vm3588, %v5274, %v5741
  %v5743 = vsel %vm3590, %v5278, %v5742
  %v5744 = vsel %vm3592, %v5282, %v5743
  %v5745 = vsel %vm3580, %v5290, %v5286
  %v5746 = vsel %vm3582, %v5294, %v5745
  %v5747 = vsel %vm3584, %v5298, %v5746
  %v5748 = vsel %vm3586, %v5302, %v5747
  %v5749 = vsel %vm3588, %v5306, %v5748
  %v5750 = vsel %vm3590, %v5310, %v5749
  %v5751 = vsel %vm3592, %v5314, %v5750
  %v5752 = vsel %vm3580, %v5322, %v5318
  %v5753 = vsel %vm3582, %v5326, %v5752
  %v5754 = vsel %vm3584, %v5330, %v5753
  %v5755 = vsel %vm3586, %v5334, %v5754
  %v5756 = vsel %vm3588, %v5338, %v5755
  %v5757 = vsel %vm3590, %v5342, %v5756
  %v5758 = vsel %vm3592, %v5346, %v5757
  %v5759 = vsel %vm3580, %v5354, %v5350
  %v5760 = vsel %vm3582, %v5358, %v5759
  %v5761 = vsel %vm3584, %v5362, %v5760
  %v5762 = vsel %vm3586, %v5366, %v5761
  %v5763 = vsel %vm3588, %v5370, %v5762
  %v5764 = vsel %vm3590, %v5374, %v5763
  %v5765 = vsel %vm3592, %v5378, %v5764
  %v5766 = vsel %vm3580, %v5386, %v5382
  %v5767 = vsel %vm3582, %v5390, %v5766
  %v5768 = vsel %vm3584, %v5394, %v5767
  %v5769 = vsel %vm3586, %v5398, %v5768
  %v5770 = vsel %vm3588, %v5402, %v5769
  %v5771 = vsel %vm3590, %v5406, %v5770
  %v5772 = vsel %vm3592, %v5410, %v5771
  %v5773 = vsel %vm3580, %v5418, %v5414
  %v5774 = vsel %vm3582, %v5422, %v5773
  %v5775 = vsel %vm3584, %v5426, %v5774
  %v5776 = vsel %vm3586, %v5430, %v5775
  %v5777 = vsel %vm3588, %v5434, %v5776
  %v5778 = vsel %vm3590, %v5438, %v5777
  %v5779 = vsel %vm3592, %v5442, %v5778
  %v5780 = vsel %vm3580, %v5450, %v5446
  %v5781 = vsel %vm3582, %v5454, %v5780
  %v5782 = vsel %vm3584, %v5458, %v5781
  %v5783 = vsel %vm3586, %v5462, %v5782
  %v5784 = vsel %vm3588, %v5466, %v5783
  %v5785 = vsel %vm3590, %v5470, %v5784
  %v5786 = vsel %vm3592, %v5474, %v5785
  %v5787 = vsel %vm3580, %v5482, %v5478
  %v5788 = vsel %vm3582, %v5486, %v5787
  %v5789 = vsel %vm3584, %v5490, %v5788
  %v5790 = vsel %vm3586, %v5494, %v5789
  %v5791 = vsel %vm3588, %v5498, %v5790
  %v5792 = vsel %vm3590, %v5502, %v5791
  %v5793 = vsel %vm3592, %v5506, %v5792
  %v5794 = vsel %vm3580, %v5514, %v5510
  %v5795 = vsel %vm3582, %v5518, %v5794
  %v5796 = vsel %vm3584, %v5522, %v5795
  %v5797 = vsel %vm3586, %v5526, %v5796
  %v5798 = vsel %vm3588, %v5530, %v5797
  %v5799 = vsel %vm3590, %v5534, %v5798
  %v5800 = vsel %vm3592, %v5538, %v5799
  %v5801 = vsel %vm3580, %v5546, %v5542
  %v5802 = vsel %vm3582, %v5550, %v5801
  %v5803 = vsel %vm3584, %v5554, %v5802
  %v5804 = vsel %vm3586, %v5558, %v5803
  %v5805 = vsel %vm3588, %v5562, %v5804
  %v5806 = vsel %vm3590, %v5566, %v5805
  %v5807 = vsel %vm3592, %v5570, %v5806
  %v5808 = vsel %vm3580, %v5578, %v5574
  %v5809 = vsel %vm3582, %v5582, %v5808
  %v5810 = vsel %vm3584, %v5586, %v5809
  %v5811 = vsel %vm3586, %v5590, %v5810
  %v5812 = vsel %vm3588, %v5594, %v5811
  %v5813 = vsel %vm3590, %v5598, %v5812
  %v5814 = vsel %vm3592, %v5602, %v5813
  %v5815 = vsel %vm3580, %v5610, %v5606
  %v5816 = vsel %vm3582, %v5614, %v5815
  %v5817 = vsel %vm3584, %v5618, %v5816
  %v5818 = vsel %vm3586, %v5622, %v5817
  %v5819 = vsel %vm3588, %v5626, %v5818
  %v5820 = vsel %vm3590, %v5630, %v5819
  %v5821 = vsel %vm3592, %v5634, %v5820
  %v5822 = vsel %vm3580, %v5642, %v5638
  %v5823 = vsel %vm3582, %v5646, %v5822
  %v5824 = vsel %vm3584, %v5650, %v5823
  %v5825 = vsel %vm3586, %v5654, %v5824
  %v5826 = vsel %vm3588, %v5658, %v5825
  %v5827 = vsel %vm3590, %v5662, %v5826
  %v5828 = vsel %vm3592, %v5666, %v5827
  %v5829 = vsel %vm3580, %v5674, %v5670
  %v5830 = vsel %vm3582, %v5678, %v5829
  %v5831 = vsel %vm3584, %v5682, %v5830
  %v5832 = vsel %vm3586, %v5686, %v5831
  %v5833 = vsel %vm3588, %v5690, %v5832
  %v5834 = vsel %vm3590, %v5694, %v5833
  %v5835 = vsel %vm3592, %v5698, %v5834
  %v5836 = vsel %vm3580, %v5706, %v5702
  %v5837 = vsel %vm3582, %v5710, %v5836
  %v5838 = vsel %vm3584, %v5714, %v5837
  %v5839 = vsel %vm3586, %v5718, %v5838
  %v5840 = vsel %vm3588, %v5722, %v5839
  %v5841 = vsel %vm3590, %v5726, %v5840
  %v5842 = vsel %vm3592, %v5730, %v5841
  %5843 = vrot.lane.b32.xlu0 %v5737, 64
  %v5844 = vpop.permute.xlu0 %5843
  %5845 = vrot.lane.b32.xlu0 %v5744, 64
  %v5846 = vpop.permute.xlu0 %5845
  %5847 = vrot.lane.b32.xlu0 %v5751, 64
  %v5848 = vpop.permute.xlu0 %5847
  %5849 = vrot.lane.b32.xlu0 %v5758, 64
  %v5850 = vpop.permute.xlu0 %5849
  %5851 = vrot.lane.b32.xlu0 %v5765, 64
  %v5852 = vpop.permute.xlu0 %5851
  %5853 = vrot.lane.b32.xlu0 %v5772, 64
  %v5854 = vpop.permute.xlu0 %5853
  %5855 = vrot.lane.b32.xlu0 %v5779, 64
  %v5856 = vpop.permute.xlu0 %5855
  %5857 = vrot.lane.b32.xlu0 %v5786, 64
  %v5858 = vpop.permute.xlu0 %5857
  %5859 = vrot.lane.b32.xlu0 %v5793, 64
  %v5860 = vpop.permute.xlu0 %5859
  %5861 = vrot.lane.b32.xlu0 %v5800, 64
  %v5862 = vpop.permute.xlu0 %5861
  %5863 = vrot.lane.b32.xlu0 %v5807, 64
  %v5864 = vpop.permute.xlu0 %5863
  %5865 = vrot.lane.b32.xlu0 %v5814, 64
  %v5866 = vpop.permute.xlu0 %5865
  %5867 = vrot.lane.b32.xlu0 %v5821, 64
  %v5868 = vpop.permute.xlu0 %5867
  %5869 = vrot.lane.b32.xlu0 %v5828, 64
  %v5870 = vpop.permute.xlu0 %5869
  %5871 = vrot.lane.b32.xlu0 %v5835, 64
  %v5872 = vpop.permute.xlu0 %5871
  %5873 = vrot.lane.b32.xlu0 %v5842, 64
  %v5874 = vpop.permute.xlu0 %5873
  %v5891 = vlaneseq
  %v5892 = vshrl.u32 %v5891, 7
  %v5893 = vsub.s32 0, %v5892
  %v5894 = vrot.slane %v1828, %v5893
  %v5895 = vlaneseq
  %v5896 = vshrl.u32 %v5895, 7
  %v5897 = vsub.s32 0, %v5896
  %v5898 = vrot.slane %v1910, %v5897
  %v5899 = vlaneseq
  %v5900 = vshrl.u32 %v5899, 7
  %v5901 = vsub.s32 0, %v5900
  %v5902 = vrot.slane %v1992, %v5901
  %v5903 = vlaneseq
  %v5904 = vshrl.u32 %v5903, 7
  %v5905 = vsub.s32 0, %v5904
  %v5906 = vrot.slane %v2074, %v5905
  %v5907 = vlaneseq
  %v5908 = vshrl.u32 %v5907, 7
  %v5909 = vsub.s32 0, %v5908
  %v5910 = vrot.slane %v2156, %v5909
  %v5911 = vlaneseq
  %v5912 = vshrl.u32 %v5911, 7
  %v5913 = vsub.s32 0, %v5912
  %v5914 = vrot.slane %v2238, %v5913
  %v5915 = vlaneseq
  %v5916 = vshrl.u32 %v5915, 7
  %v5917 = vsub.s32 0, %v5916
  %v5918 = vrot.slane %v2320, %v5917
  %v5919 = vlaneseq
  %v5920 = vshrl.u32 %v5919, 7
  %v5921 = vsub.s32 0, %v5920
  %v5922 = vrot.slane %v2402, %v5921
  %v5923 = vlaneseq
  %v5924 = vshrl.u32 %v5923, 7
  %v5925 = vsub.s32 0, %v5924
  %v5926 = vrot.slane %v2484, %v5925
  %v5927 = vlaneseq
  %v5928 = vshrl.u32 %v5927, 7
  %v5929 = vsub.s32 0, %v5928
  %v5930 = vrot.slane %v2566, %v5929
  %v5931 = vlaneseq
  %v5932 = vshrl.u32 %v5931, 7
  %v5933 = vsub.s32 0, %v5932
  %v5934 = vrot.slane %v2648, %v5933
  %v5935 = vlaneseq
  %v5936 = vshrl.u32 %v5935, 7
  %v5937 = vsub.s32 0, %v5936
  %v5938 = vrot.slane %v2730, %v5937
  %v5939 = vlaneseq
  %v5940 = vshrl.u32 %v5939, 7
  %v5941 = vsub.s32 0, %v5940
  %v5942 = vrot.slane %v2812, %v5941
  %v5943 = vlaneseq
  %v5944 = vshrl.u32 %v5943, 7
  %v5945 = vsub.s32 0, %v5944
  %v5946 = vrot.slane %v2894, %v5945
  %v5947 = vlaneseq
  %v5948 = vshrl.u32 %v5947, 7
  %v5949 = vsub.s32 0, %v5948
  %v5950 = vrot.slane %v2976, %v5949
  %v5951 = vlaneseq
  %v5952 = vshrl.u32 %v5951, 7
  %v5953 = vsub.s32 0, %v5952
  %v5954 = vrot.slane %v3058, %v5953
  %v5955 = vsel %vm3580, %v4558, %v4554
  %v5956 = vsel %vm3582, %v4562, %v5955
  %v5957 = vsel %vm3584, %v4566, %v5956
  %v5958 = vsel %vm3586, %v4570, %v5957
  %v5959 = vsel %vm3588, %v4574, %v5958
  %v5960 = vsel %vm3590, %v4578, %v5959
  %v5961 = vsel %vm3592, %v5894, %v5960
  %v5962 = vsel %vm3580, %v4590, %v4586
  %v5963 = vsel %vm3582, %v4594, %v5962
  %v5964 = vsel %vm3584, %v4598, %v5963
  %v5965 = vsel %vm3586, %v4602, %v5964
  %v5966 = vsel %vm3588, %v4606, %v5965
  %v5967 = vsel %vm3590, %v4610, %v5966
  %v5968 = vsel %vm3592, %v5898, %v5967
  %v5969 = vsel %vm3580, %v4622, %v4618
  %v5970 = vsel %vm3582, %v4626, %v5969
  %v5971 = vsel %vm3584, %v4630, %v5970
  %v5972 = vsel %vm3586, %v4634, %v5971
  %v5973 = vsel %vm3588, %v4638, %v5972
  %v5974 = vsel %vm3590, %v4642, %v5973
  %v5975 = vsel %vm3592, %v5902, %v5974
  %v5976 = vsel %vm3580, %v4654, %v4650
  %v5977 = vsel %vm3582, %v4658, %v5976
  %v5978 = vsel %vm3584, %v4662, %v5977
  %v5979 = vsel %vm3586, %v4666, %v5978
  %v5980 = vsel %vm3588, %v4670, %v5979
  %v5981 = vsel %vm3590, %v4674, %v5980
  %v5982 = vsel %vm3592, %v5906, %v5981
  %v5983 = vsel %vm3580, %v4686, %v4682
  %v5984 = vsel %vm3582, %v4690, %v5983
  %v5985 = vsel %vm3584, %v4694, %v5984
  %v5986 = vsel %vm3586, %v4698, %v5985
  %v5987 = vsel %vm3588, %v4702, %v5986
  %v5988 = vsel %vm3590, %v4706, %v5987
  %v5989 = vsel %vm3592, %v5910, %v5988
  %v5990 = vsel %vm3580, %v4718, %v4714
  %v5991 = vsel %vm3582, %v4722, %v5990
  %v5992 = vsel %vm3584, %v4726, %v5991
  %v5993 = vsel %vm3586, %v4730, %v5992
  %v5994 = vsel %vm3588, %v4734, %v5993
  %v5995 = vsel %vm3590, %v4738, %v5994
  %v5996 = vsel %vm3592, %v5914, %v5995
  %v5997 = vsel %vm3580, %v4750, %v4746
  %v5998 = vsel %vm3582, %v4754, %v5997
  %v5999 = vsel %vm3584, %v4758, %v5998
  %v6000 = vsel %vm3586, %v4762, %v5999
  %v6001 = vsel %vm3588, %v4766, %v6000
  %v6002 = vsel %vm3590, %v4770, %v6001
  %v6003 = vsel %vm3592, %v5918, %v6002
  %v6004 = vsel %vm3580, %v4782, %v4778
  %v6005 = vsel %vm3582, %v4786, %v6004
  %v6006 = vsel %vm3584, %v4790, %v6005
  %v6007 = vsel %vm3586, %v4794, %v6006
  %v6008 = vsel %vm3588, %v4798, %v6007
  %v6009 = vsel %vm3590, %v4802, %v6008
  %v6010 = vsel %vm3592, %v5922, %v6009
  %v6011 = vsel %vm3580, %v4814, %v4810
  %v6012 = vsel %vm3582, %v4818, %v6011
  %v6013 = vsel %vm3584, %v4822, %v6012
  %v6014 = vsel %vm3586, %v4826, %v6013
  %v6015 = vsel %vm3588, %v4830, %v6014
  %v6016 = vsel %vm3590, %v4834, %v6015
  %v6017 = vsel %vm3592, %v5926, %v6016
  %v6018 = vsel %vm3580, %v4846, %v4842
  %v6019 = vsel %vm3582, %v4850, %v6018
  %v6020 = vsel %vm3584, %v4854, %v6019
  %v6021 = vsel %vm3586, %v4858, %v6020
  %v6022 = vsel %vm3588, %v4862, %v6021
  %v6023 = vsel %vm3590, %v4866, %v6022
  %v6024 = vsel %vm3592, %v5930, %v6023
  %v6025 = vsel %vm3580, %v4878, %v4874
  %v6026 = vsel %vm3582, %v4882, %v6025
  %v6027 = vsel %vm3584, %v4886, %v6026
  %v6028 = vsel %vm3586, %v4890, %v6027
  %v6029 = vsel %vm3588, %v4894, %v6028
  %v6030 = vsel %vm3590, %v4898, %v6029
  %v6031 = vsel %vm3592, %v5934, %v6030
  %v6032 = vsel %vm3580, %v4910, %v4906
  %v6033 = vsel %vm3582, %v4914, %v6032
  %v6034 = vsel %vm3584, %v4918, %v6033
  %v6035 = vsel %vm3586, %v4922, %v6034
  %v6036 = vsel %vm3588, %v4926, %v6035
  %v6037 = vsel %vm3590, %v4930, %v6036
  %v6038 = vsel %vm3592, %v5938, %v6037
  %v6039 = vsel %vm3580, %v4942, %v4938
  %v6040 = vsel %vm3582, %v4946, %v6039
  %v6041 = vsel %vm3584, %v4950, %v6040
  %v6042 = vsel %vm3586, %v4954, %v6041
  %v6043 = vsel %vm3588, %v4958, %v6042
  %v6044 = vsel %vm3590, %v4962, %v6043
  %v6045 = vsel %vm3592, %v5942, %v6044
  %v6046 = vsel %vm3580, %v4974, %v4970
  %v6047 = vsel %vm3582, %v4978, %v6046
  %v6048 = vsel %vm3584, %v4982, %v6047
  %v6049 = vsel %vm3586, %v4986, %v6048
  %v6050 = vsel %vm3588, %v4990, %v6049
  %v6051 = vsel %vm3590, %v4994, %v6050
  %v6052 = vsel %vm3592, %v5946, %v6051
  %v6053 = vsel %vm3580, %v5006, %v5002
  %v6054 = vsel %vm3582, %v5010, %v6053
  %v6055 = vsel %vm3584, %v5014, %v6054
  %v6056 = vsel %vm3586, %v5018, %v6055
  %v6057 = vsel %vm3588, %v5022, %v6056
  %v6058 = vsel %vm3590, %v5026, %v6057
  %v6059 = vsel %vm3592, %v5950, %v6058
  %v6060 = vsel %vm3580, %v5038, %v5034
  %v6061 = vsel %vm3582, %v5042, %v6060
  %v6062 = vsel %vm3584, %v5046, %v6061
  %v6063 = vsel %vm3586, %v5050, %v6062
  %v6064 = vsel %vm3588, %v5054, %v6063
  %v6065 = vsel %vm3590, %v5058, %v6064
  %v6066 = vsel %vm3592, %v5954, %v6065
  %6067 = vrot.lane.b32.xlu0 %v5961, 80
  %v6068 = vpop.permute.xlu0 %6067
  %6069 = vrot.lane.b32.xlu0 %v5968, 80
  %v6070 = vpop.permute.xlu0 %6069
  %6071 = vrot.lane.b32.xlu0 %v5975, 80
  %v6072 = vpop.permute.xlu0 %6071
  %6073 = vrot.lane.b32.xlu0 %v5982, 80
  %v6074 = vpop.permute.xlu0 %6073
  %6075 = vrot.lane.b32.xlu0 %v5989, 80
  %v6076 = vpop.permute.xlu0 %6075
  %6077 = vrot.lane.b32.xlu0 %v5996, 80
  %v6078 = vpop.permute.xlu0 %6077
  %6079 = vrot.lane.b32.xlu0 %v6003, 80
  %v6080 = vpop.permute.xlu0 %6079
  %6081 = vrot.lane.b32.xlu0 %v6010, 80
  %v6082 = vpop.permute.xlu0 %6081
  %6083 = vrot.lane.b32.xlu0 %v6017, 80
  %v6084 = vpop.permute.xlu0 %6083
  %6085 = vrot.lane.b32.xlu0 %v6024, 80
  %v6086 = vpop.permute.xlu0 %6085
  %6087 = vrot.lane.b32.xlu0 %v6031, 80
  %v6088 = vpop.permute.xlu0 %6087
  %6089 = vrot.lane.b32.xlu0 %v6038, 80
  %v6090 = vpop.permute.xlu0 %6089
  %6091 = vrot.lane.b32.xlu0 %v6045, 80
  %v6092 = vpop.permute.xlu0 %6091
  %6093 = vrot.lane.b32.xlu0 %v6052, 80
  %v6094 = vpop.permute.xlu0 %6093
  %6095 = vrot.lane.b32.xlu0 %v6059, 80
  %v6096 = vpop.permute.xlu0 %6095
  %6097 = vrot.lane.b32.xlu0 %v6066, 80
  %v6098 = vpop.permute.xlu0 %6097
  %v6115 = vlaneseq
  %v6116 = vshrl.u32 %v6115, 7
  %v6117 = vsub.s32 0, %v6116
  %v6118 = vrot.slane %v2410, %v6117
  %v6119 = vlaneseq
  %v6120 = vshrl.u32 %v6119, 7
  %v6121 = vsub.s32 0, %v6120
  %v6122 = vrot.slane %v2418, %v6121
  %v6123 = vlaneseq
  %v6124 = vshrl.u32 %v6123, 7
  %v6125 = vsub.s32 0, %v6124
  %v6126 = vrot.slane %v2417, %v6125
  %v6127 = vlaneseq
  %v6128 = vshrl.u32 %v6127, 7
  %v6129 = vsub.s32 0, %v6128
  %v6130 = vrot.slane %v2419, %v6129
  %v6131 = vlaneseq
  %v6132 = vshrl.u32 %v6131, 7
  %v6133 = vsub.s32 0, %v6132
  %v6134 = vrot.slane %v2427, %v6133
  %v6135 = vlaneseq
  %v6136 = vshrl.u32 %v6135, 7
  %v6137 = vsub.s32 0, %v6136
  %v6138 = vrot.slane %v2435, %v6137
  %v6139 = vlaneseq
  %v6140 = vshrl.u32 %v6139, 7
  %v6141 = vsub.s32 0, %v6140
  %v6142 = vrot.slane %v2434, %v6141
  %v6143 = vlaneseq
  %v6144 = vshrl.u32 %v6143, 7
  %v6145 = vsub.s32 0, %v6144
  %v6146 = vrot.slane %v2436, %v6145
  %v6147 = vlaneseq
  %v6148 = vshrl.u32 %v6147, 7
  %v6149 = vsub.s32 0, %v6148
  %v6150 = vrot.slane %v3066, %v6149
  %v6151 = vlaneseq
  %v6152 = vshrl.u32 %v6151, 7
  %v6153 = vsub.s32 0, %v6152
  %v6154 = vrot.slane %v3074, %v6153
  %v6155 = vlaneseq
  %v6156 = vshrl.u32 %v6155, 7
  %v6157 = vsub.s32 0, %v6156
  %v6158 = vrot.slane %v3073, %v6157
  %v6159 = vlaneseq
  %v6160 = vshrl.u32 %v6159, 7
  %v6161 = vsub.s32 0, %v6160
  %v6162 = vrot.slane %v3075, %v6161
  %v6163 = vlaneseq
  %v6164 = vshrl.u32 %v6163, 7
  %v6165 = vsub.s32 0, %v6164
  %v6166 = vrot.slane %v3083, %v6165
  %v6167 = vlaneseq
  %v6168 = vshrl.u32 %v6167, 7
  %v6169 = vsub.s32 0, %v6168
  %v6170 = vrot.slane %v3091, %v6169
  %v6171 = vlaneseq
  %v6172 = vshrl.u32 %v6171, 7
  %v6173 = vsub.s32 0, %v6172
  %v6174 = vrot.slane %v3090, %v6173
  %v6175 = vlaneseq
  %v6176 = vshrl.u32 %v6175, 7
  %v6177 = vsub.s32 0, %v6176
  %v6178 = vrot.slane %v3092, %v6177
  %v6179 = vsel %vm3580, %v6122, %v6118
  %v6180 = vsel %vm3582, %v6126, %v6179
  %v6181 = vsel %vm3584, %v6130, %v6180
  %v6182 = vsel %vm3586, %v6134, %v6181
  %v6183 = vsel %vm3588, %v6138, %v6182
  %v6184 = vsel %vm3590, %v6142, %v6183
  %v6185 = vsel %vm3592, %v6146, %v6184
  %v6186 = vsel %vm3580, %v6154, %v6150
  %v6187 = vsel %vm3582, %v6158, %v6186
  %v6188 = vsel %vm3584, %v6162, %v6187
  %v6189 = vsel %vm3586, %v6166, %v6188
  %v6190 = vsel %vm3588, %v6170, %v6189
  %v6191 = vsel %vm3590, %v6174, %v6190
  %v6192 = vsel %vm3592, %v6178, %v6191
  %6193 = vrot.lane.b32.xlu0 %v3600, 96
  %v6194 = vpop.permute.xlu0 %6193
  %6195 = vrot.lane.b32.xlu0 %v3607, 96
  %v6196 = vpop.permute.xlu0 %6195
  %6197 = vrot.lane.b32.xlu0 %v3614, 96
  %v6198 = vpop.permute.xlu0 %6197
  %6199 = vrot.lane.b32.xlu0 %v3621, 96
  %v6200 = vpop.permute.xlu0 %6199
  %6201 = vrot.lane.b32.xlu0 %v3628, 96
  %v6202 = vpop.permute.xlu0 %6201
  %6203 = vrot.lane.b32.xlu0 %v3635, 96
  %v6204 = vpop.permute.xlu0 %6203
  %6205 = vrot.lane.b32.xlu0 %v3642, 96
  %v6206 = vpop.permute.xlu0 %6205
  %6207 = vrot.lane.b32.xlu0 %v6185, 96
  %v6208 = vpop.permute.xlu0 %6207
  %6209 = vrot.lane.b32.xlu0 %v3649, 96
  %v6210 = vpop.permute.xlu0 %6209
  %6211 = vrot.lane.b32.xlu0 %v3656, 96
  %v6212 = vpop.permute.xlu0 %6211
  %6213 = vrot.lane.b32.xlu0 %v3663, 96
  %v6214 = vpop.permute.xlu0 %6213
  %6215 = vrot.lane.b32.xlu0 %v3670, 96
  %v6216 = vpop.permute.xlu0 %6215
  %6217 = vrot.lane.b32.xlu0 %v3677, 96
  %v6218 = vpop.permute.xlu0 %6217
  %6219 = vrot.lane.b32.xlu0 %v3684, 96
  %v6220 = vpop.permute.xlu0 %6219
  %6221 = vrot.lane.b32.xlu0 %v3691, 96
  %v6222 = vpop.permute.xlu0 %6221
  %6223 = vrot.lane.b32.xlu0 %v6192, 96
  %v6224 = vpop.permute.xlu0 %6223
  %v6241 = vlaneseq
  %v6242 = vshrl.u32 %v6241, 7
  %v6243 = vsub.s32 1, %v6242
  %v6244 = vrot.slane %v2410, %v6243
  %v6245 = vlaneseq
  %v6246 = vshrl.u32 %v6245, 7
  %v6247 = vsub.s32 1, %v6246
  %v6248 = vrot.slane %v2418, %v6247
  %v6249 = vlaneseq
  %v6250 = vshrl.u32 %v6249, 7
  %v6251 = vsub.s32 1, %v6250
  %v6252 = vrot.slane %v2417, %v6251
  %v6253 = vlaneseq
  %v6254 = vshrl.u32 %v6253, 7
  %v6255 = vsub.s32 1, %v6254
  %v6256 = vrot.slane %v2419, %v6255
  %v6257 = vlaneseq
  %v6258 = vshrl.u32 %v6257, 7
  %v6259 = vsub.s32 1, %v6258
  %v6260 = vrot.slane %v2427, %v6259
  %v6261 = vlaneseq
  %v6262 = vshrl.u32 %v6261, 7
  %v6263 = vsub.s32 1, %v6262
  %v6264 = vrot.slane %v2435, %v6263
  %v6265 = vlaneseq
  %v6266 = vshrl.u32 %v6265, 7
  %v6267 = vsub.s32 1, %v6266
  %v6268 = vrot.slane %v2434, %v6267
  %v6269 = vlaneseq
  %v6270 = vshrl.u32 %v6269, 7
  %v6271 = vsub.s32 1, %v6270
  %v6272 = vrot.slane %v2436, %v6271
  %v6273 = vlaneseq
  %v6274 = vshrl.u32 %v6273, 7
  %v6275 = vsub.s32 1, %v6274
  %v6276 = vrot.slane %v3066, %v6275
  %v6277 = vlaneseq
  %v6278 = vshrl.u32 %v6277, 7
  %v6279 = vsub.s32 1, %v6278
  %v6280 = vrot.slane %v3074, %v6279
  %v6281 = vlaneseq
  %v6282 = vshrl.u32 %v6281, 7
  %v6283 = vsub.s32 1, %v6282
  %v6284 = vrot.slane %v3073, %v6283
  %v6285 = vlaneseq
  %v6286 = vshrl.u32 %v6285, 7
  %v6287 = vsub.s32 1, %v6286
  %v6288 = vrot.slane %v3075, %v6287
  %v6289 = vlaneseq
  %v6290 = vshrl.u32 %v6289, 7
  %v6291 = vsub.s32 1, %v6290
  %v6292 = vrot.slane %v3083, %v6291
  %v6293 = vlaneseq
  %v6294 = vshrl.u32 %v6293, 7
  %v6295 = vsub.s32 1, %v6294
  %v6296 = vrot.slane %v3091, %v6295
  %v6297 = vlaneseq
  %v6298 = vshrl.u32 %v6297, 7
  %v6299 = vsub.s32 1, %v6298
  %v6300 = vrot.slane %v3090, %v6299
  %v6301 = vlaneseq
  %v6302 = vshrl.u32 %v6301, 7
  %v6303 = vsub.s32 1, %v6302
  %v6304 = vrot.slane %v3092, %v6303
  %v6305 = vsel %vm3580, %v6248, %v6244
  %v6306 = vsel %vm3582, %v6252, %v6305
  %v6307 = vsel %vm3584, %v6256, %v6306
  %v6308 = vsel %vm3586, %v6260, %v6307
  %v6309 = vsel %vm3588, %v6264, %v6308
  %v6310 = vsel %vm3590, %v6268, %v6309
  %v6311 = vsel %vm3592, %v6272, %v6310
  %v6312 = vsel %vm3580, %v6280, %v6276
  %v6313 = vsel %vm3582, %v6284, %v6312
  %v6314 = vsel %vm3584, %v6288, %v6313
  %v6315 = vsel %vm3586, %v6292, %v6314
  %v6316 = vsel %vm3588, %v6296, %v6315
  %v6317 = vsel %vm3590, %v6300, %v6316
  %v6318 = vsel %vm3592, %v6304, %v6317
  %6319 = vrot.lane.b32.xlu0 %v4200, 112
  %v6320 = vpop.permute.xlu0 %6319
  %6321 = vrot.lane.b32.xlu0 %v4207, 112
  %v6322 = vpop.permute.xlu0 %6321
  %6323 = vrot.lane.b32.xlu0 %v4214, 112
  %v6324 = vpop.permute.xlu0 %6323
  %6325 = vrot.lane.b32.xlu0 %v4221, 112
  %v6326 = vpop.permute.xlu0 %6325
  %6327 = vrot.lane.b32.xlu0 %v4228, 112
  %v6328 = vpop.permute.xlu0 %6327
  %6329 = vrot.lane.b32.xlu0 %v4235, 112
  %v6330 = vpop.permute.xlu0 %6329
  %6331 = vrot.lane.b32.xlu0 %v4242, 112
  %v6332 = vpop.permute.xlu0 %6331
  %6333 = vrot.lane.b32.xlu0 %v6311, 112
  %v6334 = vpop.permute.xlu0 %6333
  %6335 = vrot.lane.b32.xlu0 %v4249, 112
  %v6336 = vpop.permute.xlu0 %6335
  %6337 = vrot.lane.b32.xlu0 %v4256, 112
  %v6338 = vpop.permute.xlu0 %6337
  %6339 = vrot.lane.b32.xlu0 %v4263, 112
  %v6340 = vpop.permute.xlu0 %6339
  %6341 = vrot.lane.b32.xlu0 %v4270, 112
  %v6342 = vpop.permute.xlu0 %6341
  %6343 = vrot.lane.b32.xlu0 %v4277, 112
  %v6344 = vpop.permute.xlu0 %6343
  %6345 = vrot.lane.b32.xlu0 %v4284, 112
  %v6346 = vpop.permute.xlu0 %6345
  %6347 = vrot.lane.b32.xlu0 %v4291, 112
  %v6348 = vpop.permute.xlu0 %6347
  %6349 = vrot.lane.b32.xlu0 %v6318, 112
  %v6350 = vpop.permute.xlu0 %6349
  %v6367 = vlaneseq
  %v6368 = vshrl.u32 %v6367, 7
  %v6369 = vsub.s32 0, %v6368
  %v6370 = vrot.slane %v2443, %v6369
  %v6371 = vlaneseq
  %v6372 = vshrl.u32 %v6371, 7
  %v6373 = vsub.s32 0, %v6372
  %v6374 = vrot.slane %v3099, %v6373
  %v6375 = vsel %vm3580, %v6126, %v6122
  %v6376 = vsel %vm3582, %v6130, %v6375
  %v6377 = vsel %vm3584, %v6134, %v6376
  %v6378 = vsel %vm3586, %v6138, %v6377
  %v6379 = vsel %vm3588, %v6142, %v6378
  %v6380 = vsel %vm3590, %v6146, %v6379
  %v6381 = vsel %vm3592, %v6370, %v6380
  %v6382 = vsel %vm3580, %v6158, %v6154
  %v6383 = vsel %vm3582, %v6162, %v6382
  %v6384 = vsel %vm3584, %v6166, %v6383
  %v6385 = vsel %vm3586, %v6170, %v6384
  %v6386 = vsel %vm3588, %v6174, %v6385
  %v6387 = vsel %vm3590, %v6178, %v6386
  %v6388 = vsel %vm3592, %v6374, %v6387
  %v6405 = vsel %vm762, %v3593, %v4293
  %v6406 = vsel %vm762, %v3600, %v4295
  %v6407 = vsel %vm762, %v3607, %v4297
  %v6408 = vsel %vm762, %v3614, %v4299
  %v6409 = vsel %vm762, %v3621, %v4301
  %v6410 = vsel %vm762, %v3628, %v4303
  %v6411 = vsel %vm762, %v3635, %v4305
  %v6412 = vsel %vm762, %v3642, %v4307
  %v6413 = vsel %vm762, %v3649, %v4309
  %v6414 = vsel %vm762, %v3656, %v4311
  %v6415 = vsel %vm762, %v3663, %v4313
  %v6416 = vsel %vm762, %v3670, %v4315
  %v6417 = vsel %vm762, %v3677, %v4317
  %v6418 = vsel %vm762, %v3684, %v4319
  %v6419 = vsel %vm762, %v3691, %v4321
  %vm6420 = vcmask 261120
  %v6421 = vsel %vm6420, %v6405, %v4503
  %v6422 = vsel %vm6420, %v6406, %v4505
  %v6423 = vsel %vm6420, %v6407, %v4507
  %v6424 = vsel %vm6420, %v6408, %v4509
  %v6425 = vsel %vm6420, %v6409, %v4511
  %v6426 = vsel %vm6420, %v6410, %v4513
  %v6427 = vsel %vm6420, %v6411, %v4515
  %v6428 = vsel %vm6420, %v6412, %v4517
  %v6429 = vsel %vm6420, %v6413, %v4519
  %v6430 = vsel %vm6420, %v6414, %v4521
  %v6431 = vsel %vm6420, %v6415, %v4523
  %v6432 = vsel %vm6420, %v6416, %v4525
  %v6433 = vsel %vm6420, %v6417, %v4527
  %v6434 = vsel %vm6420, %v6418, %v4529
  %v6435 = vsel %vm6420, %v6419, %v4531
  %vm6436 = vcmask 392192
  %v6437 = vsel %vm6436, %v6421, %v5172
  %v6438 = vsel %vm6436, %v6422, %v5174
  %v6439 = vsel %vm6436, %v6423, %v5176
  %v6440 = vsel %vm6436, %v6424, %v5178
  %v6441 = vsel %vm6436, %v6425, %v5180
  %v6442 = vsel %vm6436, %v6426, %v5182
  %v6443 = vsel %vm6436, %v6427, %v5184
  %v6444 = vsel %vm6436, %v6428, %v5186
  %v6445 = vsel %vm6436, %v6421, %v5188
  %v6446 = vsel %vm6436, %v6429, %v5190
  %v6447 = vsel %vm6436, %v6430, %v5192
  %v6448 = vsel %vm6436, %v6431, %v5194
  %v6449 = vsel %vm6436, %v6432, %v5196
  %v6450 = vsel %vm6436, %v6433, %v5198
  %v6451 = vsel %vm6436, %v6434, %v5200
  %v6452 = vsel %vm6436, %v6435, %v5202
  %vm6453 = vcmask 523264
  %v6454 = vsel %vm6453, %v6437, %v5844
  %v6455 = vsel %vm6453, %v6438, %v5846
  %v6456 = vsel %vm6453, %v6439, %v5848
  %v6457 = vsel %vm6453, %v6440, %v5850
  %v6458 = vsel %vm6453, %v6441, %v5852
  %v6459 = vsel %vm6453, %v6442, %v5854
  %v6460 = vsel %vm6453, %v6443, %v5856
  %v6461 = vsel %vm6453, %v6444, %v5858
  %v6462 = vsel %vm6453, %v6445, %v5860
  %v6463 = vsel %vm6453, %v6446, %v5862
  %v6464 = vsel %vm6453, %v6447, %v5864
  %v6465 = vsel %vm6453, %v6448, %v5866
  %v6466 = vsel %vm6453, %v6449, %v5868
  %v6467 = vsel %vm6453, %v6450, %v5870
  %v6468 = vsel %vm6453, %v6451, %v5872
  %v6469 = vsel %vm6453, %v6452, %v5874
  %vm6470 = vcmask 654336
  %v6471 = vsel %vm6470, %v6454, %v6068
  %v6472 = vsel %vm6470, %v6455, %v6070
  %v6473 = vsel %vm6470, %v6456, %v6072
  %v6474 = vsel %vm6470, %v6457, %v6074
  %v6475 = vsel %vm6470, %v6458, %v6076
  %v6476 = vsel %vm6470, %v6459, %v6078
  %v6477 = vsel %vm6470, %v6460, %v6080
  %v6478 = vsel %vm6470, %v6461, %v6082
  %v6479 = vsel %vm6470, %v6462, %v6084
  %v6480 = vsel %vm6470, %v6463, %v6086
  %v6481 = vsel %vm6470, %v6464, %v6088
  %v6482 = vsel %vm6470, %v6465, %v6090
  %v6483 = vsel %vm6470, %v6466, %v6092
  %v6484 = vsel %vm6470, %v6467, %v6094
  %v6485 = vsel %vm6470, %v6468, %v6096
  %v6486 = vsel %vm6470, %v6469, %v6098
  %vm6487 = vcmask 785408
  %v6488 = vsel %vm6487, %v6471, %v6194
  %v6489 = vsel %vm6487, %v6472, %v6196
  %v6490 = vsel %vm6487, %v6473, %v6198
  %v6491 = vsel %vm6487, %v6474, %v6200
  %v6492 = vsel %vm6487, %v6475, %v6202
  %v6493 = vsel %vm6487, %v6476, %v6204
  %v6494 = vsel %vm6487, %v6477, %v6206
  %v6495 = vsel %vm6487, %v6478, %v6208
  %v6496 = vsel %vm6487, %v6479, %v6210
  %v6497 = vsel %vm6487, %v6480, %v6212
  %v6498 = vsel %vm6487, %v6481, %v6214
  %v6499 = vsel %vm6487, %v6482, %v6216
  %v6500 = vsel %vm6487, %v6483, %v6218
  %v6501 = vsel %vm6487, %v6484, %v6220
  %v6502 = vsel %vm6487, %v6485, %v6222
  %v6503 = vsel %vm6487, %v6486, %v6224
  %vm6504 = vcmask 916480
  %v6505 = vsel %vm6504, %v6488, %v6320
  %v6506 = vsel %vm6504, %v6489, %v6322
  %v6507 = vsel %vm6504, %v6490, %v6324
  %v6508 = vsel %vm6504, %v6491, %v6326
  %v6509 = vsel %vm6504, %v6492, %v6328
  %v6510 = vsel %vm6504, %v6493, %v6330
  %v6511 = vsel %vm6504, %v6494, %v6332
  %v6512 = vsel %vm6504, %v6495, %v6334
  %v6513 = vsel %vm6504, %v6496, %v6336
  %v6514 = vsel %vm6504, %v6497, %v6338
  %v6515 = vsel %vm6504, %v6498, %v6340
  %v6516 = vsel %vm6504, %v6499, %v6342
  %v6517 = vsel %vm6504, %v6500, %v6344
  %v6518 = vsel %vm6504, %v6501, %v6346
  %v6519 = vsel %vm6504, %v6502, %v6348
  %v6520 = vsel %vm6504, %v6503, %v6350
  %v6521 = vpack.c.bf16 %v6506, %v6505
  %v6522 = vpack.c.bf16 %v4417, %v4410
  %v6523 = vpack.c.bf16 %v6508, %v6507
  %v6524 = vpack.c.bf16 %v4431, %v4424
  %v6525 = vpack.c.bf16 %v6510, %v6509
  %v6526 = vpack.c.bf16 %v4445, %v4438
  %v6527 = vpack.c.bf16 %v6512, %v6511
  %v6528 = vpack.c.bf16 %v6381, %v4452
  %v6529 = vpack.c.bf16 %v6514, %v6513
  %v6530 = vpack.c.bf16 %v4466, %v4459
  %v6531 = vpack.c.bf16 %v6516, %v6515
  %v6532 = vpack.c.bf16 %v4480, %v4473
  %v6533 = vpack.c.bf16 %v6518, %v6517
  %v6534 = vpack.c.bf16 %v4494, %v4487
  %v6535 = vpack.c.bf16 %v6520, %v6519
  %v6536 = vpack.c.bf16 %v6388, %v4501
  %v6538 = vlaneseq
  %v6539 = vshrl.u32 %v6538, 7
  %v6540 = vsub.s32 0, %v6539
  %v6541 = vrot.slane %v1383, %v6540
  %v6561 = vunpack.c.l.b16 %v1365
  %v6562 = vunpack.c.l.b16 %v1366
  %v6563 = vunpack.c.l.b16 %v1367
  %v6564 = vunpack.c.l.b16 %v1368
  %v6565 = vunpack.c.l.b16 %v1369
  %v6566 = vunpack.c.l.b16 %v1370
  %v6567 = vunpack.c.l.b16 %v1371
  %v6568 = vunpack.c.l.b16 %v1372
  %v6569 = vunpack.c.l.b16 %v1373
  %v6570 = vunpack.c.l.b16 %v1374
  %v6571 = vunpack.c.l.b16 %v1375
  %v6572 = vunpack.c.l.b16 %v1376
  %v6573 = vunpack.c.l.b16 %v1377
  %v6574 = vunpack.c.l.b16 %v1378
  %v6575 = vunpack.c.l.b16 %v1379
  %v6576 = vunpack.c.l.b16 %v1380
  %v6577 = vunpack.c.l.b16 %v1381
  %v6578 = vunpack.c.l.b16 %v1382
  %v6579 = vpack.c.b16 %v6562, %v6561
  %v6580 = vpack.c.b16 %v6564, %v6563
  %v6581 = vpack.c.b16 %v6566, %v6565
  %v6582 = vpack.c.b16 %v6568, %v6567
  %v6583 = vpack.c.b16 %v6570, %v6569
  %v6584 = vpack.c.b16 %v6572, %v6571
  %v6585 = vpack.c.b16 %v6574, %v6573
  %v6586 = vpack.c.b16 %v6576, %v6575
  %v6587 = vpack.c.b16 %v6578, %v6577
  %v6598 = vsel %vm762, %v6522, 0
  %v6601 = vsel %vm762, %v6524, 0
  %v6604 = vsel %vm762, %v6526, 0
  %v6607 = vsel %vm762, %v6528, 0
  %v6610 = vsel %vm762, %v6530, 0
  %v6613 = vsel %vm762, %v6532, 0
  %v6616 = vsel %vm762, %v6534, 0
  %v6619 = vsel %vm762, %v6536, 0
  %6621 = vmatprep.subr.bf16.mxu0 0
  %6622 = vmatpush1.bf16.msra.mxu0 %v6579
  %6623 = vmatprep.subr.bf16.mxu0 0
  %6624 = vmatpush1.bf16.msra.mxu0 %v6580
  %6625 = vmatprep.subr.bf16.mxu0 0
  %6626 = vmatpush1.bf16.msra.mxu0 %v6581
  %6627 = vmatprep.subr.bf16.mxu0 0
  %6628 = vmatpush1.bf16.msra.mxu0 %v6582
  %6629 = vmatprep.subr.bf16.mxu0 0
  %6630 = vmatpush1.bf16.msra.mxu0 %v6583
  %6631 = vmatprep.subr.bf16.mxu0 0
  %6632 = vmatpush1.bf16.msra.mxu0 %v6584
  %6633 = vmatprep.subr.bf16.mxu0 0
  %6634 = vmatpush1.bf16.msra.mxu0 %v6585
  %6635 = vmatprep.subr.bf16.mxu0 0
  %6636 = vmatpush1.bf16.msra.mxu0 %v6586
  %6637 = vmatprep.subr.bf16.mxu0 0
  %6638 = vmatpush1.bf16.msra.mxu0 %v6587
  %6639 = vmatprep.subr.bf16.mxu0 0
  %6640 = vmatpush1.bf16.msra.mxu0 0
  %6641 = vmatprep.subr.bf16.mxu0 0
  %6642 = vmatpush1.bf16.msra.mxu0 0
  %6643 = vmatprep.subr.bf16.mxu0 0
  %6644 = vmatpush1.bf16.msra.mxu0 0
  %6645 = vmatprep.subr.bf16.mxu0 0
  %6646 = vmatpush1.bf16.msra.mxu0 0
  %6647 = vmatprep.subr.bf16.mxu0 0
  %6648 = vmatpush1.bf16.msra.mxu0 0
  %6649 = vmatprep.subr.bf16.mxu0 0
  %6650 = vmatpush1.bf16.msra.mxu0 0
  %6651 = vmatprep.subr.bf16.mxu0 0
  %6652 = vmatpush1.bf16.msra.mxu0 0
  %6653 = vmatprep.mubr.bf16.mxu0 %v6598
  %6654 = vmatmul.mubr.bf16.gmra.mrb[0].mxu0 %v6521
  %v6655 = vpop.f32.mrb[0].mxu0
  %v6656 = vadd.f32 %v6541, %v6655
  %v6657 = vpop.f32.mrb[0].mxu0
  %v6658 = vpop.f32.mrb[0].mxu0
  %v6659 = vadd.f32 %v6541, %v6658
  %v6660 = vpop.f32.mrb[0].mxu0
  %6661 = vmatprep.mubr.bf16.mxu0 %v6601
  %6662 = vmatmul.mubr.bf16.gmra.mrb[0].mxu0 %v6523
  %v6663 = vpop.f32.mrb[0].mxu0
  %v6664 = vadd.f32 %v6541, %v6663
  %v6665 = vpop.f32.mrb[0].mxu0
  %v6666 = vpop.f32.mrb[0].mxu0
  %v6667 = vadd.f32 %v6541, %v6666
  %v6668 = vpop.f32.mrb[0].mxu0
  %6669 = vmatprep.mubr.bf16.mxu0 %v6604
  %6670 = vmatmul.mubr.bf16.gmra.mrb[0].mxu0 %v6525
  %v6671 = vpop.f32.mrb[0].mxu0
  %v6672 = vadd.f32 %v6541, %v6671
  %v6673 = vpop.f32.mrb[0].mxu0
  %v6674 = vpop.f32.mrb[0].mxu0
  %v6675 = vadd.f32 %v6541, %v6674
  %v6676 = vpop.f32.mrb[0].mxu0
  %6677 = vmatprep.mubr.bf16.mxu0 %v6607
  %6678 = vmatmul.mubr.bf16.gmra.mrb[0].mxu0 %v6527
  %v6679 = vpop.f32.mrb[0].mxu0
  %v6680 = vadd.f32 %v6541, %v6679
  %v6681 = vpop.f32.mrb[0].mxu0
  %v6682 = vpop.f32.mrb[0].mxu0
  %v6683 = vadd.f32 %v6541, %v6682
  %v6684 = vpop.f32.mrb[0].mxu0
  %6685 = vmatprep.mubr.bf16.mxu0 %v6610
  %6686 = vmatmul.mubr.bf16.gmra.mrb[0].mxu0 %v6529
  %v6687 = vpop.f32.mrb[0].mxu0
  %v6688 = vadd.f32 %v6541, %v6687
  %v6689 = vpop.f32.mrb[0].mxu0
  %v6690 = vpop.f32.mrb[0].mxu0
  %v6691 = vadd.f32 %v6541, %v6690
  %v6692 = vpop.f32.mrb[0].mxu0
  %6693 = vmatprep.mubr.bf16.mxu0 %v6613
  %6694 = vmatmul.mubr.bf16.gmra.mrb[0].mxu0 %v6531
  %v6695 = vpop.f32.mrb[0].mxu0
  %v6696 = vadd.f32 %v6541, %v6695
  %v6697 = vpop.f32.mrb[0].mxu0
  %v6698 = vpop.f32.mrb[0].mxu0
  %v6699 = vadd.f32 %v6541, %v6698
  %v6700 = vpop.f32.mrb[0].mxu0
  %6701 = vmatprep.mubr.bf16.mxu0 %v6616
  %6702 = vmatmul.mubr.bf16.gmra.mrb[0].mxu0 %v6533
  %v6703 = vpop.f32.mrb[0].mxu0
  %v6704 = vadd.f32 %v6541, %v6703
  %v6705 = vpop.f32.mrb[0].mxu0
  %v6706 = vpop.f32.mrb[0].mxu0
  %v6707 = vadd.f32 %v6541, %v6706
  %v6708 = vpop.f32.mrb[0].mxu0
  %6709 = vmatprep.mubr.bf16.mxu0 %v6619
  %6710 = vmatmul.mubr.bf16.gmra.mrb[0].mxu0 %v6535
  %v6711 = vpop.f32.mrb[0].mxu0
  %v6712 = vadd.f32 %v6541, %v6711
  %v6713 = vpop.f32.mrb[0].mxu0
  %v6714 = vpop.f32.mrb[0].mxu0
  %v6715 = vadd.f32 %v6541, %v6714
  %v6716 = vpop.f32.mrb[0].mxu0
  %6717 = vdwg.mxu0
  %vm6718 = vcmp.ge.f32.partialorder %v6656, 0.0
  %vm6719 = vcmp.ge.f32.partialorder %v6659, 0.0
  %vm6720 = vcmp.ge.f32.partialorder %v6664, 0.0
  %vm6721 = vcmp.ge.f32.partialorder %v6667, 0.0
  %vm6722 = vcmp.ge.f32.partialorder %v6672, 0.0
  %vm6723 = vcmp.ge.f32.partialorder %v6675, 0.0
  %vm6724 = vcmp.ge.f32.partialorder %v6680, 0.0
  %vm6725 = vcmp.ge.f32.partialorder %v6683, 0.0
  %vm6726 = vcmp.ge.f32.partialorder %v6688, 0.0
  %vm6727 = vcmp.ge.f32.partialorder %v6691, 0.0
  %vm6728 = vcmp.ge.f32.partialorder %v6696, 0.0
  %vm6729 = vcmp.ge.f32.partialorder %v6699, 0.0
  %vm6730 = vcmp.ge.f32.partialorder %v6704, 0.0
  %vm6731 = vcmp.ge.f32.partialorder %v6707, 0.0
  %vm6732 = vcmp.ge.f32.partialorder %v6712, 0.0
  %vm6733 = vcmp.ge.f32.partialorder %v6715, 0.0
  %v6734 = vmul.f32 %v6656, 0.2
  %v6735 = vmul.f32 %v6659, 0.2
  %v6736 = vmul.f32 %v6664, 0.2
  %v6737 = vmul.f32 %v6667, 0.2
  %v6738 = vmul.f32 %v6672, 0.2
  %v6739 = vmul.f32 %v6675, 0.2
  %v6740 = vmul.f32 %v6680, 0.2
  %v6741 = vmul.f32 %v6683, 0.2
  %v6742 = vmul.f32 %v6688, 0.2
  %v6743 = vmul.f32 %v6691, 0.2
  %v6744 = vmul.f32 %v6696, 0.2
  %v6745 = vmul.f32 %v6699, 0.2
  %v6746 = vmul.f32 %v6704, 0.2
  %v6747 = vmul.f32 %v6707, 0.2
  %v6748 = vmul.f32 %v6712, 0.2
  %v6749 = vmul.f32 %v6715, 0.2
  %v6750 = vsel %vm6718, %v6656, %v6734
  %v6751 = vsel %vm6719, %v6659, %v6735
  %v6752 = vsel %vm6720, %v6664, %v6736
  %v6753 = vsel %vm6721, %v6667, %v6737
  %v6754 = vsel %vm6722, %v6672, %v6738
  %v6755 = vsel %vm6723, %v6675, %v6739
  %v6756 = vsel %vm6724, %v6680, %v6740
  %v6757 = vsel %vm6725, %v6683, %v6741
  %v6758 = vsel %vm6726, %v6688, %v6742
  %v6759 = vsel %vm6727, %v6691, %v6743
  %v6760 = vsel %vm6728, %v6696, %v6744
  %v6761 = vsel %vm6729, %v6699, %v6745
  %v6762 = vsel %vm6730, %v6704, %v6746
  %v6763 = vsel %vm6731, %v6707, %v6747
  %v6764 = vsel %vm6732, %v6712, %v6748
  %v6765 = vsel %vm6733, %v6715, %v6749
  %v6766 = vsel %vm6420, %v6750, 0.0
  %v6767 = vsel %vm6420, %v6751, 0.0
  %v6768 = vadd.f32 %v6766, %v6767
  %v6769 = vsel %vm6420, %v6752, 0.0
  %v6770 = vadd.f32 %v6768, %v6769
  %v6771 = vsel %vm6420, %v6753, 0.0
  %v6772 = vadd.f32 %v6770, %v6771
  %v6773 = vsel %vm6420, %v6754, 0.0
  %v6774 = vadd.f32 %v6772, %v6773
  %v6775 = vsel %vm6420, %v6755, 0.0
  %v6776 = vadd.f32 %v6774, %v6775
  %v6777 = vsel %vm6420, %v6756, 0.0
  %v6778 = vadd.f32 %v6776, %v6777
  %v6779 = vsel %vm6420, %v6757, 0.0
  %v6780 = vadd.f32 %v6778, %v6779
  %v6781 = vsel %vm6420, %v6758, 0.0
  %v6782 = vadd.f32 %v6780, %v6781
  %v6783 = vsel %vm6420, %v6759, 0.0
  %v6784 = vadd.f32 %v6782, %v6783
  %v6785 = vsel %vm6420, %v6760, 0.0
  %v6786 = vadd.f32 %v6784, %v6785
  %v6787 = vsel %vm6420, %v6761, 0.0
  %v6788 = vadd.f32 %v6786, %v6787
  %v6789 = vsel %vm6420, %v6762, 0.0
  %v6790 = vadd.f32 %v6788, %v6789
  %v6791 = vsel %vm6420, %v6763, 0.0
  %v6792 = vadd.f32 %v6790, %v6791
  %v6793 = vsel %vm6420, %v6764, 0.0
  %v6794 = vadd.f32 %v6792, %v6793
  %v6795 = vsel %vm6420, %v6765, 0.0
  %v6796 = vadd.f32 %v6794, %v6795
  %v6797 = vrot.slane %v6796, 4
  %v6798 = vadd.f32 %v6796, %v6797
  %v6799 = vrot.slane %v6798, 2
  %v6800 = vadd.f32 %v6798, %v6799
  %v6801 = vrot.slane %v6800, 1
  %v6802 = vadd.f32 %v6800, %v6801
  %v6803 = vmul.f32 %v6802, 0.0078125
  %v6804 = vsub.f32 %v6750, %v6803
  %v6805 = vsub.f32 %v6751, %v6803
  %v6806 = vsub.f32 %v6752, %v6803
  %v6807 = vsub.f32 %v6753, %v6803
  %v6808 = vsub.f32 %v6754, %v6803
  %v6809 = vsub.f32 %v6755, %v6803
  %v6810 = vsub.f32 %v6756, %v6803
  %v6811 = vsub.f32 %v6757, %v6803
  %v6812 = vsub.f32 %v6758, %v6803
  %v6813 = vsub.f32 %v6759, %v6803
  %v6814 = vsub.f32 %v6760, %v6803
  %v6815 = vsub.f32 %v6761, %v6803
  %v6816 = vsub.f32 %v6762, %v6803
  %v6817 = vsub.f32 %v6763, %v6803
  %v6818 = vsub.f32 %v6764, %v6803
  %v6819 = vsub.f32 %v6765, %v6803
  %v6820 = vmul.f32 %v6804, %v6804
  %v6821 = vmul.f32 %v6805, %v6805
  %v6822 = vmul.f32 %v6806, %v6806
  %v6823 = vmul.f32 %v6807, %v6807
  %v6824 = vmul.f32 %v6808, %v6808
  %v6825 = vmul.f32 %v6809, %v6809
  %v6826 = vmul.f32 %v6810, %v6810
  %v6827 = vmul.f32 %v6811, %v6811
  %v6828 = vmul.f32 %v6812, %v6812
  %v6829 = vmul.f32 %v6813, %v6813
  %v6830 = vmul.f32 %v6814, %v6814
  %v6831 = vmul.f32 %v6815, %v6815
  %v6832 = vmul.f32 %v6816, %v6816
  %v6833 = vmul.f32 %v6817, %v6817
  %v6834 = vmul.f32 %v6818, %v6818
  %v6835 = vmul.f32 %v6819, %v6819
  %v6836 = vsel %vm6420, %v6820, 0.0
  %v6837 = vsel %vm6420, %v6821, 0.0
  %v6838 = vadd.f32 %v6836, %v6837
  %v6839 = vsel %vm6420, %v6822, 0.0
  %v6840 = vadd.f32 %v6838, %v6839
  %v6841 = vsel %vm6420, %v6823, 0.0
  %v6842 = vadd.f32 %v6840, %v6841
  %v6843 = vsel %vm6420, %v6824, 0.0
  %v6844 = vadd.f32 %v6842, %v6843
  %v6845 = vsel %vm6420, %v6825, 0.0
  %v6846 = vadd.f32 %v6844, %v6845
  %v6847 = vsel %vm6420, %v6826, 0.0
  %v6848 = vadd.f32 %v6846, %v6847
  %v6849 = vsel %vm6420, %v6827, 0.0
  %v6850 = vadd.f32 %v6848, %v6849
  %v6851 = vsel %vm6420, %v6828, 0.0
  %v6852 = vadd.f32 %v6850, %v6851
  %v6853 = vsel %vm6420, %v6829, 0.0
  %v6854 = vadd.f32 %v6852, %v6853
  %v6855 = vsel %vm6420, %v6830, 0.0
  %v6856 = vadd.f32 %v6854, %v6855
  %v6857 = vsel %vm6420, %v6831, 0.0
  %v6858 = vadd.f32 %v6856, %v6857
  %v6859 = vsel %vm6420, %v6832, 0.0
  %v6860 = vadd.f32 %v6858, %v6859
  %v6861 = vsel %vm6420, %v6833, 0.0
  %v6862 = vadd.f32 %v6860, %v6861
  %v6863 = vsel %vm6420, %v6834, 0.0
  %v6864 = vadd.f32 %v6862, %v6863
  %v6865 = vsel %vm6420, %v6835, 0.0
  %v6866 = vadd.f32 %v6864, %v6865
  %v6867 = vrot.slane %v6866, 4
  %v6868 = vadd.f32 %v6866, %v6867
  %v6869 = vrot.slane %v6868, 2
  %v6870 = vadd.f32 %v6868, %v6869
  %v6871 = vrot.slane %v6870, 1
  %v6872 = vadd.f32 %v6870, %v6871
  %v6873 = vmul.f32 %v6872, 0.0078125
  %v6874 = vadd.f32 %v6873, 0.8
  %v6875 = vrsqrt.pop %v6874
  %v6876 = vmul.f32 %v6804, %v6875
  %v6877 = vmul.f32 %v6805, %v6875
  %v6878 = vmul.f32 %v6806, %v6875
  %v6879 = vmul.f32 %v6807, %v6875
  %v6880 = vmul.f32 %v6808, %v6875
  %v6881 = vmul.f32 %v6809, %v6875
  %v6882 = vmul.f32 %v6810, %v6875
  %v6883 = vmul.f32 %v6811, %v6875
  %v6884 = vmul.f32 %v6812, %v6875
  %v6885 = vmul.f32 %v6813, %v6875
  %v6886 = vmul.f32 %v6814, %v6875
  %v6887 = vmul.f32 %v6815, %v6875
  %v6888 = vmul.f32 %v6816, %v6875
  %v6889 = vmul.f32 %v6817, %v6875
  %v6890 = vmul.f32 %v6818, %v6875
  %v6891 = vmul.f32 %v6819, %v6875
  %v6893 = vlaneseq
  %v6894 = vshrl.u32 %v6893, 7
  %v6895 = vsub.s32 0, %v6894
  %v6896 = vrot.slane %v1384, %v6895
  %v6898 = vmul.f32 %v6876, %v6896
  %v6899 = vmul.f32 %v6877, %v6896
  %v6900 = vmul.f32 %v6878, %v6896
  %v6901 = vmul.f32 %v6879, %v6896
  %v6902 = vmul.f32 %v6880, %v6896
  %v6903 = vmul.f32 %v6881, %v6896
  %v6904 = vmul.f32 %v6882, %v6896
  %v6905 = vmul.f32 %v6883, %v6896
  %v6906 = vmul.f32 %v6884, %v6896
  %v6907 = vmul.f32 %v6885, %v6896
  %v6908 = vmul.f32 %v6886, %v6896
  %v6909 = vmul.f32 %v6887, %v6896
  %v6910 = vmul.f32 %v6888, %v6896
  %v6911 = vmul.f32 %v6889, %v6896
  %v6912 = vmul.f32 %v6890, %v6896
  %v6913 = vmul.f32 %v6891, %v6896
  %v6915 = vlaneseq
  %v6916 = vshrl.u32 %v6915, 7
  %v6917 = vsub.s32 0, %v6916
  %v6918 = vrot.slane %v1385, %v6917
  %v6920 = vadd.f32 %v6898, %v6918
  %v6921 = vadd.f32 %v6899, %v6918
  %v6922 = vadd.f32 %v6900, %v6918
  %v6923 = vadd.f32 %v6901, %v6918
  %v6924 = vadd.f32 %v6902, %v6918
  %v6925 = vadd.f32 %v6903, %v6918
  %v6926 = vadd.f32 %v6904, %v6918
  %v6927 = vadd.f32 %v6905, %v6918
  %v6928 = vadd.f32 %v6906, %v6918
  %v6929 = vadd.f32 %v6907, %v6918
  %v6930 = vadd.f32 %v6908, %v6918
  %v6931 = vadd.f32 %v6909, %v6918
  %v6932 = vadd.f32 %v6910, %v6918
  %v6933 = vadd.f32 %v6911, %v6918
  %v6934 = vadd.f32 %v6912, %v6918
  %v6935 = vadd.f32 %v6913, %v6918
  %v6936 = vld [vmem:[%s9] sm:$0xf]
  %v6937 = vld [vmem:[%s9 + $0x4] sm:$0xf]
  %v6938 = vld [vmem:[%s9 + $0x8] sm:$0xf]
  %v6939 = vld [vmem:[%s9 + $0xc] sm:$0xf]
  %v6940 = vld [vmem:[%s9 + $0x10] sm:$0xf]
  %v6941 = vld [vmem:[%s9 + $0x14] sm:$0xf]
  %v6942 = vld [vmem:[%s9 + $0x18] sm:$0xf]
  %v6943 = vld [vmem:[%s9 + $0x1c] sm:$0xf]
  %v6944 = vld [vmem:[%s9 + $0x20] sm:$0xf]
  %v6945 = vld [vmem:[%s9 + $0x24] sm:$0xf]
  %v6946 = vld [vmem:[%s9 + $0x28] sm:$0xf]
  %v6947 = vld [vmem:[%s9 + $0x2c] sm:$0xf]
  %v6948 = vld [vmem:[%s9 + $0x30] sm:$0xf]
  %v6949 = vld [vmem:[%s9 + $0x34] sm:$0xf]
  %v6950 = vld [vmem:[%s9 + $0x38] sm:$0xf]
  %v6951 = vld [vmem:[%s9 + $0x3c] sm:$0xf]
  %v6952 = vld [vmem:[%s9 + $0x40] sm:$0xf]
  %v6953 = vld [vmem:[%s9 + $0x44] sm:$0xf]
  %v6954 = vld [vmem:[%s9 + $0x48] sm:$0xf]
  %v6955 = vld [vmem:[%s9 + $0x4c] sm:$0xf]
  %v6956 = vld [vmem:[%s9 + $0x50] sm:$0xf]
  %v6957 = vld [vmem:[%s9 + $0x54] sm:$0xf]
  %v6958 = vld [vmem:[%s9 + $0x58] sm:$0xf]
  %v6959 = vld [vmem:[%s9 + $0x5c] sm:$0xf]
  %v6960 = vld [vmem:[%s9 + $0x60] sm:$0xf]
  %v6961 = vld [vmem:[%s9 + $0x64] sm:$0xf]
  %v6962 = vld [vmem:[%s9 + $0x68] sm:$0xf]
  %v6963 = vld [vmem:[%s9 + $0x6c] sm:$0xf]
  %v6964 = vld [vmem:[%s9 + $0x70] sm:$0xf]
  %v6965 = vld [vmem:[%s9 + $0x74] sm:$0xf]
  %v6966 = vld [vmem:[%s9 + $0x78] sm:$0xf]
  %v6967 = vld [vmem:[%s9 + $0x7c] sm:$0xf]
  %v6968 = vld [vmem:[%s9 + $0x80] sm:$0xf]
  %v6969 = vld [vmem:[%s9 + $0x84] sm:$0xf]
  %v6970 = vld [vmem:[%s9 + $0x88] sm:$0xf]
  %v6971 = vld [vmem:[%s9 + $0x8c] sm:$0xf]
  %v6972 = vld [vmem:[%s10] sm:$0x1]
  %v6973 = vld [vmem:[%s11] sm:$0x1]
  %v6974 = vld [vmem:[%s12] sm:$0x1]
  %v6991 = vrot.slane %v6920, 7
  %v6992 = vrot.slane %v6921, 7
  %v6993 = vrot.slane %v6922, 7
  %v6994 = vrot.slane %v6923, 7
  %v6995 = vrot.slane %v6924, 7
  %v6996 = vrot.slane %v6925, 7
  %v6997 = vrot.slane %v6926, 7
  %v6998 = vrot.slane %v6927, 7
  %v6999 = vrot.slane %v6928, 7
  %v7000 = vrot.slane %v6929, 7
  %v7001 = vrot.slane %v6930, 7
  %v7002 = vrot.slane %v6931, 7
  %v7003 = vrot.slane %v6932, 7
  %v7004 = vrot.slane %v6933, 7
  %v7005 = vrot.slane %v6934, 7
  %v7006 = vrot.slane %v6935, 7
  %v7023 = vsel %vm1451, 0.0, %v6991
  %v7024 = vsel %vm1451, 0.0, %v6992
  %v7025 = vsel %vm1451, 0.0, %v6993
  %v7026 = vsel %vm1451, 0.0, %v6994
  %v7027 = vsel %vm1451, 0.0, %v6995
  %v7028 = vsel %vm1451, 0.0, %v6996
  %v7029 = vsel %vm1451, 0.0, %v6997
  %v7030 = vsel %vm1451, 0.0, %v6998
  %v7031 = vsel %vm1451, 0.0, %v6999
  %v7032 = vsel %vm1451, 0.0, %v7000
  %v7033 = vsel %vm1451, 0.0, %v7001
  %v7034 = vsel %vm1451, 0.0, %v7002
  %v7035 = vsel %vm1451, 0.0, %v7003
  %v7036 = vsel %vm1451, 0.0, %v7004
  %v7037 = vsel %vm1451, 0.0, %v7005
  %v7038 = vsel %vm1451, 0.0, %v7006
  %v7039 = vsel %vm1451, %v6991, 0.0
  %v7040 = vsel %vm1451, %v6992, 0.0
  %v7041 = vsel %vm1451, %v6993, 0.0
  %v7042 = vsel %vm1451, %v6994, 0.0
  %v7043 = vsel %vm1451, %v6995, 0.0
  %v7044 = vsel %vm1451, %v6996, 0.0
  %v7045 = vsel %vm1451, %v6997, 0.0
  %v7046 = vsel %vm1451, %v6998, 0.0
  %v7047 = vsel %vm1451, %v6999, 0.0
  %v7048 = vsel %vm1451, %v7000, 0.0
  %v7049 = vsel %vm1451, %v7001, 0.0
  %v7050 = vsel %vm1451, %v7002, 0.0
  %v7051 = vsel %vm1451, %v7003, 0.0
  %v7052 = vsel %vm1451, %v7004, 0.0
  %v7053 = vsel %vm1451, %v7005, 0.0
  %v7054 = vsel %vm1451, %v7006, 0.0
  %v7087 = vcombine.high %v7023, %v7023
  %v7089 = vunpack.c.l.s4 1983009808
  %v7090 = vunpack.c.0.s8 %v7089
  %v7091 = vlaneseq
  %v7092 = vshrl.u32 %v7091, 7
  %v7093 = vsub.s32 %v7090, %v7092
  %v7094 = vrot.slane %v7023, %v7093
  %v7096 = vunpack.c.l.s4 1983009808
  %v7097 = vunpack.c.0.s8 %v7096
  %v7098 = vlaneseq
  %v7099 = vshrl.u32 %v7098, 7
  %v7100 = vsub.s32 %v7097, %v7099
  %v7101 = vrot.slane %v7087, %v7100
  %v7102 = vcombine.high %v7094, %v7094
  %v7103 = vcombine.high %v7101, %v7101
  %v7105 = vunpack.c.l.s4 1983009808
  %v7106 = vunpack.c.0.s8 %v7105
  %v7107 = vlaneseq
  %v7108 = vshrl.u32 %v7107, 7
  %v7109 = vsub.s32 %v7106, %v7108
  %v7110 = vrot.slane %v7039, %v7109
  %v7111 = vcombine.high %v7024, %v7024
  %v7113 = vunpack.c.l.s4 1983009808
  %v7114 = vunpack.c.0.s8 %v7113
  %v7115 = vlaneseq
  %v7116 = vshrl.u32 %v7115, 7
  %v7117 = vsub.s32 %v7114, %v7116
  %v7118 = vrot.slane %v7024, %v7117
  %v7120 = vunpack.c.l.s4 1983009808
  %v7121 = vunpack.c.0.s8 %v7120
  %v7122 = vlaneseq
  %v7123 = vshrl.u32 %v7122, 7
  %v7124 = vsub.s32 %v7121, %v7123
  %v7125 = vrot.slane %v7111, %v7124
  %v7126 = vcombine.high %v7118, %v7118
  %v7127 = vcombine.high %v7125, %v7125
  %v7129 = vunpack.c.l.s4 1983009808
  %v7130 = vunpack.c.0.s8 %v7129
  %v7131 = vlaneseq
  %v7132 = vshrl.u32 %v7131, 7
  %v7133 = vsub.s32 %v7130, %v7132
  %v7134 = vrot.slane %v7040, %v7133
  %v7135 = vcombine.high %v7025, %v7025
  %v7137 = vunpack.c.l.s4 1983009808
  %v7138 = vunpack.c.0.s8 %v7137
  %v7139 = vlaneseq
  %v7140 = vshrl.u32 %v7139, 7
  %v7141 = vsub.s32 %v7138, %v7140
  %v7142 = vrot.slane %v7025, %v7141
  %v7144 = vunpack.c.l.s4 1983009808
  %v7145 = vunpack.c.0.s8 %v7144
  %v7146 = vlaneseq
  %v7147 = vshrl.u32 %v7146, 7
  %v7148 = vsub.s32 %v7145, %v7147
  %v7149 = vrot.slane %v7135, %v7148
  %v7150 = vcombine.high %v7142, %v7142
  %v7151 = vcombine.high %v7149, %v7149
  %v7153 = vunpack.c.l.s4 1983009808
  %v7154 = vunpack.c.0.s8 %v7153
  %v7155 = vlaneseq
  %v7156 = vshrl.u32 %v7155, 7
  %v7157 = vsub.s32 %v7154, %v7156
  %v7158 = vrot.slane %v7041, %v7157
  %v7159 = vcombine.high %v7026, %v7026
  %v7161 = vunpack.c.l.s4 1983009808
  %v7162 = vunpack.c.0.s8 %v7161
  %v7163 = vlaneseq
  %v7164 = vshrl.u32 %v7163, 7
  %v7165 = vsub.s32 %v7162, %v7164
  %v7166 = vrot.slane %v7026, %v7165
  %v7168 = vunpack.c.l.s4 1983009808
  %v7169 = vunpack.c.0.s8 %v7168
  %v7170 = vlaneseq
  %v7171 = vshrl.u32 %v7170, 7
  %v7172 = vsub.s32 %v7169, %v7171
  %v7173 = vrot.slane %v7159, %v7172
  %v7174 = vcombine.high %v7166, %v7166
  %v7175 = vcombine.high %v7173, %v7173
  %v7177 = vunpack.c.l.s4 1983009808
  %v7178 = vunpack.c.0.s8 %v7177
  %v7179 = vlaneseq
  %v7180 = vshrl.u32 %v7179, 7
  %v7181 = vsub.s32 %v7178, %v7180
  %v7182 = vrot.slane %v7042, %v7181
  %v7183 = vcombine.high %v7027, %v7027
  %v7185 = vunpack.c.l.s4 1983009808
  %v7186 = vunpack.c.0.s8 %v7185
  %v7187 = vlaneseq
  %v7188 = vshrl.u32 %v7187, 7
  %v7189 = vsub.s32 %v7186, %v7188
  %v7190 = vrot.slane %v7027, %v7189
  %v7192 = vunpack.c.l.s4 1983009808
  %v7193 = vunpack.c.0.s8 %v7192
  %v7194 = vlaneseq
  %v7195 = vshrl.u32 %v7194, 7
  %v7196 = vsub.s32 %v7193, %v7195
  %v7197 = vrot.slane %v7183, %v7196
  %v7198 = vcombine.high %v7190, %v7190
  %v7199 = vcombine.high %v7197, %v7197
  %v7201 = vunpack.c.l.s4 1983009808
  %v7202 = vunpack.c.0.s8 %v7201
  %v7203 = vlaneseq
  %v7204 = vshrl.u32 %v7203, 7
  %v7205 = vsub.s32 %v7202, %v7204
  %v7206 = vrot.slane %v7043, %v7205
  %v7207 = vcombine.high %v7028, %v7028
  %v7209 = vunpack.c.l.s4 1983009808
  %v7210 = vunpack.c.0.s8 %v7209
  %v7211 = vlaneseq
  %v7212 = vshrl.u32 %v7211, 7
  %v7213 = vsub.s32 %v7210, %v7212
  %v7214 = vrot.slane %v7028, %v7213
  %v7216 = vunpack.c.l.s4 1983009808
  %v7217 = vunpack.c.0.s8 %v7216
  %v7218 = vlaneseq
  %v7219 = vshrl.u32 %v7218, 7
  %v7220 = vsub.s32 %v7217, %v7219
  %v7221 = vrot.slane %v7207, %v7220
  %v7222 = vcombine.high %v7214, %v7214
  %v7223 = vcombine.high %v7221, %v7221
  %v7225 = vunpack.c.l.s4 1983009808
  %v7226 = vunpack.c.0.s8 %v7225
  %v7227 = vlaneseq
  %v7228 = vshrl.u32 %v7227, 7
  %v7229 = vsub.s32 %v7226, %v7228
  %v7230 = vrot.slane %v7044, %v7229
  %v7231 = vcombine.high %v7029, %v7029
  %v7233 = vunpack.c.l.s4 1983009808
  %v7234 = vunpack.c.0.s8 %v7233
  %v7235 = vlaneseq
  %v7236 = vshrl.u32 %v7235, 7
  %v7237 = vsub.s32 %v7234, %v7236
  %v7238 = vrot.slane %v7029, %v7237
  %v7240 = vunpack.c.l.s4 1983009808
  %v7241 = vunpack.c.0.s8 %v7240
  %v7242 = vlaneseq
  %v7243 = vshrl.u32 %v7242, 7
  %v7244 = vsub.s32 %v7241, %v7243
  %v7245 = vrot.slane %v7231, %v7244
  %v7246 = vcombine.high %v7238, %v7238
  %v7247 = vcombine.high %v7245, %v7245
  %v7249 = vunpack.c.l.s4 1983009808
  %v7250 = vunpack.c.0.s8 %v7249
  %v7251 = vlaneseq
  %v7252 = vshrl.u32 %v7251, 7
  %v7253 = vsub.s32 %v7250, %v7252
  %v7254 = vrot.slane %v7045, %v7253
  %v7255 = vcombine.high %v7030, %v7030
  %v7257 = vunpack.c.l.s4 1983009808
  %v7258 = vunpack.c.0.s8 %v7257
  %v7259 = vlaneseq
  %v7260 = vshrl.u32 %v7259, 7
  %v7261 = vsub.s32 %v7258, %v7260
  %v7262 = vrot.slane %v7030, %v7261
  %v7264 = vunpack.c.l.s4 1983009808
  %v7265 = vunpack.c.0.s8 %v7264
  %v7266 = vlaneseq
  %v7267 = vshrl.u32 %v7266, 7
  %v7268 = vsub.s32 %v7265, %v7267
  %v7269 = vrot.slane %v7255, %v7268
  %v7270 = vcombine.high %v7262, %v7262
  %v7271 = vcombine.high %v7269, %v7269
  %v7273 = vunpack.c.l.s4 1983009808
  %v7274 = vunpack.c.0.s8 %v7273
  %v7275 = vlaneseq
  %v7276 = vshrl.u32 %v7275, 7
  %v7277 = vsub.s32 %v7274, %v7276
  %v7278 = vrot.slane %v7046, %v7277
  %v7279 = vcombine.high %v7031, %v7031
  %v7281 = vunpack.c.l.s4 1983009808
  %v7282 = vunpack.c.0.s8 %v7281
  %v7283 = vlaneseq
  %v7284 = vshrl.u32 %v7283, 7
  %v7285 = vsub.s32 %v7282, %v7284
  %v7286 = vrot.slane %v7031, %v7285
  %v7288 = vunpack.c.l.s4 1983009808
  %v7289 = vunpack.c.0.s8 %v7288
  %v7290 = vlaneseq
  %v7291 = vshrl.u32 %v7290, 7
  %v7292 = vsub.s32 %v7289, %v7291
  %v7293 = vrot.slane %v7279, %v7292
  %v7294 = vcombine.high %v7286, %v7286
  %v7295 = vcombine.high %v7293, %v7293
  %v7297 = vunpack.c.l.s4 1983009808
  %v7298 = vunpack.c.0.s8 %v7297
  %v7299 = vlaneseq
  %v7300 = vshrl.u32 %v7299, 7
  %v7301 = vsub.s32 %v7298, %v7300
  %v7302 = vrot.slane %v7047, %v7301
  %v7303 = vcombine.high %v7032, %v7032
  %v7305 = vunpack.c.l.s4 1983009808
  %v7306 = vunpack.c.0.s8 %v7305
  %v7307 = vlaneseq
  %v7308 = vshrl.u32 %v7307, 7
  %v7309 = vsub.s32 %v7306, %v7308
  %v7310 = vrot.slane %v7032, %v7309
  %v7312 = vunpack.c.l.s4 1983009808
  %v7313 = vunpack.c.0.s8 %v7312
  %v7314 = vlaneseq
  %v7315 = vshrl.u32 %v7314, 7
  %v7316 = vsub.s32 %v7313, %v7315
  %v7317 = vrot.slane %v7303, %v7316
  %v7318 = vcombine.high %v7310, %v7310
  %v7319 = vcombine.high %v7317, %v7317
  %v7321 = vunpack.c.l.s4 1983009808
  %v7322 = vunpack.c.0.s8 %v7321
  %v7323 = vlaneseq
  %v7324 = vshrl.u32 %v7323, 7
  %v7325 = vsub.s32 %v7322, %v7324
  %v7326 = vrot.slane %v7048, %v7325
  %v7327 = vcombine.high %v7033, %v7033
  %v7329 = vunpack.c.l.s4 1983009808
  %v7330 = vunpack.c.0.s8 %v7329
  %v7331 = vlaneseq
  %v7332 = vshrl.u32 %v7331, 7
  %v7333 = vsub.s32 %v7330, %v7332
  %v7334 = vrot.slane %v7033, %v7333
  %v7336 = vunpack.c.l.s4 1983009808
  %v7337 = vunpack.c.0.s8 %v7336
  %v7338 = vlaneseq
  %v7339 = vshrl.u32 %v7338, 7
  %v7340 = vsub.s32 %v7337, %v7339
  %v7341 = vrot.slane %v7327, %v7340
  %v7342 = vcombine.high %v7334, %v7334
  %v7343 = vcombine.high %v7341, %v7341
  %v7345 = vunpack.c.l.s4 1983009808
  %v7346 = vunpack.c.0.s8 %v7345
  %v7347 = vlaneseq
  %v7348 = vshrl.u32 %v7347, 7
  %v7349 = vsub.s32 %v7346, %v7348
  %v7350 = vrot.slane %v7049, %v7349
  %v7351 = vcombine.high %v7034, %v7034
  %v7353 = vunpack.c.l.s4 1983009808
  %v7354 = vunpack.c.0.s8 %v7353
  %v7355 = vlaneseq
  %v7356 = vshrl.u32 %v7355, 7
  %v7357 = vsub.s32 %v7354, %v7356
  %v7358 = vrot.slane %v7034, %v7357
  %v7360 = vunpack.c.l.s4 1983009808
  %v7361 = vunpack.c.0.s8 %v7360
  %v7362 = vlaneseq
  %v7363 = vshrl.u32 %v7362, 7
  %v7364 = vsub.s32 %v7361, %v7363
  %v7365 = vrot.slane %v7351, %v7364
  %v7366 = vcombine.high %v7358, %v7358
  %v7367 = vcombine.high %v7365, %v7365
  %v7369 = vunpack.c.l.s4 1983009808
  %v7370 = vunpack.c.0.s8 %v7369
  %v7371 = vlaneseq
  %v7372 = vshrl.u32 %v7371, 7
  %v7373 = vsub.s32 %v7370, %v7372
  %v7374 = vrot.slane %v7050, %v7373
  %v7375 = vcombine.high %v7035, %v7035
  %v7377 = vunpack.c.l.s4 1983009808
  %v7378 = vunpack.c.0.s8 %v7377
  %v7379 = vlaneseq
  %v7380 = vshrl.u32 %v7379, 7
  %v7381 = vsub.s32 %v7378, %v7380
  %v7382 = vrot.slane %v7035, %v7381
  %v7384 = vunpack.c.l.s4 1983009808
  %v7385 = vunpack.c.0.s8 %v7384
  %v7386 = vlaneseq
  %v7387 = vshrl.u32 %v7386, 7
  %v7388 = vsub.s32 %v7385, %v7387
  %v7389 = vrot.slane %v7375, %v7388
  %v7390 = vcombine.high %v7382, %v7382
  %v7391 = vcombine.high %v7389, %v7389
  %v7393 = vunpack.c.l.s4 1983009808
  %v7394 = vunpack.c.0.s8 %v7393
  %v7395 = vlaneseq
  %v7396 = vshrl.u32 %v7395, 7
  %v7397 = vsub.s32 %v7394, %v7396
  %v7398 = vrot.slane %v7051, %v7397
  %v7399 = vcombine.high %v7036, %v7036
  %v7401 = vunpack.c.l.s4 1983009808
  %v7402 = vunpack.c.0.s8 %v7401
  %v7403 = vlaneseq
  %v7404 = vshrl.u32 %v7403, 7
  %v7405 = vsub.s32 %v7402, %v7404
  %v7406 = vrot.slane %v7036, %v7405
  %v7408 = vunpack.c.l.s4 1983009808
  %v7409 = vunpack.c.0.s8 %v7408
  %v7410 = vlaneseq
  %v7411 = vshrl.u32 %v7410, 7
  %v7412 = vsub.s32 %v7409, %v7411
  %v7413 = vrot.slane %v7399, %v7412
  %v7414 = vcombine.high %v7406, %v7406
  %v7415 = vcombine.high %v7413, %v7413
  %v7417 = vunpack.c.l.s4 1983009808
  %v7418 = vunpack.c.0.s8 %v7417
  %v7419 = vlaneseq
  %v7420 = vshrl.u32 %v7419, 7
  %v7421 = vsub.s32 %v7418, %v7420
  %v7422 = vrot.slane %v7052, %v7421
  %v7423 = vcombine.high %v7037, %v7037
  %v7425 = vunpack.c.l.s4 1983009808
  %v7426 = vunpack.c.0.s8 %v7425
  %v7427 = vlaneseq
  %v7428 = vshrl.u32 %v7427, 7
  %v7429 = vsub.s32 %v7426, %v7428
  %v7430 = vrot.slane %v7037, %v7429
  %v7432 = vunpack.c.l.s4 1983009808
  %v7433 = vunpack.c.0.s8 %v7432
  %v7434 = vlaneseq
  %v7435 = vshrl.u32 %v7434, 7
  %v7436 = vsub.s32 %v7433, %v7435
  %v7437 = vrot.slane %v7423, %v7436
  %v7438 = vcombine.high %v7430, %v7430
  %v7439 = vcombine.high %v7437, %v7437
  %v7441 = vunpack.c.l.s4 1983009808
  %v7442 = vunpack.c.0.s8 %v7441
  %v7443 = vlaneseq
  %v7444 = vshrl.u32 %v7443, 7
  %v7445 = vsub.s32 %v7442, %v7444
  %v7446 = vrot.slane %v7053, %v7445
  %v7447 = vcombine.high %v7038, %v7038
  %v7449 = vunpack.c.l.s4 1983009808
  %v7450 = vunpack.c.0.s8 %v7449
  %v7451 = vlaneseq
  %v7452 = vshrl.u32 %v7451, 7
  %v7453 = vsub.s32 %v7450, %v7452
  %v7454 = vrot.slane %v7038, %v7453
  %v7456 = vunpack.c.l.s4 1983009808
  %v7457 = vunpack.c.0.s8 %v7456
  %v7458 = vlaneseq
  %v7459 = vshrl.u32 %v7458, 7
  %v7460 = vsub.s32 %v7457, %v7459
  %v7461 = vrot.slane %v7447, %v7460
  %v7462 = vcombine.high %v7454, %v7454
  %v7463 = vcombine.high %v7461, %v7461
  %v7465 = vunpack.c.l.s4 1983009808
  %v7466 = vunpack.c.0.s8 %v7465
  %v7467 = vlaneseq
  %v7468 = vshrl.u32 %v7467, 7
  %v7469 = vsub.s32 %v7466, %v7468
  %v7470 = vrot.slane %v7054, %v7469
  %v7471 = vlaneseq
  %v7472 = vshrl.u32 %v7471, 7
  %v7473 = vsub.s32 0, %v7472
  %v7474 = vrot.slane %v7118, %v7473
  %v7475 = vlaneseq
  %v7476 = vshrl.u32 %v7475, 7
  %v7477 = vsub.s32 0, %v7476
  %v7478 = vrot.slane %v7126, %v7477
  %v7479 = vlaneseq
  %v7480 = vshrl.u32 %v7479, 7
  %v7481 = vsub.s32 0, %v7480
  %v7482 = vrot.slane %v7125, %v7481
  %v7483 = vlaneseq
  %v7484 = vshrl.u32 %v7483, 7
  %v7485 = vsub.s32 0, %v7484
  %v7486 = vrot.slane %v7127, %v7485
  %v7487 = vlaneseq
  %v7488 = vshrl.u32 %v7487, 7
  %v7489 = vsub.s32 0, %v7488
  %v7490 = vrot.slane %v7166, %v7489
  %v7491 = vlaneseq
  %v7492 = vshrl.u32 %v7491, 7
  %v7493 = vsub.s32 0, %v7492
  %v7494 = vrot.slane %v7174, %v7493
  %v7495 = vlaneseq
  %v7496 = vshrl.u32 %v7495, 7
  %v7497 = vsub.s32 0, %v7496
  %v7498 = vrot.slane %v7173, %v7497
  %v7499 = vlaneseq
  %v7500 = vshrl.u32 %v7499, 7
  %v7501 = vsub.s32 0, %v7500
  %v7502 = vrot.slane %v7175, %v7501
  %v7503 = vlaneseq
  %v7504 = vshrl.u32 %v7503, 7
  %v7505 = vsub.s32 0, %v7504
  %v7506 = vrot.slane %v7214, %v7505
  %v7507 = vlaneseq
  %v7508 = vshrl.u32 %v7507, 7
  %v7509 = vsub.s32 0, %v7508
  %v7510 = vrot.slane %v7222, %v7509
  %v7511 = vlaneseq
  %v7512 = vshrl.u32 %v7511, 7
  %v7513 = vsub.s32 0, %v7512
  %v7514 = vrot.slane %v7221, %v7513
  %v7515 = vlaneseq
  %v7516 = vshrl.u32 %v7515, 7
  %v7517 = vsub.s32 0, %v7516
  %v7518 = vrot.slane %v7223, %v7517
  %v7519 = vlaneseq
  %v7520 = vshrl.u32 %v7519, 7
  %v7521 = vsub.s32 0, %v7520
  %v7522 = vrot.slane %v7310, %v7521
  %v7523 = vlaneseq
  %v7524 = vshrl.u32 %v7523, 7
  %v7525 = vsub.s32 0, %v7524
  %v7526 = vrot.slane %v7318, %v7525
  %v7527 = vlaneseq
  %v7528 = vshrl.u32 %v7527, 7
  %v7529 = vsub.s32 0, %v7528
  %v7530 = vrot.slane %v7317, %v7529
  %v7531 = vlaneseq
  %v7532 = vshrl.u32 %v7531, 7
  %v7533 = vsub.s32 0, %v7532
  %v7534 = vrot.slane %v7319, %v7533
  %v7535 = vlaneseq
  %v7536 = vshrl.u32 %v7535, 7
  %v7537 = vsub.s32 0, %v7536
  %v7538 = vrot.slane %v7358, %v7537
  %v7539 = vlaneseq
  %v7540 = vshrl.u32 %v7539, 7
  %v7541 = vsub.s32 0, %v7540
  %v7542 = vrot.slane %v7366, %v7541
  %v7543 = vlaneseq
  %v7544 = vshrl.u32 %v7543, 7
  %v7545 = vsub.s32 0, %v7544
  %v7546 = vrot.slane %v7365, %v7545
  %v7547 = vlaneseq
  %v7548 = vshrl.u32 %v7547, 7
  %v7549 = vsub.s32 0, %v7548
  %v7550 = vrot.slane %v7367, %v7549
  %v7551 = vlaneseq
  %v7552 = vshrl.u32 %v7551, 7
  %v7553 = vsub.s32 0, %v7552
  %v7554 = vrot.slane %v7406, %v7553
  %v7555 = vlaneseq
  %v7556 = vshrl.u32 %v7555, 7
  %v7557 = vsub.s32 0, %v7556
  %v7558 = vrot.slane %v7414, %v7557
  %v7559 = vlaneseq
  %v7560 = vshrl.u32 %v7559, 7
  %v7561 = vsub.s32 0, %v7560
  %v7562 = vrot.slane %v7413, %v7561
  %v7563 = vlaneseq
  %v7564 = vshrl.u32 %v7563, 7
  %v7565 = vsub.s32 0, %v7564
  %v7566 = vrot.slane %v7415, %v7565
  %v7567 = vsel %vm3580, %v7478, %v7474
  %v7568 = vsel %vm3582, %v7482, %v7567
  %v7569 = vsel %vm3584, %v7486, %v7568
  %v7570 = vsel %vm3580, %v7494, %v7490
  %v7571 = vsel %vm3582, %v7498, %v7570
  %v7572 = vsel %vm3584, %v7502, %v7571
  %v7573 = vsel %vm3580, %v7510, %v7506
  %v7574 = vsel %vm3582, %v7514, %v7573
  %v7575 = vsel %vm3584, %v7518, %v7574
  %v7576 = vsel %vm3580, %v7526, %v7522
  %v7577 = vsel %vm3582, %v7530, %v7576
  %v7578 = vsel %vm3584, %v7534, %v7577
  %v7579 = vsel %vm3580, %v7542, %v7538
  %v7580 = vsel %vm3582, %v7546, %v7579
  %v7581 = vsel %vm3584, %v7550, %v7580
  %v7582 = vsel %vm3580, %v7558, %v7554
  %v7583 = vsel %vm3582, %v7562, %v7582
  %v7584 = vsel %vm3584, %v7566, %v7583
  %v7592 = vlaneseq
  %v7593 = vshrl.u32 %v7592, 7
  %v7594 = vsub.s32 1, %v7593
  %v7595 = vrot.slane %v7118, %v7594
  %v7596 = vlaneseq
  %v7597 = vshrl.u32 %v7596, 7
  %v7598 = vsub.s32 1, %v7597
  %v7599 = vrot.slane %v7126, %v7598
  %v7600 = vlaneseq
  %v7601 = vshrl.u32 %v7600, 7
  %v7602 = vsub.s32 1, %v7601
  %v7603 = vrot.slane %v7125, %v7602
  %v7604 = vlaneseq
  %v7605 = vshrl.u32 %v7604, 7
  %v7606 = vsub.s32 1, %v7605
  %v7607 = vrot.slane %v7127, %v7606
  %v7608 = vlaneseq
  %v7609 = vshrl.u32 %v7608, 7
  %v7610 = vsub.s32 1, %v7609
  %v7611 = vrot.slane %v7166, %v7610
  %v7612 = vlaneseq
  %v7613 = vshrl.u32 %v7612, 7
  %v7614 = vsub.s32 1, %v7613
  %v7615 = vrot.slane %v7174, %v7614
  %v7616 = vlaneseq
  %v7617 = vshrl.u32 %v7616, 7
  %v7618 = vsub.s32 1, %v7617
  %v7619 = vrot.slane %v7173, %v7618
  %v7620 = vlaneseq
  %v7621 = vshrl.u32 %v7620, 7
  %v7622 = vsub.s32 1, %v7621
  %v7623 = vrot.slane %v7175, %v7622
  %v7624 = vlaneseq
  %v7625 = vshrl.u32 %v7624, 7
  %v7626 = vsub.s32 1, %v7625
  %v7627 = vrot.slane %v7214, %v7626
  %v7628 = vlaneseq
  %v7629 = vshrl.u32 %v7628, 7
  %v7630 = vsub.s32 1, %v7629
  %v7631 = vrot.slane %v7222, %v7630
  %v7632 = vlaneseq
  %v7633 = vshrl.u32 %v7632, 7
  %v7634 = vsub.s32 1, %v7633
  %v7635 = vrot.slane %v7221, %v7634
  %v7636 = vlaneseq
  %v7637 = vshrl.u32 %v7636, 7
  %v7638 = vsub.s32 1, %v7637
  %v7639 = vrot.slane %v7223, %v7638
  %v7640 = vlaneseq
  %v7641 = vshrl.u32 %v7640, 7
  %v7642 = vsub.s32 1, %v7641
  %v7643 = vrot.slane %v7310, %v7642
  %v7644 = vlaneseq
  %v7645 = vshrl.u32 %v7644, 7
  %v7646 = vsub.s32 1, %v7645
  %v7647 = vrot.slane %v7318, %v7646
  %v7648 = vlaneseq
  %v7649 = vshrl.u32 %v7648, 7
  %v7650 = vsub.s32 1, %v7649
  %v7651 = vrot.slane %v7317, %v7650
  %v7652 = vlaneseq
  %v7653 = vshrl.u32 %v7652, 7
  %v7654 = vsub.s32 1, %v7653
  %v7655 = vrot.slane %v7319, %v7654
  %v7656 = vlaneseq
  %v7657 = vshrl.u32 %v7656, 7
  %v7658 = vsub.s32 1, %v7657
  %v7659 = vrot.slane %v7358, %v7658
  %v7660 = vlaneseq
  %v7661 = vshrl.u32 %v7660, 7
  %v7662 = vsub.s32 1, %v7661
  %v7663 = vrot.slane %v7366, %v7662
  %v7664 = vlaneseq
  %v7665 = vshrl.u32 %v7664, 7
  %v7666 = vsub.s32 1, %v7665
  %v7667 = vrot.slane %v7365, %v7666
  %v7668 = vlaneseq
  %v7669 = vshrl.u32 %v7668, 7
  %v7670 = vsub.s32 1, %v7669
  %v7671 = vrot.slane %v7367, %v7670
  %v7672 = vlaneseq
  %v7673 = vshrl.u32 %v7672, 7
  %v7674 = vsub.s32 1, %v7673
  %v7675 = vrot.slane %v7406, %v7674
  %v7676 = vlaneseq
  %v7677 = vshrl.u32 %v7676, 7
  %v7678 = vsub.s32 1, %v7677
  %v7679 = vrot.slane %v7414, %v7678
  %v7680 = vlaneseq
  %v7681 = vshrl.u32 %v7680, 7
  %v7682 = vsub.s32 1, %v7681
  %v7683 = vrot.slane %v7413, %v7682
  %v7684 = vlaneseq
  %v7685 = vshrl.u32 %v7684, 7
  %v7686 = vsub.s32 1, %v7685
  %v7687 = vrot.slane %v7415, %v7686
  %v7688 = vsel %vm3580, %v7599, %v7595
  %v7689 = vsel %vm3582, %v7603, %v7688
  %v7690 = vsel %vm3584, %v7607, %v7689
  %v7691 = vsel %vm3580, %v7615, %v7611
  %v7692 = vsel %vm3582, %v7619, %v7691
  %v7693 = vsel %vm3584, %v7623, %v7692
  %v7694 = vsel %vm3580, %v7631, %v7627
  %v7695 = vsel %vm3582, %v7635, %v7694
  %v7696 = vsel %vm3584, %v7639, %v7695
  %v7697 = vsel %vm3580, %v7647, %v7643
  %v7698 = vsel %vm3582, %v7651, %v7697
  %v7699 = vsel %vm3584, %v7655, %v7698
  %v7700 = vsel %vm3580, %v7663, %v7659
  %v7701 = vsel %vm3582, %v7667, %v7700
  %v7702 = vsel %vm3584, %v7671, %v7701
  %v7703 = vsel %vm3580, %v7679, %v7675
  %v7704 = vsel %vm3582, %v7683, %v7703
  %v7705 = vsel %vm3584, %v7687, %v7704
  %7706 = vrot.lane.b32.xlu0 %v4189, 32
  %v7707 = vpop.permute.xlu0 %7706
  %7708 = vrot.lane.b32.xlu0 %v7690, 32
  %v7709 = vpop.permute.xlu0 %7708
  %7710 = vrot.lane.b32.xlu0 %v7693, 32
  %v7711 = vpop.permute.xlu0 %7710
  %7712 = vrot.lane.b32.xlu0 %v7696, 32
  %v7713 = vpop.permute.xlu0 %7712
  %7714 = vrot.lane.b32.xlu0 %v7699, 32
  %v7715 = vpop.permute.xlu0 %7714
  %7716 = vrot.lane.b32.xlu0 %v7702, 32
  %v7717 = vpop.permute.xlu0 %7716
  %7718 = vrot.lane.b32.xlu0 %v7705, 32
  %v7719 = vpop.permute.xlu0 %7718
  %v7727 = vlaneseq
  %v7728 = vshrl.u32 %v7727, 7
  %v7729 = vsub.s32 0, %v7728
  %v7730 = vrot.slane %v7134, %v7729
  %v7731 = vlaneseq
  %v7732 = vshrl.u32 %v7731, 7
  %v7733 = vsub.s32 0, %v7732
  %v7734 = vrot.slane %v7182, %v7733
  %v7735 = vlaneseq
  %v7736 = vshrl.u32 %v7735, 7
  %v7737 = vsub.s32 0, %v7736
  %v7738 = vrot.slane %v7230, %v7737
  %v7739 = vlaneseq
  %v7740 = vshrl.u32 %v7739, 7
  %v7741 = vsub.s32 0, %v7740
  %v7742 = vrot.slane %v7326, %v7741
  %v7743 = vlaneseq
  %v7744 = vshrl.u32 %v7743, 7
  %v7745 = vsub.s32 0, %v7744
  %v7746 = vrot.slane %v7374, %v7745
  %v7747 = vlaneseq
  %v7748 = vshrl.u32 %v7747, 7
  %v7749 = vsub.s32 0, %v7748
  %v7750 = vrot.slane %v7422, %v7749
  %v7751 = vsel %vm3584, %v4340, %v4398
  %v7752 = vsel %vm3580, %v7482, %v7478
  %v7753 = vsel %vm3582, %v7486, %v7752
  %v7754 = vsel %vm3584, %v7730, %v7753
  %v7755 = vsel %vm3580, %v7498, %v7494
  %v7756 = vsel %vm3582, %v7502, %v7755
  %v7757 = vsel %vm3584, %v7734, %v7756
  %v7758 = vsel %vm3580, %v7514, %v7510
  %v7759 = vsel %vm3582, %v7518, %v7758
  %v7760 = vsel %vm3584, %v7738, %v7759
  %v7761 = vsel %vm3580, %v7530, %v7526
  %v7762 = vsel %vm3582, %v7534, %v7761
  %v7763 = vsel %vm3584, %v7742, %v7762
  %v7764 = vsel %vm3580, %v7546, %v7542
  %v7765 = vsel %vm3582, %v7550, %v7764
  %v7766 = vsel %vm3584, %v7746, %v7765
  %v7767 = vsel %vm3580, %v7562, %v7558
  %v7768 = vsel %vm3582, %v7566, %v7767
  %v7769 = vsel %vm3584, %v7750, %v7768
  %7770 = vrot.lane.b32.xlu0 %v7751, 64
  %v7771 = vpop.permute.xlu0 %7770
  %7772 = vrot.lane.b32.xlu0 %v7754, 64
  %v7773 = vpop.permute.xlu0 %7772
  %7774 = vrot.lane.b32.xlu0 %v7757, 64
  %v7775 = vpop.permute.xlu0 %7774
  %7776 = vrot.lane.b32.xlu0 %v7760, 64
  %v7777 = vpop.permute.xlu0 %7776
  %7778 = vrot.lane.b32.xlu0 %v7763, 64
  %v7779 = vpop.permute.xlu0 %7778
  %7780 = vrot.lane.b32.xlu0 %v7766, 64
  %v7781 = vpop.permute.xlu0 %7780
  %7782 = vrot.lane.b32.xlu0 %v7769, 64
  %v7783 = vpop.permute.xlu0 %7782
  %v7791 = vlaneseq
  %v7792 = vshrl.u32 %v7791, 7
  %v7793 = vsub.s32 0, %v7792
  %v7794 = vrot.slane %v7094, %v7793
  %v7795 = vlaneseq
  %v7796 = vshrl.u32 %v7795, 7
  %v7797 = vsub.s32 0, %v7796
  %v7798 = vrot.slane %v7102, %v7797
  %v7799 = vlaneseq
  %v7800 = vshrl.u32 %v7799, 7
  %v7801 = vsub.s32 0, %v7800
  %v7802 = vrot.slane %v7101, %v7801
  %v7803 = vlaneseq
  %v7804 = vshrl.u32 %v7803, 7
  %v7805 = vsub.s32 0, %v7804
  %v7806 = vrot.slane %v7103, %v7805
  %v7807 = vlaneseq
  %v7808 = vshrl.u32 %v7807, 7
  %v7809 = vsub.s32 0, %v7808
  %v7810 = vrot.slane %v7142, %v7809
  %v7811 = vlaneseq
  %v7812 = vshrl.u32 %v7811, 7
  %v7813 = vsub.s32 0, %v7812
  %v7814 = vrot.slane %v7150, %v7813
  %v7815 = vlaneseq
  %v7816 = vshrl.u32 %v7815, 7
  %v7817 = vsub.s32 0, %v7816
  %v7818 = vrot.slane %v7149, %v7817
  %v7819 = vlaneseq
  %v7820 = vshrl.u32 %v7819, 7
  %v7821 = vsub.s32 0, %v7820
  %v7822 = vrot.slane %v7151, %v7821
  %v7823 = vlaneseq
  %v7824 = vshrl.u32 %v7823, 7
  %v7825 = vsub.s32 0, %v7824
  %v7826 = vrot.slane %v7190, %v7825
  %v7827 = vlaneseq
  %v7828 = vshrl.u32 %v7827, 7
  %v7829 = vsub.s32 0, %v7828
  %v7830 = vrot.slane %v7198, %v7829
  %v7831 = vlaneseq
  %v7832 = vshrl.u32 %v7831, 7
  %v7833 = vsub.s32 0, %v7832
  %v7834 = vrot.slane %v7197, %v7833
  %v7835 = vlaneseq
  %v7836 = vshrl.u32 %v7835, 7
  %v7837 = vsub.s32 0, %v7836
  %v7838 = vrot.slane %v7199, %v7837
  %v7839 = vlaneseq
  %v7840 = vshrl.u32 %v7839, 7
  %v7841 = vsub.s32 0, %v7840
  %v7842 = vrot.slane %v7238, %v7841
  %v7843 = vlaneseq
  %v7844 = vshrl.u32 %v7843, 7
  %v7845 = vsub.s32 0, %v7844
  %v7846 = vrot.slane %v7246, %v7845
  %v7847 = vlaneseq
  %v7848 = vshrl.u32 %v7847, 7
  %v7849 = vsub.s32 0, %v7848
  %v7850 = vrot.slane %v7245, %v7849
  %v7851 = vlaneseq
  %v7852 = vshrl.u32 %v7851, 7
  %v7853 = vsub.s32 0, %v7852
  %v7854 = vrot.slane %v7247, %v7853
  %v7855 = vlaneseq
  %v7856 = vshrl.u32 %v7855, 7
  %v7857 = vsub.s32 0, %v7856
  %v7858 = vrot.slane %v7286, %v7857
  %v7859 = vlaneseq
  %v7860 = vshrl.u32 %v7859, 7
  %v7861 = vsub.s32 0, %v7860
  %v7862 = vrot.slane %v7294, %v7861
  %v7863 = vlaneseq
  %v7864 = vshrl.u32 %v7863, 7
  %v7865 = vsub.s32 0, %v7864
  %v7866 = vrot.slane %v7293, %v7865
  %v7867 = vlaneseq
  %v7868 = vshrl.u32 %v7867, 7
  %v7869 = vsub.s32 0, %v7868
  %v7870 = vrot.slane %v7295, %v7869
  %v7871 = vlaneseq
  %v7872 = vshrl.u32 %v7871, 7
  %v7873 = vsub.s32 0, %v7872
  %v7874 = vrot.slane %v7334, %v7873
  %v7875 = vlaneseq
  %v7876 = vshrl.u32 %v7875, 7
  %v7877 = vsub.s32 0, %v7876
  %v7878 = vrot.slane %v7342, %v7877
  %v7879 = vlaneseq
  %v7880 = vshrl.u32 %v7879, 7
  %v7881 = vsub.s32 0, %v7880
  %v7882 = vrot.slane %v7341, %v7881
  %v7883 = vlaneseq
  %v7884 = vshrl.u32 %v7883, 7
  %v7885 = vsub.s32 0, %v7884
  %v7886 = vrot.slane %v7343, %v7885
  %v7887 = vlaneseq
  %v7888 = vshrl.u32 %v7887, 7
  %v7889 = vsub.s32 0, %v7888
  %v7890 = vrot.slane %v7382, %v7889
  %v7891 = vlaneseq
  %v7892 = vshrl.u32 %v7891, 7
  %v7893 = vsub.s32 0, %v7892
  %v7894 = vrot.slane %v7390, %v7893
  %v7895 = vlaneseq
  %v7896 = vshrl.u32 %v7895, 7
  %v7897 = vsub.s32 0, %v7896
  %v7898 = vrot.slane %v7389, %v7897
  %v7899 = vlaneseq
  %v7900 = vshrl.u32 %v7899, 7
  %v7901 = vsub.s32 0, %v7900
  %v7902 = vrot.slane %v7391, %v7901
  %v7903 = vlaneseq
  %v7904 = vshrl.u32 %v7903, 7
  %v7905 = vsub.s32 0, %v7904
  %v7906 = vrot.slane %v7430, %v7905
  %v7907 = vlaneseq
  %v7908 = vshrl.u32 %v7907, 7
  %v7909 = vsub.s32 0, %v7908
  %v7910 = vrot.slane %v7438, %v7909
  %v7911 = vlaneseq
  %v7912 = vshrl.u32 %v7911, 7
  %v7913 = vsub.s32 0, %v7912
  %v7914 = vrot.slane %v7437, %v7913
  %v7915 = vlaneseq
  %v7916 = vshrl.u32 %v7915, 7
  %v7917 = vsub.s32 0, %v7916
  %v7918 = vrot.slane %v7439, %v7917
  %v7919 = vsel %vm3580, %v7798, %v7794
  %v7920 = vsel %vm3582, %v7802, %v7919
  %v7921 = vsel %vm3584, %v7806, %v7920
  %v7922 = vsel %vm3580, %v7814, %v7810
  %v7923 = vsel %vm3582, %v7818, %v7922
  %v7924 = vsel %vm3584, %v7822, %v7923
  %v7925 = vsel %vm3580, %v7830, %v7826
  %v7926 = vsel %vm3582, %v7834, %v7925
  %v7927 = vsel %vm3584, %v7838, %v7926
  %v7928 = vsel %vm3580, %v7846, %v7842
  %v7929 = vsel %vm3582, %v7850, %v7928
  %v7930 = vsel %vm3584, %v7854, %v7929
  %v7931 = vsel %vm3580, %v7862, %v7858
  %v7932 = vsel %vm3582, %v7866, %v7931
  %v7933 = vsel %vm3584, %v7870, %v7932
  %v7934 = vsel %vm3580, %v7878, %v7874
  %v7935 = vsel %vm3582, %v7882, %v7934
  %v7936 = vsel %vm3584, %v7886, %v7935
  %v7937 = vsel %vm3580, %v7894, %v7890
  %v7938 = vsel %vm3582, %v7898, %v7937
  %v7939 = vsel %vm3584, %v7902, %v7938
  %v7940 = vsel %vm3580, %v7910, %v7906
  %v7941 = vsel %vm3582, %v7914, %v7940
  %v7942 = vsel %vm3584, %v7918, %v7941
  %7943 = vrot.lane.b32.xlu0 %v7921, 96
  %v7944 = vpop.permute.xlu0 %7943
  %7945 = vrot.lane.b32.xlu0 %v7924, 96
  %v7946 = vpop.permute.xlu0 %7945
  %7947 = vrot.lane.b32.xlu0 %v7927, 96
  %v7948 = vpop.permute.xlu0 %7947
  %7949 = vrot.lane.b32.xlu0 %v7930, 96
  %v7950 = vpop.permute.xlu0 %7949
  %7951 = vrot.lane.b32.xlu0 %v7933, 96
  %v7952 = vpop.permute.xlu0 %7951
  %7953 = vrot.lane.b32.xlu0 %v7936, 96
  %v7954 = vpop.permute.xlu0 %7953
  %7955 = vrot.lane.b32.xlu0 %v7939, 96
  %v7956 = vpop.permute.xlu0 %7955
  %7957 = vrot.lane.b32.xlu0 %v7942, 96
  %v7958 = vpop.permute.xlu0 %7957
  %v7967 = vlaneseq
  %v7968 = vshrl.u32 %v7967, 7
  %v7969 = vsub.s32 1, %v7968
  %v7970 = vrot.slane %v7094, %v7969
  %v7971 = vlaneseq
  %v7972 = vshrl.u32 %v7971, 7
  %v7973 = vsub.s32 1, %v7972
  %v7974 = vrot.slane %v7102, %v7973
  %v7975 = vlaneseq
  %v7976 = vshrl.u32 %v7975, 7
  %v7977 = vsub.s32 1, %v7976
  %v7978 = vrot.slane %v7101, %v7977
  %v7979 = vlaneseq
  %v7980 = vshrl.u32 %v7979, 7
  %v7981 = vsub.s32 1, %v7980
  %v7982 = vrot.slane %v7103, %v7981
  %v7983 = vlaneseq
  %v7984 = vshrl.u32 %v7983, 7
  %v7985 = vsub.s32 1, %v7984
  %v7986 = vrot.slane %v7142, %v7985
  %v7987 = vlaneseq
  %v7988 = vshrl.u32 %v7987, 7
  %v7989 = vsub.s32 1, %v7988
  %v7990 = vrot.slane %v7150, %v7989
  %v7991 = vlaneseq
  %v7992 = vshrl.u32 %v7991, 7
  %v7993 = vsub.s32 1, %v7992
  %v7994 = vrot.slane %v7149, %v7993
  %v7995 = vlaneseq
  %v7996 = vshrl.u32 %v7995, 7
  %v7997 = vsub.s32 1, %v7996
  %v7998 = vrot.slane %v7151, %v7997
  %v7999 = vlaneseq
  %v8000 = vshrl.u32 %v7999, 7
  %v8001 = vsub.s32 1, %v8000
  %v8002 = vrot.slane %v7190, %v8001
  %v8003 = vlaneseq
  %v8004 = vshrl.u32 %v8003, 7
  %v8005 = vsub.s32 1, %v8004
  %v8006 = vrot.slane %v7198, %v8005
  %v8007 = vlaneseq
  %v8008 = vshrl.u32 %v8007, 7
  %v8009 = vsub.s32 1, %v8008
  %v8010 = vrot.slane %v7197, %v8009
  %v8011 = vlaneseq
  %v8012 = vshrl.u32 %v8011, 7
  %v8013 = vsub.s32 1, %v8012
  %v8014 = vrot.slane %v7199, %v8013
  %v8015 = vlaneseq
  %v8016 = vshrl.u32 %v8015, 7
  %v8017 = vsub.s32 1, %v8016
  %v8018 = vrot.slane %v7238, %v8017
  %v8019 = vlaneseq
  %v8020 = vshrl.u32 %v8019, 7
  %v8021 = vsub.s32 1, %v8020
  %v8022 = vrot.slane %v7246, %v8021
  %v8023 = vlaneseq
  %v8024 = vshrl.u32 %v8023, 7
  %v8025 = vsub.s32 1, %v8024
  %v8026 = vrot.slane %v7245, %v8025
  %v8027 = vlaneseq
  %v8028 = vshrl.u32 %v8027, 7
  %v8029 = vsub.s32 1, %v8028
  %v8030 = vrot.slane %v7247, %v8029
  %v8031 = vlaneseq
  %v8032 = vshrl.u32 %v8031, 7
  %v8033 = vsub.s32 1, %v8032
  %v8034 = vrot.slane %v7286, %v8033
  %v8035 = vlaneseq
  %v8036 = vshrl.u32 %v8035, 7
  %v8037 = vsub.s32 1, %v8036
  %v8038 = vrot.slane %v7294, %v8037
  %v8039 = vlaneseq
  %v8040 = vshrl.u32 %v8039, 7
  %v8041 = vsub.s32 1, %v8040
  %v8042 = vrot.slane %v7293, %v8041
  %v8043 = vlaneseq
  %v8044 = vshrl.u32 %v8043, 7
  %v8045 = vsub.s32 1, %v8044
  %v8046 = vrot.slane %v7295, %v8045
  %v8047 = vlaneseq
  %v8048 = vshrl.u32 %v8047, 7
  %v8049 = vsub.s32 1, %v8048
  %v8050 = vrot.slane %v7334, %v8049
  %v8051 = vlaneseq
  %v8052 = vshrl.u32 %v8051, 7
  %v8053 = vsub.s32 1, %v8052
  %v8054 = vrot.slane %v7342, %v8053
  %v8055 = vlaneseq
  %v8056 = vshrl.u32 %v8055, 7
  %v8057 = vsub.s32 1, %v8056
  %v8058 = vrot.slane %v7341, %v8057
  %v8059 = vlaneseq
  %v8060 = vshrl.u32 %v8059, 7
  %v8061 = vsub.s32 1, %v8060
  %v8062 = vrot.slane %v7343, %v8061
  %v8063 = vlaneseq
  %v8064 = vshrl.u32 %v8063, 7
  %v8065 = vsub.s32 1, %v8064
  %v8066 = vrot.slane %v7382, %v8065
  %v8067 = vlaneseq
  %v8068 = vshrl.u32 %v8067, 7
  %v8069 = vsub.s32 1, %v8068
  %v8070 = vrot.slane %v7390, %v8069
  %v8071 = vlaneseq
  %v8072 = vshrl.u32 %v8071, 7
  %v8073 = vsub.s32 1, %v8072
  %v8074 = vrot.slane %v7389, %v8073
  %v8075 = vlaneseq
  %v8076 = vshrl.u32 %v8075, 7
  %v8077 = vsub.s32 1, %v8076
  %v8078 = vrot.slane %v7391, %v8077
  %v8079 = vlaneseq
  %v8080 = vshrl.u32 %v8079, 7
  %v8081 = vsub.s32 1, %v8080
  %v8082 = vrot.slane %v7430, %v8081
  %v8083 = vlaneseq
  %v8084 = vshrl.u32 %v8083, 7
  %v8085 = vsub.s32 1, %v8084
  %v8086 = vrot.slane %v7438, %v8085
  %v8087 = vlaneseq
  %v8088 = vshrl.u32 %v8087, 7
  %v8089 = vsub.s32 1, %v8088
  %v8090 = vrot.slane %v7437, %v8089
  %v8091 = vlaneseq
  %v8092 = vshrl.u32 %v8091, 7
  %v8093 = vsub.s32 1, %v8092
  %v8094 = vrot.slane %v7439, %v8093
  %v8095 = vsel %vm3580, %v7974, %v7970
  %v8096 = vsel %vm3582, %v7978, %v8095
  %v8097 = vsel %vm3584, %v7982, %v8096
  %v8098 = vsel %vm3580, %v7990, %v7986
  %v8099 = vsel %vm3582, %v7994, %v8098
  %v8100 = vsel %vm3584, %v7998, %v8099
  %v8101 = vsel %vm3580, %v8006, %v8002
  %v8102 = vsel %vm3582, %v8010, %v8101
  %v8103 = vsel %vm3584, %v8014, %v8102
  %v8104 = vsel %vm3580, %v8022, %v8018
  %v8105 = vsel %vm3582, %v8026, %v8104
  %v8106 = vsel %vm3584, %v8030, %v8105
  %v8107 = vsel %vm3580, %v8038, %v8034
  %v8108 = vsel %vm3582, %v8042, %v8107
  %v8109 = vsel %vm3584, %v8046, %v8108
  %v8110 = vsel %vm3580, %v8054, %v8050
  %v8111 = vsel %vm3582, %v8058, %v8110
  %v8112 = vsel %vm3584, %v8062, %v8111
  %v8113 = vsel %vm3580, %v8070, %v8066
  %v8114 = vsel %vm3582, %v8074, %v8113
  %v8115 = vsel %vm3584, %v8078, %v8114
  %v8116 = vsel %vm3580, %v8086, %v8082
  %v8117 = vsel %vm3582, %v8090, %v8116
  %v8118 = vsel %vm3584, %v8094, %v8117
  %v8127 = vlaneseq
  %v8128 = vshrl.u32 %v8127, 7
  %v8129 = vsub.s32 0, %v8128
  %v8130 = vrot.slane %v7110, %v8129
  %v8131 = vlaneseq
  %v8132 = vshrl.u32 %v8131, 7
  %v8133 = vsub.s32 0, %v8132
  %v8134 = vrot.slane %v7158, %v8133
  %v8135 = vlaneseq
  %v8136 = vshrl.u32 %v8135, 7
  %v8137 = vsub.s32 0, %v8136
  %v8138 = vrot.slane %v7206, %v8137
  %v8139 = vlaneseq
  %v8140 = vshrl.u32 %v8139, 7
  %v8141 = vsub.s32 0, %v8140
  %v8142 = vrot.slane %v7254, %v8141
  %v8143 = vlaneseq
  %v8144 = vshrl.u32 %v8143, 7
  %v8145 = vsub.s32 0, %v8144
  %v8146 = vrot.slane %v7302, %v8145
  %v8147 = vlaneseq
  %v8148 = vshrl.u32 %v8147, 7
  %v8149 = vsub.s32 0, %v8148
  %v8150 = vrot.slane %v7350, %v8149
  %v8151 = vlaneseq
  %v8152 = vshrl.u32 %v8151, 7
  %v8153 = vsub.s32 0, %v8152
  %v8154 = vrot.slane %v7398, %v8153
  %v8155 = vlaneseq
  %v8156 = vshrl.u32 %v8155, 7
  %v8157 = vsub.s32 0, %v8156
  %v8158 = vrot.slane %v7446, %v8157
  %v8159 = vsel %vm3580, %v7802, %v7798
  %v8160 = vsel %vm3582, %v7806, %v8159
  %v8161 = vsel %vm3584, %v8130, %v8160
  %v8162 = vsel %vm3580, %v7818, %v7814
  %v8163 = vsel %vm3582, %v7822, %v8162
  %v8164 = vsel %vm3584, %v8134, %v8163
  %v8165 = vsel %vm3580, %v7834, %v7830
  %v8166 = vsel %vm3582, %v7838, %v8165
  %v8167 = vsel %vm3584, %v8138, %v8166
  %v8168 = vsel %vm3580, %v7850, %v7846
  %v8169 = vsel %vm3582, %v7854, %v8168
  %v8170 = vsel %vm3584, %v8142, %v8169
  %v8171 = vsel %vm3580, %v7866, %v7862
  %v8172 = vsel %vm3582, %v7870, %v8171
  %v8173 = vsel %vm3584, %v8146, %v8172
  %v8174 = vsel %vm3580, %v7882, %v7878
  %v8175 = vsel %vm3582, %v7886, %v8174
  %v8176 = vsel %vm3584, %v8150, %v8175
  %v8177 = vsel %vm3580, %v7898, %v7894
  %v8178 = vsel %vm3582, %v7902, %v8177
  %v8179 = vsel %vm3584, %v8154, %v8178
  %v8180 = vsel %vm3580, %v7914, %v7910
  %v8181 = vsel %vm3582, %v7918, %v8180
  %v8182 = vsel %vm3584, %v8158, %v8181
  %8183 = vrot.lane.b32.xlu0 %v8161, 32
  %v8184 = vpop.permute.xlu0 %8183
  %8185 = vrot.lane.b32.xlu0 %v8164, 32
  %v8186 = vpop.permute.xlu0 %8185
  %8187 = vrot.lane.b32.xlu0 %v8167, 32
  %v8188 = vpop.permute.xlu0 %8187
  %8189 = vrot.lane.b32.xlu0 %v8170, 32
  %v8190 = vpop.permute.xlu0 %8189
  %8191 = vrot.lane.b32.xlu0 %v8173, 32
  %v8192 = vpop.permute.xlu0 %8191
  %8193 = vrot.lane.b32.xlu0 %v8176, 32
  %v8194 = vpop.permute.xlu0 %8193
  %8195 = vrot.lane.b32.xlu0 %v8179, 32
  %v8196 = vpop.permute.xlu0 %8195
  %8197 = vrot.lane.b32.xlu0 %v8182, 32
  %v8198 = vpop.permute.xlu0 %8197
  %v8207 = vlaneseq
  %v8208 = vshrl.u32 %v8207, 7
  %v8209 = vsub.s32 0, %v8208
  %v8210 = vrot.slane %v7262, %v8209
  %v8211 = vlaneseq
  %v8212 = vshrl.u32 %v8211, 7
  %v8213 = vsub.s32 0, %v8212
  %v8214 = vrot.slane %v7270, %v8213
  %v8215 = vlaneseq
  %v8216 = vshrl.u32 %v8215, 7
  %v8217 = vsub.s32 0, %v8216
  %v8218 = vrot.slane %v7269, %v8217
  %v8219 = vlaneseq
  %v8220 = vshrl.u32 %v8219, 7
  %v8221 = vsub.s32 0, %v8220
  %v8222 = vrot.slane %v7271, %v8221
  %v8223 = vlaneseq
  %v8224 = vshrl.u32 %v8223, 7
  %v8225 = vsub.s32 0, %v8224
  %v8226 = vrot.slane %v7454, %v8225
  %v8227 = vlaneseq
  %v8228 = vshrl.u32 %v8227, 7
  %v8229 = vsub.s32 0, %v8228
  %v8230 = vrot.slane %v7462, %v8229
  %v8231 = vlaneseq
  %v8232 = vshrl.u32 %v8231, 7
  %v8233 = vsub.s32 0, %v8232
  %v8234 = vrot.slane %v7461, %v8233
  %v8235 = vlaneseq
  %v8236 = vshrl.u32 %v8235, 7
  %v8237 = vsub.s32 0, %v8236
  %v8238 = vrot.slane %v7463, %v8237
  %v8239 = vsel %vm3580, %v8214, %v8210
  %v8240 = vsel %vm3582, %v8218, %v8239
  %v8241 = vsel %vm3584, %v8222, %v8240
  %v8242 = vsel %vm3580, %v8230, %v8226
  %v8243 = vsel %vm3582, %v8234, %v8242
  %v8244 = vsel %vm3584, %v8238, %v8243
  %8245 = vrot.lane.b32.xlu0 %v7569, 64
  %v8246 = vpop.permute.xlu0 %8245
  %8247 = vrot.lane.b32.xlu0 %v7572, 64
  %v8248 = vpop.permute.xlu0 %8247
  %8249 = vrot.lane.b32.xlu0 %v7575, 64
  %v8250 = vpop.permute.xlu0 %8249
  %8251 = vrot.lane.b32.xlu0 %v8241, 64
  %v8252 = vpop.permute.xlu0 %8251
  %8253 = vrot.lane.b32.xlu0 %v7578, 64
  %v8254 = vpop.permute.xlu0 %8253
  %8255 = vrot.lane.b32.xlu0 %v7581, 64
  %v8256 = vpop.permute.xlu0 %8255
  %8257 = vrot.lane.b32.xlu0 %v7584, 64
  %v8258 = vpop.permute.xlu0 %8257
  %8259 = vrot.lane.b32.xlu0 %v8244, 64
  %v8260 = vpop.permute.xlu0 %8259
  %v8269 = vlaneseq
  %v8270 = vshrl.u32 %v8269, 7
  %v8271 = vsub.s32 1, %v8270
  %v8272 = vrot.slane %v7262, %v8271
  %v8273 = vlaneseq
  %v8274 = vshrl.u32 %v8273, 7
  %v8275 = vsub.s32 1, %v8274
  %v8276 = vrot.slane %v7270, %v8275
  %v8277 = vlaneseq
  %v8278 = vshrl.u32 %v8277, 7
  %v8279 = vsub.s32 1, %v8278
  %v8280 = vrot.slane %v7269, %v8279
  %v8281 = vlaneseq
  %v8282 = vshrl.u32 %v8281, 7
  %v8283 = vsub.s32 1, %v8282
  %v8284 = vrot.slane %v7271, %v8283
  %v8285 = vlaneseq
  %v8286 = vshrl.u32 %v8285, 7
  %v8287 = vsub.s32 1, %v8286
  %v8288 = vrot.slane %v7454, %v8287
  %v8289 = vlaneseq
  %v8290 = vshrl.u32 %v8289, 7
  %v8291 = vsub.s32 1, %v8290
  %v8292 = vrot.slane %v7462, %v8291
  %v8293 = vlaneseq
  %v8294 = vshrl.u32 %v8293, 7
  %v8295 = vsub.s32 1, %v8294
  %v8296 = vrot.slane %v7461, %v8295
  %v8297 = vlaneseq
  %v8298 = vshrl.u32 %v8297, 7
  %v8299 = vsub.s32 1, %v8298
  %v8300 = vrot.slane %v7463, %v8299
  %v8301 = vsel %vm3580, %v8276, %v8272
  %v8302 = vsel %vm3582, %v8280, %v8301
  %v8303 = vsel %vm3584, %v8284, %v8302
  %v8304 = vsel %vm3580, %v8292, %v8288
  %v8305 = vsel %vm3582, %v8296, %v8304
  %v8306 = vsel %vm3584, %v8300, %v8305
  %8307 = vrot.lane.b32.xlu0 %v7690, 96
  %v8308 = vpop.permute.xlu0 %8307
  %8309 = vrot.lane.b32.xlu0 %v7693, 96
  %v8310 = vpop.permute.xlu0 %8309
  %8311 = vrot.lane.b32.xlu0 %v7696, 96
  %v8312 = vpop.permute.xlu0 %8311
  %8313 = vrot.lane.b32.xlu0 %v8303, 96
  %v8314 = vpop.permute.xlu0 %8313
  %8315 = vrot.lane.b32.xlu0 %v7699, 96
  %v8316 = vpop.permute.xlu0 %8315
  %8317 = vrot.lane.b32.xlu0 %v7702, 96
  %v8318 = vpop.permute.xlu0 %8317
  %8319 = vrot.lane.b32.xlu0 %v7705, 96
  %v8320 = vpop.permute.xlu0 %8319
  %8321 = vrot.lane.b32.xlu0 %v8306, 96
  %v8322 = vpop.permute.xlu0 %8321
  %v8331 = vlaneseq
  %v8332 = vshrl.u32 %v8331, 7
  %v8333 = vsub.s32 0, %v8332
  %v8334 = vrot.slane %v7278, %v8333
  %v8335 = vlaneseq
  %v8336 = vshrl.u32 %v8335, 7
  %v8337 = vsub.s32 0, %v8336
  %v8338 = vrot.slane %v7470, %v8337
  %v8339 = vsel %vm3580, %v8218, %v8214
  %v8340 = vsel %vm3582, %v8222, %v8339
  %v8341 = vsel %vm3584, %v8334, %v8340
  %v8342 = vsel %vm3580, %v8234, %v8230
  %v8343 = vsel %vm3582, %v8238, %v8342
  %v8344 = vsel %vm3584, %v8338, %v8343
  %v8345 = vsel %vm6420, %v3585, %v7707
  %v8346 = vsel %vm6420, %v7569, %v7709
  %v8347 = vsel %vm6420, %v7572, %v7711
  %v8348 = vsel %vm6420, %v7575, %v7713
  %v8349 = vsel %vm6420, %v7578, %v7715
  %v8350 = vsel %vm6420, %v7581, %v7717
  %v8351 = vsel %vm6420, %v7584, %v7719
  %v8352 = vsel %vm6453, %v8345, %v7771
  %v8353 = vsel %vm6453, %v8346, %v7773
  %v8354 = vsel %vm6453, %v8347, %v7775
  %v8355 = vsel %vm6453, %v8348, %v7777
  %v8356 = vsel %vm6453, %v8349, %v7779
  %v8357 = vsel %vm6453, %v8350, %v7781
  %v8358 = vsel %vm6453, %v8351, %v7783
  %v8359 = vsel %vm6487, %v8352, %v7944
  %v8360 = vsel %vm6487, %v8353, %v7946
  %v8361 = vsel %vm6487, %v8354, %v7948
  %v8362 = vsel %vm6487, %v8355, %v7950
  %v8363 = vsel %vm6487, %v8352, %v7952
  %v8364 = vsel %vm6487, %v8356, %v7954
  %v8365 = vsel %vm6487, %v8357, %v7956
  %v8366 = vsel %vm6487, %v8358, %v7958
  %v8367 = vsel %vm6420, %v8097, %v8184
  %v8368 = vsel %vm6420, %v8100, %v8186
  %v8369 = vsel %vm6420, %v8103, %v8188
  %v8370 = vsel %vm6420, %v8106, %v8190
  %v8371 = vsel %vm6420, %v8109, %v8192
  %v8372 = vsel %vm6420, %v8112, %v8194
  %v8373 = vsel %vm6420, %v8115, %v8196
  %v8374 = vsel %vm6420, %v8118, %v8198
  %v8375 = vsel %vm6453, %v8367, %v8246
  %v8376 = vsel %vm6453, %v8368, %v8248
  %v8377 = vsel %vm6453, %v8369, %v8250
  %v8378 = vsel %vm6453, %v8370, %v8252
  %v8379 = vsel %vm6453, %v8371, %v8254
  %v8380 = vsel %vm6453, %v8372, %v8256
  %v8381 = vsel %vm6453, %v8373, %v8258
  %v8382 = vsel %vm6453, %v8374, %v8260
  %v8383 = vsel %vm6487, %v8375, %v8308
  %v8384 = vsel %vm6487, %v8376, %v8310
  %v8385 = vsel %vm6487, %v8377, %v8312
  %v8386 = vsel %vm6487, %v8378, %v8314
  %v8387 = vsel %vm6487, %v8379, %v8316
  %v8388 = vsel %vm6487, %v8380, %v8318
  %v8389 = vsel %vm6487, %v8381, %v8320
  %v8390 = vsel %vm6487, %v8382, %v8322
  %v8407 = vcombine.low %v8359, %v8383
  %v8408 = vcombine.low %v8360, %v8384
  %v8409 = vcombine.low %v8361, %v8385
  %v8410 = vcombine.low %v8362, %v8386
  %v8411 = vcombine.low %v8363, %v8387
  %v8412 = vcombine.low %v8364, %v8388
  %v8413 = vcombine.low %v8365, %v8389
  %v8414 = vcombine.low %v8366, %v8390
  %v8415 = vcombine.low %v8407, %v8408
  %v8416 = vcombine.high %v8407, %v8408
  %v8417 = vcombine.low %v7754, %v7757
  %v8418 = vcombine.low %v8409, %v8410
  %v8419 = vcombine.high %v8409, %v8410
  %v8420 = vcombine.low %v7760, %v8341
  %v8421 = vcombine.low %v8411, %v8412
  %v8422 = vcombine.high %v8411, %v8412
  %v8423 = vcombine.low %v7763, %v7766
  %v8424 = vcombine.low %v8413, %v8414
  %v8425 = vcombine.high %v8413, %v8414
  %v8426 = vcombine.low %v7769, %v8344
  %v8439 = vpack.c.bf16 %v8418, %v8415
  %v8440 = vpack.c.bf16 %v8419, %v8416
  %v8441 = vpack.c.bf16 %v8420, %v8417
  %v8442 = vpack.c.bf16 %v8424, %v8421
  %v8443 = vpack.c.bf16 %v8425, %v8422
  %v8444 = vpack.c.bf16 %v8426, %v8423
  %v8446 = vlaneseq
  %v8447 = vshrl.u32 %v8446, 7
  %v8448 = vsub.s32 0, %v8447
  %v8449 = vrot.slane %v6972, %v8448
  %v8487 = vunpack.c.l.b16 %v6936
  %v8488 = vunpack.c.l.b16 %v6937
  %v8489 = vunpack.c.l.b16 %v6938
  %v8490 = vunpack.c.l.b16 %v6939
  %v8491 = vunpack.c.l.b16 %v6940
  %v8492 = vunpack.c.l.b16 %v6941
  %v8493 = vunpack.c.l.b16 %v6942
  %v8494 = vunpack.c.l.b16 %v6943
  %v8495 = vunpack.c.l.b16 %v6944
  %v8496 = vunpack.c.l.b16 %v6945
  %v8497 = vunpack.c.l.b16 %v6946
  %v8498 = vunpack.c.l.b16 %v6947
  %v8499 = vunpack.c.l.b16 %v6948
  %v8500 = vunpack.c.l.b16 %v6949
  %v8501 = vunpack.c.l.b16 %v6950
  %v8502 = vunpack.c.l.b16 %v6951
  %v8503 = vunpack.c.l.b16 %v6952
  %v8504 = vunpack.c.l.b16 %v6953
  %v8505 = vunpack.c.l.b16 %v6954
  %v8506 = vunpack.c.l.b16 %v6955
  %v8507 = vunpack.c.l.b16 %v6956
  %v8508 = vunpack.c.l.b16 %v6957
  %v8509 = vunpack.c.l.b16 %v6958
  %v8510 = vunpack.c.l.b16 %v6959
  %v8511 = vunpack.c.l.b16 %v6960
  %v8512 = vunpack.c.l.b16 %v6961
  %v8513 = vunpack.c.l.b16 %v6962
  %v8514 = vunpack.c.l.b16 %v6963
  %v8515 = vunpack.c.l.b16 %v6964
  %v8516 = vunpack.c.l.b16 %v6965
  %v8517 = vunpack.c.l.b16 %v6966
  %v8518 = vunpack.c.l.b16 %v6967
  %v8519 = vunpack.c.l.b16 %v6968
  %v8520 = vunpack.c.l.b16 %v6969
  %v8521 = vunpack.c.l.b16 %v6970
  %v8522 = vunpack.c.l.b16 %v6971
  %v8523 = vpack.c.b16 %v8488, %v8487
  %v8524 = vpack.c.b16 %v8490, %v8489
  %v8525 = vpack.c.b16 %v8492, %v8491
  %v8526 = vpack.c.b16 %v8494, %v8493
  %v8527 = vpack.c.b16 %v8496, %v8495
  %v8528 = vpack.c.b16 %v8498, %v8497
  %v8529 = vpack.c.b16 %v8500, %v8499
  %v8530 = vpack.c.b16 %v8502, %v8501
  %v8531 = vpack.c.b16 %v8504, %v8503
  %v8532 = vpack.c.b16 %v8506, %v8505
  %v8533 = vpack.c.b16 %v8508, %v8507
  %v8534 = vpack.c.b16 %v8510, %v8509
  %v8535 = vpack.c.b16 %v8512, %v8511
  %v8536 = vpack.c.b16 %v8514, %v8513
  %v8537 = vpack.c.b16 %v8516, %v8515
  %v8538 = vpack.c.b16 %v8518, %v8517
  %v8539 = vpack.c.b16 %v8520, %v8519
  %v8540 = vpack.c.b16 %v8522, %v8521
  %v8560 = vsel %vm6420, %v8441, 0
  %v8563 = vsel %vm6420, %v8444, 0
  %8565 = vmatprep.subr.bf16.mxu0 0
  %8566 = vmatpush1.bf16.msra.mxu0 %v8523
  %8567 = vmatprep.subr.bf16.mxu0 0
  %8568 = vmatpush1.bf16.msra.mxu0 %v8524
  %8569 = vmatprep.subr.bf16.mxu0 0
  %8570 = vmatpush1.bf16.msra.mxu0 %v8525
  %8571 = vmatprep.subr.bf16.mxu0 0
  %8572 = vmatpush1.bf16.msra.mxu0 %v8526
  %8573 = vmatprep.subr.bf16.mxu0 0
  %8574 = vmatpush1.bf16.msra.mxu0 %v8527
  %8575 = vmatprep.subr.bf16.mxu0 0
  %8576 = vmatpush1.bf16.msra.mxu0 %v8528
  %8577 = vmatprep.subr.bf16.mxu0 0
  %8578 = vmatpush1.bf16.msra.mxu0 %v8529
  %8579 = vmatprep.subr.bf16.mxu0 0
  %8580 = vmatpush1.bf16.msra.mxu0 %v8530
  %8581 = vmatprep.subr.bf16.mxu0 0
  %8582 = vmatpush1.bf16.msra.mxu0 %v8531
  %8583 = vmatprep.subr.bf16.mxu0 0
  %8584 = vmatpush1.bf16.msra.mxu0 %v8532
  %8585 = vmatprep.subr.bf16.mxu0 0
  %8586 = vmatpush1.bf16.msra.mxu0 %v8533
  %8587 = vmatprep.subr.bf16.mxu0 0
  %8588 = vmatpush1.bf16.msra.mxu0 %v8534
  %8589 = vmatprep.subr.bf16.mxu0 0
  %8590 = vmatpush1.bf16.msra.mxu0 %v8535
  %8591 = vmatprep.subr.bf16.mxu0 0
  %8592 = vmatpush1.bf16.msra.mxu0 %v8536
  %8593 = vmatprep.subr.bf16.mxu0 0
  %8594 = vmatpush1.bf16.msra.mxu0 %v8537
  %8595 = vmatprep.subr.bf16.mxu0 0
  %8596 = vmatpush1.bf16.msra.mxu0 %v8538
  %8597 = vmatprep.mubr.bf16.mxu0 %v8440
  %8598 = vmatmul.mubr.bf16.gmra.mrb[0].mxu0 %v8439
  %v8599 = vpop.f32.mrb[0].mxu0
  %v8600 = vadd.f32 %v8449, %v8599
  %v8601 = vpop.f32.mrb[0].mxu0
  %v8602 = vpop.f32.mrb[0].mxu0
  %v8603 = vadd.f32 %v8449, %v8602
  %v8604 = vpop.f32.mrb[0].mxu0
  %8605 = vmatprep.mubr.bf16.mxu0 %v8443
  %8606 = vmatmul.mubr.bf16.gmra.mrb[0].mxu0 %v8442
  %v8607 = vpop.f32.mrb[0].mxu0
  %v8608 = vadd.f32 %v8449, %v8607
  %v8609 = vpop.f32.mrb[0].mxu0
  %v8610 = vpop.f32.mrb[0].mxu0
  %v8611 = vadd.f32 %v8449, %v8610
  %v8612 = vpop.f32.mrb[0].mxu0
  %8613 = vdwg.mxu0
  %8614 = vmatprep.subr.bf16.mxu0 0
  %8615 = vmatpush1.bf16.msra.mxu0 %v8539
  %8616 = vmatprep.subr.bf16.mxu0 0
  %8617 = vmatpush1.bf16.msra.mxu0 %v8540
  %8618 = vmatprep.subr.bf16.mxu0 0
  %8619 = vmatpush1.bf16.msra.mxu0 0
  %8620 = vmatprep.subr.bf16.mxu0 0
  %8621 = vmatpush1.bf16.msra.mxu0 0
  %8622 = vmatprep.subr.bf16.mxu0 0
  %8623 = vmatpush1.bf16.msra.mxu0 0
  %8624 = vmatprep.subr.bf16.mxu0 0
  %8625 = vmatpush1.bf16.msra.mxu0 0
  %8626 = vmatprep.subr.bf16.mxu0 0
  %8627 = vmatpush1.bf16.msra.mxu0 0
  %8628 = vmatprep.subr.bf16.mxu0 0
  %8629 = vmatpush1.bf16.msra.mxu0 0
  %8630 = vmatprep.subr.bf16.mxu0 0
  %8631 = vmatpush1.bf16.msra.mxu0 0
  %8632 = vmatprep.subr.bf16.mxu0 0
  %8633 = vmatpush1.bf16.msra.mxu0 0
  %8634 = vmatprep.subr.bf16.mxu0 0
  %8635 = vmatpush1.bf16.msra.mxu0 0
  %8636 = vmatprep.subr.bf16.mxu0 0
  %8637 = vmatpush1.bf16.msra.mxu0 0
  %8638 = vmatprep.subr.bf16.mxu0 0
  %8639 = vmatpush1.bf16.msra.mxu0 0
  %8640 = vmatprep.subr.bf16.mxu0 0
  %8641 = vmatpush1.bf16.msra.mxu0 0
  %8642 = vmatprep.subr.bf16.mxu0 0
  %8643 = vmatpush1.bf16.msra.mxu0 0
  %8644 = vmatprep.subr.bf16.mxu0 0
  %8645 = vmatpush1.bf16.msra.mxu0 0
  %8646 = vmatprep.mubr.bf16.mxu0 0
  %8647 = vmatmul.mubr.bf16.gmra.mrb[0].mxu0 %v8560
  %v8648 = vpop.f32.mrb[0].mxu0
  %v8649 = vadd.f32 %v8600, %v8648
  %v8650 = vpop.f32.mrb[0].mxu0
  %v8651 = vpop.f32.mrb[0].mxu0
  %v8652 = vadd.f32 %v8603, %v8651
  %v8653 = vpop.f32.mrb[0].mxu0
  %8654 = vmatprep.mubr.bf16.mxu0 0
  %8655 = vmatmul.mubr.bf16.gmra.mrb[0].mxu0 %v8563
  %v8656 = vpop.f32.mrb[0].mxu0
  %v8657 = vadd.f32 %v8608, %v8656
  %v8658 = vpop.f32.mrb[0].mxu0
  %v8659 = vpop.f32.mrb[0].mxu0
  %v8660 = vadd.f32 %v8611, %v8659
  %v8661 = vpop.f32.mrb[0].mxu0
  %8662 = vdwg.mxu0
  %vm8663 = vcmp.ge.f32.partialorder %v8649, 0.0
  %vm8664 = vcmp.ge.f32.partialorder %v8652, 0.0
  %vm8665 = vcmp.ge.f32.partialorder %v8657, 0.0
  %vm8666 = vcmp.ge.f32.partialorder %v8660, 0.0
  %v8667 = vmul.f32 %v8649, 0.2
  %v8668 = vmul.f32 %v8652, 0.2
  %v8669 = vmul.f32 %v8657, 0.2
  %v8670 = vmul.f32 %v8660, 0.2
  %v8671 = vsel %vm8663, %v8649, %v8667
  %v8672 = vsel %vm8664, %v8652, %v8668
  %v8673 = vsel %vm8665, %v8657, %v8669
  %v8674 = vsel %vm8666, %v8660, %v8670
  %v8675 = vsel %vm6453, %v8671, 0.0
  %v8676 = vsel %vm6453, %v8672, 0.0
  %v8677 = vadd.f32 %v8675, %v8676
  %v8678 = vsel %vm6453, %v8673, 0.0
  %v8679 = vadd.f32 %v8677, %v8678
  %v8680 = vsel %vm6453, %v8674, 0.0
  %v8681 = vadd.f32 %v8679, %v8680
  %v8682 = vrot.slane %v8681, 4
  %v8683 = vadd.f32 %v8681, %v8682
  %v8684 = vrot.slane %v8683, 2
  %v8685 = vadd.f32 %v8683, %v8684
  %v8686 = vrot.slane %v8685, 1
  %v8687 = vadd.f32 %v8685, %v8686
  %v8688 = vmul.f32 %v8687, 0.03125
  %v8689 = vsub.f32 %v8671, %v8688
  %v8690 = vsub.f32 %v8672, %v8688
  %v8691 = vsub.f32 %v8673, %v8688
  %v8692 = vsub.f32 %v8674, %v8688
  %v8693 = vmul.f32 %v8689, %v8689
  %v8694 = vmul.f32 %v8690, %v8690
  %v8695 = vmul.f32 %v8691, %v8691
  %v8696 = vmul.f32 %v8692, %v8692
  %v8697 = vsel %vm6453, %v8693, 0.0
  %v8698 = vsel %vm6453, %v8694, 0.0
  %v8699 = vadd.f32 %v8697, %v8698
  %v8700 = vsel %vm6453, %v8695, 0.0
  %v8701 = vadd.f32 %v8699, %v8700
  %v8702 = vsel %vm6453, %v8696, 0.0
  %v8703 = vadd.f32 %v8701, %v8702
  %v8704 = vrot.slane %v8703, 4
  %v8705 = vadd.f32 %v8703, %v8704
  %v8706 = vrot.slane %v8705, 2
  %v8707 = vadd.f32 %v8705, %v8706
  %v8708 = vrot.slane %v8707, 1
  %v8709 = vadd.f32 %v8707, %v8708
  %v8710 = vmul.f32 %v8709, 0.03125
  %v8711 = vadd.f32 %v8710, 0.8
  %v8712 = vrsqrt.pop %v8711
  %v8713 = vmul.f32 %v8689, %v8712
  %v8714 = vmul.f32 %v8690, %v8712
  %v8715 = vmul.f32 %v8691, %v8712
  %v8716 = vmul.f32 %v8692, %v8712
  %v8718 = vlaneseq
  %v8719 = vshrl.u32 %v8718, 7
  %v8720 = vsub.s32 0, %v8719
  %v8721 = vrot.slane %v6973, %v8720
  %v8723 = vmul.f32 %v8713, %v8721
  %v8724 = vmul.f32 %v8714, %v8721
  %v8725 = vmul.f32 %v8715, %v8721
  %v8726 = vmul.f32 %v8716, %v8721
  %v8728 = vlaneseq
  %v8729 = vshrl.u32 %v8728, 7
  %v8730 = vsub.s32 0, %v8729
  %v8731 = vrot.slane %v6974, %v8730
  %v8733 = vadd.f32 %v8723, %v8731
  %v8734 = vadd.f32 %v8724, %v8731
  %v8735 = vadd.f32 %v8725, %v8731
  %v8736 = vadd.f32 %v8726, %v8731
  %v8741 = vcombine.high %v8733, %v8733
  %v8742 = vcombine.high %v8734, %v8734
  %v8743 = vcombine.high %v8735, %v8735
  %v8744 = vcombine.high %v8736, %v8736
  %v8745 = vld [vmem:[%s13] sm:$0xf]
  %v8746 = vld [vmem:[%s13 + $0x4] sm:$0xf]
  %v8747 = vld [vmem:[%s13 + $0x8] sm:$0xf]
  %v8748 = vld [vmem:[%s13 + $0xc] sm:$0xf]
  %v8749 = vld [vmem:[%s13 + $0x10] sm:$0xf]
  %v8750 = vld [vmem:[%s13 + $0x14] sm:$0xf]
  %v8751 = vld [vmem:[%s13 + $0x18] sm:$0xf]
  %v8752 = vld [vmem:[%s13 + $0x1c] sm:$0xf]
  %v8753 = vld [vmem:[%s13 + $0x20] sm:$0xf]
  %v8754 = vld [vmem:[%s13 + $0x24] sm:$0xf]
  %v8755 = vld [vmem:[%s13 + $0x28] sm:$0xf]
  %v8756 = vld [vmem:[%s13 + $0x2c] sm:$0xf]
  %v8757 = vld [vmem:[%s13 + $0x30] sm:$0xf]
  %v8758 = vld [vmem:[%s13 + $0x34] sm:$0xf]
  %v8759 = vld [vmem:[%s13 + $0x38] sm:$0xf]
  %v8760 = vld [vmem:[%s13 + $0x3c] sm:$0xf]
  %v8761 = vld [vmem:[%s13 + $0x40] sm:$0xf]
  %v8762 = vld [vmem:[%s13 + $0x44] sm:$0xf]
  %v8763 = vld [vmem:[%s13 + $0x48] sm:$0xf]
  %v8764 = vld [vmem:[%s13 + $0x4c] sm:$0xf]
  %v8765 = vld [vmem:[%s13 + $0x50] sm:$0xf]
  %v8766 = vld [vmem:[%s13 + $0x54] sm:$0xf]
  %v8767 = vld [vmem:[%s13 + $0x58] sm:$0xf]
  %v8768 = vld [vmem:[%s13 + $0x5c] sm:$0xf]
  %v8769 = vld [vmem:[%s13 + $0x60] sm:$0xf]
  %v8770 = vld [vmem:[%s13 + $0x64] sm:$0xf]
  %v8771 = vld [vmem:[%s13 + $0x68] sm:$0xf]
  %v8772 = vld [vmem:[%s13 + $0x6c] sm:$0xf]
  %v8773 = vld [vmem:[%s13 + $0x70] sm:$0xf]
  %v8774 = vld [vmem:[%s13 + $0x74] sm:$0xf]
  %v8775 = vld [vmem:[%s13 + $0x78] sm:$0xf]
  %v8776 = vld [vmem:[%s13 + $0x7c] sm:$0xf]
  %v8777 = vld [vmem:[%s13 + $0x80] sm:$0xf]
  %v8778 = vld [vmem:[%s13 + $0x84] sm:$0xf]
  %v8779 = vld [vmem:[%s13 + $0x88] sm:$0xf]
  %v8780 = vld [vmem:[%s13 + $0x8c] sm:$0xf]
  %v8781 = vld [vmem:[%s13 + $0x90] sm:$0xf]
  %v8782 = vld [vmem:[%s13 + $0x94] sm:$0xf]
  %v8783 = vld [vmem:[%s13 + $0x98] sm:$0xf]
  %v8784 = vld [vmem:[%s13 + $0x9c] sm:$0xf]
  %v8785 = vld [vmem:[%s13 + $0xa0] sm:$0xf]
  %v8786 = vld [vmem:[%s13 + $0xa4] sm:$0xf]
  %v8787 = vld [vmem:[%s13 + $0xa8] sm:$0xf]
  %v8788 = vld [vmem:[%s13 + $0xac] sm:$0xf]
  %v8789 = vld [vmem:[%s13 + $0xb0] sm:$0xf]
  %v8790 = vld [vmem:[%s13 + $0xb4] sm:$0xf]
  %v8791 = vld [vmem:[%s13 + $0xb8] sm:$0xf]
  %v8792 = vld [vmem:[%s13 + $0xbc] sm:$0xf]
  %v8793 = vld [vmem:[%s13 + $0xc0] sm:$0xf]
  %v8794 = vld [vmem:[%s13 + $0xc4] sm:$0xf]
  %v8795 = vld [vmem:[%s13 + $0xc8] sm:$0xf]
  %v8796 = vld [vmem:[%s13 + $0xcc] sm:$0xf]
  %v8797 = vld [vmem:[%s13 + $0xd0] sm:$0xf]
  %v8798 = vld [vmem:[%s13 + $0xd4] sm:$0xf]
  %v8799 = vld [vmem:[%s13 + $0xd8] sm:$0xf]
  %v8800 = vld [vmem:[%s13 + $0xdc] sm:$0xf]
  %v8801 = vld [vmem:[%s13 + $0xe0] sm:$0xf]
  %v8802 = vld [vmem:[%s13 + $0xe4] sm:$0xf]
  %v8803 = vld [vmem:[%s13 + $0xe8] sm:$0xf]
  %v8804 = vld [vmem:[%s13 + $0xec] sm:$0xf]
  %v8805 = vld [vmem:[%s13 + $0xf0] sm:$0xf]
  %v8806 = vld [vmem:[%s13 + $0xf4] sm:$0xf]
  %v8807 = vld [vmem:[%s13 + $0xf8] sm:$0xf]
  %v8808 = vld [vmem:[%s13 + $0xfc] sm:$0xf]
  %v8809 = vld [vmem:[%s13 + $0x100] sm:$0xf]
  %v8810 = vld [vmem:[%s13 + $0x104] sm:$0xf]
  %v8811 = vld [vmem:[%s13 + $0x108] sm:$0xf]
  %v8812 = vld [vmem:[%s13 + $0x10c] sm:$0xf]
  %v8813 = vld [vmem:[%s13 + $0x110] sm:$0xf]
  %v8814 = vld [vmem:[%s13 + $0x114] sm:$0xf]
  %v8815 = vld [vmem:[%s13 + $0x118] sm:$0xf]
  %v8816 = vld [vmem:[%s13 + $0x11c] sm:$0xf]
  %v8817 = vld [vmem:[%s14] sm:$0x1]
  %v8818 = vld [vmem:[%s15] sm:$0x1]
  %v8819 = vld [vmem:[%s16] sm:$0x1]
  %v8820 = vrot.slane %v8733, 7
  %v8821 = vrot.slane %v8741, 7
  %v8822 = vrot.slane %v8734, 7
  %v8823 = vrot.slane %v8742, 7
  %v8824 = vrot.slane %v8735, 7
  %v8825 = vrot.slane %v8743, 7
  %v8826 = vrot.slane %v8736, 7
  %v8827 = vrot.slane %v8744, 7
  %v8836 = vsel %vm1451, 0.0, %v8820
  %v8837 = vsel %vm1451, 0.0, %v8821
  %v8838 = vsel %vm1451, 0.0, %v8822
  %v8839 = vsel %vm1451, 0.0, %v8823
  %v8840 = vsel %vm1451, 0.0, %v8824
  %v8841 = vsel %vm1451, 0.0, %v8825
  %v8842 = vsel %vm1451, 0.0, %v8826
  %v8843 = vsel %vm1451, 0.0, %v8827
  %v8844 = vsel %vm275, %v1615, 0.0
  %v8845 = vsel %vm275, %v8836, 0.0
  %v8846 = vsel %vm275, %v8837, 0.0
  %v8847 = vsel %vm275, %v8838, 0.0
  %v8848 = vsel %vm275, %v8839, 0.0
  %v8849 = vsel %vm275, %v8840, 0.0
  %v8850 = vsel %vm275, %v8841, 0.0
  %v8851 = vsel %vm275, %v8842, 0.0
  %v8852 = vsel %vm275, %v8843, 0.0
  %v8862 = vcombine.high %v8844, %v8844
  %v8864 = vunpack.c.l.s4 1983009808
  %v8865 = vunpack.c.0.s8 %v8864
  %v8866 = vlaneseq
  %v8867 = vshrl.u32 %v8866, 7
  %v8868 = vsub.s32 %v8865, %v8867
  %v8869 = vrot.slane %v8844, %v8868
  %v8871 = vunpack.c.l.s4 1983009808
  %v8872 = vunpack.c.0.s8 %v8871
  %v8873 = vlaneseq
  %v8874 = vshrl.u32 %v8873, 7
  %v8875 = vsub.s32 %v8872, %v8874
  %v8876 = vrot.slane %v8862, %v8875
  %v8877 = vcombine.high %v8869, %v8869
  %v8878 = vcombine.high %v8845, %v8845
  %v8880 = vunpack.c.l.s4 1983009808
  %v8881 = vunpack.c.0.s8 %v8880
  %v8882 = vlaneseq
  %v8883 = vshrl.u32 %v8882, 7
  %v8884 = vsub.s32 %v8881, %v8883
  %v8885 = vrot.slane %v8845, %v8884
  %v8887 = vunpack.c.l.s4 1983009808
  %v8888 = vunpack.c.0.s8 %v8887
  %v8889 = vlaneseq
  %v8890 = vshrl.u32 %v8889, 7
  %v8891 = vsub.s32 %v8888, %v8890
  %v8892 = vrot.slane %v8878, %v8891
  %v8893 = vcombine.high %v8885, %v8885
  %v8894 = vcombine.high %v8846, %v8846
  %v8896 = vunpack.c.l.s4 1983009808
  %v8897 = vunpack.c.0.s8 %v8896
  %v8898 = vlaneseq
  %v8899 = vshrl.u32 %v8898, 7
  %v8900 = vsub.s32 %v8897, %v8899
  %v8901 = vrot.slane %v8846, %v8900
  %v8903 = vunpack.c.l.s4 1983009808
  %v8904 = vunpack.c.0.s8 %v8903
  %v8905 = vlaneseq
  %v8906 = vshrl.u32 %v8905, 7
  %v8907 = vsub.s32 %v8904, %v8906
  %v8908 = vrot.slane %v8894, %v8907
  %v8909 = vcombine.high %v8901, %v8901
  %v8910 = vcombine.high %v8847, %v8847
  %v8912 = vunpack.c.l.s4 1983009808
  %v8913 = vunpack.c.0.s8 %v8912
  %v8914 = vlaneseq
  %v8915 = vshrl.u32 %v8914, 7
  %v8916 = vsub.s32 %v8913, %v8915
  %v8917 = vrot.slane %v8847, %v8916
  %v8919 = vunpack.c.l.s4 1983009808
  %v8920 = vunpack.c.0.s8 %v8919
  %v8921 = vlaneseq
  %v8922 = vshrl.u32 %v8921, 7
  %v8923 = vsub.s32 %v8920, %v8922
  %v8924 = vrot.slane %v8910, %v8923
  %v8925 = vcombine.high %v8917, %v8917
  %v8926 = vcombine.high %v8848, %v8848
  %v8928 = vunpack.c.l.s4 1983009808
  %v8929 = vunpack.c.0.s8 %v8928
  %v8930 = vlaneseq
  %v8931 = vshrl.u32 %v8930, 7
  %v8932 = vsub.s32 %v8929, %v8931
  %v8933 = vrot.slane %v8848, %v8932
  %v8935 = vunpack.c.l.s4 1983009808
  %v8936 = vunpack.c.0.s8 %v8935
  %v8937 = vlaneseq
  %v8938 = vshrl.u32 %v8937, 7
  %v8939 = vsub.s32 %v8936, %v8938
  %v8940 = vrot.slane %v8926, %v8939
  %v8941 = vcombine.high %v8933, %v8933
  %v8942 = vcombine.high %v8849, %v8849
  %v8944 = vunpack.c.l.s4 1983009808
  %v8945 = vunpack.c.0.s8 %v8944
  %v8946 = vlaneseq
  %v8947 = vshrl.u32 %v8946, 7
  %v8948 = vsub.s32 %v8945, %v8947
  %v8949 = vrot.slane %v8849, %v8948
  %v8951 = vunpack.c.l.s4 1983009808
  %v8952 = vunpack.c.0.s8 %v8951
  %v8953 = vlaneseq
  %v8954 = vshrl.u32 %v8953, 7
  %v8955 = vsub.s32 %v8952, %v8954
  %v8956 = vrot.slane %v8942, %v8955
  %v8957 = vcombine.high %v8949, %v8949
  %v8958 = vcombine.high %v8850, %v8850
  %v8960 = vunpack.c.l.s4 1983009808
  %v8961 = vunpack.c.0.s8 %v8960
  %v8962 = vlaneseq
  %v8963 = vshrl.u32 %v8962, 7
  %v8964 = vsub.s32 %v8961, %v8963
  %v8965 = vrot.slane %v8850, %v8964
  %v8967 = vunpack.c.l.s4 1983009808
  %v8968 = vunpack.c.0.s8 %v8967
  %v8969 = vlaneseq
  %v8970 = vshrl.u32 %v8969, 7
  %v8971 = vsub.s32 %v8968, %v8970
  %v8972 = vrot.slane %v8958, %v8971
  %v8973 = vcombine.high %v8965, %v8965
  %v8974 = vcombine.high %v8851, %v8851
  %v8976 = vunpack.c.l.s4 1983009808
  %v8977 = vunpack.c.0.s8 %v8976
  %v8978 = vlaneseq
  %v8979 = vshrl.u32 %v8978, 7
  %v8980 = vsub.s32 %v8977, %v8979
  %v8981 = vrot.slane %v8851, %v8980
  %v8983 = vunpack.c.l.s4 1983009808
  %v8984 = vunpack.c.0.s8 %v8983
  %v8985 = vlaneseq
  %v8986 = vshrl.u32 %v8985, 7
  %v8987 = vsub.s32 %v8984, %v8986
  %v8988 = vrot.slane %v8974, %v8987
  %v8989 = vcombine.high %v8981, %v8981
  %v8990 = vcombine.high %v8852, %v8852
  %v8992 = vunpack.c.l.s4 1983009808
  %v8993 = vunpack.c.0.s8 %v8992
  %v8994 = vlaneseq
  %v8995 = vshrl.u32 %v8994, 7
  %v8996 = vsub.s32 %v8993, %v8995
  %v8997 = vrot.slane %v8852, %v8996
  %v8999 = vunpack.c.l.s4 1983009808
  %v9000 = vunpack.c.0.s8 %v8999
  %v9001 = vlaneseq
  %v9002 = vshrl.u32 %v9001, 7
  %v9003 = vsub.s32 %v9000, %v9002
  %v9004 = vrot.slane %v8990, %v9003
  %v9005 = vcombine.high %v8997, %v8997
  %v9006 = vlaneseq
  %v9007 = vshrl.u32 %v9006, 7
  %v9008 = vsub.s32 0, %v9007
  %v9009 = vrot.slane %v8869, %v9008
  %v9010 = vlaneseq
  %v9011 = vshrl.u32 %v9010, 7
  %v9012 = vsub.s32 0, %v9011
  %v9013 = vrot.slane %v8877, %v9012
  %v9014 = vlaneseq
  %v9015 = vshrl.u32 %v9014, 7
  %v9016 = vsub.s32 0, %v9015
  %v9017 = vrot.slane %v8901, %v9016
  %v9018 = vlaneseq
  %v9019 = vshrl.u32 %v9018, 7
  %v9020 = vsub.s32 0, %v9019
  %v9021 = vrot.slane %v8909, %v9020
  %v9022 = vlaneseq
  %v9023 = vshrl.u32 %v9022, 7
  %v9024 = vsub.s32 0, %v9023
  %v9025 = vrot.slane %v8965, %v9024
  %v9026 = vlaneseq
  %v9027 = vshrl.u32 %v9026, 7
  %v9028 = vsub.s32 0, %v9027
  %v9029 = vrot.slane %v8973, %v9028
  %v9030 = vsel %vm3580, %v9013, %v9009
  %v9031 = vsel %vm3580, %v9021, %v9017
  %v9032 = vsel %vm3580, %v9029, %v9025
  %v9036 = vlaneseq
  %v9037 = vshrl.u32 %v9036, 7
  %v9038 = vsub.s32 1, %v9037
  %v9039 = vrot.slane %v8869, %v9038
  %v9040 = vlaneseq
  %v9041 = vshrl.u32 %v9040, 7
  %v9042 = vsub.s32 1, %v9041
  %v9043 = vrot.slane %v8877, %v9042
  %v9044 = vlaneseq
  %v9045 = vshrl.u32 %v9044, 7
  %v9046 = vsub.s32 1, %v9045
  %v9047 = vrot.slane %v8901, %v9046
  %v9048 = vlaneseq
  %v9049 = vshrl.u32 %v9048, 7
  %v9050 = vsub.s32 1, %v9049
  %v9051 = vrot.slane %v8909, %v9050
  %v9052 = vlaneseq
  %v9053 = vshrl.u32 %v9052, 7
  %v9054 = vsub.s32 1, %v9053
  %v9055 = vrot.slane %v8965, %v9054
  %v9056 = vlaneseq
  %v9057 = vshrl.u32 %v9056, 7
  %v9058 = vsub.s32 1, %v9057
  %v9059 = vrot.slane %v8973, %v9058
  %v9060 = vsel %vm3580, %v9043, %v9039
  %v9061 = vsel %vm3580, %v9051, %v9047
  %v9062 = vsel %vm3580, %v9059, %v9055
  %9063 = vrot.lane.b32.xlu0 %v9060, 64
  %v9064 = vpop.permute.xlu0 %9063
  %9065 = vrot.lane.b32.xlu0 %v9061, 64
  %v9066 = vpop.permute.xlu0 %9065
  %9067 = vrot.lane.b32.xlu0 %v9062, 64
  %v9068 = vpop.permute.xlu0 %9067
  %v9072 = vlaneseq
  %v9073 = vshrl.u32 %v9072, 7
  %v9074 = vsub.s32 0, %v9073
  %v9075 = vrot.slane %v8876, %v9074
  %v9076 = vlaneseq
  %v9077 = vshrl.u32 %v9076, 7
  %v9078 = vsub.s32 0, %v9077
  %v9079 = vrot.slane %v8908, %v9078
  %v9080 = vlaneseq
  %v9081 = vshrl.u32 %v9080, 7
  %v9082 = vsub.s32 0, %v9081
  %v9083 = vrot.slane %v8972, %v9082
  %v9084 = vsel %vm3580, %v9075, %v9013
  %v9085 = vsel %vm3580, %v9079, %v9021
  %v9086 = vsel %vm3580, %v9083, %v9029
  %v9090 = vlaneseq
  %v9091 = vshrl.u32 %v9090, 7
  %v9092 = vsub.s32 0, %v9091
  %v9093 = vrot.slane %v8885, %v9092
  %v9094 = vlaneseq
  %v9095 = vshrl.u32 %v9094, 7
  %v9096 = vsub.s32 0, %v9095
  %v9097 = vrot.slane %v8893, %v9096
  %v9098 = vlaneseq
  %v9099 = vshrl.u32 %v9098, 7
  %v9100 = vsub.s32 0, %v9099
  %v9101 = vrot.slane %v8917, %v9100
  %v9102 = vlaneseq
  %v9103 = vshrl.u32 %v9102, 7
  %v9104 = vsub.s32 0, %v9103
  %v9105 = vrot.slane %v8925, %v9104
  %v9106 = vlaneseq
  %v9107 = vshrl.u32 %v9106, 7
  %v9108 = vsub.s32 0, %v9107
  %v9109 = vrot.slane %v8949, %v9108
  %v9110 = vlaneseq
  %v9111 = vshrl.u32 %v9110, 7
  %v9112 = vsub.s32 0, %v9111
  %v9113 = vrot.slane %v8957, %v9112
  %v9114 = vlaneseq
  %v9115 = vshrl.u32 %v9114, 7
  %v9116 = vsub.s32 0, %v9115
  %v9117 = vrot.slane %v8981, %v9116
  %v9118 = vlaneseq
  %v9119 = vshrl.u32 %v9118, 7
  %v9120 = vsub.s32 0, %v9119
  %v9121 = vrot.slane %v8989, %v9120
  %v9122 = vsel %vm3580, %v9097, %v9093
  %v9123 = vsel %vm3580, %v9105, %v9101
  %v9124 = vsel %vm3580, %v9113, %v9109
  %v9125 = vsel %vm3580, %v9121, %v9117
  %9126 = vrot.lane.b32.xlu0 %v9122, 64
  %v9127 = vpop.permute.xlu0 %9126
  %9128 = vrot.lane.b32.xlu0 %v9123, 64
  %v9129 = vpop.permute.xlu0 %9128
  %9130 = vrot.lane.b32.xlu0 %v9124, 64
  %v9131 = vpop.permute.xlu0 %9130
  %9132 = vrot.lane.b32.xlu0 %v9125, 64
  %v9133 = vpop.permute.xlu0 %9132
  %v9138 = vlaneseq
  %v9139 = vshrl.u32 %v9138, 7
  %v9140 = vsub.s32 1, %v9139
  %v9141 = vrot.slane %v8885, %v9140
  %v9142 = vlaneseq
  %v9143 = vshrl.u32 %v9142, 7
  %v9144 = vsub.s32 1, %v9143
  %v9145 = vrot.slane %v8893, %v9144
  %v9146 = vlaneseq
  %v9147 = vshrl.u32 %v9146, 7
  %v9148 = vsub.s32 1, %v9147
  %v9149 = vrot.slane %v8917, %v9148
  %v9150 = vlaneseq
  %v9151 = vshrl.u32 %v9150, 7
  %v9152 = vsub.s32 1, %v9151
  %v9153 = vrot.slane %v8925, %v9152
  %v9154 = vlaneseq
  %v9155 = vshrl.u32 %v9154, 7
  %v9156 = vsub.s32 1, %v9155
  %v9157 = vrot.slane %v8949, %v9156
  %v9158 = vlaneseq
  %v9159 = vshrl.u32 %v9158, 7
  %v9160 = vsub.s32 1, %v9159
  %v9161 = vrot.slane %v8957, %v9160
  %v9162 = vlaneseq
  %v9163 = vshrl.u32 %v9162, 7
  %v9164 = vsub.s32 1, %v9163
  %v9165 = vrot.slane %v8981, %v9164
  %v9166 = vlaneseq
  %v9167 = vshrl.u32 %v9166, 7
  %v9168 = vsub.s32 1, %v9167
  %v9169 = vrot.slane %v8989, %v9168
  %v9170 = vsel %vm3580, %v9145, %v9141
  %v9171 = vsel %vm3580, %v9153, %v9149
  %v9172 = vsel %vm3580, %v9161, %v9157
  %v9173 = vsel %vm3580, %v9169, %v9165
  %v9178 = vlaneseq
  %v9179 = vshrl.u32 %v9178, 7
  %v9180 = vsub.s32 0, %v9179
  %v9181 = vrot.slane %v8892, %v9180
  %v9182 = vlaneseq
  %v9183 = vshrl.u32 %v9182, 7
  %v9184 = vsub.s32 0, %v9183
  %v9185 = vrot.slane %v8924, %v9184
  %v9186 = vlaneseq
  %v9187 = vshrl.u32 %v9186, 7
  %v9188 = vsub.s32 0, %v9187
  %v9189 = vrot.slane %v8956, %v9188
  %v9190 = vlaneseq
  %v9191 = vshrl.u32 %v9190, 7
  %v9192 = vsub.s32 0, %v9191
  %v9193 = vrot.slane %v8988, %v9192
  %v9194 = vsel %vm3580, %v9181, %v9097
  %v9195 = vsel %vm3580, %v9185, %v9105
  %v9196 = vsel %vm3580, %v9189, %v9113
  %v9197 = vsel %vm3580, %v9193, %v9121
  %9198 = vrot.lane.b32.xlu0 %v9194, 64
  %v9199 = vpop.permute.xlu0 %9198
  %9200 = vrot.lane.b32.xlu0 %v9195, 64
  %v9201 = vpop.permute.xlu0 %9200
  %9202 = vrot.lane.b32.xlu0 %v9196, 64
  %v9203 = vpop.permute.xlu0 %9202
  %9204 = vrot.lane.b32.xlu0 %v9197, 64
  %v9205 = vpop.permute.xlu0 %9204
  %v9210 = vlaneseq
  %v9211 = vshrl.u32 %v9210, 7
  %v9212 = vsub.s32 0, %v9211
  %v9213 = vrot.slane %v8933, %v9212
  %v9214 = vlaneseq
  %v9215 = vshrl.u32 %v9214, 7
  %v9216 = vsub.s32 0, %v9215
  %v9217 = vrot.slane %v8941, %v9216
  %v9218 = vlaneseq
  %v9219 = vshrl.u32 %v9218, 7
  %v9220 = vsub.s32 0, %v9219
  %v9221 = vrot.slane %v8997, %v9220
  %v9222 = vlaneseq
  %v9223 = vshrl.u32 %v9222, 7
  %v9224 = vsub.s32 0, %v9223
  %v9225 = vrot.slane %v9005, %v9224
  %v9226 = vsel %vm3580, %v9217, %v9213
  %v9227 = vsel %vm3580, %v9225, %v9221
  %v9230 = vlaneseq
  %v9231 = vshrl.u32 %v9230, 7
  %v9232 = vsub.s32 1, %v9231
  %v9233 = vrot.slane %v8933, %v9232
  %v9234 = vlaneseq
  %v9235 = vshrl.u32 %v9234, 7
  %v9236 = vsub.s32 1, %v9235
  %v9237 = vrot.slane %v8941, %v9236
  %v9238 = vlaneseq
  %v9239 = vshrl.u32 %v9238, 7
  %v9240 = vsub.s32 1, %v9239
  %v9241 = vrot.slane %v8997, %v9240
  %v9242 = vlaneseq
  %v9243 = vshrl.u32 %v9242, 7
  %v9244 = vsub.s32 1, %v9243
  %v9245 = vrot.slane %v9005, %v9244
  %v9246 = vsel %vm3580, %v9237, %v9233
  %v9247 = vsel %vm3580, %v9245, %v9241
  %9248 = vrot.lane.b32.xlu0 %v9246, 64
  %v9249 = vpop.permute.xlu0 %9248
  %9250 = vrot.lane.b32.xlu0 %v9247, 64
  %v9251 = vpop.permute.xlu0 %9250
  %v9254 = vlaneseq
  %v9255 = vshrl.u32 %v9254, 7
  %v9256 = vsub.s32 0, %v9255
  %v9257 = vrot.slane %v8940, %v9256
  %v9258 = vlaneseq
  %v9259 = vshrl.u32 %v9258, 7
  %v9260 = vsub.s32 0, %v9259
  %v9261 = vrot.slane %v9004, %v9260
  %v9262 = vsel %vm3580, %v9257, %v9217
  %v9263 = vsel %vm3580, %v9261, %v9225
  %v9264 = vsel %vm6453, %v9030, %v9064
  %v9265 = vsel %vm6453, %v9031, %v9066
  %v9266 = vsel %vm6453, %v9032, %v9068
  %v9267 = vsel %vm6453, %v9084, %v9127
  %v9268 = vsel %vm6453, %v9085, %v9129
  %v9269 = vsel %vm6453, %v9084, %v9131
  %v9270 = vsel %vm6453, %v9086, %v9133
  %v9271 = vsel %vm6453, %v9170, %v9199
  %v9272 = vsel %vm6453, %v9171, %v9201
  %v9273 = vsel %vm6453, %v9172, %v9203
  %v9274 = vsel %vm6453, %v9173, %v9205
  %v9275 = vsel %vm6453, %v9226, %v9249
  %v9276 = vsel %vm6453, %v9227, %v9251
  %v9290 = vcombine.low %v9264, %v9267
  %v9291 = vcombine.low %v9271, %v9265
  %v9293 = vunpack.c.l.s4 1983009808
  %v9294 = vunpack.c.0.s8 %v9293
  %v9295 = vlaneseq
  %v9296 = vshrl.u32 %v9295, 7
  %v9297 = vsub.s32 %v9294, %v9296
  %v9298 = vrot.slane %v9290, %v9297
  %v9300 = vunpack.c.l.s4 1983009808
  %v9301 = vunpack.c.0.s8 %v9300
  %v9302 = vlaneseq
  %v9303 = vshrl.u32 %v9302, 7
  %v9304 = vsub.s32 %v9301, %v9303
  %v9305 = vrot.slane %v9291, %v9304
  %v9306 = vcombine.low %v9298, %v9305
  %v9308 = vunpack.c.l.s4 1983009808
  %v9309 = vunpack.c.0.s8 %v9308
  %v9310 = vlaneseq
  %v9311 = vshrl.u32 %v9310, 7
  %v9312 = vsub.s32 %v9309, %v9311
  %v9313 = vrot.slane %v9085, %v9312
  %v9314 = vcombine.low %v9265, %v9268
  %v9315 = vcombine.low %v9272, %v9275
  %v9317 = vunpack.c.l.s4 1983009808
  %v9318 = vunpack.c.0.s8 %v9317
  %v9319 = vlaneseq
  %v9320 = vshrl.u32 %v9319, 7
  %v9321 = vsub.s32 %v9318, %v9320
  %v9322 = vrot.slane %v9314, %v9321
  %v9324 = vunpack.c.l.s4 1983009808
  %v9325 = vunpack.c.0.s8 %v9324
  %v9326 = vlaneseq
  %v9327 = vshrl.u32 %v9326, 7
  %v9328 = vsub.s32 %v9325, %v9327
  %v9329 = vrot.slane %v9315, %v9328
  %v9330 = vcombine.low %v9322, %v9329
  %v9332 = vunpack.c.l.s4 1983009808
  %v9333 = vunpack.c.0.s8 %v9332
  %v9334 = vlaneseq
  %v9335 = vshrl.u32 %v9334, 7
  %v9336 = vsub.s32 %v9333, %v9335
  %v9337 = vrot.slane %v9262, %v9336
  %v9338 = vcombine.low %v9264, %v9269
  %v9339 = vcombine.low %v9273, %v9266
  %v9341 = vunpack.c.l.s4 1983009808
  %v9342 = vunpack.c.0.s8 %v9341
  %v9343 = vlaneseq
  %v9344 = vshrl.u32 %v9343, 7
  %v9345 = vsub.s32 %v9342, %v9344
  %v9346 = vrot.slane %v9338, %v9345
  %v9348 = vunpack.c.l.s4 1983009808
  %v9349 = vunpack.c.0.s8 %v9348
  %v9350 = vlaneseq
  %v9351 = vshrl.u32 %v9350, 7
  %v9352 = vsub.s32 %v9349, %v9351
  %v9353 = vrot.slane %v9339, %v9352
  %v9354 = vcombine.low %v9346, %v9353
  %v9356 = vunpack.c.l.s4 1983009808
  %v9357 = vunpack.c.0.s8 %v9356
  %v9358 = vlaneseq
  %v9359 = vshrl.u32 %v9358, 7
  %v9360 = vsub.s32 %v9357, %v9359
  %v9361 = vrot.slane %v9086, %v9360
  %v9362 = vcombine.low %v9266, %v9270
  %v9363 = vcombine.low %v9274, %v9276
  %v9365 = vunpack.c.l.s4 1983009808
  %v9366 = vunpack.c.0.s8 %v9365
  %v9367 = vlaneseq
  %v9368 = vshrl.u32 %v9367, 7
  %v9369 = vsub.s32 %v9366, %v9368
  %v9370 = vrot.slane %v9362, %v9369
  %v9372 = vunpack.c.l.s4 1983009808
  %v9373 = vunpack.c.0.s8 %v9372
  %v9374 = vlaneseq
  %v9375 = vshrl.u32 %v9374, 7
  %v9376 = vsub.s32 %v9373, %v9375
  %v9377 = vrot.slane %v9363, %v9376
  %v9378 = vcombine.low %v9370, %v9377
  %v9380 = vunpack.c.l.s4 1983009808
  %v9381 = vunpack.c.0.s8 %v9380
  %v9382 = vlaneseq
  %v9383 = vshrl.u32 %v9382, 7
  %v9384 = vsub.s32 %v9381, %v9383
  %v9385 = vrot.slane %v9263, %v9384
  %v9386 = vcombine.low %v9306, %v9330
  %v9387 = vcombine.high %v9306, %v9330
  %v9388 = vcombine.low %v9354, %v9378
  %v9389 = vcombine.high %v9354, %v9378
  %v9391 = vunpack.c.l.s4 1983009808
  %v9392 = vunpack.c.0.s8 %v9391
  %v9393 = vlaneseq
  %v9394 = vshrl.u32 %v9393, 7
  %v9395 = vsub.s32 %v9392, %v9394
  %v9396 = vrot.slane %v9386, %v9395
  %v9398 = vunpack.c.l.s4 1983009808
  %v9399 = vunpack.c.0.s8 %v9398
  %v9400 = vlaneseq
  %v9401 = vshrl.u32 %v9400, 7
  %v9402 = vsub.s32 %v9399, %v9401
  %v9403 = vrot.slane %v9387, %v9402
  %v9405 = vunpack.c.l.s4 1983009808
  %v9406 = vunpack.c.0.s8 %v9405
  %v9407 = vlaneseq
  %v9408 = vshrl.u32 %v9407, 7
  %v9409 = vsub.s32 %v9406, %v9408
  %v9410 = vrot.slane %v9388, %v9409
  %v9412 = vunpack.c.l.s4 1983009808
  %v9413 = vunpack.c.0.s8 %v9412
  %v9414 = vlaneseq
  %v9415 = vshrl.u32 %v9414, 7
  %v9416 = vsub.s32 %v9413, %v9415
  %v9417 = vrot.slane %v9389, %v9416
  %v9418 = vcombine.low %v9396, %v9410
  %v9419 = vcombine.high %v9396, %v9410
  %v9420 = vcombine.low %v9403, %v9417
  %v9421 = vcombine.high %v9403, %v9417
  %v9422 = vcombine.low %v9313, %v9337
  %v9423 = vcombine.low %v9361, %v9385
  %v9425 = vunpack.c.l.s4 1983009808
  %v9426 = vunpack.c.0.s8 %v9425
  %v9427 = vlaneseq
  %v9428 = vshrl.u32 %v9427, 7
  %v9429 = vsub.s32 %v9426, %v9428
  %v9430 = vrot.slane %v9422, %v9429
  %v9432 = vunpack.c.l.s4 1983009808
  %v9433 = vunpack.c.0.s8 %v9432
  %v9434 = vlaneseq
  %v9435 = vshrl.u32 %v9434, 7
  %v9436 = vsub.s32 %v9433, %v9435
  %v9437 = vrot.slane %v9423, %v9436
  %v9438 = vcombine.low %v9430, %v9437
  %v9444 = vpack.c.bf16 %v9418, %v9418
  %v9445 = vpack.c.bf16 %v9419, %v9419
  %v9446 = vpack.c.bf16 %v9420, %v9420
  %v9447 = vpack.c.bf16 %v9421, %v9421
  %v9448 = vpack.c.bf16 %v9438, %v9438
  %v9450 = vlaneseq
  %v9451 = vshrl.u32 %v9450, 7
  %v9452 = vsub.s32 0, %v9451
  %v9453 = vrot.slane %v8817, %v9452
  %v9527 = vunpack.c.l.b16 %v8745
  %v9528 = vunpack.c.l.b16 %v8746
  %v9529 = vunpack.c.l.b16 %v8747
  %v9530 = vunpack.c.l.b16 %v8748
  %v9531 = vunpack.c.l.b16 %v8749
  %v9532 = vunpack.c.l.b16 %v8750
  %v9533 = vunpack.c.l.b16 %v8751
  %v9534 = vunpack.c.l.b16 %v8752
  %v9535 = vunpack.c.l.b16 %v8753
  %v9536 = vunpack.c.l.b16 %v8754
  %v9537 = vunpack.c.l.b16 %v8755
  %v9538 = vunpack.c.l.b16 %v8756
  %v9539 = vunpack.c.l.b16 %v8757
  %v9540 = vunpack.c.l.b16 %v8758
  %v9541 = vunpack.c.l.b16 %v8759
  %v9542 = vunpack.c.l.b16 %v8760
  %v9543 = vunpack.c.l.b16 %v8761
  %v9544 = vunpack.c.l.b16 %v8762
  %v9545 = vunpack.c.l.b16 %v8763
  %v9546 = vunpack.c.l.b16 %v8764
  %v9547 = vunpack.c.l.b16 %v8765
  %v9548 = vunpack.c.l.b16 %v8766
  %v9549 = vunpack.c.l.b16 %v8767
  %v9550 = vunpack.c.l.b16 %v8768
  %v9551 = vunpack.c.l.b16 %v8769
  %v9552 = vunpack.c.l.b16 %v8770
  %v9553 = vunpack.c.l.b16 %v8771
  %v9554 = vunpack.c.l.b16 %v8772
  %v9555 = vunpack.c.l.b16 %v8773
  %v9556 = vunpack.c.l.b16 %v8774
  %v9557 = vunpack.c.l.b16 %v8775
  %v9558 = vunpack.c.l.b16 %v8776
  %v9559 = vunpack.c.l.b16 %v8777
  %v9560 = vunpack.c.l.b16 %v8778
  %v9561 = vunpack.c.l.b16 %v8779
  %v9562 = vunpack.c.l.b16 %v8780
  %v9563 = vunpack.c.l.b16 %v8781
  %v9564 = vunpack.c.l.b16 %v8782
  %v9565 = vunpack.c.l.b16 %v8783
  %v9566 = vunpack.c.l.b16 %v8784
  %v9567 = vunpack.c.l.b16 %v8785
  %v9568 = vunpack.c.l.b16 %v8786
  %v9569 = vunpack.c.l.b16 %v8787
  %v9570 = vunpack.c.l.b16 %v8788
  %v9571 = vunpack.c.l.b16 %v8789
  %v9572 = vunpack.c.l.b16 %v8790
  %v9573 = vunpack.c.l.b16 %v8791
  %v9574 = vunpack.c.l.b16 %v8792
  %v9575 = vunpack.c.l.b16 %v8793
  %v9576 = vunpack.c.l.b16 %v8794
  %v9577 = vunpack.c.l.b16 %v8795
  %v9578 = vunpack.c.l.b16 %v8796
  %v9579 = vunpack.c.l.b16 %v8797
  %v9580 = vunpack.c.l.b16 %v8798
  %v9581 = vunpack.c.l.b16 %v8799
  %v9582 = vunpack.c.l.b16 %v8800
  %v9583 = vunpack.c.l.b16 %v8801
  %v9584 = vunpack.c.l.b16 %v8802
  %v9585 = vunpack.c.l.b16 %v8803
  %v9586 = vunpack.c.l.b16 %v8804
  %v9587 = vunpack.c.l.b16 %v8805
  %v9588 = vunpack.c.l.b16 %v8806
  %v9589 = vunpack.c.l.b16 %v8807
  %v9590 = vunpack.c.l.b16 %v8808
  %v9591 = vunpack.c.l.b16 %v8809
  %v9592 = vunpack.c.l.b16 %v8810
  %v9593 = vunpack.c.l.b16 %v8811
  %v9594 = vunpack.c.l.b16 %v8812
  %v9595 = vunpack.c.l.b16 %v8813
  %v9596 = vunpack.c.l.b16 %v8814
  %v9597 = vunpack.c.l.b16 %v8815
  %v9598 = vunpack.c.l.b16 %v8816
  %v9599 = vpack.c.b16 %v9528, %v9527
  %v9600 = vpack.c.b16 %v9530, %v9529
  %v9601 = vpack.c.b16 %v9532, %v9531
  %v9602 = vpack.c.b16 %v9534, %v9533
  %v9603 = vpack.c.b16 %v9536, %v9535
  %v9604 = vpack.c.b16 %v9538, %v9537
  %v9605 = vpack.c.b16 %v9540, %v9539
  %v9606 = vpack.c.b16 %v9542, %v9541
  %v9607 = vpack.c.b16 %v9544, %v9543
  %v9608 = vpack.c.b16 %v9546, %v9545
  %v9609 = vpack.c.b16 %v9548, %v9547
  %v9610 = vpack.c.b16 %v9550, %v9549
  %v9611 = vpack.c.b16 %v9552, %v9551
  %v9612 = vpack.c.b16 %v9554, %v9553
  %v9613 = vpack.c.b16 %v9556, %v9555
  %v9614 = vpack.c.b16 %v9558, %v9557
  %v9615 = vpack.c.b16 %v9560, %v9559
  %v9616 = vpack.c.b16 %v9562, %v9561
  %v9617 = vpack.c.b16 %v9564, %v9563
  %v9618 = vpack.c.b16 %v9566, %v9565
  %v9619 = vpack.c.b16 %v9568, %v9567
  %v9620 = vpack.c.b16 %v9570, %v9569
  %v9621 = vpack.c.b16 %v9572, %v9571
  %v9622 = vpack.c.b16 %v9574, %v9573
  %v9623 = vpack.c.b16 %v9576, %v9575
  %v9624 = vpack.c.b16 %v9578, %v9577
  %v9625 = vpack.c.b16 %v9580, %v9579
  %v9626 = vpack.c.b16 %v9582, %v9581
  %v9627 = vpack.c.b16 %v9584, %v9583
  %v9628 = vpack.c.b16 %v9586, %v9585
  %v9629 = vpack.c.b16 %v9588, %v9587
  %v9630 = vpack.c.b16 %v9590, %v9589
  %v9631 = vpack.c.b16 %v9592, %v9591
  %v9632 = vpack.c.b16 %v9594, %v9593
  %v9633 = vpack.c.b16 %v9596, %v9595
  %v9634 = vpack.c.b16 %v9598, %v9597
  %v9672 = vsel %vm6453, %v9448, 0
  %9674 = vmatprep.subr.bf16.mxu0 0
  %9675 = vmatpush1.bf16.msra.mxu0 %v9599
  %9676 = vmatprep.subr.bf16.mxu0 0
  %9677 = vmatpush1.bf16.msra.mxu0 %v9600
  %9678 = vmatprep.subr.bf16.mxu0 0
  %9679 = vmatpush1.bf16.msra.mxu0 %v9601
  %9680 = vmatprep.subr.bf16.mxu0 0
  %9681 = vmatpush1.bf16.msra.mxu0 %v9602
  %9682 = vmatprep.subr.bf16.mxu0 0
  %9683 = vmatpush1.bf16.msra.mxu0 %v9603
  %9684 = vmatprep.subr.bf16.mxu0 0
  %9685 = vmatpush1.bf16.msra.mxu0 %v9604
  %9686 = vmatprep.subr.bf16.mxu0 0
  %9687 = vmatpush1.bf16.msra.mxu0 %v9605
  %9688 = vmatprep.subr.bf16.mxu0 0
  %9689 = vmatpush1.bf16.msra.mxu0 %v9606
  %9690 = vmatprep.subr.bf16.mxu0 0
  %9691 = vmatpush1.bf16.msra.mxu0 %v9607
  %9692 = vmatprep.subr.bf16.mxu0 0
  %9693 = vmatpush1.bf16.msra.mxu0 %v9608
  %9694 = vmatprep.subr.bf16.mxu0 0
  %9695 = vmatpush1.bf16.msra.mxu0 %v9609
  %9696 = vmatprep.subr.bf16.mxu0 0
  %9697 = vmatpush1.bf16.msra.mxu0 %v9610
  %9698 = vmatprep.subr.bf16.mxu0 0
  %9699 = vmatpush1.bf16.msra.mxu0 %v9611
  %9700 = vmatprep.subr.bf16.mxu0 0
  %9701 = vmatpush1.bf16.msra.mxu0 %v9612
  %9702 = vmatprep.subr.bf16.mxu0 0
  %9703 = vmatpush1.bf16.msra.mxu0 %v9613
  %9704 = vmatprep.subr.bf16.mxu0 0
  %9705 = vmatpush1.bf16.msra.mxu0 %v9614
  %9706 = vmatprep.mubr.bf16.mxu0 %v9445
  %9707 = vmatmul.mubr.bf16.gmra.mrb[0].mxu0 %v9444
  %v9708 = vpop.f32.mrb[0].mxu0
  %v9709 = vadd.f32 %v9453, %v9708
  %v9710 = vpop.f32.mrb[0].mxu0
  %v9711 = vpop.f32.mrb[0].mxu0
  %v9712 = vpop.f32.mrb[0].mxu0
  %9713 = vdwg.mxu0
  %9714 = vmatprep.subr.bf16.mxu0 0
  %9715 = vmatpush1.bf16.msra.mxu0 %v9615
  %9716 = vmatprep.subr.bf16.mxu0 0
  %9717 = vmatpush1.bf16.msra.mxu0 %v9616
  %9718 = vmatprep.subr.bf16.mxu0 0
  %9719 = vmatpush1.bf16.msra.mxu0 %v9617
  %9720 = vmatprep.subr.bf16.mxu0 0
  %9721 = vmatpush1.bf16.msra.mxu0 %v9618
  %9722 = vmatprep.subr.bf16.mxu0 0
  %9723 = vmatpush1.bf16.msra.mxu0 %v9619
  %9724 = vmatprep.subr.bf16.mxu0 0
  %9725 = vmatpush1.bf16.msra.mxu0 %v9620
  %9726 = vmatprep.subr.bf16.mxu0 0
  %9727 = vmatpush1.bf16.msra.mxu0 %v9621
  %9728 = vmatprep.subr.bf16.mxu0 0
  %9729 = vmatpush1.bf16.msra.mxu0 %v9622
  %9730 = vmatprep.subr.bf16.mxu0 0
  %9731 = vmatpush1.bf16.msra.mxu0 %v9623
  %9732 = vmatprep.subr.bf16.mxu0 0
  %9733 = vmatpush1.bf16.msra.mxu0 %v9624
  %9734 = vmatprep.subr.bf16.mxu0 0
  %9735 = vmatpush1.bf16.msra.mxu0 %v9625
  %9736 = vmatprep.subr.bf16.mxu0 0
  %9737 = vmatpush1.bf16.msra.mxu0 %v9626
  %9738 = vmatprep.subr.bf16.mxu0 0
  %9739 = vmatpush1.bf16.msra.mxu0 %v9627
  %9740 = vmatprep.subr.bf16.mxu0 0
  %9741 = vmatpush1.bf16.msra.mxu0 %v9628
  %9742 = vmatprep.subr.bf16.mxu0 0
  %9743 = vmatpush1.bf16.msra.mxu0 %v9629
  %9744 = vmatprep.subr.bf16.mxu0 0
  %9745 = vmatpush1.bf16.msra.mxu0 %v9630
  %9746 = vmatprep.mubr.bf16.mxu0 %v9447
  %9747 = vmatmul.mubr.bf16.gmra.mrb[0].mxu0 %v9446
  %v9748 = vpop.f32.mrb[0].mxu0
  %v9749 = vadd.f32 %v9709, %v9748
  %v9750 = vpop.f32.mrb[0].mxu0
  %v9751 = vpop.f32.mrb[0].mxu0
  %v9752 = vpop.f32.mrb[0].mxu0
  %9753 = vdwg.mxu0
  %9754 = vmatprep.subr.bf16.mxu0 0
  %9755 = vmatpush1.bf16.msra.mxu0 %v9631
  %9756 = vmatprep.subr.bf16.mxu0 0
  %9757 = vmatpush1.bf16.msra.mxu0 %v9632
  %9758 = vmatprep.subr.bf16.mxu0 0
  %9759 = vmatpush1.bf16.msra.mxu0 %v9633
  %9760 = vmatprep.subr.bf16.mxu0 0
  %9761 = vmatpush1.bf16.msra.mxu0 %v9634
  %9762 = vmatprep.subr.bf16.mxu0 0
  %9763 = vmatpush1.bf16.msra.mxu0 0
  %9764 = vmatprep.subr.bf16.mxu0 0
  %9765 = vmatpush1.bf16.msra.mxu0 0
  %9766 = vmatprep.subr.bf16.mxu0 0
  %9767 = vmatpush1.bf16.msra.mxu0 0
  %9768 = vmatprep.subr.bf16.mxu0 0
  %9769 = vmatpush1.bf16.msra.mxu0 0
  %9770 = vmatprep.subr.bf16.mxu0 0
  %9771 = vmatpush1.bf16.msra.mxu0 0
  %9772 = vmatprep.subr.bf16.mxu0 0
  %9773 = vmatpush1.bf16.msra.mxu0 0
  %9774 = vmatprep.subr.bf16.mxu0 0
  %9775 = vmatpush1.bf16.msra.mxu0 0
  %9776 = vmatprep.subr.bf16.mxu0 0
  %9777 = vmatpush1.bf16.msra.mxu0 0
  %9778 = vmatprep.subr.bf16.mxu0 0
  %9779 = vmatpush1.bf16.msra.mxu0 0
  %9780 = vmatprep.subr.bf16.mxu0 0
  %9781 = vmatpush1.bf16.msra.mxu0 0
  %9782 = vmatprep.subr.bf16.mxu0 0
  %9783 = vmatpush1.bf16.msra.mxu0 0
  %9784 = vmatprep.subr.bf16.mxu0 0
  %9785 = vmatpush1.bf16.msra.mxu0 0
  %9786 = vmatprep.mubr.bf16.mxu0 0
  %9787 = vmatmul.mubr.bf16.gmra.mrb[0].mxu0 %v9672
  %v9788 = vpop.f32.mrb[0].mxu0
  %v9789 = vadd.f32 %v9749, %v9788
  %v9790 = vpop.f32.mrb[0].mxu0
  %v9791 = vpop.f32.mrb[0].mxu0
  %v9792 = vpop.f32.mrb[0].mxu0
  %9793 = vdwg.mxu0
  %vm9794 = vcmp.ge.f32.partialorder %v9789, 0.0
  %v9795 = vmul.f32 %v9789, 0.2
  %v9796 = vsel %vm9794, %v9789, %v9795
  %v9797 = vrot.slane %v9796, 4
  %v9798 = vadd.f32 %v9796, %v9797
  %v9799 = vrot.slane %v9798, 2
  %v9800 = vadd.f32 %v9798, %v9799
  %v9801 = vrot.slane %v9800, 1
  %v9802 = vadd.f32 %v9800, %v9801
  %v9803 = vmul.f32 %v9802, 0.125
  %v9804 = vsub.f32 %v9796, %v9803
  %v9805 = vmul.f32 %v9804, %v9804
  %v9806 = vrot.slane %v9805, 4
  %v9807 = vadd.f32 %v9805, %v9806
  %v9808 = vrot.slane %v9807, 2
  %v9809 = vadd.f32 %v9807, %v9808
  %v9810 = vrot.slane %v9809, 1
  %v9811 = vadd.f32 %v9809, %v9810
  %v9812 = vmul.f32 %v9811, 0.125
  %v9813 = vadd.f32 %v9812, 0.8
  %v9814 = vrsqrt.pop %v9813
  %v9815 = vmul.f32 %v9804, %v9814
  %v9817 = vlaneseq
  %v9818 = vshrl.u32 %v9817, 7
  %v9819 = vsub.s32 0, %v9818
  %v9820 = vrot.slane %v8818, %v9819
  %v9822 = vmul.f32 %v9815, %v9820
  %v9824 = vlaneseq
  %v9825 = vshrl.u32 %v9824, 7
  %v9826 = vsub.s32 0, %v9825
  %v9827 = vrot.slane %v8819, %v9826
  %v9829 = vadd.f32 %v9822, %v9827
  %v9831 = vcombine.high %v9829, %v9829
  %v9833 = vunpack.c.l.s4 1983009808
  %v9834 = vunpack.c.0.s8 %v9833
  %v9835 = vlaneseq
  %v9836 = vshrl.u32 %v9835, 7
  %v9837 = vsub.s32 %v9834, %v9836
  %v9838 = vrot.slane %v9829, %v9837
  %v9840 = vunpack.c.l.s4 1983009808
  %v9841 = vunpack.c.0.s8 %v9840
  %v9842 = vlaneseq
  %v9843 = vshrl.u32 %v9842, 7
  %v9844 = vsub.s32 %v9841, %v9843
  %v9845 = vrot.slane %v9831, %v9844
  %v9846 = vcombine.high %v9838, %v9838
  %v9847 = vcombine.high %v9845, %v9845
  %v9852 = vld [vmem:[%s17] sm:$0x3]
  %v9853 = vld [vmem:[%s17 + $0x2] sm:$0x3]
  %v9854 = vmul.f32 %v9838, %v9852
  %v9855 = vmul.f32 %v9846, %v9853
  %v9856 = vmul.f32 %v9845, %v9852
  %v9857 = vmul.f32 %v9847, %v9853
  %vm9858 = vcmask 1041408
  %v9859 = vsel %vm9858, %v9854, 0.0
  %9860 = vadd.xlane.f32.xlu0 %v9859
  %v9861 = vpop.xlane.xlu0 %9860
  %v9862 = vsel %vm9858, %v9855, 0.0
  %9863 = vadd.xlane.f32.xlu0 %v9862
  %v9864 = vpop.xlane.xlu0 %9863
  %v9865 = vsel %vm9858, %v9856, 0.0
  %9866 = vadd.xlane.f32.xlu0 %v9865
  %v9867 = vpop.xlane.xlu0 %9866
  %v9868 = vsel %vm9858, %v9857, 0.0
  %9869 = vadd.xlane.f32.xlu0 %v9868
  %v9870 = vpop.xlane.xlu0 %9869
  %v9871 = vsel %vm9858, %v9861, 0.0
  %v9872 = vrot.slane %v9871, 4
  %v9873 = vadd.f32 %v9871, %v9872
  %v9874 = vrot.slane %v9873, 2
  %v9875 = vadd.f32 %v9873, %v9874
  %v9876 = vrot.slane %v9875, 1
  %v9877 = vadd.f32 %v9875, %v9876
  %v9878 = vsel %vm9858, %v9864, 0.0
  %v9879 = vrot.slane %v9878, 4
  %v9880 = vadd.f32 %v9878, %v9879
  %v9881 = vrot.slane %v9880, 2
  %v9882 = vadd.f32 %v9880, %v9881
  %v9883 = vrot.slane %v9882, 1
  %v9884 = vadd.f32 %v9882, %v9883
  %v9885 = vsel %vm9858, %v9867, 0.0
  %v9886 = vrot.slane %v9885, 4
  %v9887 = vadd.f32 %v9885, %v9886
  %v9888 = vrot.slane %v9887, 2
  %v9889 = vadd.f32 %v9887, %v9888
  %v9890 = vrot.slane %v9889, 1
  %v9891 = vadd.f32 %v9889, %v9890
  %v9892 = vsel %vm9858, %v9870, 0.0
  %v9893 = vrot.slane %v9892, 4
  %v9894 = vadd.f32 %v9892, %v9893
  %v9895 = vrot.slane %v9894, 2
  %v9896 = vadd.f32 %v9894, %v9895
  %v9897 = vrot.slane %v9896, 1
  %v9898 = vadd.f32 %v9896, %v9897
  %v9899 = vadd.f32 %v9877, %v9884
  %v9900 = vadd.f32 %v9891, %v9898
  %v9901 = vld [vmem:[#allocation2] sm:$0x1]
  %v9903 = vlaneseq
  %v9904 = vshrl.u32 %v9903, 7
  %v9905 = vsub.s32 0, %v9904
  %v9906 = vrot.slane %v9901, %v9905
  %v9908 = vadd.f32 %v9899, %v9906
  %v9909 = vadd.f32 %v9900, %v9906
  %v9910 = vsub.f32 0.0, %v9908
  %v9911 = vsub.f32 0.0, %v9909
  %v9912 = vmul.f32 %v9910, 1.442695
  %v9913 = vpow.pop %v9912
  %v9914 = vmul.f32 %v9911, 1.442695
  %v9915 = vpow.pop %v9914
  %v9916 = vadd.f32 %v9913, 1.0
  %v9917 = vadd.f32 %v9915, 1.0
  %v9918 = vrcp.pop %v9916
  %v9919 = vmul.f32 1.0, %v9918
  %v9920 = vrcp.pop %v9917
  %v9921 = vmul.f32 1.0, %v9920
  %v9924 = vrot.slane %v9921, 7
  %v9925 = vsel %vm3580, %v9924, %v9919
  %vm9927 = vcmask 1024
  %9928 = vst.msk [vmem:[%s19] sm:$0x3] %vm9927, %v9925
  // Predicated region
  $region78: #{discriminator_forward.1} parent=0 // pred_check
    _
  $region79: #{discriminator_forward.1} parent=0 // pred_check_branch
    %9930 = sbr.rel (0) target = $region81
  $region80: #{discriminator_forward.1} parent=0 // pred_region
    _
  $region81: #{discriminator_forward.1} parent=0 // pred_fallthru
    _
  // Predicated region
  $region82: #{discriminator_forward.1} parent=0 // pred_check
    _
  $region83: #{discriminator_forward.1} parent=0 // pred_check_branch
    %9932 = sbr.rel (0) target = $region85
  $region84: #{discriminator_forward.1} parent=0 // pred_region
    _
  $region85: #{discriminator_forward.1} parent=0 // pred_fallthru
    _

</llo_original>
